<compile_context>
chip_gen: v6e
topology: v6e:2x2x1
jax: 0.10.0
libtpu: 0.0.40
codegen_flags: <defaults>
</compile_context>

<pallas_src>
import math

import jax
import jax.numpy as jnp
from jax.experimental import pallas as pl
from jax.experimental.pallas import tpu as pltpu

IN_CHANNEL = 784
HIDDEN = 1200
OUTPUT_K_B = 10
NUM_SUB_HEADS = 5
HEAD_COLS = NUM_SUB_HEADS * OUTPUT_K_B      # 50
HEAD_COLS_PAD = 64                          # lane-padded fused head width
BN_EPS = 2e-5


def _imsat_kernel(x_ref, w1_ref, g1_ref, be1_ref,
                  w2_ref, g2_ref, be2_ref,
                  wh_ref, bh_ref, out_ref):
    """fc1 -> BN1(batch stats) -> ReLU -> fc2 -> BN2 -> ReLU -> fused heads -> segmented softmax."""

    def bn_relu_bf16(h, g, be):
        # One-pass batch statistics (biased variance), torch training-mode BatchNorm1d.
        mu = jnp.mean(h, axis=0, keepdims=True)
        var = jnp.maximum(jnp.mean(h * h, axis=0, keepdims=True) - mu * mu, 0.0)
        h = (h - mu) * jax.lax.rsqrt(var + BN_EPS) * g + be
        # Return bf16 so the next matmul feeds the MXU natively.
        return jnp.maximum(h, 0.0).astype(jnp.bfloat16)

    # fc1/fc2 biases are omitted: training-mode BN subtracts the batch mean, which cancels any
    # per-feature constant bias exactly.
    x = x_ref[...].astype(jnp.bfloat16)                                 # (G, 784) bf16
    h = jnp.dot(x, w1_ref[...], preferred_element_type=jnp.float32)     # bf16 x bf16 -> f32 (G,1200)
    h = bn_relu_bf16(h, g1_ref[...], be1_ref[...])

    h = jnp.dot(h, w2_ref[...], preferred_element_type=jnp.float32)     # (G, 1200)
    h = bn_relu_bf16(h, g2_ref[...], be2_ref[...])

    # Fused heads: one (G,1200) x (1200,64) matmul instead of 5 lane-starved K=10 matmuls.
    logits = (jnp.dot(h, wh_ref[...], preferred_element_type=jnp.float32)
              + bh_ref[...])                                            # (G, 64) f32

    # Fused segmented softmax over the five 10-lane blocks:
    #   5 masked row-maxes -> one per-lane max vector -> ONE exp pass ->
    #   5 masked row-sums  -> one per-lane denominator -> ONE reciprocal.
    lane = jax.lax.broadcasted_iota(jnp.int32, logits.shape, 1)
    valid = lane < HEAD_COLS
    neg_inf = jnp.float32(-jnp.inf)

    maxvec = jnp.zeros_like(logits)
    for i in range(NUM_SUB_HEADS):                                      # static unroll
        in_seg = (lane >= i * OUTPUT_K_B) & (lane < (i + 1) * OUTPUT_K_B)
        m_i = jnp.max(jnp.where(in_seg, logits, neg_inf), axis=1, keepdims=True)
        maxvec = maxvec + jnp.where(in_seg, m_i, 0.0)                   # disjoint segments

    e = jnp.where(valid, jnp.exp(logits - maxvec), 0.0)                 # single exp over (G,64)

    denom = jnp.zeros_like(logits)
    for i in range(NUM_SUB_HEADS):
        in_seg = (lane >= i * OUTPUT_K_B) & (lane < (i + 1) * OUTPUT_K_B)
        s_i = jnp.sum(jnp.where(in_seg, e, 0.0), axis=1, keepdims=True)
        denom = denom + jnp.where(in_seg, s_i, 0.0)
    denom = jnp.where(valid, denom, 1.0)                                # keep pad lanes finite

    out_ref[...] = e * pl.reciprocal(denom)                             # single lane-dense store


def prepare_kernel_params(params):
    """One-time (init-path) conversion of torch-layout params to kernel layout:
    transpose to (in, out), store big weights in bf16, fuse + lane-pad the 5 heads (50 -> 64).
    The hidden dim stays at its true size (1200); Mosaic lane-pads in VMEM for free."""
    (w1, b1, g1, be1, w2, b2, g2, be2, wh, bh) = params
    del b1, b2  # cancelled exactly by training-mode BN mean subtraction

    dK = HEAD_COLS_PAD - HEAD_COLS

    w1_k = w1.T.astype(jnp.bfloat16)                                    # (784, 1200)
    w2_k = w2.T.astype(jnp.bfloat16)                                    # (1200, 1200)

    # (5,10,1200) -> (1200, 50) with column i*10+k == head i, class k; then lane-pad to 64.
    wh_f = jnp.transpose(wh, (2, 0, 1)).reshape(HIDDEN, HEAD_COLS)
    wh_k = jnp.pad(wh_f, ((0, 0), (0, dK))).astype(jnp.bfloat16)        # (1200, 64)
    bh_k = jnp.pad(bh.reshape(HEAD_COLS), (0, dK)).reshape(1, HEAD_COLS_PAD)

    g1_k, be1_k = g1.reshape(1, HIDDEN), be1.reshape(1, HIDDEN)
    g2_k, be2_k = g2.reshape(1, HIDDEN), be2.reshape(1, HIDDEN)
    return (w1_k, g1_k, be1_k, w2_k, g2_k, be2_k, wh_k, bh_k)


def imsat_forward(x, kparams, group_size=None):
    """x: (B, C, H, W) or (B, 784). Returns a (B, NUM_SUB_HEADS, OUTPUT_K_B) softmax slab
    (head i == out[:, i]).  group_size=None -> single group == whole batch (exact module
    semantics).  With group_size set (multiple of 8, dividing B), the batch is processed in
    groups on a grid; weights stay VMEM-resident and BN stats are per group."""
    if x.ndim == 4:
        x = x.reshape(x.shape[0], -1)                                   # glue: flatten NCHW
    x = x.astype(jnp.float32)
    B = x.shape[0]

    if group_size is None:
        group_size = B
    assert B % group_size == 0, "batch must be divisible by group_size"
    assert group_size == B or group_size % 8 == 0, "group_size must be a multiple of 8"
    num_groups = B // group_size

    (w1_k, g1_k, be1_k, w2_k, g2_k, be2_k, wh_k, bh_k) = kparams

    flops = 2 * B * (IN_CHANNEL * HIDDEN + HIDDEN * HIDDEN + HIDDEN * HEAD_COLS_PAD)
    bytes_accessed = ((w1_k.size + w2_k.size + wh_k.size) * 2
                      + (x.size + B * HEAD_COLS_PAD) * 4
                      + (4 * HIDDEN + 2 * HEAD_COLS_PAD) * 4)
    transcendentals = B * HEAD_COLS_PAD + 2 * num_groups * HIDDEN       # exp + rsqrt

    resident = lambda g: (0, 0)                                         # weights: same block every step
    out = pl.pallas_call(
        _imsat_kernel,
        out_shape=jax.ShapeDtypeStruct((B, HEAD_COLS_PAD), jnp.float32),
        grid=(num_groups,),
        in_specs=[
            pl.BlockSpec((group_size, IN_CHANNEL), lambda g: (g, 0)),   # x: streamed per group
            pl.BlockSpec((IN_CHANNEL, HIDDEN), resident),               # w1 (bf16)
            pl.BlockSpec((1, HIDDEN), resident),                        # gamma1
            pl.BlockSpec((1, HIDDEN), resident),                        # beta1
            pl.BlockSpec((HIDDEN, HIDDEN), resident),                   # w2 (bf16)
            pl.BlockSpec((1, HIDDEN), resident),                        # gamma2
            pl.BlockSpec((1, HIDDEN), resident),                        # beta2
            pl.BlockSpec((HIDDEN, HEAD_COLS_PAD), resident),            # fused head weight (bf16)
            pl.BlockSpec((1, HEAD_COLS_PAD), resident),                 # fused head bias
        ],
        out_specs=pl.BlockSpec((group_size, HEAD_COLS_PAD), lambda g: (g, 0)),
        compiler_params=pltpu.CompilerParams(
            dimension_semantics=("parallel",),                          # v7x: split groups over 2 TCs
            vmem_limit_bytes=24 * 1024 * 1024),
        cost_estimate=pl.CostEstimate(flops=flops,
                                      transcendentals=transcendentals,
                                      bytes_accessed=bytes_accessed),
    )(x, w1_k, g1_k, be1_k, w2_k, g2_k, be2_k, wh_k, bh_k)

    # Single slice + reshape (no per-head slice launches); heads are out[:, i].
    return out[:, :HEAD_COLS].reshape(B, NUM_SUB_HEADS, OUTPUT_K_B)


def make_params(key):
    """Deterministic torch-layout (out, in) f32 params mirroring IMSATNet.__init__ (head B)."""
    k1, k2, k3, k4 = jax.random.split(key, 4)
    w1 = (0.1 * math.sqrt(2.0 / (28 * 28))) * jax.random.normal(
        k1, (HIDDEN, IN_CHANNEL), jnp.float32)
    b1 = jnp.zeros((HIDDEN,), jnp.float32)
    w2 = (0.1 * math.sqrt(2.0 / HIDDEN)) * jax.random.normal(
        k2, (HIDDEN, HIDDEN), jnp.float32)
    b2 = jnp.zeros((HIDDEN,), jnp.float32)
    # BatchNorm1d affine params after init: gamma=1, beta=0.
    g1 = jnp.ones((HIDDEN,), jnp.float32)
    be1 = jnp.zeros((HIDDEN,), jnp.float32)
    g2 = jnp.ones((HIDDEN,), jnp.float32)
    be2 = jnp.zeros((HIDDEN,), jnp.float32)
    # Head-B sub-head linears (deterministic normals in place of default torch init).
    bound = 1.0 / math.sqrt(HIDDEN)
    wh = bound * jax.random.normal(k3, (NUM_SUB_HEADS, OUTPUT_K_B, HIDDEN), jnp.float32)
    bh = bound * jax.random.normal(k4, (NUM_SUB_HEADS, OUTPUT_K_B), jnp.float32)
    return (w1, b1, g1, be1, w2, b2, g2, be2, wh, bh)


def reference_forward(x, params):
    """Pure-JAX reference of the module forward (head B), mirroring the kernel's compute
    precision: bf16 operands into the MXU, f32 accumulation, f32 everywhere else."""
    if x.ndim == 4:
        x = x.reshape(x.shape[0], -1)
    x = x.astype(jnp.float32)
    (w1, b1, g1, be1, w2, b2, g2, be2, wh, bh) = params

    def bf16_dot(a, w_t):
        return jnp.dot(a.astype(jnp.bfloat16), w_t.astype(jnp.bfloat16),
                       preferred_element_type=jnp.float32)

    def bn(h, g, be):
        mu = jnp.mean(h, axis=0, keepdims=True)
        var = jnp.mean((h - mu) ** 2, axis=0, keepdims=True)
        return (h - mu) / jnp.sqrt(var + BN_EPS) * g + be

    h = jnp.maximum(bn(bf16_dot(x, w1.T) + b1, g1, be1), 0.0)
    h = jnp.maximum(bn(bf16_dot(h, w2.T) + b2, g2, be2), 0.0)
    return [jax.nn.softmax(bf16_dot(h, wh[i].T) + bh[i], axis=1)
            for i in range(NUM_SUB_HEADS)]


if __name__ == "__main__":
    key = jax.random.PRNGKey(0)
    kx, kp = jax.random.split(key)
    # Small batch of MNIST-shaped images (NCHW), as the module's forward expects.
    B = 16
    x = jax.random.normal(kx, (B, 1, 28, 28), jnp.float32)
    params = make_params(kp)
    kparams = prepare_kernel_params(params)        # one-time, init-path conversion

    # 1) Whole-batch call: exact module semantics (BN stats over the full batch).
    out = jax.block_until_ready(imsat_forward(x, kparams))
    assert out.shape == (B, NUM_SUB_HEADS, OUTPUT_K_B)
    refs = reference_forward(x, params)
    for i in range(NUM_SUB_HEADS):
        assert jnp.allclose(out[:, i, :], refs[i], atol=1e-3, rtol=1e-3), \
            f"head {i} mismatch vs reference (whole batch)"

    # 2) Micro-batched grid path (weights VMEM-resident across grid steps; BN per group of 8).
    out_g = jax.block_until_ready(imsat_forward(x, kparams, group_size=8))
    for s in range(0, B, 8):
        refs_g = reference_forward(x[s:s + 8], params)
        for i in range(NUM_SUB_HEADS):
            assert jnp.allclose(out_g[s:s + 8, i, :], refs_g[i], atol=1e-3, rtol=1e-3), \
                f"head {i} mismatch vs reference (group starting at {s})"

    print("KERNEL_OK")
</pallas_src>

<mosaic_0001>
module attributes {stable_mosaic.version = 11 : i64} {
  func.func @_imsat_kernel(%arg0: i32, %arg1: memref<16x784xf32, #tpu.memory_space<vmem>>, %arg2: memref<784x1200xbf16, #tpu.memory_space<vmem>>, %arg3: memref<1x1200xf32, #tpu.memory_space<vmem>>, %arg4: memref<1x1200xf32, #tpu.memory_space<vmem>>, %arg5: memref<1200x1200xbf16, #tpu.memory_space<vmem>>, %arg6: memref<1x1200xf32, #tpu.memory_space<vmem>>, %arg7: memref<1x1200xf32, #tpu.memory_space<vmem>>, %arg8: memref<1200x64xbf16, #tpu.memory_space<vmem>>, %arg9: memref<1x64xf32, #tpu.memory_space<vmem>>, %arg10: memref<16x64xf32, #tpu.memory_space<vmem>>) attributes {dimension_semantics = [#tpu.dimension_semantics<parallel>], iteration_bounds = array<i64: 1>, scalar_prefetch = 0 : i64, scratch_operands = 0 : i64, tpu.core_type = #tpu.core_type<tc>, window_params = [{transform_indices = @transform_0, window_bounds = array<i64: 16, 784>}, {pipeline_mode = #tpu.pipeline_mode<synchronous>, transform_indices = @transform_1, window_bounds = array<i64: 784, 1200>}, {pipeline_mode = #tpu.pipeline_mode<synchronous>, transform_indices = @transform_2, window_bounds = array<i64: 1, 1200>}, {pipeline_mode = #tpu.pipeline_mode<synchronous>, transform_indices = @transform_3, window_bounds = array<i64: 1, 1200>}, {pipeline_mode = #tpu.pipeline_mode<synchronous>, transform_indices = @transform_4, window_bounds = array<i64: 1200, 1200>}, {pipeline_mode = #tpu.pipeline_mode<synchronous>, transform_indices = @transform_5, window_bounds = array<i64: 1, 1200>}, {pipeline_mode = #tpu.pipeline_mode<synchronous>, transform_indices = @transform_6, window_bounds = array<i64: 1, 1200>}, {pipeline_mode = #tpu.pipeline_mode<synchronous>, transform_indices = @transform_7, window_bounds = array<i64: 1200, 64>}, {pipeline_mode = #tpu.pipeline_mode<synchronous>, transform_indices = @transform_8, window_bounds = array<i64: 1, 64>}, {transform_indices = @transform_9, window_bounds = array<i64: 16, 64>}]} {
    %c0 = arith.constant 0 : index
    %c0_0 = arith.constant 0 : index
    %0 = vector.load %arg1[%c0, %c0_0] : memref<16x784xf32, #tpu.memory_space<vmem>>, vector<16x784xf32>
    %1 = arith.truncf %0 : vector<16x784xf32> to vector<16x784xbf16>
    %c0_1 = arith.constant 0 : index
    %c0_2 = arith.constant 0 : index
    %2 = vector.load %arg2[%c0_1, %c0_2] : memref<784x1200xbf16, #tpu.memory_space<vmem>>, vector<784x1200xbf16>
    %cst = arith.constant dense<0.000000e+00> : vector<16x1200xf32>
    %3 = tpu.matmul %1, %2, %cst {dimension_numbers = #tpu.dot_dimension_numbers<[1], [0], [0], [1], [0, 0, 1, 1], [], []>} : vector<16x784xbf16>, vector<784x1200xbf16>, vector<16x1200xf32> -> vector<16x1200xf32>
    %c0_3 = arith.constant 0 : index
    %c0_4 = arith.constant 0 : index
    %4 = vector.load %arg3[%c0_3, %c0_4] : memref<1x1200xf32, #tpu.memory_space<vmem>>, vector<1x1200xf32>
    %c0_5 = arith.constant 0 : index
    %c0_6 = arith.constant 0 : index
    %5 = vector.load %arg4[%c0_5, %c0_6] : memref<1x1200xf32, #tpu.memory_space<vmem>>, vector<1x1200xf32>
    %cst_7 = arith.constant dense<0.000000e+00> : vector<1200xf32>
    %6 = vector.multi_reduction <add>, %3, %cst_7 [0] : vector<16x1200xf32> to vector<1200xf32>
    %7 = vector.shape_cast %6 : vector<1200xf32> to vector<1x1200xf32>
    %cst_8 = arith.constant 1.600000e+01 : f32
    %8 = vector.broadcast %cst_8 : f32 to vector<1x1200xf32>
    %9 = arith.divf %7, %8 : vector<1x1200xf32>
    %10 = arith.mulf %3, %3 : vector<16x1200xf32>
    %cst_9 = arith.constant dense<0.000000e+00> : vector<1200xf32>
    %11 = vector.multi_reduction <add>, %10, %cst_9 [0] : vector<16x1200xf32> to vector<1200xf32>
    %12 = vector.shape_cast %11 : vector<1200xf32> to vector<1x1200xf32>
    %cst_10 = arith.constant 1.600000e+01 : f32
    %13 = vector.broadcast %cst_10 : f32 to vector<1x1200xf32>
    %14 = arith.divf %12, %13 : vector<1x1200xf32>
    %15 = arith.mulf %9, %9 : vector<1x1200xf32>
    %16 = arith.subf %14, %15 : vector<1x1200xf32>
    %cst_11 = arith.constant 0.000000e+00 : f32
    %17 = vector.broadcast %cst_11 : f32 to vector<1x1200xf32>
    %18 = arith.maximumf %16, %17 : vector<1x1200xf32>
    %19 = vector.broadcast %9 : vector<1x1200xf32> to vector<16x1200xf32>
    %20 = arith.subf %3, %19 : vector<16x1200xf32>
    %cst_12 = arith.constant 2.000000e-05 : f32
    %21 = vector.broadcast %cst_12 : f32 to vector<1x1200xf32>
    %22 = arith.addf %18, %21 : vector<1x1200xf32>
    %23 = math.rsqrt %22 : vector<1x1200xf32>
    %24 = vector.broadcast %23 : vector<1x1200xf32> to vector<16x1200xf32>
    %25 = arith.mulf %20, %24 : vector<16x1200xf32>
    %26 = vector.broadcast %4 : vector<1x1200xf32> to vector<16x1200xf32>
    %27 = arith.mulf %25, %26 : vector<16x1200xf32>
    %28 = vector.broadcast %5 : vector<1x1200xf32> to vector<16x1200xf32>
    %29 = arith.addf %27, %28 : vector<16x1200xf32>
    %cst_13 = arith.constant 0.000000e+00 : f32
    %30 = vector.broadcast %cst_13 : f32 to vector<16x1200xf32>
    %31 = arith.maximumf %29, %30 : vector<16x1200xf32>
    %32 = arith.truncf %31 : vector<16x1200xf32> to vector<16x1200xbf16>
    %c0_14 = arith.constant 0 : index
    %c0_15 = arith.constant 0 : index
    %33 = vector.load %arg5[%c0_14, %c0_15] : memref<1200x1200xbf16, #tpu.memory_space<vmem>>, vector<1200x1200xbf16>
    %cst_16 = arith.constant dense<0.000000e+00> : vector<16x1200xf32>
    %34 = tpu.matmul %32, %33, %cst_16 {dimension_numbers = #tpu.dot_dimension_numbers<[1], [0], [0], [1], [0, 0, 1, 1], [], []>} : vector<16x1200xbf16>, vector<1200x1200xbf16>, vector<16x1200xf32> -> vector<16x1200xf32>
    %c0_17 = arith.constant 0 : index
    %c0_18 = arith.constant 0 : index
    %35 = vector.load %arg6[%c0_17, %c0_18] : memref<1x1200xf32, #tpu.memory_space<vmem>>, vector<1x1200xf32>
    %c0_19 = arith.constant 0 : index
    %c0_20 = arith.constant 0 : index
    %36 = vector.load %arg7[%c0_19, %c0_20] : memref<1x1200xf32, #tpu.memory_space<vmem>>, vector<1x1200xf32>
    %cst_21 = arith.constant dense<0.000000e+00> : vector<1200xf32>
    %37 = vector.multi_reduction <add>, %34, %cst_21 [0] : vector<16x1200xf32> to vector<1200xf32>
    %38 = vector.shape_cast %37 : vector<1200xf32> to vector<1x1200xf32>
    %cst_22 = arith.constant 1.600000e+01 : f32
    %39 = vector.broadcast %cst_22 : f32 to vector<1x1200xf32>
    %40 = arith.divf %38, %39 : vector<1x1200xf32>
    %41 = arith.mulf %34, %34 : vector<16x1200xf32>
    %cst_23 = arith.constant dense<0.000000e+00> : vector<1200xf32>
    %42 = vector.multi_reduction <add>, %41, %cst_23 [0] : vector<16x1200xf32> to vector<1200xf32>
    %43 = vector.shape_cast %42 : vector<1200xf32> to vector<1x1200xf32>
    %cst_24 = arith.constant 1.600000e+01 : f32
    %44 = vector.broadcast %cst_24 : f32 to vector<1x1200xf32>
    %45 = arith.divf %43, %44 : vector<1x1200xf32>
    %46 = arith.mulf %40, %40 : vector<1x1200xf32>
    %47 = arith.subf %45, %46 : vector<1x1200xf32>
    %cst_25 = arith.constant 0.000000e+00 : f32
    %48 = vector.broadcast %cst_25 : f32 to vector<1x1200xf32>
    %49 = arith.maximumf %47, %48 : vector<1x1200xf32>
    %50 = vector.broadcast %40 : vector<1x1200xf32> to vector<16x1200xf32>
    %51 = arith.subf %34, %50 : vector<16x1200xf32>
    %cst_26 = arith.constant 2.000000e-05 : f32
    %52 = vector.broadcast %cst_26 : f32 to vector<1x1200xf32>
    %53 = arith.addf %49, %52 : vector<1x1200xf32>
    %54 = math.rsqrt %53 : vector<1x1200xf32>
    %55 = vector.broadcast %54 : vector<1x1200xf32> to vector<16x1200xf32>
    %56 = arith.mulf %51, %55 : vector<16x1200xf32>
    %57 = vector.broadcast %35 : vector<1x1200xf32> to vector<16x1200xf32>
    %58 = arith.mulf %56, %57 : vector<16x1200xf32>
    %59 = vector.broadcast %36 : vector<1x1200xf32> to vector<16x1200xf32>
    %60 = arith.addf %58, %59 : vector<16x1200xf32>
    %cst_27 = arith.constant 0.000000e+00 : f32
    %61 = vector.broadcast %cst_27 : f32 to vector<16x1200xf32>
    %62 = arith.maximumf %60, %61 : vector<16x1200xf32>
    %63 = arith.truncf %62 : vector<16x1200xf32> to vector<16x1200xbf16>
    %c0_28 = arith.constant 0 : index
    %c0_29 = arith.constant 0 : index
    %64 = vector.load %arg8[%c0_28, %c0_29] : memref<1200x64xbf16, #tpu.memory_space<vmem>>, vector<1200x64xbf16>
    %cst_30 = arith.constant dense<0.000000e+00> : vector<16x64xf32>
    %65 = tpu.matmul %63, %64, %cst_30 {dimension_numbers = #tpu.dot_dimension_numbers<[1], [0], [0], [1], [0, 0, 1, 1], [], []>} : vector<16x1200xbf16>, vector<1200x64xbf16>, vector<16x64xf32> -> vector<16x64xf32>
    %c0_31 = arith.constant 0 : index
    %c0_32 = arith.constant 0 : index
    %66 = vector.load %arg9[%c0_31, %c0_32] : memref<1x64xf32, #tpu.memory_space<vmem>>, vector<1x64xf32>
    %67 = vector.broadcast %66 : vector<1x64xf32> to vector<16x64xf32>
    %68 = arith.addf %65, %67 : vector<16x64xf32>
    %69 = tpu.iota {dimensions = array<i32: 1>} : vector<16x64xi32>
    %c50_i32 = arith.constant 50 : i32
    %70 = vector.broadcast %c50_i32 : i32 to vector<16x64xi32>
    %71 = arith.cmpi slt, %69, %70 : vector<16x64xi32>
    %cst_33 = arith.constant 0.000000e+00 : f32
    %72 = vector.broadcast %cst_33 : f32 to vector<16x64xf32>
    %c0_i32 = arith.constant 0 : i32
    %73 = vector.broadcast %c0_i32 : i32 to vector<16x64xi32>
    %74 = arith.cmpi sge, %69, %73 : vector<16x64xi32>
    %c10_i32 = arith.constant 10 : i32
    %75 = vector.broadcast %c10_i32 : i32 to vector<16x64xi32>
    %76 = arith.cmpi slt, %69, %75 : vector<16x64xi32>
    %77 = arith.andi %74, %76 : vector<16x64xi1>
    %cst_34 = arith.constant 0xFF800000 : f32
    %78 = vector.broadcast %cst_34 : f32 to vector<16x64xf32>
    %79 = arith.select %77, %68, %78 : vector<16x64xi1>, vector<16x64xf32>
    %cst_35 = arith.constant dense<0xFF800000> : vector<16xf32>
    %80 = vector.multi_reduction <maximumf>, %79, %cst_35 [1] : vector<16x64xf32> to vector<16xf32>
    %81 = vector.shape_cast %80 : vector<16xf32> to vector<16x1xf32>
    %cst_36 = arith.constant 0.000000e+00 : f32
    %82 = vector.shape_cast %81 : vector<16x1xf32> to vector<16x1xf32>
    %83 = vector.broadcast %82 : vector<16x1xf32> to vector<16x64xf32>
    %84 = vector.broadcast %cst_36 : f32 to vector<16x64xf32>
    %85 = arith.select %77, %83, %84 : vector<16x64xi1>, vector<16x64xf32>
    %86 = arith.addf %72, %85 : vector<16x64xf32>
    %c10_i32_37 = arith.constant 10 : i32
    %87 = vector.broadcast %c10_i32_37 : i32 to vector<16x64xi32>
    %88 = arith.cmpi sge, %69, %87 : vector<16x64xi32>
    %c20_i32 = arith.constant 20 : i32
    %89 = vector.broadcast %c20_i32 : i32 to vector<16x64xi32>
    %90 = arith.cmpi slt, %69, %89 : vector<16x64xi32>
    %91 = arith.andi %88, %90 : vector<16x64xi1>
    %cst_38 = arith.constant 0xFF800000 : f32
    %92 = vector.broadcast %cst_38 : f32 to vector<16x64xf32>
    %93 = arith.select %91, %68, %92 : vector<16x64xi1>, vector<16x64xf32>
    %cst_39 = arith.constant dense<0xFF800000> : vector<16xf32>
    %94 = vector.multi_reduction <maximumf>, %93, %cst_39 [1] : vector<16x64xf32> to vector<16xf32>
    %95 = vector.shape_cast %94 : vector<16xf32> to vector<16x1xf32>
    %cst_40 = arith.constant 0.000000e+00 : f32
    %96 = vector.shape_cast %95 : vector<16x1xf32> to vector<16x1xf32>
    %97 = vector.broadcast %96 : vector<16x1xf32> to vector<16x64xf32>
    %98 = vector.broadcast %cst_40 : f32 to vector<16x64xf32>
    %99 = arith.select %91, %97, %98 : vector<16x64xi1>, vector<16x64xf32>
    %100 = arith.addf %86, %99 : vector<16x64xf32>
    %c20_i32_41 = arith.constant 20 : i32
    %101 = vector.broadcast %c20_i32_41 : i32 to vector<16x64xi32>
    %102 = arith.cmpi sge, %69, %101 : vector<16x64xi32>
    %c30_i32 = arith.constant 30 : i32
    %103 = vector.broadcast %c30_i32 : i32 to vector<16x64xi32>
    %104 = arith.cmpi slt, %69, %103 : vector<16x64xi32>
    %105 = arith.andi %102, %104 : vector<16x64xi1>
    %cst_42 = arith.constant 0xFF800000 : f32
    %106 = vector.broadcast %cst_42 : f32 to vector<16x64xf32>
    %107 = arith.select %105, %68, %106 : vector<16x64xi1>, vector<16x64xf32>
    %cst_43 = arith.constant dense<0xFF800000> : vector<16xf32>
    %108 = vector.multi_reduction <maximumf>, %107, %cst_43 [1] : vector<16x64xf32> to vector<16xf32>
    %109 = vector.shape_cast %108 : vector<16xf32> to vector<16x1xf32>
    %cst_44 = arith.constant 0.000000e+00 : f32
    %110 = vector.shape_cast %109 : vector<16x1xf32> to vector<16x1xf32>
    %111 = vector.broadcast %110 : vector<16x1xf32> to vector<16x64xf32>
    %112 = vector.broadcast %cst_44 : f32 to vector<16x64xf32>
    %113 = arith.select %105, %111, %112 : vector<16x64xi1>, vector<16x64xf32>
    %114 = arith.addf %100, %113 : vector<16x64xf32>
    %c30_i32_45 = arith.constant 30 : i32
    %115 = vector.broadcast %c30_i32_45 : i32 to vector<16x64xi32>
    %116 = arith.cmpi sge, %69, %115 : vector<16x64xi32>
    %c40_i32 = arith.constant 40 : i32
    %117 = vector.broadcast %c40_i32 : i32 to vector<16x64xi32>
    %118 = arith.cmpi slt, %69, %117 : vector<16x64xi32>
    %119 = arith.andi %116, %118 : vector<16x64xi1>
    %cst_46 = arith.constant 0xFF800000 : f32
    %120 = vector.broadcast %cst_46 : f32 to vector<16x64xf32>
    %121 = arith.select %119, %68, %120 : vector<16x64xi1>, vector<16x64xf32>
    %cst_47 = arith.constant dense<0xFF800000> : vector<16xf32>
    %122 = vector.multi_reduction <maximumf>, %121, %cst_47 [1] : vector<16x64xf32> to vector<16xf32>
    %123 = vector.shape_cast %122 : vector<16xf32> to vector<16x1xf32>
    %cst_48 = arith.constant 0.000000e+00 : f32
    %124 = vector.shape_cast %123 : vector<16x1xf32> to vector<16x1xf32>
    %125 = vector.broadcast %124 : vector<16x1xf32> to vector<16x64xf32>
    %126 = vector.broadcast %cst_48 : f32 to vector<16x64xf32>
    %127 = arith.select %119, %125, %126 : vector<16x64xi1>, vector<16x64xf32>
    %128 = arith.addf %114, %127 : vector<16x64xf32>
    %c40_i32_49 = arith.constant 40 : i32
    %129 = vector.broadcast %c40_i32_49 : i32 to vector<16x64xi32>
    %130 = arith.cmpi sge, %69, %129 : vector<16x64xi32>
    %c50_i32_50 = arith.constant 50 : i32
    %131 = vector.broadcast %c50_i32_50 : i32 to vector<16x64xi32>
    %132 = arith.cmpi slt, %69, %131 : vector<16x64xi32>
    %133 = arith.andi %130, %132 : vector<16x64xi1>
    %cst_51 = arith.constant 0xFF800000 : f32
    %134 = vector.broadcast %cst_51 : f32 to vector<16x64xf32>
    %135 = arith.select %133, %68, %134 : vector<16x64xi1>, vector<16x64xf32>
    %cst_52 = arith.constant dense<0xFF800000> : vector<16xf32>
    %136 = vector.multi_reduction <maximumf>, %135, %cst_52 [1] : vector<16x64xf32> to vector<16xf32>
    %137 = vector.shape_cast %136 : vector<16xf32> to vector<16x1xf32>
    %cst_53 = arith.constant 0.000000e+00 : f32
    %138 = vector.shape_cast %137 : vector<16x1xf32> to vector<16x1xf32>
    %139 = vector.broadcast %138 : vector<16x1xf32> to vector<16x64xf32>
    %140 = vector.broadcast %cst_53 : f32 to vector<16x64xf32>
    %141 = arith.select %133, %139, %140 : vector<16x64xi1>, vector<16x64xf32>
    %142 = arith.addf %128, %141 : vector<16x64xf32>
    %143 = arith.subf %68, %142 : vector<16x64xf32>
    %144 = math.exp %143 : vector<16x64xf32>
    %cst_54 = arith.constant 0.000000e+00 : f32
    %145 = vector.broadcast %cst_54 : f32 to vector<16x64xf32>
    %146 = arith.select %71, %144, %145 : vector<16x64xi1>, vector<16x64xf32>
    %cst_55 = arith.constant 0.000000e+00 : f32
    %147 = vector.broadcast %cst_55 : f32 to vector<16x64xf32>
    %c0_i32_56 = arith.constant 0 : i32
    %148 = vector.broadcast %c0_i32_56 : i32 to vector<16x64xi32>
    %149 = arith.cmpi sge, %69, %148 : vector<16x64xi32>
    %c10_i32_57 = arith.constant 10 : i32
    %150 = vector.broadcast %c10_i32_57 : i32 to vector<16x64xi32>
    %151 = arith.cmpi slt, %69, %150 : vector<16x64xi32>
    %152 = arith.andi %149, %151 : vector<16x64xi1>
    %cst_58 = arith.constant 0.000000e+00 : f32
    %153 = vector.broadcast %cst_58 : f32 to vector<16x64xf32>
    %154 = arith.select %152, %146, %153 : vector<16x64xi1>, vector<16x64xf32>
    %cst_59 = arith.constant dense<0.000000e+00> : vector<16xf32>
    %155 = vector.multi_reduction <add>, %154, %cst_59 [1] : vector<16x64xf32> to vector<16xf32>
    %156 = vector.shape_cast %155 : vector<16xf32> to vector<16x1xf32>
    %cst_60 = arith.constant 0.000000e+00 : f32
    %157 = vector.shape_cast %156 : vector<16x1xf32> to vector<16x1xf32>
    %158 = vector.broadcast %157 : vector<16x1xf32> to vector<16x64xf32>
    %159 = vector.broadcast %cst_60 : f32 to vector<16x64xf32>
    %160 = arith.select %152, %158, %159 : vector<16x64xi1>, vector<16x64xf32>
    %161 = arith.addf %147, %160 : vector<16x64xf32>
    %c10_i32_61 = arith.constant 10 : i32
    %162 = vector.broadcast %c10_i32_61 : i32 to vector<16x64xi32>
    %163 = arith.cmpi sge, %69, %162 : vector<16x64xi32>
    %c20_i32_62 = arith.constant 20 : i32
    %164 = vector.broadcast %c20_i32_62 : i32 to vector<16x64xi32>
    %165 = arith.cmpi slt, %69, %164 : vector<16x64xi32>
    %166 = arith.andi %163, %165 : vector<16x64xi1>
    %cst_63 = arith.constant 0.000000e+00 : f32
    %167 = vector.broadcast %cst_63 : f32 to vector<16x64xf32>
    %168 = arith.select %166, %146, %167 : vector<16x64xi1>, vector<16x64xf32>
    %cst_64 = arith.constant dense<0.000000e+00> : vector<16xf32>
    %169 = vector.multi_reduction <add>, %168, %cst_64 [1] : vector<16x64xf32> to vector<16xf32>
    %170 = vector.shape_cast %169 : vector<16xf32> to vector<16x1xf32>
    %cst_65 = arith.constant 0.000000e+00 : f32
    %171 = vector.shape_cast %170 : vector<16x1xf32> to vector<16x1xf32>
    %172 = vector.broadcast %171 : vector<16x1xf32> to vector<16x64xf32>
    %173 = vector.broadcast %cst_65 : f32 to vector<16x64xf32>
    %174 = arith.select %166, %172, %173 : vector<16x64xi1>, vector<16x64xf32>
    %175 = arith.addf %161, %174 : vector<16x64xf32>
    %c20_i32_66 = arith.constant 20 : i32
    %176 = vector.broadcast %c20_i32_66 : i32 to vector<16x64xi32>
    %177 = arith.cmpi sge, %69, %176 : vector<16x64xi32>
    %c30_i32_67 = arith.constant 30 : i32
    %178 = vector.broadcast %c30_i32_67 : i32 to vector<16x64xi32>
    %179 = arith.cmpi slt, %69, %178 : vector<16x64xi32>
    %180 = arith.andi %177, %179 : vector<16x64xi1>
    %cst_68 = arith.constant 0.000000e+00 : f32
    %181 = vector.broadcast %cst_68 : f32 to vector<16x64xf32>
    %182 = arith.select %180, %146, %181 : vector<16x64xi1>, vector<16x64xf32>
    %cst_69 = arith.constant dense<0.000000e+00> : vector<16xf32>
    %183 = vector.multi_reduction <add>, %182, %cst_69 [1] : vector<16x64xf32> to vector<16xf32>
    %184 = vector.shape_cast %183 : vector<16xf32> to vector<16x1xf32>
    %cst_70 = arith.constant 0.000000e+00 : f32
    %185 = vector.shape_cast %184 : vector<16x1xf32> to vector<16x1xf32>
    %186 = vector.broadcast %185 : vector<16x1xf32> to vector<16x64xf32>
    %187 = vector.broadcast %cst_70 : f32 to vector<16x64xf32>
    %188 = arith.select %180, %186, %187 : vector<16x64xi1>, vector<16x64xf32>
    %189 = arith.addf %175, %188 : vector<16x64xf32>
    %c30_i32_71 = arith.constant 30 : i32
    %190 = vector.broadcast %c30_i32_71 : i32 to vector<16x64xi32>
    %191 = arith.cmpi sge, %69, %190 : vector<16x64xi32>
    %c40_i32_72 = arith.constant 40 : i32
    %192 = vector.broadcast %c40_i32_72 : i32 to vector<16x64xi32>
    %193 = arith.cmpi slt, %69, %192 : vector<16x64xi32>
    %194 = arith.andi %191, %193 : vector<16x64xi1>
    %cst_73 = arith.constant 0.000000e+00 : f32
    %195 = vector.broadcast %cst_73 : f32 to vector<16x64xf32>
    %196 = arith.select %194, %146, %195 : vector<16x64xi1>, vector<16x64xf32>
    %cst_74 = arith.constant dense<0.000000e+00> : vector<16xf32>
    %197 = vector.multi_reduction <add>, %196, %cst_74 [1] : vector<16x64xf32> to vector<16xf32>
    %198 = vector.shape_cast %197 : vector<16xf32> to vector<16x1xf32>
    %cst_75 = arith.constant 0.000000e+00 : f32
    %199 = vector.shape_cast %198 : vector<16x1xf32> to vector<16x1xf32>
    %200 = vector.broadcast %199 : vector<16x1xf32> to vector<16x64xf32>
    %201 = vector.broadcast %cst_75 : f32 to vector<16x64xf32>
    %202 = arith.select %194, %200, %201 : vector<16x64xi1>, vector<16x64xf32>
    %203 = arith.addf %189, %202 : vector<16x64xf32>
    %c40_i32_76 = arith.constant 40 : i32
    %204 = vector.broadcast %c40_i32_76 : i32 to vector<16x64xi32>
    %205 = arith.cmpi sge, %69, %204 : vector<16x64xi32>
    %c50_i32_77 = arith.constant 50 : i32
    %206 = vector.broadcast %c50_i32_77 : i32 to vector<16x64xi32>
    %207 = arith.cmpi slt, %69, %206 : vector<16x64xi32>
    %208 = arith.andi %205, %207 : vector<16x64xi1>
    %cst_78 = arith.constant 0.000000e+00 : f32
    %209 = vector.broadcast %cst_78 : f32 to vector<16x64xf32>
    %210 = arith.select %208, %146, %209 : vector<16x64xi1>, vector<16x64xf32>
    %cst_79 = arith.constant dense<0.000000e+00> : vector<16xf32>
    %211 = vector.multi_reduction <add>, %210, %cst_79 [1] : vector<16x64xf32> to vector<16xf32>
    %212 = vector.shape_cast %211 : vector<16xf32> to vector<16x1xf32>
    %cst_80 = arith.constant 0.000000e+00 : f32
    %213 = vector.shape_cast %212 : vector<16x1xf32> to vector<16x1xf32>
    %214 = vector.broadcast %213 : vector<16x1xf32> to vector<16x64xf32>
    %215 = vector.broadcast %cst_80 : f32 to vector<16x64xf32>
    %216 = arith.select %208, %214, %215 : vector<16x64xi1>, vector<16x64xf32>
    %217 = arith.addf %203, %216 : vector<16x64xf32>
    %cst_81 = arith.constant 1.000000e+00 : f32
    %218 = vector.broadcast %cst_81 : f32 to vector<16x64xf32>
    %219 = arith.select %71, %217, %218 : vector<16x64xi1>, vector<16x64xf32>
    %220 = tpu.reciprocal %219 : vector<16x64xf32> -> vector<16x64xf32>
    %221 = arith.mulf %146, %220 : vector<16x64xf32>
    %c0_82 = arith.constant 0 : index
    %c0_83 = arith.constant 0 : index
    %222 = vector.load %arg10[%c0_82, %c0_83] : memref<16x64xf32, #tpu.memory_space<vmem>>, vector<16x64xf32>
    tpu.vector_store %arg10[%c0_82, %c0_83], %221 {strides = array<i32>} : memref<16x64xf32, #tpu.memory_space<vmem>>, vector<16x64xf32>,
    return
  }
  func.func @transform_0(%arg0: i32) -> (i32, i32) {
    %c0_i32 = arith.constant 0 : i32
    %c0_i32_0 = arith.constant 0 : i32
    return %arg0, %c0_i32 : i32, i32
  }
  func.func @transform_1(%arg0: i32) -> (i32, i32) {
    %c0_i32 = arith.constant 0 : i32
    %c0_i32_0 = arith.constant 0 : i32
    %c0_i32_1 = arith.constant 0 : i32
    return %c0_i32, %c0_i32_0 : i32, i32
  }
  func.func @transform_2(%arg0: i32) -> (i32, i32) {
    %c0_i32 = arith.constant 0 : i32
    %c0_i32_0 = arith.constant 0 : i32
    %c0_i32_1 = arith.constant 0 : i32
    return %c0_i32, %c0_i32_0 : i32, i32
  }
  func.func @transform_3(%arg0: i32) -> (i32, i32) {
    %c0_i32 = arith.constant 0 : i32
    %c0_i32_0 = arith.constant 0 : i32
    %c0_i32_1 = arith.constant 0 : i32
    return %c0_i32, %c0_i32_0 : i32, i32
  }
  func.func @transform_4(%arg0: i32) -> (i32, i32) {
    %c0_i32 = arith.constant 0 : i32
    %c0_i32_0 = arith.constant 0 : i32
    %c0_i32_1 = arith.constant 0 : i32
    return %c0_i32, %c0_i32_0 : i32, i32
  }
  func.func @transform_5(%arg0: i32) -> (i32, i32) {
    %c0_i32 = arith.constant 0 : i32
    %c0_i32_0 = arith.constant 0 : i32
    %c0_i32_1 = arith.constant 0 : i32
    return %c0_i32, %c0_i32_0 : i32, i32
  }
  func.func @transform_6(%arg0: i32) -> (i32, i32) {
    %c0_i32 = arith.constant 0 : i32
    %c0_i32_0 = arith.constant 0 : i32
    %c0_i32_1 = arith.constant 0 : i32
    return %c0_i32, %c0_i32_0 : i32, i32
  }
  func.func @transform_7(%arg0: i32) -> (i32, i32) {
    %c0_i32 = arith.constant 0 : i32
    %c0_i32_0 = arith.constant 0 : i32
    %c0_i32_1 = arith.constant 0 : i32
    return %c0_i32, %c0_i32_0 : i32, i32
  }
  func.func @transform_8(%arg0: i32) -> (i32, i32) {
    %c0_i32 = arith.constant 0 : i32
    %c0_i32_0 = arith.constant 0 : i32
    %c0_i32_1 = arith.constant 0 : i32
    return %c0_i32, %c0_i32_0 : i32, i32
  }
  func.func @transform_9(%arg0: i32) -> (i32, i32) {
    %c0_i32 = arith.constant 0 : i32
    %c0_i32_0 = arith.constant 0 : i32
    return %arg0, %c0_i32 : i32, i32
  }
}

</mosaic_0001>

<llo_original>
// kernel: tpu_custom_call.1
$region0: #{tpu_custom_call.1}
  #allocation0 [shape = 'u32[]', space=smem, size = 0x4, offset = 0x4, fixed_abs, tag = 'smem constant byte address 0x4 - core index']
  #allocation1 [shape = 'u32[144,128]{1,0:T(1,128)}', space=vmem, size = 0x12000, scoped, tag = 'internal scratch']
  %s0 = inlined_call_operand.hbm [shape: f32[16,784], index: 0, kind: input, shape index: {}]
  %s1 = inlined_call_operand.hbm [shape: bf16[784,1200], index: 1, kind: input, shape index: {}]
  %s2 = inlined_call_operand.hbm [shape: f32[1,1200], index: 2, kind: input, shape index: {}]
  %s3 = inlined_call_operand.hbm [shape: f32[1,1200], index: 3, kind: input, shape index: {}]
  %s4 = inlined_call_operand.hbm [shape: bf16[1200,1200], index: 4, kind: input, shape index: {}]
  %s5 = inlined_call_operand.hbm [shape: f32[1,1200], index: 5, kind: input, shape index: {}]
  %s6 = inlined_call_operand.hbm [shape: f32[1,1200], index: 6, kind: input, shape index: {}]
  %s7 = inlined_call_operand.vmem [shape: bf16[1200,64], index: 7, kind: input, shape index: {}]
  %s8 = inlined_call_operand.hbm [shape: f32[1,64], index: 8, kind: input, shape index: {}]
  %s9 = inlined_call_operand.hbm [shape: f32[16,64], index: 9, kind: output, shape index: {}]
  %s10 = sld [smem:[#allocation0]]
  $region78: #{tpu_custom_call.1} parent=0
    _
  %s12 = ssub.s32 1, %s10
  %s13 = scalar_select 0, %s12, %s10
  $region1: #{tpu_custom_call.1} parent=0
    #allocation2 [shape = 'u8[57344]{0}', space=vmem, size = 0xe000, scoped, tag = 'input window, operand 0, single buffered']
    #allocation3 [shape = 's32[1]{0}', space=sflag, size = 0x4, scoped, tag = 'scoped memory for tpu_custom_call.1']
    #allocation4 [shape = 's32[1]{0}', space=sflag, size = 0x4, scoped, tag = 'scoped memory for tpu_custom_call.1']
    #allocation5 [shape = 'u8[2007040]{0}', space=vmem, size = 0x1ea000, scoped, tag = 'input window, operand 1, single buffered']
    #allocation6 [shape = 's32[1]{0}', space=sflag, size = 0x4, scoped, tag = 'scoped memory for tpu_custom_call.1']
    #allocation7 [shape = 'u8[5120]{0}', space=vmem, size = 0x1400, scoped, tag = 'input window, operand 2, single buffered']
    #allocation8 [shape = 'u8[5120]{0}', space=vmem, size = 0x1400, scoped, tag = 'input window, operand 3, single buffered']
    #allocation9 [shape = 's32[1]{0}', space=sflag, size = 0x4, scoped, tag = 'scoped memory for tpu_custom_call.1']
    #allocation10 [shape = 'u8[3072000]{0}', space=vmem, size = 0x2ee000, scoped, tag = 'input window, operand 4, single buffered']
    #allocation11 [shape = 'u8[5120]{0}', space=vmem, size = 0x1400, scoped, tag = 'input window, operand 5, single buffered']
    #allocation12 [shape = 's32[1]{0}', space=sflag, size = 0x4, scoped, tag = 'scoped memory for tpu_custom_call.1']
    #allocation13 [shape = 'u8[5120]{0}', space=vmem, size = 0x1400, scoped, tag = 'input window, operand 6, single buffered']
    #allocation14 [shape = 'u8[512]{0}', space=vmem, size = 0x400, scoped, tag = 'input window, operand 8, single buffered']
    #allocation15 [shape = 's32[1]{0}', space=sflag, size = 0x4, scoped, tag = 'scoped memory for tpu_custom_call.1']
    #allocation16 [shape = 'u8[8192]{0}', space=vmem, size = 0x2000, scoped, tag = 'output window, operand 0, single buffered']
    %14 = vsyncpa [#allocation3], 0
    %15 = vsyncpa [#allocation6], 0
    %16 = vsyncpa [#allocation9], 0
    %17 = vsyncpa [#allocation12], 0
    %18 = vsyncpa [#allocation15], 0
    %19 = vsyncpa [#allocation4], 0
    // Predicated region
    $region2: #{tpu_custom_call.1} parent=1 // pred_check
      _
    $region3: #{tpu_custom_call.1} parent=1 // pred_check_branch
      %21 = sbr.rel (0) target = $region5
    $region4: #{tpu_custom_call.1} parent=1 // pred_region
      %s23 = ssub.s32 1792, 1792
      %24 = vsyncadd [#allocation3], %s23
      %s25 = sshll.u32 [#allocation2], 4
      %s26 = int_to_ptr.vmem [resolvable:$true] %s25
      %31 = dma.hbm_to_vmem [thread:$0]  %s0, 1792, %s26, [#allocation3], 896, 896, 56
    $region5: #{tpu_custom_call.1} parent=1 // pred_fallthru
      _
    // Predicated region
    $region6: #{tpu_custom_call.1} parent=1 // pred_check
      _
    $region7: #{tpu_custom_call.1} parent=1 // pred_check_branch
      %33 = sbr.rel (0) target = $region9
    $region8: #{tpu_custom_call.1} parent=1 // pred_region
      %s35 = ssub.s32 62720, 62720
      %36 = vsyncadd [#allocation6], %s35
      %s37 = sshll.u32 [#allocation5], 4
      %s38 = int_to_ptr.vmem [resolvable:$true] %s37
      %43 = dma.hbm_to_vmem [thread:$0]  %s1, 62720, %s38, [#allocation6], 640, 640, 40
    $region9: #{tpu_custom_call.1} parent=1 // pred_fallthru
      _
    // Predicated region
    $region10: #{tpu_custom_call.1} parent=1 // pred_check
      _
    $region11: #{tpu_custom_call.1} parent=1 // pred_check_branch
      %45 = sbr.rel (0) target = $region13
    $region12: #{tpu_custom_call.1} parent=1 // pred_region
      %s47 = ssub.s32 160, 160
      %48 = vsyncadd [#allocation6], %s47
      %s50 = sshll.u32 [#allocation7], 4
      %s51 = int_to_ptr.vmem [resolvable:$true] %s50
      %53 = dma.hbm_to_vmem [thread:$0]  %s2, 160, %s51, [#allocation6]
    $region13: #{tpu_custom_call.1} parent=1 // pred_fallthru
      _
    // Predicated region
    $region14: #{tpu_custom_call.1} parent=1 // pred_check
      _
    $region15: #{tpu_custom_call.1} parent=1 // pred_check_branch
      %55 = sbr.rel (0) target = $region17
    $region16: #{tpu_custom_call.1} parent=1 // pred_region
      %s57 = ssub.s32 160, 160
      %58 = vsyncadd [#allocation9], %s57
      %s60 = sshll.u32 [#allocation8], 4
      %s61 = int_to_ptr.vmem [resolvable:$true] %s60
      %63 = dma.hbm_to_vmem [thread:$0]  %s3, 160, %s61, [#allocation9]
    $region17: #{tpu_custom_call.1} parent=1 // pred_fallthru
      _
    // Predicated region
    $region18: #{tpu_custom_call.1} parent=1 // pred_check
      _
    $region19: #{tpu_custom_call.1} parent=1 // pred_check_branch
      %65 = sbr.rel (0) target = $region21
    $region20: #{tpu_custom_call.1} parent=1 // pred_region
      %s67 = ssub.s32 96000, 96000
      %68 = vsyncadd [#allocation9], %s67
      %s69 = sshll.u32 [#allocation10], 4
      %s70 = int_to_ptr.vmem [resolvable:$true] %s69
      %75 = dma.hbm_to_vmem [thread:$0]  %s4, 96000, %s70, [#allocation9], 640, 640, 40
    $region21: #{tpu_custom_call.1} parent=1 // pred_fallthru
      _
    // Predicated region
    $region22: #{tpu_custom_call.1} parent=1 // pred_check
      _
    $region23: #{tpu_custom_call.1} parent=1 // pred_check_branch
      %77 = sbr.rel (0) target = $region25
    $region24: #{tpu_custom_call.1} parent=1 // pred_region
      %s79 = ssub.s32 160, 160
      %80 = vsyncadd [#allocation12], %s79
      %s82 = sshll.u32 [#allocation11], 4
      %s83 = int_to_ptr.vmem [resolvable:$true] %s82
      %85 = dma.hbm_to_vmem [thread:$0]  %s5, 160, %s83, [#allocation12]
    $region25: #{tpu_custom_call.1} parent=1 // pred_fallthru
      _
    // Predicated region
    $region26: #{tpu_custom_call.1} parent=1 // pred_check
      _
    $region27: #{tpu_custom_call.1} parent=1 // pred_check_branch
      %87 = sbr.rel (0) target = $region29
    $region28: #{tpu_custom_call.1} parent=1 // pred_region
      %s89 = ssub.s32 160, 160
      %90 = vsyncadd [#allocation12], %s89
      %s92 = sshll.u32 [#allocation13], 4
      %s93 = int_to_ptr.vmem [resolvable:$true] %s92
      %95 = dma.hbm_to_vmem [thread:$0]  %s6, 160, %s93, [#allocation12]
    $region29: #{tpu_custom_call.1} parent=1 // pred_fallthru
      _
    // Predicated region
    $region30: #{tpu_custom_call.1} parent=1 // pred_check
      _
    $region31: #{tpu_custom_call.1} parent=1 // pred_check_branch
      %97 = sbr.rel (0) target = $region33
    $region32: #{tpu_custom_call.1} parent=1 // pred_region
      _
    $region33: #{tpu_custom_call.1} parent=1 // pred_fallthru
      _
    // Predicated region
    $region34: #{tpu_custom_call.1} parent=1 // pred_check
      _
    $region35: #{tpu_custom_call.1} parent=1 // pred_check_branch
      %99 = sbr.rel (0) target = $region37
    $region36: #{tpu_custom_call.1} parent=1 // pred_region
      %s101 = ssub.s32 16, 16
      %102 = vsyncadd [#allocation15], %s101
      %s104 = sshll.u32 [#allocation14], 4
      %s105 = int_to_ptr.vmem [resolvable:$true] %s104
      %107 = dma.hbm_to_vmem [thread:$0]  %s8, 16, %s105, [#allocation15]
    $region37: #{tpu_custom_call.1} parent=1 // pred_fallthru
      _
    // Predicated region
    $region38: #{tpu_custom_call.1} parent=1 // pred_check
      _
    $region39: #{tpu_custom_call.1} parent=1 // pred_check_branch
      %109 = sbr.rel (0) target = $region41
    $region40: #{tpu_custom_call.1} parent=1 // pred_region
      %110 = dma.done [#allocation3], 1792
    $region41: #{tpu_custom_call.1} parent=1 // pred_fallthru
      _
    // Predicated region
    $region42: #{tpu_custom_call.1} parent=1 // pred_check
      _
    $region43: #{tpu_custom_call.1} parent=1 // pred_check_branch
      %112 = sbr.rel (0) target = $region45
    $region44: #{tpu_custom_call.1} parent=1 // pred_region
      %113 = dma.done [#allocation6], 62720
    $region45: #{tpu_custom_call.1} parent=1 // pred_fallthru
      _
    // Predicated region
    $region46: #{tpu_custom_call.1} parent=1 // pred_check
      _
    $region47: #{tpu_custom_call.1} parent=1 // pred_check_branch
      %115 = sbr.rel (0) target = $region49
    $region48: #{tpu_custom_call.1} parent=1 // pred_region
      %116 = dma.done [#allocation6], 160
    $region49: #{tpu_custom_call.1} parent=1 // pred_fallthru
      _
    // Predicated region
    $region50: #{tpu_custom_call.1} parent=1 // pred_check
      _
    $region51: #{tpu_custom_call.1} parent=1 // pred_check_branch
      %118 = sbr.rel (0) target = $region53
    $region52: #{tpu_custom_call.1} parent=1 // pred_region
      %119 = dma.done [#allocation9], 160
    $region53: #{tpu_custom_call.1} parent=1 // pred_fallthru
      _
    // Predicated region
    $region54: #{tpu_custom_call.1} parent=1 // pred_check
      _
    $region55: #{tpu_custom_call.1} parent=1 // pred_check_branch
      %121 = sbr.rel (0) target = $region57
    $region56: #{tpu_custom_call.1} parent=1 // pred_region
      %122 = dma.done [#allocation9], 96000
    $region57: #{tpu_custom_call.1} parent=1 // pred_fallthru
      _
    // Predicated region
    $region58: #{tpu_custom_call.1} parent=1 // pred_check
      _
    $region59: #{tpu_custom_call.1} parent=1 // pred_check_branch
      %124 = sbr.rel (0) target = $region61
    $region60: #{tpu_custom_call.1} parent=1 // pred_region
      %125 = dma.done [#allocation12], 160
    $region61: #{tpu_custom_call.1} parent=1 // pred_fallthru
      _
    // Predicated region
    $region62: #{tpu_custom_call.1} parent=1 // pred_check
      _
    $region63: #{tpu_custom_call.1} parent=1 // pred_check_branch
      %127 = sbr.rel (0) target = $region65
    $region64: #{tpu_custom_call.1} parent=1 // pred_region
      %128 = dma.done [#allocation12], 160
    $region65: #{tpu_custom_call.1} parent=1 // pred_fallthru
      _
    // Predicated region
    $region66: #{tpu_custom_call.1} parent=1 // pred_check
      _
    $region67: #{tpu_custom_call.1} parent=1 // pred_check_branch
      %130 = sbr.rel (0) target = $region69
    $region68: #{tpu_custom_call.1} parent=1 // pred_region
      %131 = dma.done [#allocation15], 16
    $region69: #{tpu_custom_call.1} parent=1 // pred_fallthru
      _
    %v133 = vld [vmem:[#allocation2] sm:$0xff]
    %v134 = vld [vmem:[#allocation2 + $0x8] sm:$0xff]
    %v135 = vld [vmem:[#allocation2 + $0x10] sm:$0xff]
    %v136 = vld [vmem:[#allocation2 + $0x18] sm:$0xff]
    %v137 = vld [vmem:[#allocation2 + $0x20] sm:$0xff]
    %v138 = vld [vmem:[#allocation2 + $0x28] sm:$0xff]
    %v139 = vld [vmem:[#allocation2 + $0x30] sm:$0xff]
    %v140 = vld [vmem:[#allocation2 + $0x38] sm:$0xff]
    %v141 = vld [vmem:[#allocation2 + $0x40] sm:$0xff]
    %v142 = vld [vmem:[#allocation2 + $0x48] sm:$0xff]
    %v143 = vld [vmem:[#allocation2 + $0x50] sm:$0xff]
    %v144 = vld [vmem:[#allocation2 + $0x58] sm:$0xff]
    %v145 = vld [vmem:[#allocation2 + $0x60] sm:$0xff]
    %v146 = vld [vmem:[#allocation2 + $0x68] sm:$0xff]
    %v147 = vpack.c.bf16 %v140, %v133
    %v148 = vpack.c.bf16 %v141, %v134
    %v149 = vpack.c.bf16 %v142, %v135
    %v150 = vpack.c.bf16 %v143, %v136
    %v151 = vpack.c.bf16 %v144, %v137
    %v152 = vpack.c.bf16 %v145, %v138
    %v153 = vpack.c.bf16 %v146, %v139
    %v154 = vld [vmem:[#allocation5] sm:$0xff]
    %v155 = vld [vmem:[#allocation5 + $0x8] sm:$0xff]
    %v156 = vld [vmem:[#allocation5 + $0x10] sm:$0xff]
    %v157 = vld [vmem:[#allocation5 + $0x18] sm:$0xff]
    %v158 = vld [vmem:[#allocation5 + $0x20] sm:$0xff]
    %v159 = vld [vmem:[#allocation5 + $0x28] sm:$0xff]
    %v160 = vld [vmem:[#allocation5 + $0x30] sm:$0xff]
    %v161 = vld [vmem:[#allocation5 + $0x38] sm:$0xff]
    %v162 = vld [vmem:[#allocation5 + $0x40] sm:$0xff]
    %v163 = vld [vmem:[#allocation5 + $0x48] sm:$0xff]
    %v164 = vld [vmem:[#allocation5 + $0x50] sm:$0xff]
    %v165 = vld [vmem:[#allocation5 + $0x58] sm:$0xff]
    %v166 = vld [vmem:[#allocation5 + $0x60] sm:$0xff]
    %v167 = vld [vmem:[#allocation5 + $0x68] sm:$0xff]
    %v168 = vld [vmem:[#allocation5 + $0x70] sm:$0xff]
    %v169 = vld [vmem:[#allocation5 + $0x78] sm:$0xff]
    %v170 = vld [vmem:[#allocation5 + $0x80] sm:$0xff]
    %v171 = vld [vmem:[#allocation5 + $0x88] sm:$0xff]
    %v172 = vld [vmem:[#allocation5 + $0x90] sm:$0xff]
    %v173 = vld [vmem:[#allocation5 + $0x98] sm:$0xff]
    %v174 = vld [vmem:[#allocation5 + $0xa0] sm:$0xff]
    %v175 = vld [vmem:[#allocation5 + $0xa8] sm:$0xff]
    %v176 = vld [vmem:[#allocation5 + $0xb0] sm:$0xff]
    %v177 = vld [vmem:[#allocation5 + $0xb8] sm:$0xff]
    %v178 = vld [vmem:[#allocation5 + $0xc0] sm:$0xff]
    %v179 = vld [vmem:[#allocation5 + $0xc8] sm:$0xff]
    %v180 = vld [vmem:[#allocation5 + $0xd0] sm:$0xff]
    %v181 = vld [vmem:[#allocation5 + $0xd8] sm:$0xff]
    %v182 = vld [vmem:[#allocation5 + $0xe0] sm:$0xff]
    %v183 = vld [vmem:[#allocation5 + $0xe8] sm:$0xff]
    %v184 = vld [vmem:[#allocation5 + $0xf0] sm:$0xff]
    %v185 = vld [vmem:[#allocation5 + $0xf8] sm:$0xff]
    %v186 = vld [vmem:[#allocation5 + $0x100] sm:$0xff]
    %v187 = vld [vmem:[#allocation5 + $0x108] sm:$0xff]
    %v188 = vld [vmem:[#allocation5 + $0x110] sm:$0xff]
    %v189 = vld [vmem:[#allocation5 + $0x118] sm:$0xff]
    %v190 = vld [vmem:[#allocation5 + $0x120] sm:$0xff]
    %v191 = vld [vmem:[#allocation5 + $0x128] sm:$0xff]
    %v192 = vld [vmem:[#allocation5 + $0x130] sm:$0xff]
    %v193 = vld [vmem:[#allocation5 + $0x138] sm:$0xff]
    %v194 = vld [vmem:[#allocation5 + $0x140] sm:$0xff]
    %v195 = vld [vmem:[#allocation5 + $0x148] sm:$0xff]
    %v196 = vld [vmem:[#allocation5 + $0x150] sm:$0xff]
    %v197 = vld [vmem:[#allocation5 + $0x158] sm:$0xff]
    %v198 = vld [vmem:[#allocation5 + $0x160] sm:$0xff]
    %v199 = vld [vmem:[#allocation5 + $0x168] sm:$0xff]
    %v200 = vld [vmem:[#allocation5 + $0x170] sm:$0xff]
    %v201 = vld [vmem:[#allocation5 + $0x178] sm:$0xff]
    %v202 = vld [vmem:[#allocation5 + $0x180] sm:$0xff]
    %v203 = vld [vmem:[#allocation5 + $0x188] sm:$0xff]
    %v204 = vld [vmem:[#allocation5 + $0x190] sm:$0xff]
    %v205 = vld [vmem:[#allocation5 + $0x198] sm:$0xff]
    %v206 = vld [vmem:[#allocation5 + $0x1a0] sm:$0xff]
    %v207 = vld [vmem:[#allocation5 + $0x1a8] sm:$0xff]
    %v208 = vld [vmem:[#allocation5 + $0x1b0] sm:$0xff]
    %v209 = vld [vmem:[#allocation5 + $0x1b8] sm:$0xff]
    %v210 = vld [vmem:[#allocation5 + $0x1c0] sm:$0xff]
    %v211 = vld [vmem:[#allocation5 + $0x1c8] sm:$0xff]
    %v212 = vld [vmem:[#allocation5 + $0x1d0] sm:$0xff]
    %v213 = vld [vmem:[#allocation5 + $0x1d8] sm:$0xff]
    %v214 = vld [vmem:[#allocation5 + $0x1e0] sm:$0xff]
    %v215 = vld [vmem:[#allocation5 + $0x1e8] sm:$0xff]
    %v216 = vld [vmem:[#allocation5 + $0x1f0] sm:$0xff]
    %v217 = vld [vmem:[#allocation5 + $0x1f8] sm:$0xff]
    %v218 = vld [vmem:[#allocation5 + $0x200] sm:$0xff]
    %v219 = vld [vmem:[#allocation5 + $0x208] sm:$0xff]
    %v220 = vld [vmem:[#allocation5 + $0x210] sm:$0xff]
    %v221 = vld [vmem:[#allocation5 + $0x218] sm:$0xff]
    %v222 = vld [vmem:[#allocation5 + $0x220] sm:$0xff]
    %v223 = vld [vmem:[#allocation5 + $0x228] sm:$0xff]
    %v224 = vld [vmem:[#allocation5 + $0x230] sm:$0xff]
    %v225 = vld [vmem:[#allocation5 + $0x238] sm:$0xff]
    %v226 = vld [vmem:[#allocation5 + $0x240] sm:$0xff]
    %v227 = vld [vmem:[#allocation5 + $0x248] sm:$0xff]
    %v228 = vld [vmem:[#allocation5 + $0x250] sm:$0xff]
    %v229 = vld [vmem:[#allocation5 + $0x258] sm:$0xff]
    %v230 = vld [vmem:[#allocation5 + $0x260] sm:$0xff]
    %v231 = vld [vmem:[#allocation5 + $0x268] sm:$0xff]
    %v232 = vld [vmem:[#allocation5 + $0x270] sm:$0xff]
    %v233 = vld [vmem:[#allocation5 + $0x278] sm:$0xff]
    %v234 = vld [vmem:[#allocation5 + $0x280] sm:$0xff]
    %v235 = vld [vmem:[#allocation5 + $0x288] sm:$0xff]
    %v236 = vld [vmem:[#allocation5 + $0x290] sm:$0xff]
    %v237 = vld [vmem:[#allocation5 + $0x298] sm:$0xff]
    %v238 = vld [vmem:[#allocation5 + $0x2a0] sm:$0xff]
    %v239 = vld [vmem:[#allocation5 + $0x2a8] sm:$0xff]
    %v240 = vld [vmem:[#allocation5 + $0x2b0] sm:$0xff]
    %v241 = vld [vmem:[#allocation5 + $0x2b8] sm:$0xff]
    %v242 = vld [vmem:[#allocation5 + $0x2c0] sm:$0xff]
    %v243 = vld [vmem:[#allocation5 + $0x2c8] sm:$0xff]
    %v244 = vld [vmem:[#allocation5 + $0x2d0] sm:$0xff]
    %v245 = vld [vmem:[#allocation5 + $0x2d8] sm:$0xff]
    %v246 = vld [vmem:[#allocation5 + $0x2e0] sm:$0xff]
    %v247 = vld [vmem:[#allocation5 + $0x2e8] sm:$0xff]
    %v248 = vld [vmem:[#allocation5 + $0x2f0] sm:$0xff]
    %v249 = vld [vmem:[#allocation5 + $0x2f8] sm:$0xff]
    %v250 = vld [vmem:[#allocation5 + $0x300] sm:$0xff]
    %v251 = vld [vmem:[#allocation5 + $0x308] sm:$0xff]
    %v252 = vld [vmem:[#allocation5 + $0x310] sm:$0xff]
    %v253 = vld [vmem:[#allocation5 + $0x318] sm:$0xff]
    %v254 = vld [vmem:[#allocation5 + $0x320] sm:$0xff]
    %v255 = vld [vmem:[#allocation5 + $0x328] sm:$0xff]
    %v256 = vld [vmem:[#allocation5 + $0x330] sm:$0xff]
    %v257 = vld [vmem:[#allocation5 + $0x338] sm:$0xff]
    %v258 = vld [vmem:[#allocation5 + $0x340] sm:$0xff]
    %v259 = vld [vmem:[#allocation5 + $0x348] sm:$0xff]
    %v260 = vld [vmem:[#allocation5 + $0x350] sm:$0xff]
    %v261 = vld [vmem:[#allocation5 + $0x358] sm:$0xff]
    %v262 = vld [vmem:[#allocation5 + $0x360] sm:$0xff]
    %v263 = vld [vmem:[#allocation5 + $0x368] sm:$0xff]
    %v264 = vld [vmem:[#allocation5 + $0x370] sm:$0xff]
    %v265 = vld [vmem:[#allocation5 + $0x378] sm:$0xff]
    %v266 = vld [vmem:[#allocation5 + $0x380] sm:$0xff]
    %v267 = vld [vmem:[#allocation5 + $0x388] sm:$0xff]
    %v268 = vld [vmem:[#allocation5 + $0x390] sm:$0xff]
    %v269 = vld [vmem:[#allocation5 + $0x398] sm:$0xff]
    %v270 = vld [vmem:[#allocation5 + $0x3a0] sm:$0xff]
    %v271 = vld [vmem:[#allocation5 + $0x3a8] sm:$0xff]
    %v272 = vld [vmem:[#allocation5 + $0x3b0] sm:$0xff]
    %v273 = vld [vmem:[#allocation5 + $0x3b8] sm:$0xff]
    %v274 = vld [vmem:[#allocation5 + $0x3c0] sm:$0xff]
    %v275 = vld [vmem:[#allocation5 + $0x3c8] sm:$0xff]
    %v276 = vld [vmem:[#allocation5 + $0x3d0] sm:$0xff]
    %v277 = vld [vmem:[#allocation5 + $0x3d8] sm:$0xff]
    %v278 = vld [vmem:[#allocation5 + $0x3e0] sm:$0xff]
    %v279 = vld [vmem:[#allocation5 + $0x3e8] sm:$0xff]
    %v280 = vld [vmem:[#allocation5 + $0x3f0] sm:$0xff]
    %v281 = vld [vmem:[#allocation5 + $0x3f8] sm:$0xff]
    %v282 = vld [vmem:[#allocation5 + $0x400] sm:$0xff]
    %v283 = vld [vmem:[#allocation5 + $0x408] sm:$0xff]
    %v284 = vld [vmem:[#allocation5 + $0x410] sm:$0xff]
    %v285 = vld [vmem:[#allocation5 + $0x418] sm:$0xff]
    %v286 = vld [vmem:[#allocation5 + $0x420] sm:$0xff]
    %v287 = vld [vmem:[#allocation5 + $0x428] sm:$0xff]
    %v288 = vld [vmem:[#allocation5 + $0x430] sm:$0xff]
    %v289 = vld [vmem:[#allocation5 + $0x438] sm:$0xff]
    %v290 = vld [vmem:[#allocation5 + $0x440] sm:$0xff]
    %v291 = vld [vmem:[#allocation5 + $0x448] sm:$0xff]
    %v292 = vld [vmem:[#allocation5 + $0x450] sm:$0xff]
    %v293 = vld [vmem:[#allocation5 + $0x458] sm:$0xff]
    %v294 = vld [vmem:[#allocation5 + $0x460] sm:$0xff]
    %v295 = vld [vmem:[#allocation5 + $0x468] sm:$0xff]
    %v296 = vld [vmem:[#allocation5 + $0x470] sm:$0xff]
    %v297 = vld [vmem:[#allocation5 + $0x478] sm:$0xff]
    %v298 = vld [vmem:[#allocation5 + $0x480] sm:$0xff]
    %v299 = vld [vmem:[#allocation5 + $0x488] sm:$0xff]
    %v300 = vld [vmem:[#allocation5 + $0x490] sm:$0xff]
    %v301 = vld [vmem:[#allocation5 + $0x498] sm:$0xff]
    %v302 = vld [vmem:[#allocation5 + $0x4a0] sm:$0xff]
    %v303 = vld [vmem:[#allocation5 + $0x4a8] sm:$0xff]
    %v304 = vld [vmem:[#allocation5 + $0x4b0] sm:$0xff]
    %v305 = vld [vmem:[#allocation5 + $0x4b8] sm:$0xff]
    %v306 = vld [vmem:[#allocation5 + $0x4c0] sm:$0xff]
    %v307 = vld [vmem:[#allocation5 + $0x4c8] sm:$0xff]
    %v308 = vld [vmem:[#allocation5 + $0x4d0] sm:$0xff]
    %v309 = vld [vmem:[#allocation5 + $0x4d8] sm:$0xff]
    %v310 = vld [vmem:[#allocation5 + $0x4e0] sm:$0xff]
    %v311 = vld [vmem:[#allocation5 + $0x4e8] sm:$0xff]
    %v312 = vld [vmem:[#allocation5 + $0x4f0] sm:$0xff]
    %v313 = vld [vmem:[#allocation5 + $0x4f8] sm:$0xff]
    %v314 = vld [vmem:[#allocation5 + $0x500] sm:$0xff]
    %v315 = vld [vmem:[#allocation5 + $0x508] sm:$0xff]
    %v316 = vld [vmem:[#allocation5 + $0x510] sm:$0xff]
    %v317 = vld [vmem:[#allocation5 + $0x518] sm:$0xff]
    %v318 = vld [vmem:[#allocation5 + $0x520] sm:$0xff]
    %v319 = vld [vmem:[#allocation5 + $0x528] sm:$0xff]
    %v320 = vld [vmem:[#allocation5 + $0x530] sm:$0xff]
    %v321 = vld [vmem:[#allocation5 + $0x538] sm:$0xff]
    %v322 = vld [vmem:[#allocation5 + $0x540] sm:$0xff]
    %v323 = vld [vmem:[#allocation5 + $0x548] sm:$0xff]
    %v324 = vld [vmem:[#allocation5 + $0x550] sm:$0xff]
    %v325 = vld [vmem:[#allocation5 + $0x558] sm:$0xff]
    %v326 = vld [vmem:[#allocation5 + $0x560] sm:$0xff]
    %v327 = vld [vmem:[#allocation5 + $0x568] sm:$0xff]
    %v328 = vld [vmem:[#allocation5 + $0x570] sm:$0xff]
    %v329 = vld [vmem:[#allocation5 + $0x578] sm:$0xff]
    %v330 = vld [vmem:[#allocation5 + $0x580] sm:$0xff]
    %v331 = vld [vmem:[#allocation5 + $0x588] sm:$0xff]
    %v332 = vld [vmem:[#allocation5 + $0x590] sm:$0xff]
    %v333 = vld [vmem:[#allocation5 + $0x598] sm:$0xff]
    %v334 = vld [vmem:[#allocation5 + $0x5a0] sm:$0xff]
    %v335 = vld [vmem:[#allocation5 + $0x5a8] sm:$0xff]
    %v336 = vld [vmem:[#allocation5 + $0x5b0] sm:$0xff]
    %v337 = vld [vmem:[#allocation5 + $0x5b8] sm:$0xff]
    %v338 = vld [vmem:[#allocation5 + $0x5c0] sm:$0xff]
    %v339 = vld [vmem:[#allocation5 + $0x5c8] sm:$0xff]
    %v340 = vld [vmem:[#allocation5 + $0x5d0] sm:$0xff]
    %v341 = vld [vmem:[#allocation5 + $0x5d8] sm:$0xff]
    %v342 = vld [vmem:[#allocation5 + $0x5e0] sm:$0xff]
    %v343 = vld [vmem:[#allocation5 + $0x5e8] sm:$0xff]
    %v344 = vld [vmem:[#allocation5 + $0x5f0] sm:$0xff]
    %v345 = vld [vmem:[#allocation5 + $0x5f8] sm:$0xff]
    %v346 = vld [vmem:[#allocation5 + $0x600] sm:$0xff]
    %v347 = vld [vmem:[#allocation5 + $0x608] sm:$0xff]
    %v348 = vld [vmem:[#allocation5 + $0x610] sm:$0xff]
    %v349 = vld [vmem:[#allocation5 + $0x618] sm:$0xff]
    %v350 = vld [vmem:[#allocation5 + $0x620] sm:$0xff]
    %v351 = vld [vmem:[#allocation5 + $0x628] sm:$0xff]
    %v352 = vld [vmem:[#allocation5 + $0x630] sm:$0xff]
    %v353 = vld [vmem:[#allocation5 + $0x638] sm:$0xff]
    %v354 = vld [vmem:[#allocation5 + $0x640] sm:$0xff]
    %v355 = vld [vmem:[#allocation5 + $0x648] sm:$0xff]
    %v356 = vld [vmem:[#allocation5 + $0x650] sm:$0xff]
    %v357 = vld [vmem:[#allocation5 + $0x658] sm:$0xff]
    %v358 = vld [vmem:[#allocation5 + $0x660] sm:$0xff]
    %v359 = vld [vmem:[#allocation5 + $0x668] sm:$0xff]
    %v360 = vld [vmem:[#allocation5 + $0x670] sm:$0xff]
    %v361 = vld [vmem:[#allocation5 + $0x678] sm:$0xff]
    %v362 = vld [vmem:[#allocation5 + $0x680] sm:$0xff]
    %v363 = vld [vmem:[#allocation5 + $0x688] sm:$0xff]
    %v364 = vld [vmem:[#allocation5 + $0x690] sm:$0xff]
    %v365 = vld [vmem:[#allocation5 + $0x698] sm:$0xff]
    %v366 = vld [vmem:[#allocation5 + $0x6a0] sm:$0xff]
    %v367 = vld [vmem:[#allocation5 + $0x6a8] sm:$0xff]
    %v368 = vld [vmem:[#allocation5 + $0x6b0] sm:$0xff]
    %v369 = vld [vmem:[#allocation5 + $0x6b8] sm:$0xff]
    %v370 = vld [vmem:[#allocation5 + $0x6c0] sm:$0xff]
    %v371 = vld [vmem:[#allocation5 + $0x6c8] sm:$0xff]
    %v372 = vld [vmem:[#allocation5 + $0x6d0] sm:$0xff]
    %v373 = vld [vmem:[#allocation5 + $0x6d8] sm:$0xff]
    %v374 = vld [vmem:[#allocation5 + $0x6e0] sm:$0xff]
    %v375 = vld [vmem:[#allocation5 + $0x6e8] sm:$0xff]
    %v376 = vld [vmem:[#allocation5 + $0x6f0] sm:$0xff]
    %v377 = vld [vmem:[#allocation5 + $0x6f8] sm:$0xff]
    %v378 = vld [vmem:[#allocation5 + $0x700] sm:$0xff]
    %v379 = vld [vmem:[#allocation5 + $0x708] sm:$0xff]
    %v380 = vld [vmem:[#allocation5 + $0x710] sm:$0xff]
    %v381 = vld [vmem:[#allocation5 + $0x718] sm:$0xff]
    %v382 = vld [vmem:[#allocation5 + $0x720] sm:$0xff]
    %v383 = vld [vmem:[#allocation5 + $0x728] sm:$0xff]
    %v384 = vld [vmem:[#allocation5 + $0x730] sm:$0xff]
    %v385 = vld [vmem:[#allocation5 + $0x738] sm:$0xff]
    %v386 = vld [vmem:[#allocation5 + $0x740] sm:$0xff]
    %v387 = vld [vmem:[#allocation5 + $0x748] sm:$0xff]
    %v388 = vld [vmem:[#allocation5 + $0x750] sm:$0xff]
    %v389 = vld [vmem:[#allocation5 + $0x758] sm:$0xff]
    %v390 = vld [vmem:[#allocation5 + $0x760] sm:$0xff]
    %v391 = vld [vmem:[#allocation5 + $0x768] sm:$0xff]
    %v392 = vld [vmem:[#allocation5 + $0x770] sm:$0xff]
    %v393 = vld [vmem:[#allocation5 + $0x778] sm:$0xff]
    %v394 = vld [vmem:[#allocation5 + $0x780] sm:$0xff]
    %v395 = vld [vmem:[#allocation5 + $0x788] sm:$0xff]
    %v396 = vld [vmem:[#allocation5 + $0x790] sm:$0xff]
    %v397 = vld [vmem:[#allocation5 + $0x798] sm:$0xff]
    %v398 = vld [vmem:[#allocation5 + $0x7a0] sm:$0xff]
    %v399 = vld [vmem:[#allocation5 + $0x7a8] sm:$0xff]
    %v400 = vld [vmem:[#allocation5 + $0x7b0] sm:$0xff]
    %v401 = vld [vmem:[#allocation5 + $0x7b8] sm:$0xff]
    %v402 = vld [vmem:[#allocation5 + $0x7c0] sm:$0xff]
    %v403 = vld [vmem:[#allocation5 + $0x7c8] sm:$0xff]
    %v404 = vld [vmem:[#allocation5 + $0x7d0] sm:$0xff]
    %v405 = vld [vmem:[#allocation5 + $0x7d8] sm:$0xff]
    %v406 = vld [vmem:[#allocation5 + $0x7e0] sm:$0xff]
    %v407 = vld [vmem:[#allocation5 + $0x7e8] sm:$0xff]
    %v408 = vld [vmem:[#allocation5 + $0x7f0] sm:$0xff]
    %v409 = vld [vmem:[#allocation5 + $0x7f8] sm:$0xff]
    %v410 = vld [vmem:[#allocation5 + $0x800] sm:$0xff]
    %v411 = vld [vmem:[#allocation5 + $0x808] sm:$0xff]
    %v412 = vld [vmem:[#allocation5 + $0x810] sm:$0xff]
    %v413 = vld [vmem:[#allocation5 + $0x818] sm:$0xff]
    %v414 = vld [vmem:[#allocation5 + $0x820] sm:$0xff]
    %v415 = vld [vmem:[#allocation5 + $0x828] sm:$0xff]
    %v416 = vld [vmem:[#allocation5 + $0x830] sm:$0xff]
    %v417 = vld [vmem:[#allocation5 + $0x838] sm:$0xff]
    %v418 = vld [vmem:[#allocation5 + $0x840] sm:$0xff]
    %v419 = vld [vmem:[#allocation5 + $0x848] sm:$0xff]
    %v420 = vld [vmem:[#allocation5 + $0x850] sm:$0xff]
    %v421 = vld [vmem:[#allocation5 + $0x858] sm:$0xff]
    %v422 = vld [vmem:[#allocation5 + $0x860] sm:$0xff]
    %v423 = vld [vmem:[#allocation5 + $0x868] sm:$0xff]
    %v424 = vld [vmem:[#allocation5 + $0x870] sm:$0xff]
    %v425 = vld [vmem:[#allocation5 + $0x878] sm:$0xff]
    %v426 = vld [vmem:[#allocation5 + $0x880] sm:$0xff]
    %v427 = vld [vmem:[#allocation5 + $0x888] sm:$0xff]
    %v428 = vld [vmem:[#allocation5 + $0x890] sm:$0xff]
    %v429 = vld [vmem:[#allocation5 + $0x898] sm:$0xff]
    %v430 = vld [vmem:[#allocation5 + $0x8a0] sm:$0xff]
    %v431 = vld [vmem:[#allocation5 + $0x8a8] sm:$0xff]
    %v432 = vld [vmem:[#allocation5 + $0x8b0] sm:$0xff]
    %v433 = vld [vmem:[#allocation5 + $0x8b8] sm:$0xff]
    %v434 = vld [vmem:[#allocation5 + $0x8c0] sm:$0xff]
    %v435 = vld [vmem:[#allocation5 + $0x8c8] sm:$0xff]
    %v436 = vld [vmem:[#allocation5 + $0x8d0] sm:$0xff]
    %v437 = vld [vmem:[#allocation5 + $0x8d8] sm:$0xff]
    %v438 = vld [vmem:[#allocation5 + $0x8e0] sm:$0xff]
    %v439 = vld [vmem:[#allocation5 + $0x8e8] sm:$0xff]
    %v440 = vld [vmem:[#allocation5 + $0x8f0] sm:$0xff]
    %v441 = vld [vmem:[#allocation5 + $0x8f8] sm:$0xff]
    %v442 = vld [vmem:[#allocation5 + $0x900] sm:$0xff]
    %v443 = vld [vmem:[#allocation5 + $0x908] sm:$0xff]
    %v444 = vld [vmem:[#allocation5 + $0x910] sm:$0xff]
    %v445 = vld [vmem:[#allocation5 + $0x918] sm:$0xff]
    %v446 = vld [vmem:[#allocation5 + $0x920] sm:$0xff]
    %v447 = vld [vmem:[#allocation5 + $0x928] sm:$0xff]
    %v448 = vld [vmem:[#allocation5 + $0x930] sm:$0xff]
    %v449 = vld [vmem:[#allocation5 + $0x938] sm:$0xff]
    %v450 = vld [vmem:[#allocation5 + $0x940] sm:$0xff]
    %v451 = vld [vmem:[#allocation5 + $0x948] sm:$0xff]
    %v452 = vld [vmem:[#allocation5 + $0x950] sm:$0xff]
    %v453 = vld [vmem:[#allocation5 + $0x958] sm:$0xff]
    %v454 = vld [vmem:[#allocation5 + $0x960] sm:$0xff]
    %v455 = vld [vmem:[#allocation5 + $0x968] sm:$0xff]
    %v456 = vld [vmem:[#allocation5 + $0x970] sm:$0xff]
    %v457 = vld [vmem:[#allocation5 + $0x978] sm:$0xff]
    %v458 = vld [vmem:[#allocation5 + $0x980] sm:$0xff]
    %v459 = vld [vmem:[#allocation5 + $0x988] sm:$0xff]
    %v460 = vld [vmem:[#allocation5 + $0x990] sm:$0xff]
    %v461 = vld [vmem:[#allocation5 + $0x998] sm:$0xff]
    %v462 = vld [vmem:[#allocation5 + $0x9a0] sm:$0xff]
    %v463 = vld [vmem:[#allocation5 + $0x9a8] sm:$0xff]
    %v464 = vld [vmem:[#allocation5 + $0x9b0] sm:$0xff]
    %v465 = vld [vmem:[#allocation5 + $0x9b8] sm:$0xff]
    %v466 = vld [vmem:[#allocation5 + $0x9c0] sm:$0xff]
    %v467 = vld [vmem:[#allocation5 + $0x9c8] sm:$0xff]
    %v468 = vld [vmem:[#allocation5 + $0x9d0] sm:$0xff]
    %v469 = vld [vmem:[#allocation5 + $0x9d8] sm:$0xff]
    %v470 = vld [vmem:[#allocation5 + $0x9e0] sm:$0xff]
    %v471 = vld [vmem:[#allocation5 + $0x9e8] sm:$0xff]
    %v472 = vld [vmem:[#allocation5 + $0x9f0] sm:$0xff]
    %v473 = vld [vmem:[#allocation5 + $0x9f8] sm:$0xff]
    %v474 = vld [vmem:[#allocation5 + $0xa00] sm:$0xff]
    %v475 = vld [vmem:[#allocation5 + $0xa08] sm:$0xff]
    %v476 = vld [vmem:[#allocation5 + $0xa10] sm:$0xff]
    %v477 = vld [vmem:[#allocation5 + $0xa18] sm:$0xff]
    %v478 = vld [vmem:[#allocation5 + $0xa20] sm:$0xff]
    %v479 = vld [vmem:[#allocation5 + $0xa28] sm:$0xff]
    %v480 = vld [vmem:[#allocation5 + $0xa30] sm:$0xff]
    %v481 = vld [vmem:[#allocation5 + $0xa38] sm:$0xff]
    %v482 = vld [vmem:[#allocation5 + $0xa40] sm:$0xff]
    %v483 = vld [vmem:[#allocation5 + $0xa48] sm:$0xff]
    %v484 = vld [vmem:[#allocation5 + $0xa50] sm:$0xff]
    %v485 = vld [vmem:[#allocation5 + $0xa58] sm:$0xff]
    %v486 = vld [vmem:[#allocation5 + $0xa60] sm:$0xff]
    %v487 = vld [vmem:[#allocation5 + $0xa68] sm:$0xff]
    %v488 = vld [vmem:[#allocation5 + $0xa70] sm:$0xff]
    %v489 = vld [vmem:[#allocation5 + $0xa78] sm:$0xff]
    %v490 = vld [vmem:[#allocation5 + $0xa80] sm:$0xff]
    %v491 = vld [vmem:[#allocation5 + $0xa88] sm:$0xff]
    %v492 = vld [vmem:[#allocation5 + $0xa90] sm:$0xff]
    %v493 = vld [vmem:[#allocation5 + $0xa98] sm:$0xff]
    %v494 = vld [vmem:[#allocation5 + $0xaa0] sm:$0xff]
    %v495 = vld [vmem:[#allocation5 + $0xaa8] sm:$0xff]
    %v496 = vld [vmem:[#allocation5 + $0xab0] sm:$0xff]
    %v497 = vld [vmem:[#allocation5 + $0xab8] sm:$0xff]
    %v498 = vld [vmem:[#allocation5 + $0xac0] sm:$0xff]
    %v499 = vld [vmem:[#allocation5 + $0xac8] sm:$0xff]
    %v500 = vld [vmem:[#allocation5 + $0xad0] sm:$0xff]
    %v501 = vld [vmem:[#allocation5 + $0xad8] sm:$0xff]
    %v502 = vld [vmem:[#allocation5 + $0xae0] sm:$0xff]
    %v503 = vld [vmem:[#allocation5 + $0xae8] sm:$0xff]
    %v504 = vld [vmem:[#allocation5 + $0xaf0] sm:$0xff]
    %v505 = vld [vmem:[#allocation5 + $0xaf8] sm:$0xff]
    %v506 = vld [vmem:[#allocation5 + $0xb00] sm:$0xff]
    %v507 = vld [vmem:[#allocation5 + $0xb08] sm:$0xff]
    %v508 = vld [vmem:[#allocation5 + $0xb10] sm:$0xff]
    %v509 = vld [vmem:[#allocation5 + $0xb18] sm:$0xff]
    %v510 = vld [vmem:[#allocation5 + $0xb20] sm:$0xff]
    %v511 = vld [vmem:[#allocation5 + $0xb28] sm:$0xff]
    %v512 = vld [vmem:[#allocation5 + $0xb30] sm:$0xff]
    %v513 = vld [vmem:[#allocation5 + $0xb38] sm:$0xff]
    %v514 = vld [vmem:[#allocation5 + $0xb40] sm:$0xff]
    %v515 = vld [vmem:[#allocation5 + $0xb48] sm:$0xff]
    %v516 = vld [vmem:[#allocation5 + $0xb50] sm:$0xff]
    %v517 = vld [vmem:[#allocation5 + $0xb58] sm:$0xff]
    %v518 = vld [vmem:[#allocation5 + $0xb60] sm:$0xff]
    %v519 = vld [vmem:[#allocation5 + $0xb68] sm:$0xff]
    %v520 = vld [vmem:[#allocation5 + $0xb70] sm:$0xff]
    %v521 = vld [vmem:[#allocation5 + $0xb78] sm:$0xff]
    %v522 = vld [vmem:[#allocation5 + $0xb80] sm:$0xff]
    %v523 = vld [vmem:[#allocation5 + $0xb88] sm:$0xff]
    %v524 = vld [vmem:[#allocation5 + $0xb90] sm:$0xff]
    %v525 = vld [vmem:[#allocation5 + $0xb98] sm:$0xff]
    %v526 = vld [vmem:[#allocation5 + $0xba0] sm:$0xff]
    %v527 = vld [vmem:[#allocation5 + $0xba8] sm:$0xff]
    %v528 = vld [vmem:[#allocation5 + $0xbb0] sm:$0xff]
    %v529 = vld [vmem:[#allocation5 + $0xbb8] sm:$0xff]
    %v530 = vld [vmem:[#allocation5 + $0xbc0] sm:$0xff]
    %v531 = vld [vmem:[#allocation5 + $0xbc8] sm:$0xff]
    %v532 = vld [vmem:[#allocation5 + $0xbd0] sm:$0xff]
    %v533 = vld [vmem:[#allocation5 + $0xbd8] sm:$0xff]
    %v534 = vld [vmem:[#allocation5 + $0xbe0] sm:$0xff]
    %v535 = vld [vmem:[#allocation5 + $0xbe8] sm:$0xff]
    %v536 = vld [vmem:[#allocation5 + $0xbf0] sm:$0xff]
    %v537 = vld [vmem:[#allocation5 + $0xbf8] sm:$0xff]
    %v538 = vld [vmem:[#allocation5 + $0xc00] sm:$0xff]
    %v539 = vld [vmem:[#allocation5 + $0xc08] sm:$0xff]
    %v540 = vld [vmem:[#allocation5 + $0xc10] sm:$0xff]
    %v541 = vld [vmem:[#allocation5 + $0xc18] sm:$0xff]
    %v542 = vld [vmem:[#allocation5 + $0xc20] sm:$0xff]
    %v543 = vld [vmem:[#allocation5 + $0xc28] sm:$0xff]
    %v544 = vld [vmem:[#allocation5 + $0xc30] sm:$0xff]
    %v545 = vld [vmem:[#allocation5 + $0xc38] sm:$0xff]
    %v546 = vld [vmem:[#allocation5 + $0xc40] sm:$0xff]
    %v547 = vld [vmem:[#allocation5 + $0xc48] sm:$0xff]
    %v548 = vld [vmem:[#allocation5 + $0xc50] sm:$0xff]
    %v549 = vld [vmem:[#allocation5 + $0xc58] sm:$0xff]
    %v550 = vld [vmem:[#allocation5 + $0xc60] sm:$0xff]
    %v551 = vld [vmem:[#allocation5 + $0xc68] sm:$0xff]
    %v552 = vld [vmem:[#allocation5 + $0xc70] sm:$0xff]
    %v553 = vld [vmem:[#allocation5 + $0xc78] sm:$0xff]
    %v554 = vld [vmem:[#allocation5 + $0xc80] sm:$0xff]
    %v555 = vld [vmem:[#allocation5 + $0xc88] sm:$0xff]
    %v556 = vld [vmem:[#allocation5 + $0xc90] sm:$0xff]
    %v557 = vld [vmem:[#allocation5 + $0xc98] sm:$0xff]
    %v558 = vld [vmem:[#allocation5 + $0xca0] sm:$0xff]
    %v559 = vld [vmem:[#allocation5 + $0xca8] sm:$0xff]
    %v560 = vld [vmem:[#allocation5 + $0xcb0] sm:$0xff]
    %v561 = vld [vmem:[#allocation5 + $0xcb8] sm:$0xff]
    %v562 = vld [vmem:[#allocation5 + $0xcc0] sm:$0xff]
    %v563 = vld [vmem:[#allocation5 + $0xcc8] sm:$0xff]
    %v564 = vld [vmem:[#allocation5 + $0xcd0] sm:$0xff]
    %v565 = vld [vmem:[#allocation5 + $0xcd8] sm:$0xff]
    %v566 = vld [vmem:[#allocation5 + $0xce0] sm:$0xff]
    %v567 = vld [vmem:[#allocation5 + $0xce8] sm:$0xff]
    %v568 = vld [vmem:[#allocation5 + $0xcf0] sm:$0xff]
    %v569 = vld [vmem:[#allocation5 + $0xcf8] sm:$0xff]
    %v570 = vld [vmem:[#allocation5 + $0xd00] sm:$0xff]
    %v571 = vld [vmem:[#allocation5 + $0xd08] sm:$0xff]
    %v572 = vld [vmem:[#allocation5 + $0xd10] sm:$0xff]
    %v573 = vld [vmem:[#allocation5 + $0xd18] sm:$0xff]
    %v574 = vld [vmem:[#allocation5 + $0xd20] sm:$0xff]
    %v575 = vld [vmem:[#allocation5 + $0xd28] sm:$0xff]
    %v576 = vld [vmem:[#allocation5 + $0xd30] sm:$0xff]
    %v577 = vld [vmem:[#allocation5 + $0xd38] sm:$0xff]
    %v578 = vld [vmem:[#allocation5 + $0xd40] sm:$0xff]
    %v579 = vld [vmem:[#allocation5 + $0xd48] sm:$0xff]
    %v580 = vld [vmem:[#allocation5 + $0xd50] sm:$0xff]
    %v581 = vld [vmem:[#allocation5 + $0xd58] sm:$0xff]
    %v582 = vld [vmem:[#allocation5 + $0xd60] sm:$0xff]
    %v583 = vld [vmem:[#allocation5 + $0xd68] sm:$0xff]
    %v584 = vld [vmem:[#allocation5 + $0xd70] sm:$0xff]
    %v585 = vld [vmem:[#allocation5 + $0xd78] sm:$0xff]
    %v586 = vld [vmem:[#allocation5 + $0xd80] sm:$0xff]
    %v587 = vld [vmem:[#allocation5 + $0xd88] sm:$0xff]
    %v588 = vld [vmem:[#allocation5 + $0xd90] sm:$0xff]
    %v589 = vld [vmem:[#allocation5 + $0xd98] sm:$0xff]
    %v590 = vld [vmem:[#allocation5 + $0xda0] sm:$0xff]
    %v591 = vld [vmem:[#allocation5 + $0xda8] sm:$0xff]
    %v592 = vld [vmem:[#allocation5 + $0xdb0] sm:$0xff]
    %v593 = vld [vmem:[#allocation5 + $0xdb8] sm:$0xff]
    %v594 = vld [vmem:[#allocation5 + $0xdc0] sm:$0xff]
    %v595 = vld [vmem:[#allocation5 + $0xdc8] sm:$0xff]
    %v596 = vld [vmem:[#allocation5 + $0xdd0] sm:$0xff]
    %v597 = vld [vmem:[#allocation5 + $0xdd8] sm:$0xff]
    %v598 = vld [vmem:[#allocation5 + $0xde0] sm:$0xff]
    %v599 = vld [vmem:[#allocation5 + $0xde8] sm:$0xff]
    %v600 = vld [vmem:[#allocation5 + $0xdf0] sm:$0xff]
    %v601 = vld [vmem:[#allocation5 + $0xdf8] sm:$0xff]
    %v602 = vld [vmem:[#allocation5 + $0xe00] sm:$0xff]
    %v603 = vld [vmem:[#allocation5 + $0xe08] sm:$0xff]
    %v604 = vld [vmem:[#allocation5 + $0xe10] sm:$0xff]
    %v605 = vld [vmem:[#allocation5 + $0xe18] sm:$0xff]
    %v606 = vld [vmem:[#allocation5 + $0xe20] sm:$0xff]
    %v607 = vld [vmem:[#allocation5 + $0xe28] sm:$0xff]
    %v608 = vld [vmem:[#allocation5 + $0xe30] sm:$0xff]
    %v609 = vld [vmem:[#allocation5 + $0xe38] sm:$0xff]
    %v610 = vld [vmem:[#allocation5 + $0xe40] sm:$0xff]
    %v611 = vld [vmem:[#allocation5 + $0xe48] sm:$0xff]
    %v612 = vld [vmem:[#allocation5 + $0xe50] sm:$0xff]
    %v613 = vld [vmem:[#allocation5 + $0xe58] sm:$0xff]
    %v614 = vld [vmem:[#allocation5 + $0xe60] sm:$0xff]
    %v615 = vld [vmem:[#allocation5 + $0xe68] sm:$0xff]
    %v616 = vld [vmem:[#allocation5 + $0xe70] sm:$0xff]
    %v617 = vld [vmem:[#allocation5 + $0xe78] sm:$0xff]
    %v618 = vld [vmem:[#allocation5 + $0xe80] sm:$0xff]
    %v619 = vld [vmem:[#allocation5 + $0xe88] sm:$0xff]
    %v620 = vld [vmem:[#allocation5 + $0xe90] sm:$0xff]
    %v621 = vld [vmem:[#allocation5 + $0xe98] sm:$0xff]
    %v622 = vld [vmem:[#allocation5 + $0xea0] sm:$0xff]
    %v623 = vld [vmem:[#allocation5 + $0xea8] sm:$0xff]
    %v624 = vld [vmem:[#allocation5 + $0xeb0] sm:$0xff]
    %v625 = vld [vmem:[#allocation5 + $0xeb8] sm:$0xff]
    %v626 = vld [vmem:[#allocation5 + $0xec0] sm:$0xff]
    %v627 = vld [vmem:[#allocation5 + $0xec8] sm:$0xff]
    %v628 = vld [vmem:[#allocation5 + $0xed0] sm:$0xff]
    %v629 = vld [vmem:[#allocation5 + $0xed8] sm:$0xff]
    %v630 = vld [vmem:[#allocation5 + $0xee0] sm:$0xff]
    %v631 = vld [vmem:[#allocation5 + $0xee8] sm:$0xff]
    %v632 = vld [vmem:[#allocation5 + $0xef0] sm:$0xff]
    %v633 = vld [vmem:[#allocation5 + $0xef8] sm:$0xff]
    %v634 = vld [vmem:[#allocation5 + $0xf00] sm:$0xff]
    %v635 = vld [vmem:[#allocation5 + $0xf08] sm:$0xff]
    %v636 = vld [vmem:[#allocation5 + $0xf10] sm:$0xff]
    %v637 = vld [vmem:[#allocation5 + $0xf18] sm:$0xff]
    %v638 = vld [vmem:[#allocation5 + $0xf20] sm:$0xff]
    %v639 = vld [vmem:[#allocation5 + $0xf28] sm:$0xff]
    %v640 = vld [vmem:[#allocation5 + $0xf30] sm:$0xff]
    %v641 = vld [vmem:[#allocation5 + $0xf38] sm:$0xff]
    %v642 = vld [vmem:[#allocation5 + $0xf40] sm:$0xff]
    %v643 = vld [vmem:[#allocation5 + $0xf48] sm:$0xff]
    %v1134 = vunpack.c.l.b16 %v154
    %v1135 = vunpack.c.h.b16 %v154
    %v1136 = vunpack.c.l.b16 %v155
    %v1137 = vunpack.c.h.b16 %v155
    %v1138 = vunpack.c.l.b16 %v156
    %v1139 = vunpack.c.h.b16 %v156
    %v1140 = vunpack.c.l.b16 %v157
    %v1141 = vunpack.c.h.b16 %v157
    %v1142 = vunpack.c.l.b16 %v158
    %v1143 = vunpack.c.h.b16 %v158
    %v1144 = vunpack.c.l.b16 %v159
    %v1145 = vunpack.c.h.b16 %v159
    %v1146 = vunpack.c.l.b16 %v160
    %v1147 = vunpack.c.h.b16 %v160
    %v1148 = vunpack.c.l.b16 %v161
    %v1149 = vunpack.c.h.b16 %v161
    %v1150 = vunpack.c.l.b16 %v162
    %v1151 = vunpack.c.h.b16 %v162
    %v1152 = vunpack.c.l.b16 %v163
    %v1153 = vunpack.c.h.b16 %v163
    %v1154 = vunpack.c.l.b16 %v164
    %v1155 = vunpack.c.h.b16 %v164
    %v1156 = vunpack.c.l.b16 %v165
    %v1157 = vunpack.c.h.b16 %v165
    %v1158 = vunpack.c.l.b16 %v166
    %v1159 = vunpack.c.h.b16 %v166
    %v1160 = vunpack.c.l.b16 %v167
    %v1161 = vunpack.c.h.b16 %v167
    %v1162 = vunpack.c.l.b16 %v168
    %v1163 = vunpack.c.h.b16 %v168
    %v1164 = vunpack.c.l.b16 %v169
    %v1165 = vunpack.c.h.b16 %v169
    %v1166 = vunpack.c.l.b16 %v170
    %v1167 = vunpack.c.h.b16 %v170
    %v1168 = vunpack.c.l.b16 %v171
    %v1169 = vunpack.c.h.b16 %v171
    %v1170 = vunpack.c.l.b16 %v172
    %v1171 = vunpack.c.h.b16 %v172
    %v1172 = vunpack.c.l.b16 %v173
    %v1173 = vunpack.c.h.b16 %v173
    %v1174 = vunpack.c.l.b16 %v174
    %v1175 = vunpack.c.h.b16 %v174
    %v1176 = vunpack.c.l.b16 %v175
    %v1177 = vunpack.c.h.b16 %v175
    %v1178 = vunpack.c.l.b16 %v176
    %v1179 = vunpack.c.h.b16 %v176
    %v1180 = vunpack.c.l.b16 %v177
    %v1181 = vunpack.c.h.b16 %v177
    %v1182 = vunpack.c.l.b16 %v178
    %v1183 = vunpack.c.h.b16 %v178
    %v1184 = vunpack.c.l.b16 %v179
    %v1185 = vunpack.c.h.b16 %v179
    %v1186 = vunpack.c.l.b16 %v180
    %v1187 = vunpack.c.h.b16 %v180
    %v1188 = vunpack.c.l.b16 %v181
    %v1189 = vunpack.c.h.b16 %v181
    %v1190 = vunpack.c.l.b16 %v182
    %v1191 = vunpack.c.h.b16 %v182
    %v1192 = vunpack.c.l.b16 %v183
    %v1193 = vunpack.c.h.b16 %v183
    %v1194 = vunpack.c.l.b16 %v184
    %v1195 = vunpack.c.h.b16 %v184
    %v1196 = vunpack.c.l.b16 %v185
    %v1197 = vunpack.c.h.b16 %v185
    %v1198 = vunpack.c.l.b16 %v186
    %v1199 = vunpack.c.h.b16 %v186
    %v1200 = vunpack.c.l.b16 %v187
    %v1201 = vunpack.c.h.b16 %v187
    %v1202 = vunpack.c.l.b16 %v188
    %v1203 = vunpack.c.h.b16 %v188
    %v1204 = vunpack.c.l.b16 %v189
    %v1205 = vunpack.c.h.b16 %v189
    %v1206 = vunpack.c.l.b16 %v190
    %v1207 = vunpack.c.h.b16 %v190
    %v1208 = vunpack.c.l.b16 %v191
    %v1209 = vunpack.c.h.b16 %v191
    %v1210 = vunpack.c.l.b16 %v192
    %v1211 = vunpack.c.h.b16 %v192
    %v1212 = vunpack.c.l.b16 %v193
    %v1213 = vunpack.c.h.b16 %v193
    %v1214 = vunpack.c.l.b16 %v194
    %v1215 = vunpack.c.h.b16 %v194
    %v1216 = vunpack.c.l.b16 %v195
    %v1217 = vunpack.c.h.b16 %v195
    %v1218 = vunpack.c.l.b16 %v196
    %v1219 = vunpack.c.h.b16 %v196
    %v1220 = vunpack.c.l.b16 %v197
    %v1221 = vunpack.c.h.b16 %v197
    %v1222 = vunpack.c.l.b16 %v198
    %v1223 = vunpack.c.h.b16 %v198
    %v1224 = vunpack.c.l.b16 %v199
    %v1225 = vunpack.c.h.b16 %v199
    %v1226 = vunpack.c.l.b16 %v200
    %v1227 = vunpack.c.h.b16 %v200
    %v1228 = vunpack.c.l.b16 %v201
    %v1229 = vunpack.c.h.b16 %v201
    %v1230 = vunpack.c.l.b16 %v202
    %v1231 = vunpack.c.h.b16 %v202
    %v1232 = vunpack.c.l.b16 %v203
    %v1233 = vunpack.c.h.b16 %v203
    %v1234 = vunpack.c.l.b16 %v204
    %v1235 = vunpack.c.h.b16 %v204
    %v1236 = vunpack.c.l.b16 %v205
    %v1237 = vunpack.c.h.b16 %v205
    %v1238 = vunpack.c.l.b16 %v206
    %v1239 = vunpack.c.h.b16 %v206
    %v1240 = vunpack.c.l.b16 %v207
    %v1241 = vunpack.c.h.b16 %v207
    %v1242 = vunpack.c.l.b16 %v208
    %v1243 = vunpack.c.h.b16 %v208
    %v1244 = vunpack.c.l.b16 %v209
    %v1245 = vunpack.c.h.b16 %v209
    %v1246 = vunpack.c.l.b16 %v210
    %v1247 = vunpack.c.h.b16 %v210
    %v1248 = vunpack.c.l.b16 %v211
    %v1249 = vunpack.c.h.b16 %v211
    %v1250 = vunpack.c.l.b16 %v212
    %v1251 = vunpack.c.h.b16 %v212
    %v1252 = vunpack.c.l.b16 %v213
    %v1253 = vunpack.c.h.b16 %v213
    %v1254 = vunpack.c.l.b16 %v214
    %v1255 = vunpack.c.h.b16 %v214
    %v1256 = vunpack.c.l.b16 %v215
    %v1257 = vunpack.c.h.b16 %v215
    %v1258 = vunpack.c.l.b16 %v216
    %v1259 = vunpack.c.h.b16 %v216
    %v1260 = vunpack.c.l.b16 %v217
    %v1261 = vunpack.c.h.b16 %v217
    %v1262 = vunpack.c.l.b16 %v218
    %v1263 = vunpack.c.h.b16 %v218
    %v1264 = vunpack.c.l.b16 %v219
    %v1265 = vunpack.c.h.b16 %v219
    %v1266 = vunpack.c.l.b16 %v220
    %v1267 = vunpack.c.h.b16 %v220
    %v1268 = vunpack.c.l.b16 %v221
    %v1269 = vunpack.c.h.b16 %v221
    %v1270 = vunpack.c.l.b16 %v222
    %v1271 = vunpack.c.h.b16 %v222
    %v1272 = vunpack.c.l.b16 %v223
    %v1273 = vunpack.c.h.b16 %v223
    %v1274 = vunpack.c.l.b16 %v224
    %v1275 = vunpack.c.h.b16 %v224
    %v1276 = vunpack.c.l.b16 %v225
    %v1277 = vunpack.c.h.b16 %v225
    %v1278 = vunpack.c.l.b16 %v226
    %v1279 = vunpack.c.h.b16 %v226
    %v1280 = vunpack.c.l.b16 %v227
    %v1281 = vunpack.c.h.b16 %v227
    %v1282 = vunpack.c.l.b16 %v228
    %v1283 = vunpack.c.h.b16 %v228
    %v1284 = vunpack.c.l.b16 %v229
    %v1285 = vunpack.c.h.b16 %v229
    %v1286 = vunpack.c.l.b16 %v230
    %v1287 = vunpack.c.h.b16 %v230
    %v1288 = vunpack.c.l.b16 %v231
    %v1289 = vunpack.c.h.b16 %v231
    %v1290 = vunpack.c.l.b16 %v232
    %v1291 = vunpack.c.h.b16 %v232
    %v1292 = vunpack.c.l.b16 %v233
    %v1293 = vunpack.c.h.b16 %v233
    %v1294 = vunpack.c.l.b16 %v234
    %v1295 = vunpack.c.h.b16 %v234
    %v1296 = vunpack.c.l.b16 %v235
    %v1297 = vunpack.c.h.b16 %v235
    %v1298 = vunpack.c.l.b16 %v236
    %v1299 = vunpack.c.h.b16 %v236
    %v1300 = vunpack.c.l.b16 %v237
    %v1301 = vunpack.c.h.b16 %v237
    %v1302 = vunpack.c.l.b16 %v238
    %v1303 = vunpack.c.h.b16 %v238
    %v1304 = vunpack.c.l.b16 %v239
    %v1305 = vunpack.c.h.b16 %v239
    %v1306 = vunpack.c.l.b16 %v240
    %v1307 = vunpack.c.h.b16 %v240
    %v1308 = vunpack.c.l.b16 %v241
    %v1309 = vunpack.c.h.b16 %v241
    %v1310 = vunpack.c.l.b16 %v242
    %v1311 = vunpack.c.h.b16 %v242
    %v1312 = vunpack.c.l.b16 %v243
    %v1313 = vunpack.c.h.b16 %v243
    %v1314 = vunpack.c.l.b16 %v244
    %v1315 = vunpack.c.h.b16 %v244
    %v1316 = vunpack.c.l.b16 %v245
    %v1317 = vunpack.c.h.b16 %v245
    %v1318 = vunpack.c.l.b16 %v246
    %v1319 = vunpack.c.h.b16 %v246
    %v1320 = vunpack.c.l.b16 %v247
    %v1321 = vunpack.c.h.b16 %v247
    %v1322 = vunpack.c.l.b16 %v248
    %v1323 = vunpack.c.h.b16 %v248
    %v1324 = vunpack.c.l.b16 %v249
    %v1325 = vunpack.c.h.b16 %v249
    %v1326 = vunpack.c.l.b16 %v250
    %v1327 = vunpack.c.h.b16 %v250
    %v1328 = vunpack.c.l.b16 %v251
    %v1329 = vunpack.c.h.b16 %v251
    %v1330 = vunpack.c.l.b16 %v252
    %v1331 = vunpack.c.h.b16 %v252
    %v1332 = vunpack.c.l.b16 %v253
    %v1333 = vunpack.c.h.b16 %v253
    %v1334 = vunpack.c.l.b16 %v254
    %v1335 = vunpack.c.h.b16 %v254
    %v1336 = vunpack.c.l.b16 %v255
    %v1337 = vunpack.c.h.b16 %v255
    %v1338 = vunpack.c.l.b16 %v256
    %v1339 = vunpack.c.h.b16 %v256
    %v1340 = vunpack.c.l.b16 %v257
    %v1341 = vunpack.c.h.b16 %v257
    %v1342 = vunpack.c.l.b16 %v258
    %v1343 = vunpack.c.h.b16 %v258
    %v1344 = vunpack.c.l.b16 %v259
    %v1345 = vunpack.c.h.b16 %v259
    %v1346 = vunpack.c.l.b16 %v260
    %v1347 = vunpack.c.h.b16 %v260
    %v1348 = vunpack.c.l.b16 %v261
    %v1349 = vunpack.c.h.b16 %v261
    %v1350 = vunpack.c.l.b16 %v262
    %v1351 = vunpack.c.h.b16 %v262
    %v1352 = vunpack.c.l.b16 %v263
    %v1353 = vunpack.c.h.b16 %v263
    %v1354 = vunpack.c.l.b16 %v264
    %v1355 = vunpack.c.h.b16 %v264
    %v1356 = vunpack.c.l.b16 %v265
    %v1357 = vunpack.c.h.b16 %v265
    %v1358 = vunpack.c.l.b16 %v266
    %v1359 = vunpack.c.h.b16 %v266
    %v1360 = vunpack.c.l.b16 %v267
    %v1361 = vunpack.c.h.b16 %v267
    %v1362 = vunpack.c.l.b16 %v268
    %v1363 = vunpack.c.h.b16 %v268
    %v1364 = vunpack.c.l.b16 %v269
    %v1365 = vunpack.c.h.b16 %v269
    %v1366 = vunpack.c.l.b16 %v270
    %v1367 = vunpack.c.h.b16 %v270
    %v1368 = vunpack.c.l.b16 %v271
    %v1369 = vunpack.c.h.b16 %v271
    %v1370 = vunpack.c.l.b16 %v272
    %v1371 = vunpack.c.h.b16 %v272
    %v1372 = vunpack.c.l.b16 %v273
    %v1373 = vunpack.c.h.b16 %v273
    %v1374 = vunpack.c.l.b16 %v274
    %v1375 = vunpack.c.h.b16 %v274
    %v1376 = vunpack.c.l.b16 %v275
    %v1377 = vunpack.c.h.b16 %v275
    %v1378 = vunpack.c.l.b16 %v276
    %v1379 = vunpack.c.h.b16 %v276
    %v1380 = vunpack.c.l.b16 %v277
    %v1381 = vunpack.c.h.b16 %v277
    %v1382 = vunpack.c.l.b16 %v278
    %v1383 = vunpack.c.h.b16 %v278
    %v1384 = vunpack.c.l.b16 %v279
    %v1385 = vunpack.c.h.b16 %v279
    %v1386 = vunpack.c.l.b16 %v280
    %v1387 = vunpack.c.h.b16 %v280
    %v1388 = vunpack.c.l.b16 %v281
    %v1389 = vunpack.c.h.b16 %v281
    %v1390 = vunpack.c.l.b16 %v282
    %v1391 = vunpack.c.h.b16 %v282
    %v1392 = vunpack.c.l.b16 %v283
    %v1393 = vunpack.c.h.b16 %v283
    %v1394 = vunpack.c.l.b16 %v284
    %v1395 = vunpack.c.h.b16 %v284
    %v1396 = vunpack.c.l.b16 %v285
    %v1397 = vunpack.c.h.b16 %v285
    %v1398 = vunpack.c.l.b16 %v286
    %v1399 = vunpack.c.h.b16 %v286
    %v1400 = vunpack.c.l.b16 %v287
    %v1401 = vunpack.c.h.b16 %v287
    %v1402 = vunpack.c.l.b16 %v288
    %v1403 = vunpack.c.h.b16 %v288
    %v1404 = vunpack.c.l.b16 %v289
    %v1405 = vunpack.c.h.b16 %v289
    %v1406 = vunpack.c.l.b16 %v290
    %v1407 = vunpack.c.h.b16 %v290
    %v1408 = vunpack.c.l.b16 %v291
    %v1409 = vunpack.c.h.b16 %v291
    %v1410 = vunpack.c.l.b16 %v292
    %v1411 = vunpack.c.h.b16 %v292
    %v1412 = vunpack.c.l.b16 %v293
    %v1413 = vunpack.c.h.b16 %v293
    %v1414 = vunpack.c.l.b16 %v294
    %v1415 = vunpack.c.h.b16 %v294
    %v1416 = vunpack.c.l.b16 %v295
    %v1417 = vunpack.c.h.b16 %v295
    %v1418 = vunpack.c.l.b16 %v296
    %v1419 = vunpack.c.h.b16 %v296
    %v1420 = vunpack.c.l.b16 %v297
    %v1421 = vunpack.c.h.b16 %v297
    %v1422 = vunpack.c.l.b16 %v298
    %v1423 = vunpack.c.h.b16 %v298
    %v1424 = vunpack.c.l.b16 %v299
    %v1425 = vunpack.c.h.b16 %v299
    %v1426 = vunpack.c.l.b16 %v300
    %v1427 = vunpack.c.h.b16 %v300
    %v1428 = vunpack.c.l.b16 %v301
    %v1429 = vunpack.c.h.b16 %v301
    %v1430 = vunpack.c.l.b16 %v302
    %v1431 = vunpack.c.h.b16 %v302
    %v1432 = vunpack.c.l.b16 %v303
    %v1433 = vunpack.c.h.b16 %v303
    %v1434 = vunpack.c.l.b16 %v304
    %v1435 = vunpack.c.h.b16 %v304
    %v1436 = vunpack.c.l.b16 %v305
    %v1437 = vunpack.c.h.b16 %v305
    %v1438 = vunpack.c.l.b16 %v306
    %v1439 = vunpack.c.h.b16 %v306
    %v1440 = vunpack.c.l.b16 %v307
    %v1441 = vunpack.c.h.b16 %v307
    %v1442 = vunpack.c.l.b16 %v308
    %v1443 = vunpack.c.h.b16 %v308
    %v1444 = vunpack.c.l.b16 %v309
    %v1445 = vunpack.c.h.b16 %v309
    %v1446 = vunpack.c.l.b16 %v310
    %v1447 = vunpack.c.h.b16 %v310
    %v1448 = vunpack.c.l.b16 %v311
    %v1449 = vunpack.c.h.b16 %v311
    %v1450 = vunpack.c.l.b16 %v312
    %v1451 = vunpack.c.h.b16 %v312
    %v1452 = vunpack.c.l.b16 %v313
    %v1453 = vunpack.c.h.b16 %v313
    %v1454 = vunpack.c.l.b16 %v314
    %v1455 = vunpack.c.h.b16 %v314
    %v1456 = vunpack.c.l.b16 %v315
    %v1457 = vunpack.c.h.b16 %v315
    %v1458 = vunpack.c.l.b16 %v316
    %v1459 = vunpack.c.h.b16 %v316
    %v1460 = vunpack.c.l.b16 %v317
    %v1461 = vunpack.c.h.b16 %v317
    %v1462 = vunpack.c.l.b16 %v318
    %v1463 = vunpack.c.h.b16 %v318
    %v1464 = vunpack.c.l.b16 %v319
    %v1465 = vunpack.c.h.b16 %v319
    %v1466 = vunpack.c.l.b16 %v320
    %v1467 = vunpack.c.h.b16 %v320
    %v1468 = vunpack.c.l.b16 %v321
    %v1469 = vunpack.c.h.b16 %v321
    %v1470 = vunpack.c.l.b16 %v322
    %v1471 = vunpack.c.h.b16 %v322
    %v1472 = vunpack.c.l.b16 %v323
    %v1473 = vunpack.c.h.b16 %v323
    %v1474 = vunpack.c.l.b16 %v324
    %v1475 = vunpack.c.h.b16 %v324
    %v1476 = vunpack.c.l.b16 %v325
    %v1477 = vunpack.c.h.b16 %v325
    %v1478 = vunpack.c.l.b16 %v326
    %v1479 = vunpack.c.h.b16 %v326
    %v1480 = vunpack.c.l.b16 %v327
    %v1481 = vunpack.c.h.b16 %v327
    %v1482 = vunpack.c.l.b16 %v328
    %v1483 = vunpack.c.h.b16 %v328
    %v1484 = vunpack.c.l.b16 %v329
    %v1485 = vunpack.c.h.b16 %v329
    %v1486 = vunpack.c.l.b16 %v330
    %v1487 = vunpack.c.h.b16 %v330
    %v1488 = vunpack.c.l.b16 %v331
    %v1489 = vunpack.c.h.b16 %v331
    %v1490 = vunpack.c.l.b16 %v332
    %v1491 = vunpack.c.h.b16 %v332
    %v1492 = vunpack.c.l.b16 %v333
    %v1493 = vunpack.c.h.b16 %v333
    %v1494 = vunpack.c.l.b16 %v334
    %v1495 = vunpack.c.h.b16 %v334
    %v1496 = vunpack.c.l.b16 %v335
    %v1497 = vunpack.c.h.b16 %v335
    %v1498 = vunpack.c.l.b16 %v336
    %v1499 = vunpack.c.h.b16 %v336
    %v1500 = vunpack.c.l.b16 %v337
    %v1501 = vunpack.c.h.b16 %v337
    %v1502 = vunpack.c.l.b16 %v338
    %v1503 = vunpack.c.h.b16 %v338
    %v1504 = vunpack.c.l.b16 %v339
    %v1505 = vunpack.c.h.b16 %v339
    %v1506 = vunpack.c.l.b16 %v340
    %v1507 = vunpack.c.h.b16 %v340
    %v1508 = vunpack.c.l.b16 %v341
    %v1509 = vunpack.c.h.b16 %v341
    %v1510 = vunpack.c.l.b16 %v342
    %v1511 = vunpack.c.h.b16 %v342
    %v1512 = vunpack.c.l.b16 %v343
    %v1513 = vunpack.c.h.b16 %v343
    %v1514 = vunpack.c.l.b16 %v344
    %v1515 = vunpack.c.h.b16 %v344
    %v1516 = vunpack.c.l.b16 %v345
    %v1517 = vunpack.c.h.b16 %v345
    %v1518 = vunpack.c.l.b16 %v346
    %v1519 = vunpack.c.h.b16 %v346
    %v1520 = vunpack.c.l.b16 %v347
    %v1521 = vunpack.c.h.b16 %v347
    %v1522 = vunpack.c.l.b16 %v348
    %v1523 = vunpack.c.h.b16 %v348
    %v1524 = vunpack.c.l.b16 %v349
    %v1525 = vunpack.c.h.b16 %v349
    %v1526 = vunpack.c.l.b16 %v350
    %v1527 = vunpack.c.h.b16 %v350
    %v1528 = vunpack.c.l.b16 %v351
    %v1529 = vunpack.c.h.b16 %v351
    %v1530 = vunpack.c.l.b16 %v352
    %v1531 = vunpack.c.h.b16 %v352
    %v1532 = vunpack.c.l.b16 %v353
    %v1533 = vunpack.c.h.b16 %v353
    %v1534 = vunpack.c.l.b16 %v354
    %v1535 = vunpack.c.h.b16 %v354
    %v1536 = vunpack.c.l.b16 %v355
    %v1537 = vunpack.c.h.b16 %v355
    %v1538 = vunpack.c.l.b16 %v356
    %v1539 = vunpack.c.h.b16 %v356
    %v1540 = vunpack.c.l.b16 %v357
    %v1541 = vunpack.c.h.b16 %v357
    %v1542 = vunpack.c.l.b16 %v358
    %v1543 = vunpack.c.h.b16 %v358
    %v1544 = vunpack.c.l.b16 %v359
    %v1545 = vunpack.c.h.b16 %v359
    %v1546 = vunpack.c.l.b16 %v360
    %v1547 = vunpack.c.h.b16 %v360
    %v1548 = vunpack.c.l.b16 %v361
    %v1549 = vunpack.c.h.b16 %v361
    %v1550 = vunpack.c.l.b16 %v362
    %v1551 = vunpack.c.h.b16 %v362
    %v1552 = vunpack.c.l.b16 %v363
    %v1553 = vunpack.c.h.b16 %v363
    %v1554 = vunpack.c.l.b16 %v364
    %v1555 = vunpack.c.h.b16 %v364
    %v1556 = vunpack.c.l.b16 %v365
    %v1557 = vunpack.c.h.b16 %v365
    %v1558 = vunpack.c.l.b16 %v366
    %v1559 = vunpack.c.h.b16 %v366
    %v1560 = vunpack.c.l.b16 %v367
    %v1561 = vunpack.c.h.b16 %v367
    %v1562 = vunpack.c.l.b16 %v368
    %v1563 = vunpack.c.h.b16 %v368
    %v1564 = vunpack.c.l.b16 %v369
    %v1565 = vunpack.c.h.b16 %v369
    %v1566 = vunpack.c.l.b16 %v370
    %v1567 = vunpack.c.h.b16 %v370
    %v1568 = vunpack.c.l.b16 %v371
    %v1569 = vunpack.c.h.b16 %v371
    %v1570 = vunpack.c.l.b16 %v372
    %v1571 = vunpack.c.h.b16 %v372
    %v1572 = vunpack.c.l.b16 %v373
    %v1573 = vunpack.c.h.b16 %v373
    %v1574 = vunpack.c.l.b16 %v374
    %v1575 = vunpack.c.h.b16 %v374
    %v1576 = vunpack.c.l.b16 %v375
    %v1577 = vunpack.c.h.b16 %v375
    %v1578 = vunpack.c.l.b16 %v376
    %v1579 = vunpack.c.h.b16 %v376
    %v1580 = vunpack.c.l.b16 %v377
    %v1581 = vunpack.c.h.b16 %v377
    %v1582 = vunpack.c.l.b16 %v378
    %v1583 = vunpack.c.h.b16 %v378
    %v1584 = vunpack.c.l.b16 %v379
    %v1585 = vunpack.c.h.b16 %v379
    %v1586 = vunpack.c.l.b16 %v380
    %v1587 = vunpack.c.h.b16 %v380
    %v1588 = vunpack.c.l.b16 %v381
    %v1589 = vunpack.c.h.b16 %v381
    %v1590 = vunpack.c.l.b16 %v382
    %v1591 = vunpack.c.h.b16 %v382
    %v1592 = vunpack.c.l.b16 %v383
    %v1593 = vunpack.c.h.b16 %v383
    %v1594 = vunpack.c.l.b16 %v384
    %v1595 = vunpack.c.h.b16 %v384
    %v1596 = vunpack.c.l.b16 %v385
    %v1597 = vunpack.c.h.b16 %v385
    %v1598 = vunpack.c.l.b16 %v386
    %v1599 = vunpack.c.h.b16 %v386
    %v1600 = vunpack.c.l.b16 %v387
    %v1601 = vunpack.c.h.b16 %v387
    %v1602 = vunpack.c.l.b16 %v388
    %v1603 = vunpack.c.h.b16 %v388
    %v1604 = vunpack.c.l.b16 %v389
    %v1605 = vunpack.c.h.b16 %v389
    %v1606 = vunpack.c.l.b16 %v390
    %v1607 = vunpack.c.h.b16 %v390
    %v1608 = vunpack.c.l.b16 %v391
    %v1609 = vunpack.c.h.b16 %v391
    %v1610 = vunpack.c.l.b16 %v392
    %v1611 = vunpack.c.h.b16 %v392
    %v1612 = vunpack.c.l.b16 %v393
    %v1613 = vunpack.c.h.b16 %v393
    %v1614 = vunpack.c.l.b16 %v394
    %v1615 = vunpack.c.h.b16 %v394
    %v1616 = vunpack.c.l.b16 %v395
    %v1617 = vunpack.c.h.b16 %v395
    %v1618 = vunpack.c.l.b16 %v396
    %v1619 = vunpack.c.h.b16 %v396
    %v1620 = vunpack.c.l.b16 %v397
    %v1621 = vunpack.c.h.b16 %v397
    %v1622 = vunpack.c.l.b16 %v398
    %v1623 = vunpack.c.h.b16 %v398
    %v1624 = vunpack.c.l.b16 %v399
    %v1625 = vunpack.c.h.b16 %v399
    %v1626 = vunpack.c.l.b16 %v400
    %v1627 = vunpack.c.h.b16 %v400
    %v1628 = vunpack.c.l.b16 %v401
    %v1629 = vunpack.c.h.b16 %v401
    %v1630 = vunpack.c.l.b16 %v402
    %v1631 = vunpack.c.h.b16 %v402
    %v1632 = vunpack.c.l.b16 %v403
    %v1633 = vunpack.c.h.b16 %v403
    %v1634 = vunpack.c.l.b16 %v404
    %v1635 = vunpack.c.h.b16 %v404
    %v1636 = vunpack.c.l.b16 %v405
    %v1637 = vunpack.c.h.b16 %v405
    %v1638 = vunpack.c.l.b16 %v406
    %v1639 = vunpack.c.h.b16 %v406
    %v1640 = vunpack.c.l.b16 %v407
    %v1641 = vunpack.c.h.b16 %v407
    %v1642 = vunpack.c.l.b16 %v408
    %v1643 = vunpack.c.h.b16 %v408
    %v1644 = vunpack.c.l.b16 %v409
    %v1645 = vunpack.c.h.b16 %v409
    %v1646 = vunpack.c.l.b16 %v410
    %v1647 = vunpack.c.h.b16 %v410
    %v1648 = vunpack.c.l.b16 %v411
    %v1649 = vunpack.c.h.b16 %v411
    %v1650 = vunpack.c.l.b16 %v412
    %v1651 = vunpack.c.h.b16 %v412
    %v1652 = vunpack.c.l.b16 %v413
    %v1653 = vunpack.c.h.b16 %v413
    %v1654 = vunpack.c.l.b16 %v414
    %v1655 = vunpack.c.h.b16 %v414
    %v1656 = vunpack.c.l.b16 %v415
    %v1657 = vunpack.c.h.b16 %v415
    %v1658 = vunpack.c.l.b16 %v416
    %v1659 = vunpack.c.h.b16 %v416
    %v1660 = vunpack.c.l.b16 %v417
    %v1661 = vunpack.c.h.b16 %v417
    %v1662 = vunpack.c.l.b16 %v418
    %v1663 = vunpack.c.h.b16 %v418
    %v1664 = vunpack.c.l.b16 %v419
    %v1665 = vunpack.c.h.b16 %v419
    %v1666 = vunpack.c.l.b16 %v420
    %v1667 = vunpack.c.h.b16 %v420
    %v1668 = vunpack.c.l.b16 %v421
    %v1669 = vunpack.c.h.b16 %v421
    %v1670 = vunpack.c.l.b16 %v422
    %v1671 = vunpack.c.h.b16 %v422
    %v1672 = vunpack.c.l.b16 %v423
    %v1673 = vunpack.c.h.b16 %v423
    %v1674 = vunpack.c.l.b16 %v424
    %v1675 = vunpack.c.h.b16 %v424
    %v1676 = vunpack.c.l.b16 %v425
    %v1677 = vunpack.c.h.b16 %v425
    %v1678 = vunpack.c.l.b16 %v426
    %v1679 = vunpack.c.h.b16 %v426
    %v1680 = vunpack.c.l.b16 %v427
    %v1681 = vunpack.c.h.b16 %v427
    %v1682 = vunpack.c.l.b16 %v428
    %v1683 = vunpack.c.h.b16 %v428
    %v1684 = vunpack.c.l.b16 %v429
    %v1685 = vunpack.c.h.b16 %v429
    %v1686 = vunpack.c.l.b16 %v430
    %v1687 = vunpack.c.h.b16 %v430
    %v1688 = vunpack.c.l.b16 %v431
    %v1689 = vunpack.c.h.b16 %v431
    %v1690 = vunpack.c.l.b16 %v432
    %v1691 = vunpack.c.h.b16 %v432
    %v1692 = vunpack.c.l.b16 %v433
    %v1693 = vunpack.c.h.b16 %v433
    %v1694 = vunpack.c.l.b16 %v434
    %v1695 = vunpack.c.h.b16 %v434
    %v1696 = vunpack.c.l.b16 %v435
    %v1697 = vunpack.c.h.b16 %v435
    %v1698 = vunpack.c.l.b16 %v436
    %v1699 = vunpack.c.h.b16 %v436
    %v1700 = vunpack.c.l.b16 %v437
    %v1701 = vunpack.c.h.b16 %v437
    %v1702 = vunpack.c.l.b16 %v438
    %v1703 = vunpack.c.h.b16 %v438
    %v1704 = vunpack.c.l.b16 %v439
    %v1705 = vunpack.c.h.b16 %v439
    %v1706 = vunpack.c.l.b16 %v440
    %v1707 = vunpack.c.h.b16 %v440
    %v1708 = vunpack.c.l.b16 %v441
    %v1709 = vunpack.c.h.b16 %v441
    %v1710 = vunpack.c.l.b16 %v442
    %v1711 = vunpack.c.h.b16 %v442
    %v1712 = vunpack.c.l.b16 %v443
    %v1713 = vunpack.c.h.b16 %v443
    %v1714 = vunpack.c.l.b16 %v444
    %v1715 = vunpack.c.h.b16 %v444
    %v1716 = vunpack.c.l.b16 %v445
    %v1717 = vunpack.c.h.b16 %v445
    %v1718 = vunpack.c.l.b16 %v446
    %v1719 = vunpack.c.h.b16 %v446
    %v1720 = vunpack.c.l.b16 %v447
    %v1721 = vunpack.c.h.b16 %v447
    %v1722 = vunpack.c.l.b16 %v448
    %v1723 = vunpack.c.h.b16 %v448
    %v1724 = vunpack.c.l.b16 %v449
    %v1725 = vunpack.c.h.b16 %v449
    %v1726 = vunpack.c.l.b16 %v450
    %v1727 = vunpack.c.h.b16 %v450
    %v1728 = vunpack.c.l.b16 %v451
    %v1729 = vunpack.c.h.b16 %v451
    %v1730 = vunpack.c.l.b16 %v452
    %v1731 = vunpack.c.h.b16 %v452
    %v1732 = vunpack.c.l.b16 %v453
    %v1733 = vunpack.c.h.b16 %v453
    %v1734 = vunpack.c.l.b16 %v454
    %v1735 = vunpack.c.h.b16 %v454
    %v1736 = vunpack.c.l.b16 %v455
    %v1737 = vunpack.c.h.b16 %v455
    %v1738 = vunpack.c.l.b16 %v456
    %v1739 = vunpack.c.h.b16 %v456
    %v1740 = vunpack.c.l.b16 %v457
    %v1741 = vunpack.c.h.b16 %v457
    %v1742 = vunpack.c.l.b16 %v458
    %v1743 = vunpack.c.h.b16 %v458
    %v1744 = vunpack.c.l.b16 %v459
    %v1745 = vunpack.c.h.b16 %v459
    %v1746 = vunpack.c.l.b16 %v460
    %v1747 = vunpack.c.h.b16 %v460
    %v1748 = vunpack.c.l.b16 %v461
    %v1749 = vunpack.c.h.b16 %v461
    %v1750 = vunpack.c.l.b16 %v462
    %v1751 = vunpack.c.h.b16 %v462
    %v1752 = vunpack.c.l.b16 %v463
    %v1753 = vunpack.c.h.b16 %v463
    %v1754 = vunpack.c.l.b16 %v464
    %v1755 = vunpack.c.h.b16 %v464
    %v1756 = vunpack.c.l.b16 %v465
    %v1757 = vunpack.c.h.b16 %v465
    %v1758 = vunpack.c.l.b16 %v466
    %v1759 = vunpack.c.h.b16 %v466
    %v1760 = vunpack.c.l.b16 %v467
    %v1761 = vunpack.c.h.b16 %v467
    %v1762 = vunpack.c.l.b16 %v468
    %v1763 = vunpack.c.h.b16 %v468
    %v1764 = vunpack.c.l.b16 %v469
    %v1765 = vunpack.c.h.b16 %v469
    %v1766 = vunpack.c.l.b16 %v470
    %v1767 = vunpack.c.h.b16 %v470
    %v1768 = vunpack.c.l.b16 %v471
    %v1769 = vunpack.c.h.b16 %v471
    %v1770 = vunpack.c.l.b16 %v472
    %v1771 = vunpack.c.h.b16 %v472
    %v1772 = vunpack.c.l.b16 %v473
    %v1773 = vunpack.c.h.b16 %v473
    %v1774 = vunpack.c.l.b16 %v474
    %v1775 = vunpack.c.h.b16 %v474
    %v1776 = vunpack.c.l.b16 %v475
    %v1777 = vunpack.c.h.b16 %v475
    %v1778 = vunpack.c.l.b16 %v476
    %v1779 = vunpack.c.h.b16 %v476
    %v1780 = vunpack.c.l.b16 %v477
    %v1781 = vunpack.c.h.b16 %v477
    %v1782 = vunpack.c.l.b16 %v478
    %v1783 = vunpack.c.h.b16 %v478
    %v1784 = vunpack.c.l.b16 %v479
    %v1785 = vunpack.c.h.b16 %v479
    %v1786 = vunpack.c.l.b16 %v480
    %v1787 = vunpack.c.h.b16 %v480
    %v1788 = vunpack.c.l.b16 %v481
    %v1789 = vunpack.c.h.b16 %v481
    %v1790 = vunpack.c.l.b16 %v482
    %v1791 = vunpack.c.h.b16 %v482
    %v1792 = vunpack.c.l.b16 %v483
    %v1793 = vunpack.c.h.b16 %v483
    %v1794 = vunpack.c.l.b16 %v484
    %v1795 = vunpack.c.h.b16 %v484
    %v1796 = vunpack.c.l.b16 %v485
    %v1797 = vunpack.c.h.b16 %v485
    %v1798 = vunpack.c.l.b16 %v486
    %v1799 = vunpack.c.h.b16 %v486
    %v1800 = vunpack.c.l.b16 %v487
    %v1801 = vunpack.c.h.b16 %v487
    %v1802 = vunpack.c.l.b16 %v488
    %v1803 = vunpack.c.h.b16 %v488
    %v1804 = vunpack.c.l.b16 %v489
    %v1805 = vunpack.c.h.b16 %v489
    %v1806 = vunpack.c.l.b16 %v490
    %v1807 = vunpack.c.h.b16 %v490
    %v1808 = vunpack.c.l.b16 %v491
    %v1809 = vunpack.c.h.b16 %v491
    %v1810 = vunpack.c.l.b16 %v492
    %v1811 = vunpack.c.h.b16 %v492
    %v1812 = vunpack.c.l.b16 %v493
    %v1813 = vunpack.c.h.b16 %v493
    %v1814 = vunpack.c.l.b16 %v494
    %v1815 = vunpack.c.h.b16 %v494
    %v1816 = vunpack.c.l.b16 %v495
    %v1817 = vunpack.c.h.b16 %v495
    %v1818 = vunpack.c.l.b16 %v496
    %v1819 = vunpack.c.h.b16 %v496
    %v1820 = vunpack.c.l.b16 %v497
    %v1821 = vunpack.c.h.b16 %v497
    %v1822 = vunpack.c.l.b16 %v498
    %v1823 = vunpack.c.h.b16 %v498
    %v1824 = vunpack.c.l.b16 %v499
    %v1825 = vunpack.c.h.b16 %v499
    %v1826 = vunpack.c.l.b16 %v500
    %v1827 = vunpack.c.h.b16 %v500
    %v1828 = vunpack.c.l.b16 %v501
    %v1829 = vunpack.c.h.b16 %v501
    %v1830 = vunpack.c.l.b16 %v502
    %v1831 = vunpack.c.h.b16 %v502
    %v1832 = vunpack.c.l.b16 %v503
    %v1833 = vunpack.c.h.b16 %v503
    %v1834 = vunpack.c.l.b16 %v504
    %v1835 = vunpack.c.h.b16 %v504
    %v1836 = vunpack.c.l.b16 %v505
    %v1837 = vunpack.c.h.b16 %v505
    %v1838 = vunpack.c.l.b16 %v506
    %v1839 = vunpack.c.h.b16 %v506
    %v1840 = vunpack.c.l.b16 %v507
    %v1841 = vunpack.c.h.b16 %v507
    %v1842 = vunpack.c.l.b16 %v508
    %v1843 = vunpack.c.h.b16 %v508
    %v1844 = vunpack.c.l.b16 %v509
    %v1845 = vunpack.c.h.b16 %v509
    %v1846 = vunpack.c.l.b16 %v510
    %v1847 = vunpack.c.h.b16 %v510
    %v1848 = vunpack.c.l.b16 %v511
    %v1849 = vunpack.c.h.b16 %v511
    %v1850 = vunpack.c.l.b16 %v512
    %v1851 = vunpack.c.h.b16 %v512
    %v1852 = vunpack.c.l.b16 %v513
    %v1853 = vunpack.c.h.b16 %v513
    %v1854 = vunpack.c.l.b16 %v514
    %v1855 = vunpack.c.h.b16 %v514
    %v1856 = vunpack.c.l.b16 %v515
    %v1857 = vunpack.c.h.b16 %v515
    %v1858 = vunpack.c.l.b16 %v516
    %v1859 = vunpack.c.h.b16 %v516
    %v1860 = vunpack.c.l.b16 %v517
    %v1861 = vunpack.c.h.b16 %v517
    %v1862 = vunpack.c.l.b16 %v518
    %v1863 = vunpack.c.h.b16 %v518
    %v1864 = vunpack.c.l.b16 %v519
    %v1865 = vunpack.c.h.b16 %v519
    %v1866 = vunpack.c.l.b16 %v520
    %v1867 = vunpack.c.h.b16 %v520
    %v1868 = vunpack.c.l.b16 %v521
    %v1869 = vunpack.c.h.b16 %v521
    %v1870 = vunpack.c.l.b16 %v522
    %v1871 = vunpack.c.h.b16 %v522
    %v1872 = vunpack.c.l.b16 %v523
    %v1873 = vunpack.c.h.b16 %v523
    %v1874 = vunpack.c.l.b16 %v524
    %v1875 = vunpack.c.h.b16 %v524
    %v1876 = vunpack.c.l.b16 %v525
    %v1877 = vunpack.c.h.b16 %v525
    %v1878 = vunpack.c.l.b16 %v526
    %v1879 = vunpack.c.h.b16 %v526
    %v1880 = vunpack.c.l.b16 %v527
    %v1881 = vunpack.c.h.b16 %v527
    %v1882 = vunpack.c.l.b16 %v528
    %v1883 = vunpack.c.h.b16 %v528
    %v1884 = vunpack.c.l.b16 %v529
    %v1885 = vunpack.c.h.b16 %v529
    %v1886 = vunpack.c.l.b16 %v530
    %v1887 = vunpack.c.h.b16 %v530
    %v1888 = vunpack.c.l.b16 %v531
    %v1889 = vunpack.c.h.b16 %v531
    %v1890 = vunpack.c.l.b16 %v532
    %v1891 = vunpack.c.h.b16 %v532
    %v1892 = vunpack.c.l.b16 %v533
    %v1893 = vunpack.c.h.b16 %v533
    %v1894 = vunpack.c.l.b16 %v534
    %v1895 = vunpack.c.h.b16 %v534
    %v1896 = vunpack.c.l.b16 %v535
    %v1897 = vunpack.c.h.b16 %v535
    %v1898 = vunpack.c.l.b16 %v536
    %v1899 = vunpack.c.h.b16 %v536
    %v1900 = vunpack.c.l.b16 %v537
    %v1901 = vunpack.c.h.b16 %v537
    %v1902 = vunpack.c.l.b16 %v538
    %v1903 = vunpack.c.h.b16 %v538
    %v1904 = vunpack.c.l.b16 %v539
    %v1905 = vunpack.c.h.b16 %v539
    %v1906 = vunpack.c.l.b16 %v540
    %v1907 = vunpack.c.h.b16 %v540
    %v1908 = vunpack.c.l.b16 %v541
    %v1909 = vunpack.c.h.b16 %v541
    %v1910 = vunpack.c.l.b16 %v542
    %v1911 = vunpack.c.h.b16 %v542
    %v1912 = vunpack.c.l.b16 %v543
    %v1913 = vunpack.c.h.b16 %v543
    %v1914 = vunpack.c.l.b16 %v544
    %v1915 = vunpack.c.h.b16 %v544
    %v1916 = vunpack.c.l.b16 %v545
    %v1917 = vunpack.c.h.b16 %v545
    %v1918 = vunpack.c.l.b16 %v546
    %v1919 = vunpack.c.h.b16 %v546
    %v1920 = vunpack.c.l.b16 %v547
    %v1921 = vunpack.c.h.b16 %v547
    %v1922 = vunpack.c.l.b16 %v548
    %v1923 = vunpack.c.h.b16 %v548
    %v1924 = vunpack.c.l.b16 %v549
    %v1925 = vunpack.c.h.b16 %v549
    %v1926 = vunpack.c.l.b16 %v550
    %v1927 = vunpack.c.h.b16 %v550
    %v1928 = vunpack.c.l.b16 %v551
    %v1929 = vunpack.c.h.b16 %v551
    %v1930 = vunpack.c.l.b16 %v552
    %v1931 = vunpack.c.h.b16 %v552
    %v1932 = vunpack.c.l.b16 %v553
    %v1933 = vunpack.c.h.b16 %v553
    %v1934 = vunpack.c.l.b16 %v554
    %v1935 = vunpack.c.h.b16 %v554
    %v1936 = vunpack.c.l.b16 %v555
    %v1937 = vunpack.c.h.b16 %v555
    %v1938 = vunpack.c.l.b16 %v556
    %v1939 = vunpack.c.h.b16 %v556
    %v1940 = vunpack.c.l.b16 %v557
    %v1941 = vunpack.c.h.b16 %v557
    %v1942 = vunpack.c.l.b16 %v558
    %v1943 = vunpack.c.h.b16 %v558
    %v1944 = vunpack.c.l.b16 %v559
    %v1945 = vunpack.c.h.b16 %v559
    %v1946 = vunpack.c.l.b16 %v560
    %v1947 = vunpack.c.h.b16 %v560
    %v1948 = vunpack.c.l.b16 %v561
    %v1949 = vunpack.c.h.b16 %v561
    %v1950 = vunpack.c.l.b16 %v562
    %v1951 = vunpack.c.h.b16 %v562
    %v1952 = vunpack.c.l.b16 %v563
    %v1953 = vunpack.c.h.b16 %v563
    %v1954 = vunpack.c.l.b16 %v564
    %v1955 = vunpack.c.h.b16 %v564
    %v1956 = vunpack.c.l.b16 %v565
    %v1957 = vunpack.c.h.b16 %v565
    %v1958 = vunpack.c.l.b16 %v566
    %v1959 = vunpack.c.h.b16 %v566
    %v1960 = vunpack.c.l.b16 %v567
    %v1961 = vunpack.c.h.b16 %v567
    %v1962 = vunpack.c.l.b16 %v568
    %v1963 = vunpack.c.h.b16 %v568
    %v1964 = vunpack.c.l.b16 %v569
    %v1965 = vunpack.c.h.b16 %v569
    %v1966 = vunpack.c.l.b16 %v570
    %v1967 = vunpack.c.h.b16 %v570
    %v1968 = vunpack.c.l.b16 %v571
    %v1969 = vunpack.c.h.b16 %v571
    %v1970 = vunpack.c.l.b16 %v572
    %v1971 = vunpack.c.h.b16 %v572
    %v1972 = vunpack.c.l.b16 %v573
    %v1973 = vunpack.c.h.b16 %v573
    %v1974 = vunpack.c.l.b16 %v574
    %v1975 = vunpack.c.h.b16 %v574
    %v1976 = vunpack.c.l.b16 %v575
    %v1977 = vunpack.c.h.b16 %v575
    %v1978 = vunpack.c.l.b16 %v576
    %v1979 = vunpack.c.h.b16 %v576
    %v1980 = vunpack.c.l.b16 %v577
    %v1981 = vunpack.c.h.b16 %v577
    %v1982 = vunpack.c.l.b16 %v578
    %v1983 = vunpack.c.h.b16 %v578
    %v1984 = vunpack.c.l.b16 %v579
    %v1985 = vunpack.c.h.b16 %v579
    %v1986 = vunpack.c.l.b16 %v580
    %v1987 = vunpack.c.h.b16 %v580
    %v1988 = vunpack.c.l.b16 %v581
    %v1989 = vunpack.c.h.b16 %v581
    %v1990 = vunpack.c.l.b16 %v582
    %v1991 = vunpack.c.h.b16 %v582
    %v1992 = vunpack.c.l.b16 %v583
    %v1993 = vunpack.c.h.b16 %v583
    %v1994 = vunpack.c.l.b16 %v584
    %v1995 = vunpack.c.h.b16 %v584
    %v1996 = vunpack.c.l.b16 %v585
    %v1997 = vunpack.c.h.b16 %v585
    %v1998 = vunpack.c.l.b16 %v586
    %v1999 = vunpack.c.h.b16 %v586
    %v2000 = vunpack.c.l.b16 %v587
    %v2001 = vunpack.c.h.b16 %v587
    %v2002 = vunpack.c.l.b16 %v588
    %v2003 = vunpack.c.h.b16 %v588
    %v2004 = vunpack.c.l.b16 %v589
    %v2005 = vunpack.c.h.b16 %v589
    %v2006 = vunpack.c.l.b16 %v590
    %v2007 = vunpack.c.h.b16 %v590
    %v2008 = vunpack.c.l.b16 %v591
    %v2009 = vunpack.c.h.b16 %v591
    %v2010 = vunpack.c.l.b16 %v592
    %v2011 = vunpack.c.h.b16 %v592
    %v2012 = vunpack.c.l.b16 %v593
    %v2013 = vunpack.c.h.b16 %v593
    %v2014 = vunpack.c.l.b16 %v594
    %v2015 = vunpack.c.h.b16 %v594
    %v2016 = vunpack.c.l.b16 %v595
    %v2017 = vunpack.c.h.b16 %v595
    %v2018 = vunpack.c.l.b16 %v596
    %v2019 = vunpack.c.h.b16 %v596
    %v2020 = vunpack.c.l.b16 %v597
    %v2021 = vunpack.c.h.b16 %v597
    %v2022 = vunpack.c.l.b16 %v598
    %v2023 = vunpack.c.h.b16 %v598
    %v2024 = vunpack.c.l.b16 %v599
    %v2025 = vunpack.c.h.b16 %v599
    %v2026 = vunpack.c.l.b16 %v600
    %v2027 = vunpack.c.h.b16 %v600
    %v2028 = vunpack.c.l.b16 %v601
    %v2029 = vunpack.c.h.b16 %v601
    %v2030 = vunpack.c.l.b16 %v602
    %v2031 = vunpack.c.h.b16 %v602
    %v2032 = vunpack.c.l.b16 %v603
    %v2033 = vunpack.c.h.b16 %v603
    %v2034 = vunpack.c.l.b16 %v604
    %v2035 = vunpack.c.h.b16 %v604
    %v2036 = vunpack.c.l.b16 %v605
    %v2037 = vunpack.c.h.b16 %v605
    %v2038 = vunpack.c.l.b16 %v606
    %v2039 = vunpack.c.h.b16 %v606
    %v2040 = vunpack.c.l.b16 %v607
    %v2041 = vunpack.c.h.b16 %v607
    %v2042 = vunpack.c.l.b16 %v608
    %v2043 = vunpack.c.h.b16 %v608
    %v2044 = vunpack.c.l.b16 %v609
    %v2045 = vunpack.c.h.b16 %v609
    %v2046 = vunpack.c.l.b16 %v610
    %v2047 = vunpack.c.h.b16 %v610
    %v2048 = vunpack.c.l.b16 %v611
    %v2049 = vunpack.c.h.b16 %v611
    %v2050 = vunpack.c.l.b16 %v612
    %v2051 = vunpack.c.h.b16 %v612
    %v2052 = vunpack.c.l.b16 %v613
    %v2053 = vunpack.c.h.b16 %v613
    %v2054 = vunpack.c.l.b16 %v614
    %v2055 = vunpack.c.h.b16 %v614
    %v2056 = vunpack.c.l.b16 %v615
    %v2057 = vunpack.c.h.b16 %v615
    %v2058 = vunpack.c.l.b16 %v616
    %v2059 = vunpack.c.h.b16 %v616
    %v2060 = vunpack.c.l.b16 %v617
    %v2061 = vunpack.c.h.b16 %v617
    %v2062 = vunpack.c.l.b16 %v618
    %v2063 = vunpack.c.h.b16 %v618
    %v2064 = vunpack.c.l.b16 %v619
    %v2065 = vunpack.c.h.b16 %v619
    %v2066 = vunpack.c.l.b16 %v620
    %v2067 = vunpack.c.h.b16 %v620
    %v2068 = vunpack.c.l.b16 %v621
    %v2069 = vunpack.c.h.b16 %v621
    %v2070 = vunpack.c.l.b16 %v622
    %v2071 = vunpack.c.h.b16 %v622
    %v2072 = vunpack.c.l.b16 %v623
    %v2073 = vunpack.c.h.b16 %v623
    %v2074 = vunpack.c.l.b16 %v624
    %v2075 = vunpack.c.h.b16 %v624
    %v2076 = vunpack.c.l.b16 %v625
    %v2077 = vunpack.c.h.b16 %v625
    %v2078 = vunpack.c.l.b16 %v626
    %v2079 = vunpack.c.h.b16 %v626
    %v2080 = vunpack.c.l.b16 %v627
    %v2081 = vunpack.c.h.b16 %v627
    %v2082 = vunpack.c.l.b16 %v628
    %v2083 = vunpack.c.h.b16 %v628
    %v2084 = vunpack.c.l.b16 %v629
    %v2085 = vunpack.c.h.b16 %v629
    %v2086 = vunpack.c.l.b16 %v630
    %v2087 = vunpack.c.h.b16 %v630
    %v2088 = vunpack.c.l.b16 %v631
    %v2089 = vunpack.c.h.b16 %v631
    %v2090 = vunpack.c.l.b16 %v632
    %v2091 = vunpack.c.h.b16 %v632
    %v2092 = vunpack.c.l.b16 %v633
    %v2093 = vunpack.c.h.b16 %v633
    %v2094 = vunpack.c.l.b16 %v634
    %v2095 = vunpack.c.h.b16 %v634
    %v2096 = vunpack.c.l.b16 %v635
    %v2097 = vunpack.c.h.b16 %v635
    %v2098 = vunpack.c.l.b16 %v636
    %v2099 = vunpack.c.h.b16 %v636
    %v2100 = vunpack.c.l.b16 %v637
    %v2101 = vunpack.c.h.b16 %v637
    %v2102 = vunpack.c.l.b16 %v638
    %v2103 = vunpack.c.h.b16 %v638
    %v2104 = vunpack.c.l.b16 %v639
    %v2105 = vunpack.c.h.b16 %v639
    %v2106 = vunpack.c.l.b16 %v640
    %v2107 = vunpack.c.h.b16 %v640
    %v2108 = vunpack.c.l.b16 %v641
    %v2109 = vunpack.c.h.b16 %v641
    %v2110 = vunpack.c.l.b16 %v642
    %v2111 = vunpack.c.h.b16 %v642
    %v2112 = vunpack.c.l.b16 %v643
    %v2113 = vunpack.c.h.b16 %v643
    %v2114 = vpack.c.b16 %v1144, %v1134
    %v2115 = vpack.c.b16 %v1145, %v1135
    %v2116 = vpack.c.b16 %v1146, %v1136
    %v2117 = vpack.c.b16 %v1147, %v1137
    %v2118 = vpack.c.b16 %v1148, %v1138
    %v2119 = vpack.c.b16 %v1149, %v1139
    %v2120 = vpack.c.b16 %v1150, %v1140
    %v2121 = vpack.c.b16 %v1151, %v1141
    %v2122 = vpack.c.b16 %v1152, %v1142
    %v2123 = vpack.c.b16 %v1153, %v1143
    %v2124 = vpack.c.b16 %v1164, %v1154
    %v2125 = vpack.c.b16 %v1165, %v1155
    %v2126 = vpack.c.b16 %v1166, %v1156
    %v2127 = vpack.c.b16 %v1167, %v1157
    %v2128 = vpack.c.b16 %v1168, %v1158
    %v2129 = vpack.c.b16 %v1169, %v1159
    %v2130 = vpack.c.b16 %v1170, %v1160
    %v2131 = vpack.c.b16 %v1171, %v1161
    %v2132 = vpack.c.b16 %v1172, %v1162
    %v2133 = vpack.c.b16 %v1173, %v1163
    %v2134 = vpack.c.b16 %v1184, %v1174
    %v2135 = vpack.c.b16 %v1185, %v1175
    %v2136 = vpack.c.b16 %v1186, %v1176
    %v2137 = vpack.c.b16 %v1187, %v1177
    %v2138 = vpack.c.b16 %v1188, %v1178
    %v2139 = vpack.c.b16 %v1189, %v1179
    %v2140 = vpack.c.b16 %v1190, %v1180
    %v2141 = vpack.c.b16 %v1191, %v1181
    %v2142 = vpack.c.b16 %v1192, %v1182
    %v2143 = vpack.c.b16 %v1193, %v1183
    %v2144 = vpack.c.b16 %v1204, %v1194
    %v2145 = vpack.c.b16 %v1205, %v1195
    %v2146 = vpack.c.b16 %v1206, %v1196
    %v2147 = vpack.c.b16 %v1207, %v1197
    %v2148 = vpack.c.b16 %v1208, %v1198
    %v2149 = vpack.c.b16 %v1209, %v1199
    %v2150 = vpack.c.b16 %v1210, %v1200
    %v2151 = vpack.c.b16 %v1211, %v1201
    %v2152 = vpack.c.b16 %v1212, %v1202
    %v2153 = vpack.c.b16 %v1213, %v1203
    %v2154 = vpack.c.b16 %v1224, %v1214
    %v2155 = vpack.c.b16 %v1225, %v1215
    %v2156 = vpack.c.b16 %v1226, %v1216
    %v2157 = vpack.c.b16 %v1227, %v1217
    %v2158 = vpack.c.b16 %v1228, %v1218
    %v2159 = vpack.c.b16 %v1229, %v1219
    %v2160 = vpack.c.b16 %v1230, %v1220
    %v2161 = vpack.c.b16 %v1231, %v1221
    %v2162 = vpack.c.b16 %v1232, %v1222
    %v2163 = vpack.c.b16 %v1233, %v1223
    %v2164 = vpack.c.b16 %v1244, %v1234
    %v2165 = vpack.c.b16 %v1245, %v1235
    %v2166 = vpack.c.b16 %v1246, %v1236
    %v2167 = vpack.c.b16 %v1247, %v1237
    %v2168 = vpack.c.b16 %v1248, %v1238
    %v2169 = vpack.c.b16 %v1249, %v1239
    %v2170 = vpack.c.b16 %v1250, %v1240
    %v2171 = vpack.c.b16 %v1251, %v1241
    %v2172 = vpack.c.b16 %v1252, %v1242
    %v2173 = vpack.c.b16 %v1253, %v1243
    %v2174 = vpack.c.b16 %v1264, %v1254
    %v2175 = vpack.c.b16 %v1265, %v1255
    %v2176 = vpack.c.b16 %v1266, %v1256
    %v2177 = vpack.c.b16 %v1267, %v1257
    %v2178 = vpack.c.b16 %v1268, %v1258
    %v2179 = vpack.c.b16 %v1269, %v1259
    %v2180 = vpack.c.b16 %v1270, %v1260
    %v2181 = vpack.c.b16 %v1271, %v1261
    %v2182 = vpack.c.b16 %v1272, %v1262
    %v2183 = vpack.c.b16 %v1273, %v1263
    %v2184 = vpack.c.b16 %v1284, %v1274
    %v2185 = vpack.c.b16 %v1285, %v1275
    %v2186 = vpack.c.b16 %v1286, %v1276
    %v2187 = vpack.c.b16 %v1287, %v1277
    %v2188 = vpack.c.b16 %v1288, %v1278
    %v2189 = vpack.c.b16 %v1289, %v1279
    %v2190 = vpack.c.b16 %v1290, %v1280
    %v2191 = vpack.c.b16 %v1291, %v1281
    %v2192 = vpack.c.b16 %v1292, %v1282
    %v2193 = vpack.c.b16 %v1293, %v1283
    %v2194 = vpack.c.b16 %v1304, %v1294
    %v2195 = vpack.c.b16 %v1305, %v1295
    %v2196 = vpack.c.b16 %v1306, %v1296
    %v2197 = vpack.c.b16 %v1307, %v1297
    %v2198 = vpack.c.b16 %v1308, %v1298
    %v2199 = vpack.c.b16 %v1309, %v1299
    %v2200 = vpack.c.b16 %v1310, %v1300
    %v2201 = vpack.c.b16 %v1311, %v1301
    %v2202 = vpack.c.b16 %v1312, %v1302
    %v2203 = vpack.c.b16 %v1313, %v1303
    %v2204 = vpack.c.b16 %v1324, %v1314
    %v2205 = vpack.c.b16 %v1325, %v1315
    %v2206 = vpack.c.b16 %v1326, %v1316
    %v2207 = vpack.c.b16 %v1327, %v1317
    %v2208 = vpack.c.b16 %v1328, %v1318
    %v2209 = vpack.c.b16 %v1329, %v1319
    %v2210 = vpack.c.b16 %v1330, %v1320
    %v2211 = vpack.c.b16 %v1331, %v1321
    %v2212 = vpack.c.b16 %v1332, %v1322
    %v2213 = vpack.c.b16 %v1333, %v1323
    %v2214 = vpack.c.b16 %v1344, %v1334
    %v2215 = vpack.c.b16 %v1345, %v1335
    %v2216 = vpack.c.b16 %v1346, %v1336
    %v2217 = vpack.c.b16 %v1347, %v1337
    %v2218 = vpack.c.b16 %v1348, %v1338
    %v2219 = vpack.c.b16 %v1349, %v1339
    %v2220 = vpack.c.b16 %v1350, %v1340
    %v2221 = vpack.c.b16 %v1351, %v1341
    %v2222 = vpack.c.b16 %v1352, %v1342
    %v2223 = vpack.c.b16 %v1353, %v1343
    %v2224 = vpack.c.b16 %v1364, %v1354
    %v2225 = vpack.c.b16 %v1365, %v1355
    %v2226 = vpack.c.b16 %v1366, %v1356
    %v2227 = vpack.c.b16 %v1367, %v1357
    %v2228 = vpack.c.b16 %v1368, %v1358
    %v2229 = vpack.c.b16 %v1369, %v1359
    %v2230 = vpack.c.b16 %v1370, %v1360
    %v2231 = vpack.c.b16 %v1371, %v1361
    %v2232 = vpack.c.b16 %v1372, %v1362
    %v2233 = vpack.c.b16 %v1373, %v1363
    %v2234 = vpack.c.b16 %v1384, %v1374
    %v2235 = vpack.c.b16 %v1385, %v1375
    %v2236 = vpack.c.b16 %v1386, %v1376
    %v2237 = vpack.c.b16 %v1387, %v1377
    %v2238 = vpack.c.b16 %v1388, %v1378
    %v2239 = vpack.c.b16 %v1389, %v1379
    %v2240 = vpack.c.b16 %v1390, %v1380
    %v2241 = vpack.c.b16 %v1391, %v1381
    %v2242 = vpack.c.b16 %v1392, %v1382
    %v2243 = vpack.c.b16 %v1393, %v1383
    %v2244 = vpack.c.b16 %v1404, %v1394
    %v2245 = vpack.c.b16 %v1405, %v1395
    %v2246 = vpack.c.b16 %v1406, %v1396
    %v2247 = vpack.c.b16 %v1407, %v1397
    %v2248 = vpack.c.b16 %v1408, %v1398
    %v2249 = vpack.c.b16 %v1409, %v1399
    %v2250 = vpack.c.b16 %v1410, %v1400
    %v2251 = vpack.c.b16 %v1411, %v1401
    %v2252 = vpack.c.b16 %v1412, %v1402
    %v2253 = vpack.c.b16 %v1413, %v1403
    %v2254 = vpack.c.b16 %v1424, %v1414
    %v2255 = vpack.c.b16 %v1425, %v1415
    %v2256 = vpack.c.b16 %v1426, %v1416
    %v2257 = vpack.c.b16 %v1427, %v1417
    %v2258 = vpack.c.b16 %v1428, %v1418
    %v2259 = vpack.c.b16 %v1429, %v1419
    %v2260 = vpack.c.b16 %v1430, %v1420
    %v2261 = vpack.c.b16 %v1431, %v1421
    %v2262 = vpack.c.b16 %v1432, %v1422
    %v2263 = vpack.c.b16 %v1433, %v1423
    %v2264 = vpack.c.b16 %v1444, %v1434
    %v2265 = vpack.c.b16 %v1445, %v1435
    %v2266 = vpack.c.b16 %v1446, %v1436
    %v2267 = vpack.c.b16 %v1447, %v1437
    %v2268 = vpack.c.b16 %v1448, %v1438
    %v2269 = vpack.c.b16 %v1449, %v1439
    %v2270 = vpack.c.b16 %v1450, %v1440
    %v2271 = vpack.c.b16 %v1451, %v1441
    %v2272 = vpack.c.b16 %v1452, %v1442
    %v2273 = vpack.c.b16 %v1453, %v1443
    %v2274 = vpack.c.b16 %v1464, %v1454
    %v2275 = vpack.c.b16 %v1465, %v1455
    %v2276 = vpack.c.b16 %v1466, %v1456
    %v2277 = vpack.c.b16 %v1467, %v1457
    %v2278 = vpack.c.b16 %v1468, %v1458
    %v2279 = vpack.c.b16 %v1469, %v1459
    %v2280 = vpack.c.b16 %v1470, %v1460
    %v2281 = vpack.c.b16 %v1471, %v1461
    %v2282 = vpack.c.b16 %v1472, %v1462
    %v2283 = vpack.c.b16 %v1473, %v1463
    %v2284 = vpack.c.b16 %v1484, %v1474
    %v2285 = vpack.c.b16 %v1485, %v1475
    %v2286 = vpack.c.b16 %v1486, %v1476
    %v2287 = vpack.c.b16 %v1487, %v1477
    %v2288 = vpack.c.b16 %v1488, %v1478
    %v2289 = vpack.c.b16 %v1489, %v1479
    %v2290 = vpack.c.b16 %v1490, %v1480
    %v2291 = vpack.c.b16 %v1491, %v1481
    %v2292 = vpack.c.b16 %v1492, %v1482
    %v2293 = vpack.c.b16 %v1493, %v1483
    %v2294 = vpack.c.b16 %v1504, %v1494
    %v2295 = vpack.c.b16 %v1505, %v1495
    %v2296 = vpack.c.b16 %v1506, %v1496
    %v2297 = vpack.c.b16 %v1507, %v1497
    %v2298 = vpack.c.b16 %v1508, %v1498
    %v2299 = vpack.c.b16 %v1509, %v1499
    %v2300 = vpack.c.b16 %v1510, %v1500
    %v2301 = vpack.c.b16 %v1511, %v1501
    %v2302 = vpack.c.b16 %v1512, %v1502
    %v2303 = vpack.c.b16 %v1513, %v1503
    %v2304 = vpack.c.b16 %v1524, %v1514
    %v2305 = vpack.c.b16 %v1525, %v1515
    %v2306 = vpack.c.b16 %v1526, %v1516
    %v2307 = vpack.c.b16 %v1527, %v1517
    %v2308 = vpack.c.b16 %v1528, %v1518
    %v2309 = vpack.c.b16 %v1529, %v1519
    %v2310 = vpack.c.b16 %v1530, %v1520
    %v2311 = vpack.c.b16 %v1531, %v1521
    %v2312 = vpack.c.b16 %v1532, %v1522
    %v2313 = vpack.c.b16 %v1533, %v1523
    %v2314 = vpack.c.b16 %v1544, %v1534
    %v2315 = vpack.c.b16 %v1545, %v1535
    %v2316 = vpack.c.b16 %v1546, %v1536
    %v2317 = vpack.c.b16 %v1547, %v1537
    %v2318 = vpack.c.b16 %v1548, %v1538
    %v2319 = vpack.c.b16 %v1549, %v1539
    %v2320 = vpack.c.b16 %v1550, %v1540
    %v2321 = vpack.c.b16 %v1551, %v1541
    %v2322 = vpack.c.b16 %v1552, %v1542
    %v2323 = vpack.c.b16 %v1553, %v1543
    %v2324 = vpack.c.b16 %v1564, %v1554
    %v2325 = vpack.c.b16 %v1565, %v1555
    %v2326 = vpack.c.b16 %v1566, %v1556
    %v2327 = vpack.c.b16 %v1567, %v1557
    %v2328 = vpack.c.b16 %v1568, %v1558
    %v2329 = vpack.c.b16 %v1569, %v1559
    %v2330 = vpack.c.b16 %v1570, %v1560
    %v2331 = vpack.c.b16 %v1571, %v1561
    %v2332 = vpack.c.b16 %v1572, %v1562
    %v2333 = vpack.c.b16 %v1573, %v1563
    %v2334 = vpack.c.b16 %v1584, %v1574
    %v2335 = vpack.c.b16 %v1585, %v1575
    %v2336 = vpack.c.b16 %v1586, %v1576
    %v2337 = vpack.c.b16 %v1587, %v1577
    %v2338 = vpack.c.b16 %v1588, %v1578
    %v2339 = vpack.c.b16 %v1589, %v1579
    %v2340 = vpack.c.b16 %v1590, %v1580
    %v2341 = vpack.c.b16 %v1591, %v1581
    %v2342 = vpack.c.b16 %v1592, %v1582
    %v2343 = vpack.c.b16 %v1593, %v1583
    %v2344 = vpack.c.b16 %v1604, %v1594
    %v2345 = vpack.c.b16 %v1605, %v1595
    %v2346 = vpack.c.b16 %v1606, %v1596
    %v2347 = vpack.c.b16 %v1607, %v1597
    %v2348 = vpack.c.b16 %v1608, %v1598
    %v2349 = vpack.c.b16 %v1609, %v1599
    %v2350 = vpack.c.b16 %v1610, %v1600
    %v2351 = vpack.c.b16 %v1611, %v1601
    %v2352 = vpack.c.b16 %v1612, %v1602
    %v2353 = vpack.c.b16 %v1613, %v1603
    %v2354 = vpack.c.b16 %v1624, %v1614
    %v2355 = vpack.c.b16 %v1625, %v1615
    %v2356 = vpack.c.b16 %v1626, %v1616
    %v2357 = vpack.c.b16 %v1627, %v1617
    %v2358 = vpack.c.b16 %v1628, %v1618
    %v2359 = vpack.c.b16 %v1629, %v1619
    %v2360 = vpack.c.b16 %v1630, %v1620
    %v2361 = vpack.c.b16 %v1631, %v1621
    %v2362 = vpack.c.b16 %v1632, %v1622
    %v2363 = vpack.c.b16 %v1633, %v1623
    %v2364 = vpack.c.b16 %v1644, %v1634
    %v2365 = vpack.c.b16 %v1645, %v1635
    %v2366 = vpack.c.b16 %v1646, %v1636
    %v2367 = vpack.c.b16 %v1647, %v1637
    %v2368 = vpack.c.b16 %v1648, %v1638
    %v2369 = vpack.c.b16 %v1649, %v1639
    %v2370 = vpack.c.b16 %v1650, %v1640
    %v2371 = vpack.c.b16 %v1651, %v1641
    %v2372 = vpack.c.b16 %v1652, %v1642
    %v2373 = vpack.c.b16 %v1653, %v1643
    %v2374 = vpack.c.b16 %v1664, %v1654
    %v2375 = vpack.c.b16 %v1665, %v1655
    %v2376 = vpack.c.b16 %v1666, %v1656
    %v2377 = vpack.c.b16 %v1667, %v1657
    %v2378 = vpack.c.b16 %v1668, %v1658
    %v2379 = vpack.c.b16 %v1669, %v1659
    %v2380 = vpack.c.b16 %v1670, %v1660
    %v2381 = vpack.c.b16 %v1671, %v1661
    %v2382 = vpack.c.b16 %v1672, %v1662
    %v2383 = vpack.c.b16 %v1673, %v1663
    %v2384 = vpack.c.b16 %v1684, %v1674
    %v2385 = vpack.c.b16 %v1685, %v1675
    %v2386 = vpack.c.b16 %v1686, %v1676
    %v2387 = vpack.c.b16 %v1687, %v1677
    %v2388 = vpack.c.b16 %v1688, %v1678
    %v2389 = vpack.c.b16 %v1689, %v1679
    %v2390 = vpack.c.b16 %v1690, %v1680
    %v2391 = vpack.c.b16 %v1691, %v1681
    %v2392 = vpack.c.b16 %v1692, %v1682
    %v2393 = vpack.c.b16 %v1693, %v1683
    %v2394 = vpack.c.b16 %v1704, %v1694
    %v2395 = vpack.c.b16 %v1705, %v1695
    %v2396 = vpack.c.b16 %v1706, %v1696
    %v2397 = vpack.c.b16 %v1707, %v1697
    %v2398 = vpack.c.b16 %v1708, %v1698
    %v2399 = vpack.c.b16 %v1709, %v1699
    %v2400 = vpack.c.b16 %v1710, %v1700
    %v2401 = vpack.c.b16 %v1711, %v1701
    %v2402 = vpack.c.b16 %v1712, %v1702
    %v2403 = vpack.c.b16 %v1713, %v1703
    %v2404 = vpack.c.b16 %v1724, %v1714
    %v2405 = vpack.c.b16 %v1725, %v1715
    %v2406 = vpack.c.b16 %v1726, %v1716
    %v2407 = vpack.c.b16 %v1727, %v1717
    %v2408 = vpack.c.b16 %v1728, %v1718
    %v2409 = vpack.c.b16 %v1729, %v1719
    %v2410 = vpack.c.b16 %v1730, %v1720
    %v2411 = vpack.c.b16 %v1731, %v1721
    %v2412 = vpack.c.b16 %v1732, %v1722
    %v2413 = vpack.c.b16 %v1733, %v1723
    %v2414 = vpack.c.b16 %v1744, %v1734
    %v2415 = vpack.c.b16 %v1745, %v1735
    %v2416 = vpack.c.b16 %v1746, %v1736
    %v2417 = vpack.c.b16 %v1747, %v1737
    %v2418 = vpack.c.b16 %v1748, %v1738
    %v2419 = vpack.c.b16 %v1749, %v1739
    %v2420 = vpack.c.b16 %v1750, %v1740
    %v2421 = vpack.c.b16 %v1751, %v1741
    %v2422 = vpack.c.b16 %v1752, %v1742
    %v2423 = vpack.c.b16 %v1753, %v1743
    %v2424 = vpack.c.b16 %v1764, %v1754
    %v2425 = vpack.c.b16 %v1765, %v1755
    %v2426 = vpack.c.b16 %v1766, %v1756
    %v2427 = vpack.c.b16 %v1767, %v1757
    %v2428 = vpack.c.b16 %v1768, %v1758
    %v2429 = vpack.c.b16 %v1769, %v1759
    %v2430 = vpack.c.b16 %v1770, %v1760
    %v2431 = vpack.c.b16 %v1771, %v1761
    %v2432 = vpack.c.b16 %v1772, %v1762
    %v2433 = vpack.c.b16 %v1773, %v1763
    %v2434 = vpack.c.b16 %v1784, %v1774
    %v2435 = vpack.c.b16 %v1785, %v1775
    %v2436 = vpack.c.b16 %v1786, %v1776
    %v2437 = vpack.c.b16 %v1787, %v1777
    %v2438 = vpack.c.b16 %v1788, %v1778
    %v2439 = vpack.c.b16 %v1789, %v1779
    %v2440 = vpack.c.b16 %v1790, %v1780
    %v2441 = vpack.c.b16 %v1791, %v1781
    %v2442 = vpack.c.b16 %v1792, %v1782
    %v2443 = vpack.c.b16 %v1793, %v1783
    %v2444 = vpack.c.b16 %v1804, %v1794
    %v2445 = vpack.c.b16 %v1805, %v1795
    %v2446 = vpack.c.b16 %v1806, %v1796
    %v2447 = vpack.c.b16 %v1807, %v1797
    %v2448 = vpack.c.b16 %v1808, %v1798
    %v2449 = vpack.c.b16 %v1809, %v1799
    %v2450 = vpack.c.b16 %v1810, %v1800
    %v2451 = vpack.c.b16 %v1811, %v1801
    %v2452 = vpack.c.b16 %v1812, %v1802
    %v2453 = vpack.c.b16 %v1813, %v1803
    %v2454 = vpack.c.b16 %v1824, %v1814
    %v2455 = vpack.c.b16 %v1825, %v1815
    %v2456 = vpack.c.b16 %v1826, %v1816
    %v2457 = vpack.c.b16 %v1827, %v1817
    %v2458 = vpack.c.b16 %v1828, %v1818
    %v2459 = vpack.c.b16 %v1829, %v1819
    %v2460 = vpack.c.b16 %v1830, %v1820
    %v2461 = vpack.c.b16 %v1831, %v1821
    %v2462 = vpack.c.b16 %v1832, %v1822
    %v2463 = vpack.c.b16 %v1833, %v1823
    %v2464 = vpack.c.b16 %v1844, %v1834
    %v2465 = vpack.c.b16 %v1845, %v1835
    %v2466 = vpack.c.b16 %v1846, %v1836
    %v2467 = vpack.c.b16 %v1847, %v1837
    %v2468 = vpack.c.b16 %v1848, %v1838
    %v2469 = vpack.c.b16 %v1849, %v1839
    %v2470 = vpack.c.b16 %v1850, %v1840
    %v2471 = vpack.c.b16 %v1851, %v1841
    %v2472 = vpack.c.b16 %v1852, %v1842
    %v2473 = vpack.c.b16 %v1853, %v1843
    %v2474 = vpack.c.b16 %v1864, %v1854
    %v2475 = vpack.c.b16 %v1865, %v1855
    %v2476 = vpack.c.b16 %v1866, %v1856
    %v2477 = vpack.c.b16 %v1867, %v1857
    %v2478 = vpack.c.b16 %v1868, %v1858
    %v2479 = vpack.c.b16 %v1869, %v1859
    %v2480 = vpack.c.b16 %v1870, %v1860
    %v2481 = vpack.c.b16 %v1871, %v1861
    %v2482 = vpack.c.b16 %v1872, %v1862
    %v2483 = vpack.c.b16 %v1873, %v1863
    %v2484 = vpack.c.b16 %v1884, %v1874
    %v2485 = vpack.c.b16 %v1885, %v1875
    %v2486 = vpack.c.b16 %v1886, %v1876
    %v2487 = vpack.c.b16 %v1887, %v1877
    %v2488 = vpack.c.b16 %v1888, %v1878
    %v2489 = vpack.c.b16 %v1889, %v1879
    %v2490 = vpack.c.b16 %v1890, %v1880
    %v2491 = vpack.c.b16 %v1891, %v1881
    %v2492 = vpack.c.b16 %v1892, %v1882
    %v2493 = vpack.c.b16 %v1893, %v1883
    %v2494 = vpack.c.b16 %v1904, %v1894
    %v2495 = vpack.c.b16 %v1905, %v1895
    %v2496 = vpack.c.b16 %v1906, %v1896
    %v2497 = vpack.c.b16 %v1907, %v1897
    %v2498 = vpack.c.b16 %v1908, %v1898
    %v2499 = vpack.c.b16 %v1909, %v1899
    %v2500 = vpack.c.b16 %v1910, %v1900
    %v2501 = vpack.c.b16 %v1911, %v1901
    %v2502 = vpack.c.b16 %v1912, %v1902
    %v2503 = vpack.c.b16 %v1913, %v1903
    %v2504 = vpack.c.b16 %v1924, %v1914
    %v2505 = vpack.c.b16 %v1925, %v1915
    %v2506 = vpack.c.b16 %v1926, %v1916
    %v2507 = vpack.c.b16 %v1927, %v1917
    %v2508 = vpack.c.b16 %v1928, %v1918
    %v2509 = vpack.c.b16 %v1929, %v1919
    %v2510 = vpack.c.b16 %v1930, %v1920
    %v2511 = vpack.c.b16 %v1931, %v1921
    %v2512 = vpack.c.b16 %v1932, %v1922
    %v2513 = vpack.c.b16 %v1933, %v1923
    %v2514 = vpack.c.b16 %v1944, %v1934
    %v2515 = vpack.c.b16 %v1945, %v1935
    %v2516 = vpack.c.b16 %v1946, %v1936
    %v2517 = vpack.c.b16 %v1947, %v1937
    %v2518 = vpack.c.b16 %v1948, %v1938
    %v2519 = vpack.c.b16 %v1949, %v1939
    %v2520 = vpack.c.b16 %v1950, %v1940
    %v2521 = vpack.c.b16 %v1951, %v1941
    %v2522 = vpack.c.b16 %v1952, %v1942
    %v2523 = vpack.c.b16 %v1953, %v1943
    %v2524 = vpack.c.b16 %v1964, %v1954
    %v2525 = vpack.c.b16 %v1965, %v1955
    %v2526 = vpack.c.b16 %v1966, %v1956
    %v2527 = vpack.c.b16 %v1967, %v1957
    %v2528 = vpack.c.b16 %v1968, %v1958
    %v2529 = vpack.c.b16 %v1969, %v1959
    %v2530 = vpack.c.b16 %v1970, %v1960
    %v2531 = vpack.c.b16 %v1971, %v1961
    %v2532 = vpack.c.b16 %v1972, %v1962
    %v2533 = vpack.c.b16 %v1973, %v1963
    %v2534 = vpack.c.b16 %v1984, %v1974
    %v2535 = vpack.c.b16 %v1985, %v1975
    %v2536 = vpack.c.b16 %v1986, %v1976
    %v2537 = vpack.c.b16 %v1987, %v1977
    %v2538 = vpack.c.b16 %v1988, %v1978
    %v2539 = vpack.c.b16 %v1989, %v1979
    %v2540 = vpack.c.b16 %v1990, %v1980
    %v2541 = vpack.c.b16 %v1991, %v1981
    %v2542 = vpack.c.b16 %v1992, %v1982
    %v2543 = vpack.c.b16 %v1993, %v1983
    %v2544 = vpack.c.b16 %v2004, %v1994
    %v2545 = vpack.c.b16 %v2005, %v1995
    %v2546 = vpack.c.b16 %v2006, %v1996
    %v2547 = vpack.c.b16 %v2007, %v1997
    %v2548 = vpack.c.b16 %v2008, %v1998
    %v2549 = vpack.c.b16 %v2009, %v1999
    %v2550 = vpack.c.b16 %v2010, %v2000
    %v2551 = vpack.c.b16 %v2011, %v2001
    %v2552 = vpack.c.b16 %v2012, %v2002
    %v2553 = vpack.c.b16 %v2013, %v2003
    %v2554 = vpack.c.b16 %v2024, %v2014
    %v2555 = vpack.c.b16 %v2025, %v2015
    %v2556 = vpack.c.b16 %v2026, %v2016
    %v2557 = vpack.c.b16 %v2027, %v2017
    %v2558 = vpack.c.b16 %v2028, %v2018
    %v2559 = vpack.c.b16 %v2029, %v2019
    %v2560 = vpack.c.b16 %v2030, %v2020
    %v2561 = vpack.c.b16 %v2031, %v2021
    %v2562 = vpack.c.b16 %v2032, %v2022
    %v2563 = vpack.c.b16 %v2033, %v2023
    %v2564 = vpack.c.b16 %v2044, %v2034
    %v2565 = vpack.c.b16 %v2045, %v2035
    %v2566 = vpack.c.b16 %v2046, %v2036
    %v2567 = vpack.c.b16 %v2047, %v2037
    %v2568 = vpack.c.b16 %v2048, %v2038
    %v2569 = vpack.c.b16 %v2049, %v2039
    %v2570 = vpack.c.b16 %v2050, %v2040
    %v2571 = vpack.c.b16 %v2051, %v2041
    %v2572 = vpack.c.b16 %v2052, %v2042
    %v2573 = vpack.c.b16 %v2053, %v2043
    %v2574 = vpack.c.b16 %v2064, %v2054
    %v2575 = vpack.c.b16 %v2065, %v2055
    %v2576 = vpack.c.b16 %v2066, %v2056
    %v2577 = vpack.c.b16 %v2067, %v2057
    %v2578 = vpack.c.b16 %v2068, %v2058
    %v2579 = vpack.c.b16 %v2069, %v2059
    %v2580 = vpack.c.b16 %v2070, %v2060
    %v2581 = vpack.c.b16 %v2071, %v2061
    %v2582 = vpack.c.b16 %v2072, %v2062
    %v2583 = vpack.c.b16 %v2073, %v2063
    %v2584 = vpack.c.b16 %v2084, %v2074
    %v2585 = vpack.c.b16 %v2085, %v2075
    %v2586 = vpack.c.b16 %v2086, %v2076
    %v2587 = vpack.c.b16 %v2087, %v2077
    %v2588 = vpack.c.b16 %v2088, %v2078
    %v2589 = vpack.c.b16 %v2089, %v2079
    %v2590 = vpack.c.b16 %v2090, %v2080
    %v2591 = vpack.c.b16 %v2091, %v2081
    %v2592 = vpack.c.b16 %v2092, %v2082
    %v2593 = vpack.c.b16 %v2093, %v2083
    %v2594 = vpack.c.b16 %v2104, %v2094
    %v2595 = vpack.c.b16 %v2105, %v2095
    %v2596 = vpack.c.b16 %v2106, %v2096
    %v2597 = vpack.c.b16 %v2107, %v2097
    %v2598 = vpack.c.b16 %v2108, %v2098
    %v2599 = vpack.c.b16 %v2109, %v2099
    %v2600 = vpack.c.b16 %v2110, %v2100
    %v2601 = vpack.c.b16 %v2111, %v2101
    %v2602 = vpack.c.b16 %v2112, %v2102
    %v2603 = vpack.c.b16 %v2113, %v2103
    %vm3094 = vcmask 130048
    %v3096 = vsel %vm3094, %v153, 0
    %3098 = vmatprep.subr.bf16.mxu0 %v2185
    %3099 = vmatpush1.bf16.msra.mxu0 %v2184
    %3100 = vmatprep.subr.bf16.mxu0 %v2175
    %3101 = vmatpush1.bf16.msra.mxu0 %v2174
    %3102 = vmatprep.subr.bf16.mxu0 %v2165
    %3103 = vmatpush1.bf16.msra.mxu0 %v2164
    %3104 = vmatprep.subr.bf16.mxu0 %v2155
    %3105 = vmatpush1.bf16.msra.mxu0 %v2154
    %3106 = vmatprep.subr.bf16.mxu0 %v2145
    %3107 = vmatpush1.bf16.msra.mxu0 %v2144
    %3108 = vmatprep.subr.bf16.mxu0 %v2135
    %3109 = vmatpush1.bf16.msra.mxu0 %v2134
    %3110 = vmatprep.subr.bf16.mxu0 %v2125
    %3111 = vmatpush1.bf16.msra.mxu0 %v2124
    %3112 = vmatprep.subr.bf16.mxu0 %v2115
    %3113 = vmatpush1.bf16.msra.mxu0 %v2114
    %3114 = vmatprep.subr.bf16.mxu0 %v2265
    %3115 = vmatpush2.bf16.msra.mxu0 %v2264
    %3116 = vmatprep.subr.bf16.mxu0 %v2255
    %3117 = vmatpush2.bf16.msra.mxu0 %v2254
    %3118 = vmatprep.subr.bf16.mxu0 %v2245
    %3119 = vmatpush2.bf16.msra.mxu0 %v2244
    %3120 = vmatprep.subr.bf16.mxu0 %v2235
    %3121 = vmatpush2.bf16.msra.mxu0 %v2234
    %3122 = vmatprep.subr.bf16.mxu0 %v2225
    %3123 = vmatpush2.bf16.msra.mxu0 %v2224
    %3124 = vmatprep.subr.bf16.mxu0 %v2215
    %3125 = vmatpush2.bf16.msra.mxu0 %v2214
    %3126 = vmatprep.subr.bf16.mxu0 %v2205
    %3127 = vmatpush2.bf16.msra.mxu0 %v2204
    %3128 = vmatprep.subr.bf16.mxu0 %v2195
    %3129 = vmatpush2.bf16.msra.mxu0 %v2194
    %3130 = vmatprep.mubr.bf16.mxu0 %v148
    %3131 = vmatmul.mubr.bf16.gmra.mxu0 %v147
    %v3132 = vpop.f32.mrf.mxu0
    %v3133 = vadd.f32 0.0, %v3132
    %v3134 = vpop.f32.mrf.mxu0
    %v3135 = vadd.f32 0.0, %v3134
    %v3136 = vpop.f32.mrf.mxu0
    %v3137 = vadd.f32 0.0, %v3136
    %v3138 = vpop.f32.mrf.mxu0
    %v3139 = vadd.f32 0.0, %v3138
    %3140 = vdwg.mxu0
    %3141 = vmatprep.subr.bf16.mxu0 %v2345
    %3142 = vmatpush1.bf16.msra.mxu0 %v2344
    %3143 = vmatprep.subr.bf16.mxu0 %v2335
    %3144 = vmatpush1.bf16.msra.mxu0 %v2334
    %3145 = vmatprep.subr.bf16.mxu0 %v2325
    %3146 = vmatpush1.bf16.msra.mxu0 %v2324
    %3147 = vmatprep.subr.bf16.mxu0 %v2315
    %3148 = vmatpush1.bf16.msra.mxu0 %v2314
    %3149 = vmatprep.subr.bf16.mxu0 %v2305
    %3150 = vmatpush1.bf16.msra.mxu0 %v2304
    %3151 = vmatprep.subr.bf16.mxu0 %v2295
    %3152 = vmatpush1.bf16.msra.mxu0 %v2294
    %3153 = vmatprep.subr.bf16.mxu0 %v2285
    %3154 = vmatpush1.bf16.msra.mxu0 %v2284
    %3155 = vmatprep.subr.bf16.mxu0 %v2275
    %3156 = vmatpush1.bf16.msra.mxu0 %v2274
    %3157 = vmatprep.subr.bf16.mxu0 %v2425
    %3158 = vmatpush2.bf16.msra.mxu0 %v2424
    %3159 = vmatprep.subr.bf16.mxu0 %v2415
    %3160 = vmatpush2.bf16.msra.mxu0 %v2414
    %3161 = vmatprep.subr.bf16.mxu0 %v2405
    %3162 = vmatpush2.bf16.msra.mxu0 %v2404
    %3163 = vmatprep.subr.bf16.mxu0 %v2395
    %3164 = vmatpush2.bf16.msra.mxu0 %v2394
    %3165 = vmatprep.subr.bf16.mxu0 %v2385
    %3166 = vmatpush2.bf16.msra.mxu0 %v2384
    %3167 = vmatprep.subr.bf16.mxu0 %v2375
    %3168 = vmatpush2.bf16.msra.mxu0 %v2374
    %3169 = vmatprep.subr.bf16.mxu0 %v2365
    %3170 = vmatpush2.bf16.msra.mxu0 %v2364
    %3171 = vmatprep.subr.bf16.mxu0 %v2355
    %3172 = vmatpush2.bf16.msra.mxu0 %v2354
    %3173 = vmatprep.mubr.bf16.mxu0 %v150
    %3174 = vmatmul.mubr.bf16.gmra.mxu0 %v149
    %v3175 = vpop.f32.mrf.mxu0
    %v3176 = vadd.f32 %v3133, %v3175
    %v3177 = vpop.f32.mrf.mxu0
    %v3178 = vadd.f32 %v3135, %v3177
    %v3179 = vpop.f32.mrf.mxu0
    %v3180 = vadd.f32 %v3137, %v3179
    %v3181 = vpop.f32.mrf.mxu0
    %v3182 = vadd.f32 %v3139, %v3181
    %3183 = vdwg.mxu0
    %3184 = vmatprep.subr.bf16.mxu0 %v2505
    %3185 = vmatpush1.bf16.msra.mxu0 %v2504
    %3186 = vmatprep.subr.bf16.mxu0 %v2495
    %3187 = vmatpush1.bf16.msra.mxu0 %v2494
    %3188 = vmatprep.subr.bf16.mxu0 %v2485
    %3189 = vmatpush1.bf16.msra.mxu0 %v2484
    %3190 = vmatprep.subr.bf16.mxu0 %v2475
    %3191 = vmatpush1.bf16.msra.mxu0 %v2474
    %3192 = vmatprep.subr.bf16.mxu0 %v2465
    %3193 = vmatpush1.bf16.msra.mxu0 %v2464
    %3194 = vmatprep.subr.bf16.mxu0 %v2455
    %3195 = vmatpush1.bf16.msra.mxu0 %v2454
    %3196 = vmatprep.subr.bf16.mxu0 %v2445
    %3197 = vmatpush1.bf16.msra.mxu0 %v2444
    %3198 = vmatprep.subr.bf16.mxu0 %v2435
    %3199 = vmatpush1.bf16.msra.mxu0 %v2434
    %3200 = vmatprep.subr.bf16.mxu0 %v2585
    %3201 = vmatpush2.bf16.msra.mxu0 %v2584
    %3202 = vmatprep.subr.bf16.mxu0 %v2575
    %3203 = vmatpush2.bf16.msra.mxu0 %v2574
    %3204 = vmatprep.subr.bf16.mxu0 %v2565
    %3205 = vmatpush2.bf16.msra.mxu0 %v2564
    %3206 = vmatprep.subr.bf16.mxu0 %v2555
    %3207 = vmatpush2.bf16.msra.mxu0 %v2554
    %3208 = vmatprep.subr.bf16.mxu0 %v2545
    %3209 = vmatpush2.bf16.msra.mxu0 %v2544
    %3210 = vmatprep.subr.bf16.mxu0 %v2535
    %3211 = vmatpush2.bf16.msra.mxu0 %v2534
    %3212 = vmatprep.subr.bf16.mxu0 %v2525
    %3213 = vmatpush2.bf16.msra.mxu0 %v2524
    %3214 = vmatprep.subr.bf16.mxu0 %v2515
    %3215 = vmatpush2.bf16.msra.mxu0 %v2514
    %3216 = vmatprep.mubr.bf16.mxu0 %v152
    %3217 = vmatmul.mubr.bf16.gmra.mxu0 %v151
    %v3218 = vpop.f32.mrf.mxu0
    %v3219 = vadd.f32 %v3176, %v3218
    %v3220 = vpop.f32.mrf.mxu0
    %v3221 = vadd.f32 %v3178, %v3220
    %v3222 = vpop.f32.mrf.mxu0
    %v3223 = vadd.f32 %v3180, %v3222
    %v3224 = vpop.f32.mrf.mxu0
    %v3225 = vadd.f32 %v3182, %v3224
    %3226 = vdwg.mxu0
    %3227 = vmatprep.subr.bf16.mxu0 0
    %3228 = vmatpush1.bf16.msra.mxu0 0
    %3229 = vmatprep.subr.bf16.mxu0 0
    %3230 = vmatpush1.bf16.msra.mxu0 0
    %3231 = vmatprep.subr.bf16.mxu0 0
    %3232 = vmatpush1.bf16.msra.mxu0 0
    %3233 = vmatprep.subr.bf16.mxu0 0
    %3234 = vmatpush1.bf16.msra.mxu0 0
    %3235 = vmatprep.subr.bf16.mxu0 0
    %3236 = vmatpush1.bf16.msra.mxu0 0
    %3237 = vmatprep.subr.bf16.mxu0 0
    %3238 = vmatpush1.bf16.msra.mxu0 0
    %3239 = vmatprep.subr.bf16.mxu0 0
    %3240 = vmatpush1.bf16.msra.mxu0 0
    %3241 = vmatprep.subr.bf16.mxu0 %v2595
    %3242 = vmatpush1.bf16.msra.mxu0 %v2594
    %3243 = vmatprep.subr.bf16.mxu0 0
    %3244 = vmatpush2.bf16.msra.mxu0 0
    %3245 = vmatprep.subr.bf16.mxu0 0
    %3246 = vmatpush2.bf16.msra.mxu0 0
    %3247 = vmatprep.subr.bf16.mxu0 0
    %3248 = vmatpush2.bf16.msra.mxu0 0
    %3249 = vmatprep.subr.bf16.mxu0 0
    %3250 = vmatpush2.bf16.msra.mxu0 0
    %3251 = vmatprep.subr.bf16.mxu0 0
    %3252 = vmatpush2.bf16.msra.mxu0 0
    %3253 = vmatprep.subr.bf16.mxu0 0
    %3254 = vmatpush2.bf16.msra.mxu0 0
    %3255 = vmatprep.subr.bf16.mxu0 0
    %3256 = vmatpush2.bf16.msra.mxu0 0
    %3257 = vmatprep.subr.bf16.mxu0 0
    %3258 = vmatpush2.bf16.msra.mxu0 0
    %3259 = vmatprep.mubr.bf16.mxu0 0
    %3260 = vmatmul.mubr.bf16.gmra.mxu0 %v3096
    %v3261 = vpop.f32.mrf.mxu0
    %v3262 = vadd.f32 %v3219, %v3261
    %v3263 = vpop.f32.mrf.mxu0
    %v3264 = vadd.f32 %v3221, %v3263
    %v3265 = vpop.f32.mrf.mxu0
    %v3266 = vadd.f32 %v3223, %v3265
    %v3267 = vpop.f32.mrf.mxu0
    %v3268 = vadd.f32 %v3225, %v3267
    %3269 = vdwg.mxu0
    %3270 = vmatprep.subr.bf16.mxu0 %v2187
    %3271 = vmatpush1.bf16.msra.mxu0 %v2186
    %3272 = vmatprep.subr.bf16.mxu0 %v2177
    %3273 = vmatpush1.bf16.msra.mxu0 %v2176
    %3274 = vmatprep.subr.bf16.mxu0 %v2167
    %3275 = vmatpush1.bf16.msra.mxu0 %v2166
    %3276 = vmatprep.subr.bf16.mxu0 %v2157
    %3277 = vmatpush1.bf16.msra.mxu0 %v2156
    %3278 = vmatprep.subr.bf16.mxu0 %v2147
    %3279 = vmatpush1.bf16.msra.mxu0 %v2146
    %3280 = vmatprep.subr.bf16.mxu0 %v2137
    %3281 = vmatpush1.bf16.msra.mxu0 %v2136
    %3282 = vmatprep.subr.bf16.mxu0 %v2127
    %3283 = vmatpush1.bf16.msra.mxu0 %v2126
    %3284 = vmatprep.subr.bf16.mxu0 %v2117
    %3285 = vmatpush1.bf16.msra.mxu0 %v2116
    %3286 = vmatprep.subr.bf16.mxu0 %v2267
    %3287 = vmatpush2.bf16.msra.mxu0 %v2266
    %3288 = vmatprep.subr.bf16.mxu0 %v2257
    %3289 = vmatpush2.bf16.msra.mxu0 %v2256
    %3290 = vmatprep.subr.bf16.mxu0 %v2247
    %3291 = vmatpush2.bf16.msra.mxu0 %v2246
    %3292 = vmatprep.subr.bf16.mxu0 %v2237
    %3293 = vmatpush2.bf16.msra.mxu0 %v2236
    %3294 = vmatprep.subr.bf16.mxu0 %v2227
    %3295 = vmatpush2.bf16.msra.mxu0 %v2226
    %3296 = vmatprep.subr.bf16.mxu0 %v2217
    %3297 = vmatpush2.bf16.msra.mxu0 %v2216
    %3298 = vmatprep.subr.bf16.mxu0 %v2207
    %3299 = vmatpush2.bf16.msra.mxu0 %v2206
    %3300 = vmatprep.subr.bf16.mxu0 %v2197
    %3301 = vmatpush2.bf16.msra.mxu0 %v2196
    %3302 = vmatprep.mubr.bf16.mxu0 %v148
    %3303 = vmatmul.mubr.bf16.gmra.mxu0 %v147
    %v3304 = vpop.f32.mrf.mxu0
    %v3305 = vadd.f32 0.0, %v3304
    %v3306 = vpop.f32.mrf.mxu0
    %v3307 = vadd.f32 0.0, %v3306
    %v3308 = vpop.f32.mrf.mxu0
    %v3309 = vadd.f32 0.0, %v3308
    %v3310 = vpop.f32.mrf.mxu0
    %v3311 = vadd.f32 0.0, %v3310
    %3312 = vdwg.mxu0
    %3313 = vmatprep.subr.bf16.mxu0 %v2347
    %3314 = vmatpush1.bf16.msra.mxu0 %v2346
    %3315 = vmatprep.subr.bf16.mxu0 %v2337
    %3316 = vmatpush1.bf16.msra.mxu0 %v2336
    %3317 = vmatprep.subr.bf16.mxu0 %v2327
    %3318 = vmatpush1.bf16.msra.mxu0 %v2326
    %3319 = vmatprep.subr.bf16.mxu0 %v2317
    %3320 = vmatpush1.bf16.msra.mxu0 %v2316
    %3321 = vmatprep.subr.bf16.mxu0 %v2307
    %3322 = vmatpush1.bf16.msra.mxu0 %v2306
    %3323 = vmatprep.subr.bf16.mxu0 %v2297
    %3324 = vmatpush1.bf16.msra.mxu0 %v2296
    %3325 = vmatprep.subr.bf16.mxu0 %v2287
    %3326 = vmatpush1.bf16.msra.mxu0 %v2286
    %3327 = vmatprep.subr.bf16.mxu0 %v2277
    %3328 = vmatpush1.bf16.msra.mxu0 %v2276
    %3329 = vmatprep.subr.bf16.mxu0 %v2427
    %3330 = vmatpush2.bf16.msra.mxu0 %v2426
    %3331 = vmatprep.subr.bf16.mxu0 %v2417
    %3332 = vmatpush2.bf16.msra.mxu0 %v2416
    %3333 = vmatprep.subr.bf16.mxu0 %v2407
    %3334 = vmatpush2.bf16.msra.mxu0 %v2406
    %3335 = vmatprep.subr.bf16.mxu0 %v2397
    %3336 = vmatpush2.bf16.msra.mxu0 %v2396
    %3337 = vmatprep.subr.bf16.mxu0 %v2387
    %3338 = vmatpush2.bf16.msra.mxu0 %v2386
    %3339 = vmatprep.subr.bf16.mxu0 %v2377
    %3340 = vmatpush2.bf16.msra.mxu0 %v2376
    %3341 = vmatprep.subr.bf16.mxu0 %v2367
    %3342 = vmatpush2.bf16.msra.mxu0 %v2366
    %3343 = vmatprep.subr.bf16.mxu0 %v2357
    %3344 = vmatpush2.bf16.msra.mxu0 %v2356
    %3345 = vmatprep.mubr.bf16.mxu0 %v150
    %3346 = vmatmul.mubr.bf16.gmra.mxu0 %v149
    %v3347 = vpop.f32.mrf.mxu0
    %v3348 = vadd.f32 %v3305, %v3347
    %v3349 = vpop.f32.mrf.mxu0
    %v3350 = vadd.f32 %v3307, %v3349
    %v3351 = vpop.f32.mrf.mxu0
    %v3352 = vadd.f32 %v3309, %v3351
    %v3353 = vpop.f32.mrf.mxu0
    %v3354 = vadd.f32 %v3311, %v3353
    %3355 = vdwg.mxu0
    %3356 = vmatprep.subr.bf16.mxu0 %v2507
    %3357 = vmatpush1.bf16.msra.mxu0 %v2506
    %3358 = vmatprep.subr.bf16.mxu0 %v2497
    %3359 = vmatpush1.bf16.msra.mxu0 %v2496
    %3360 = vmatprep.subr.bf16.mxu0 %v2487
    %3361 = vmatpush1.bf16.msra.mxu0 %v2486
    %3362 = vmatprep.subr.bf16.mxu0 %v2477
    %3363 = vmatpush1.bf16.msra.mxu0 %v2476
    %3364 = vmatprep.subr.bf16.mxu0 %v2467
    %3365 = vmatpush1.bf16.msra.mxu0 %v2466
    %3366 = vmatprep.subr.bf16.mxu0 %v2457
    %3367 = vmatpush1.bf16.msra.mxu0 %v2456
    %3368 = vmatprep.subr.bf16.mxu0 %v2447
    %3369 = vmatpush1.bf16.msra.mxu0 %v2446
    %3370 = vmatprep.subr.bf16.mxu0 %v2437
    %3371 = vmatpush1.bf16.msra.mxu0 %v2436
    %3372 = vmatprep.subr.bf16.mxu0 %v2587
    %3373 = vmatpush2.bf16.msra.mxu0 %v2586
    %3374 = vmatprep.subr.bf16.mxu0 %v2577
    %3375 = vmatpush2.bf16.msra.mxu0 %v2576
    %3376 = vmatprep.subr.bf16.mxu0 %v2567
    %3377 = vmatpush2.bf16.msra.mxu0 %v2566
    %3378 = vmatprep.subr.bf16.mxu0 %v2557
    %3379 = vmatpush2.bf16.msra.mxu0 %v2556
    %3380 = vmatprep.subr.bf16.mxu0 %v2547
    %3381 = vmatpush2.bf16.msra.mxu0 %v2546
    %3382 = vmatprep.subr.bf16.mxu0 %v2537
    %3383 = vmatpush2.bf16.msra.mxu0 %v2536
    %3384 = vmatprep.subr.bf16.mxu0 %v2527
    %3385 = vmatpush2.bf16.msra.mxu0 %v2526
    %3386 = vmatprep.subr.bf16.mxu0 %v2517
    %3387 = vmatpush2.bf16.msra.mxu0 %v2516
    %3388 = vmatprep.mubr.bf16.mxu0 %v152
    %3389 = vmatmul.mubr.bf16.gmra.mxu0 %v151
    %v3390 = vpop.f32.mrf.mxu0
    %v3391 = vadd.f32 %v3348, %v3390
    %v3392 = vpop.f32.mrf.mxu0
    %v3393 = vadd.f32 %v3350, %v3392
    %v3394 = vpop.f32.mrf.mxu0
    %v3395 = vadd.f32 %v3352, %v3394
    %v3396 = vpop.f32.mrf.mxu0
    %v3397 = vadd.f32 %v3354, %v3396
    %3398 = vdwg.mxu0
    %3399 = vmatprep.subr.bf16.mxu0 0
    %3400 = vmatpush1.bf16.msra.mxu0 0
    %3401 = vmatprep.subr.bf16.mxu0 0
    %3402 = vmatpush1.bf16.msra.mxu0 0
    %3403 = vmatprep.subr.bf16.mxu0 0
    %3404 = vmatpush1.bf16.msra.mxu0 0
    %3405 = vmatprep.subr.bf16.mxu0 0
    %3406 = vmatpush1.bf16.msra.mxu0 0
    %3407 = vmatprep.subr.bf16.mxu0 0
    %3408 = vmatpush1.bf16.msra.mxu0 0
    %3409 = vmatprep.subr.bf16.mxu0 0
    %3410 = vmatpush1.bf16.msra.mxu0 0
    %3411 = vmatprep.subr.bf16.mxu0 0
    %3412 = vmatpush1.bf16.msra.mxu0 0
    %3413 = vmatprep.subr.bf16.mxu0 %v2597
    %3414 = vmatpush1.bf16.msra.mxu0 %v2596
    %3415 = vmatprep.subr.bf16.mxu0 0
    %3416 = vmatpush2.bf16.msra.mxu0 0
    %3417 = vmatprep.subr.bf16.mxu0 0
    %3418 = vmatpush2.bf16.msra.mxu0 0
    %3419 = vmatprep.subr.bf16.mxu0 0
    %3420 = vmatpush2.bf16.msra.mxu0 0
    %3421 = vmatprep.subr.bf16.mxu0 0
    %3422 = vmatpush2.bf16.msra.mxu0 0
    %3423 = vmatprep.subr.bf16.mxu0 0
    %3424 = vmatpush2.bf16.msra.mxu0 0
    %3425 = vmatprep.subr.bf16.mxu0 0
    %3426 = vmatpush2.bf16.msra.mxu0 0
    %3427 = vmatprep.subr.bf16.mxu0 0
    %3428 = vmatpush2.bf16.msra.mxu0 0
    %3429 = vmatprep.subr.bf16.mxu0 0
    %3430 = vmatpush2.bf16.msra.mxu0 0
    %3431 = vmatprep.mubr.bf16.mxu0 0
    %3432 = vmatmul.mubr.bf16.gmra.mxu0 %v3096
    %v3433 = vpop.f32.mrf.mxu0
    %v3434 = vadd.f32 %v3391, %v3433
    %v3435 = vpop.f32.mrf.mxu0
    %v3436 = vadd.f32 %v3393, %v3435
    %v3437 = vpop.f32.mrf.mxu0
    %v3438 = vadd.f32 %v3395, %v3437
    %v3439 = vpop.f32.mrf.mxu0
    %v3440 = vadd.f32 %v3397, %v3439
    %3441 = vdwg.mxu0
    %3442 = vmatprep.subr.bf16.mxu0 %v2189
    %3443 = vmatpush1.bf16.msra.mxu0 %v2188
    %3444 = vmatprep.subr.bf16.mxu0 %v2179
    %3445 = vmatpush1.bf16.msra.mxu0 %v2178
    %3446 = vmatprep.subr.bf16.mxu0 %v2169
    %3447 = vmatpush1.bf16.msra.mxu0 %v2168
    %3448 = vmatprep.subr.bf16.mxu0 %v2159
    %3449 = vmatpush1.bf16.msra.mxu0 %v2158
    %3450 = vmatprep.subr.bf16.mxu0 %v2149
    %3451 = vmatpush1.bf16.msra.mxu0 %v2148
    %3452 = vmatprep.subr.bf16.mxu0 %v2139
    %3453 = vmatpush1.bf16.msra.mxu0 %v2138
    %3454 = vmatprep.subr.bf16.mxu0 %v2129
    %3455 = vmatpush1.bf16.msra.mxu0 %v2128
    %3456 = vmatprep.subr.bf16.mxu0 %v2119
    %3457 = vmatpush1.bf16.msra.mxu0 %v2118
    %3458 = vmatprep.subr.bf16.mxu0 %v2269
    %3459 = vmatpush2.bf16.msra.mxu0 %v2268
    %3460 = vmatprep.subr.bf16.mxu0 %v2259
    %3461 = vmatpush2.bf16.msra.mxu0 %v2258
    %3462 = vmatprep.subr.bf16.mxu0 %v2249
    %3463 = vmatpush2.bf16.msra.mxu0 %v2248
    %3464 = vmatprep.subr.bf16.mxu0 %v2239
    %3465 = vmatpush2.bf16.msra.mxu0 %v2238
    %3466 = vmatprep.subr.bf16.mxu0 %v2229
    %3467 = vmatpush2.bf16.msra.mxu0 %v2228
    %3468 = vmatprep.subr.bf16.mxu0 %v2219
    %3469 = vmatpush2.bf16.msra.mxu0 %v2218
    %3470 = vmatprep.subr.bf16.mxu0 %v2209
    %3471 = vmatpush2.bf16.msra.mxu0 %v2208
    %3472 = vmatprep.subr.bf16.mxu0 %v2199
    %3473 = vmatpush2.bf16.msra.mxu0 %v2198
    %3474 = vmatprep.mubr.bf16.mxu0 %v148
    %3475 = vmatmul.mubr.bf16.gmra.mxu0 %v147
    %v3476 = vpop.f32.mrf.mxu0
    %v3477 = vadd.f32 0.0, %v3476
    %v3478 = vpop.f32.mrf.mxu0
    %v3479 = vadd.f32 0.0, %v3478
    %v3480 = vpop.f32.mrf.mxu0
    %v3481 = vadd.f32 0.0, %v3480
    %v3482 = vpop.f32.mrf.mxu0
    %v3483 = vadd.f32 0.0, %v3482
    %3484 = vdwg.mxu0
    %3485 = vmatprep.subr.bf16.mxu0 %v2349
    %3486 = vmatpush1.bf16.msra.mxu0 %v2348
    %3487 = vmatprep.subr.bf16.mxu0 %v2339
    %3488 = vmatpush1.bf16.msra.mxu0 %v2338
    %3489 = vmatprep.subr.bf16.mxu0 %v2329
    %3490 = vmatpush1.bf16.msra.mxu0 %v2328
    %3491 = vmatprep.subr.bf16.mxu0 %v2319
    %3492 = vmatpush1.bf16.msra.mxu0 %v2318
    %3493 = vmatprep.subr.bf16.mxu0 %v2309
    %3494 = vmatpush1.bf16.msra.mxu0 %v2308
    %3495 = vmatprep.subr.bf16.mxu0 %v2299
    %3496 = vmatpush1.bf16.msra.mxu0 %v2298
    %3497 = vmatprep.subr.bf16.mxu0 %v2289
    %3498 = vmatpush1.bf16.msra.mxu0 %v2288
    %3499 = vmatprep.subr.bf16.mxu0 %v2279
    %3500 = vmatpush1.bf16.msra.mxu0 %v2278
    %3501 = vmatprep.subr.bf16.mxu0 %v2429
    %3502 = vmatpush2.bf16.msra.mxu0 %v2428
    %3503 = vmatprep.subr.bf16.mxu0 %v2419
    %3504 = vmatpush2.bf16.msra.mxu0 %v2418
    %3505 = vmatprep.subr.bf16.mxu0 %v2409
    %3506 = vmatpush2.bf16.msra.mxu0 %v2408
    %3507 = vmatprep.subr.bf16.mxu0 %v2399
    %3508 = vmatpush2.bf16.msra.mxu0 %v2398
    %3509 = vmatprep.subr.bf16.mxu0 %v2389
    %3510 = vmatpush2.bf16.msra.mxu0 %v2388
    %3511 = vmatprep.subr.bf16.mxu0 %v2379
    %3512 = vmatpush2.bf16.msra.mxu0 %v2378
    %3513 = vmatprep.subr.bf16.mxu0 %v2369
    %3514 = vmatpush2.bf16.msra.mxu0 %v2368
    %3515 = vmatprep.subr.bf16.mxu0 %v2359
    %3516 = vmatpush2.bf16.msra.mxu0 %v2358
    %3517 = vmatprep.mubr.bf16.mxu0 %v150
    %3518 = vmatmul.mubr.bf16.gmra.mxu0 %v149
    %v3519 = vpop.f32.mrf.mxu0
    %v3520 = vadd.f32 %v3477, %v3519
    %v3521 = vpop.f32.mrf.mxu0
    %v3522 = vadd.f32 %v3479, %v3521
    %v3523 = vpop.f32.mrf.mxu0
    %v3524 = vadd.f32 %v3481, %v3523
    %v3525 = vpop.f32.mrf.mxu0
    %v3526 = vadd.f32 %v3483, %v3525
    %3527 = vdwg.mxu0
    %3528 = vmatprep.subr.bf16.mxu0 %v2509
    %3529 = vmatpush1.bf16.msra.mxu0 %v2508
    %3530 = vmatprep.subr.bf16.mxu0 %v2499
    %3531 = vmatpush1.bf16.msra.mxu0 %v2498
    %3532 = vmatprep.subr.bf16.mxu0 %v2489
    %3533 = vmatpush1.bf16.msra.mxu0 %v2488
    %3534 = vmatprep.subr.bf16.mxu0 %v2479
    %3535 = vmatpush1.bf16.msra.mxu0 %v2478
    %3536 = vmatprep.subr.bf16.mxu0 %v2469
    %3537 = vmatpush1.bf16.msra.mxu0 %v2468
    %3538 = vmatprep.subr.bf16.mxu0 %v2459
    %3539 = vmatpush1.bf16.msra.mxu0 %v2458
    %3540 = vmatprep.subr.bf16.mxu0 %v2449
    %3541 = vmatpush1.bf16.msra.mxu0 %v2448
    %3542 = vmatprep.subr.bf16.mxu0 %v2439
    %3543 = vmatpush1.bf16.msra.mxu0 %v2438
    %3544 = vmatprep.subr.bf16.mxu0 %v2589
    %3545 = vmatpush2.bf16.msra.mxu0 %v2588
    %3546 = vmatprep.subr.bf16.mxu0 %v2579
    %3547 = vmatpush2.bf16.msra.mxu0 %v2578
    %3548 = vmatprep.subr.bf16.mxu0 %v2569
    %3549 = vmatpush2.bf16.msra.mxu0 %v2568
    %3550 = vmatprep.subr.bf16.mxu0 %v2559
    %3551 = vmatpush2.bf16.msra.mxu0 %v2558
    %3552 = vmatprep.subr.bf16.mxu0 %v2549
    %3553 = vmatpush2.bf16.msra.mxu0 %v2548
    %3554 = vmatprep.subr.bf16.mxu0 %v2539
    %3555 = vmatpush2.bf16.msra.mxu0 %v2538
    %3556 = vmatprep.subr.bf16.mxu0 %v2529
    %3557 = vmatpush2.bf16.msra.mxu0 %v2528
    %3558 = vmatprep.subr.bf16.mxu0 %v2519
    %3559 = vmatpush2.bf16.msra.mxu0 %v2518
    %3560 = vmatprep.mubr.bf16.mxu0 %v152
    %3561 = vmatmul.mubr.bf16.gmra.mxu0 %v151
    %v3562 = vpop.f32.mrf.mxu0
    %v3563 = vadd.f32 %v3520, %v3562
    %v3564 = vpop.f32.mrf.mxu0
    %v3565 = vadd.f32 %v3522, %v3564
    %v3566 = vpop.f32.mrf.mxu0
    %v3567 = vadd.f32 %v3524, %v3566
    %v3568 = vpop.f32.mrf.mxu0
    %v3569 = vadd.f32 %v3526, %v3568
    %3570 = vdwg.mxu0
    %3571 = vmatprep.subr.bf16.mxu0 0
    %3572 = vmatpush1.bf16.msra.mxu0 0
    %3573 = vmatprep.subr.bf16.mxu0 0
    %3574 = vmatpush1.bf16.msra.mxu0 0
    %3575 = vmatprep.subr.bf16.mxu0 0
    %3576 = vmatpush1.bf16.msra.mxu0 0
    %3577 = vmatprep.subr.bf16.mxu0 0
    %3578 = vmatpush1.bf16.msra.mxu0 0
    %3579 = vmatprep.subr.bf16.mxu0 0
    %3580 = vmatpush1.bf16.msra.mxu0 0
    %3581 = vmatprep.subr.bf16.mxu0 0
    %3582 = vmatpush1.bf16.msra.mxu0 0
    %3583 = vmatprep.subr.bf16.mxu0 0
    %3584 = vmatpush1.bf16.msra.mxu0 0
    %3585 = vmatprep.subr.bf16.mxu0 %v2599
    %3586 = vmatpush1.bf16.msra.mxu0 %v2598
    %3587 = vmatprep.subr.bf16.mxu0 0
    %3588 = vmatpush2.bf16.msra.mxu0 0
    %3589 = vmatprep.subr.bf16.mxu0 0
    %3590 = vmatpush2.bf16.msra.mxu0 0
    %3591 = vmatprep.subr.bf16.mxu0 0
    %3592 = vmatpush2.bf16.msra.mxu0 0
    %3593 = vmatprep.subr.bf16.mxu0 0
    %3594 = vmatpush2.bf16.msra.mxu0 0
    %3595 = vmatprep.subr.bf16.mxu0 0
    %3596 = vmatpush2.bf16.msra.mxu0 0
    %3597 = vmatprep.subr.bf16.mxu0 0
    %3598 = vmatpush2.bf16.msra.mxu0 0
    %3599 = vmatprep.subr.bf16.mxu0 0
    %3600 = vmatpush2.bf16.msra.mxu0 0
    %3601 = vmatprep.subr.bf16.mxu0 0
    %3602 = vmatpush2.bf16.msra.mxu0 0
    %3603 = vmatprep.mubr.bf16.mxu0 0
    %3604 = vmatmul.mubr.bf16.gmra.mxu0 %v3096
    %v3605 = vpop.f32.mrf.mxu0
    %v3606 = vadd.f32 %v3563, %v3605
    %v3607 = vpop.f32.mrf.mxu0
    %v3608 = vadd.f32 %v3565, %v3607
    %v3609 = vpop.f32.mrf.mxu0
    %v3610 = vadd.f32 %v3567, %v3609
    %v3611 = vpop.f32.mrf.mxu0
    %v3612 = vadd.f32 %v3569, %v3611
    %3613 = vdwg.mxu0
    %3614 = vmatprep.subr.bf16.mxu0 %v2191
    %3615 = vmatpush1.bf16.msra.mxu0 %v2190
    %3616 = vmatprep.subr.bf16.mxu0 %v2181
    %3617 = vmatpush1.bf16.msra.mxu0 %v2180
    %3618 = vmatprep.subr.bf16.mxu0 %v2171
    %3619 = vmatpush1.bf16.msra.mxu0 %v2170
    %3620 = vmatprep.subr.bf16.mxu0 %v2161
    %3621 = vmatpush1.bf16.msra.mxu0 %v2160
    %3622 = vmatprep.subr.bf16.mxu0 %v2151
    %3623 = vmatpush1.bf16.msra.mxu0 %v2150
    %3624 = vmatprep.subr.bf16.mxu0 %v2141
    %3625 = vmatpush1.bf16.msra.mxu0 %v2140
    %3626 = vmatprep.subr.bf16.mxu0 %v2131
    %3627 = vmatpush1.bf16.msra.mxu0 %v2130
    %3628 = vmatprep.subr.bf16.mxu0 %v2121
    %3629 = vmatpush1.bf16.msra.mxu0 %v2120
    %3630 = vmatprep.subr.bf16.mxu0 %v2271
    %3631 = vmatpush2.bf16.msra.mxu0 %v2270
    %3632 = vmatprep.subr.bf16.mxu0 %v2261
    %3633 = vmatpush2.bf16.msra.mxu0 %v2260
    %3634 = vmatprep.subr.bf16.mxu0 %v2251
    %3635 = vmatpush2.bf16.msra.mxu0 %v2250
    %3636 = vmatprep.subr.bf16.mxu0 %v2241
    %3637 = vmatpush2.bf16.msra.mxu0 %v2240
    %3638 = vmatprep.subr.bf16.mxu0 %v2231
    %3639 = vmatpush2.bf16.msra.mxu0 %v2230
    %3640 = vmatprep.subr.bf16.mxu0 %v2221
    %3641 = vmatpush2.bf16.msra.mxu0 %v2220
    %3642 = vmatprep.subr.bf16.mxu0 %v2211
    %3643 = vmatpush2.bf16.msra.mxu0 %v2210
    %3644 = vmatprep.subr.bf16.mxu0 %v2201
    %3645 = vmatpush2.bf16.msra.mxu0 %v2200
    %3646 = vmatprep.mubr.bf16.mxu0 %v148
    %3647 = vmatmul.mubr.bf16.gmra.mxu0 %v147
    %v3648 = vpop.f32.mrf.mxu0
    %v3649 = vadd.f32 0.0, %v3648
    %v3650 = vpop.f32.mrf.mxu0
    %v3651 = vadd.f32 0.0, %v3650
    %v3652 = vpop.f32.mrf.mxu0
    %v3653 = vadd.f32 0.0, %v3652
    %v3654 = vpop.f32.mrf.mxu0
    %v3655 = vadd.f32 0.0, %v3654
    %3656 = vdwg.mxu0
    %3657 = vmatprep.subr.bf16.mxu0 %v2351
    %3658 = vmatpush1.bf16.msra.mxu0 %v2350
    %3659 = vmatprep.subr.bf16.mxu0 %v2341
    %3660 = vmatpush1.bf16.msra.mxu0 %v2340
    %3661 = vmatprep.subr.bf16.mxu0 %v2331
    %3662 = vmatpush1.bf16.msra.mxu0 %v2330
    %3663 = vmatprep.subr.bf16.mxu0 %v2321
    %3664 = vmatpush1.bf16.msra.mxu0 %v2320
    %3665 = vmatprep.subr.bf16.mxu0 %v2311
    %3666 = vmatpush1.bf16.msra.mxu0 %v2310
    %3667 = vmatprep.subr.bf16.mxu0 %v2301
    %3668 = vmatpush1.bf16.msra.mxu0 %v2300
    %3669 = vmatprep.subr.bf16.mxu0 %v2291
    %3670 = vmatpush1.bf16.msra.mxu0 %v2290
    %3671 = vmatprep.subr.bf16.mxu0 %v2281
    %3672 = vmatpush1.bf16.msra.mxu0 %v2280
    %3673 = vmatprep.subr.bf16.mxu0 %v2431
    %3674 = vmatpush2.bf16.msra.mxu0 %v2430
    %3675 = vmatprep.subr.bf16.mxu0 %v2421
    %3676 = vmatpush2.bf16.msra.mxu0 %v2420
    %3677 = vmatprep.subr.bf16.mxu0 %v2411
    %3678 = vmatpush2.bf16.msra.mxu0 %v2410
    %3679 = vmatprep.subr.bf16.mxu0 %v2401
    %3680 = vmatpush2.bf16.msra.mxu0 %v2400
    %3681 = vmatprep.subr.bf16.mxu0 %v2391
    %3682 = vmatpush2.bf16.msra.mxu0 %v2390
    %3683 = vmatprep.subr.bf16.mxu0 %v2381
    %3684 = vmatpush2.bf16.msra.mxu0 %v2380
    %3685 = vmatprep.subr.bf16.mxu0 %v2371
    %3686 = vmatpush2.bf16.msra.mxu0 %v2370
    %3687 = vmatprep.subr.bf16.mxu0 %v2361
    %3688 = vmatpush2.bf16.msra.mxu0 %v2360
    %3689 = vmatprep.mubr.bf16.mxu0 %v150
    %3690 = vmatmul.mubr.bf16.gmra.mxu0 %v149
    %v3691 = vpop.f32.mrf.mxu0
    %v3692 = vadd.f32 %v3649, %v3691
    %v3693 = vpop.f32.mrf.mxu0
    %v3694 = vadd.f32 %v3651, %v3693
    %v3695 = vpop.f32.mrf.mxu0
    %v3696 = vadd.f32 %v3653, %v3695
    %v3697 = vpop.f32.mrf.mxu0
    %v3698 = vadd.f32 %v3655, %v3697
    %3699 = vdwg.mxu0
    %3700 = vmatprep.subr.bf16.mxu0 %v2511
    %3701 = vmatpush1.bf16.msra.mxu0 %v2510
    %3702 = vmatprep.subr.bf16.mxu0 %v2501
    %3703 = vmatpush1.bf16.msra.mxu0 %v2500
    %3704 = vmatprep.subr.bf16.mxu0 %v2491
    %3705 = vmatpush1.bf16.msra.mxu0 %v2490
    %3706 = vmatprep.subr.bf16.mxu0 %v2481
    %3707 = vmatpush1.bf16.msra.mxu0 %v2480
    %3708 = vmatprep.subr.bf16.mxu0 %v2471
    %3709 = vmatpush1.bf16.msra.mxu0 %v2470
    %3710 = vmatprep.subr.bf16.mxu0 %v2461
    %3711 = vmatpush1.bf16.msra.mxu0 %v2460
    %3712 = vmatprep.subr.bf16.mxu0 %v2451
    %3713 = vmatpush1.bf16.msra.mxu0 %v2450
    %3714 = vmatprep.subr.bf16.mxu0 %v2441
    %3715 = vmatpush1.bf16.msra.mxu0 %v2440
    %3716 = vmatprep.subr.bf16.mxu0 %v2591
    %3717 = vmatpush2.bf16.msra.mxu0 %v2590
    %3718 = vmatprep.subr.bf16.mxu0 %v2581
    %3719 = vmatpush2.bf16.msra.mxu0 %v2580
    %3720 = vmatprep.subr.bf16.mxu0 %v2571
    %3721 = vmatpush2.bf16.msra.mxu0 %v2570
    %3722 = vmatprep.subr.bf16.mxu0 %v2561
    %3723 = vmatpush2.bf16.msra.mxu0 %v2560
    %3724 = vmatprep.subr.bf16.mxu0 %v2551
    %3725 = vmatpush2.bf16.msra.mxu0 %v2550
    %3726 = vmatprep.subr.bf16.mxu0 %v2541
    %3727 = vmatpush2.bf16.msra.mxu0 %v2540
    %3728 = vmatprep.subr.bf16.mxu0 %v2531
    %3729 = vmatpush2.bf16.msra.mxu0 %v2530
    %3730 = vmatprep.subr.bf16.mxu0 %v2521
    %3731 = vmatpush2.bf16.msra.mxu0 %v2520
    %3732 = vmatprep.mubr.bf16.mxu0 %v152
    %3733 = vmatmul.mubr.bf16.gmra.mxu0 %v151
    %v3734 = vpop.f32.mrf.mxu0
    %v3735 = vadd.f32 %v3692, %v3734
    %v3736 = vpop.f32.mrf.mxu0
    %v3737 = vadd.f32 %v3694, %v3736
    %v3738 = vpop.f32.mrf.mxu0
    %v3739 = vadd.f32 %v3696, %v3738
    %v3740 = vpop.f32.mrf.mxu0
    %v3741 = vadd.f32 %v3698, %v3740
    %3742 = vdwg.mxu0
    %3743 = vmatprep.subr.bf16.mxu0 0
    %3744 = vmatpush1.bf16.msra.mxu0 0
    %3745 = vmatprep.subr.bf16.mxu0 0
    %3746 = vmatpush1.bf16.msra.mxu0 0
    %3747 = vmatprep.subr.bf16.mxu0 0
    %3748 = vmatpush1.bf16.msra.mxu0 0
    %3749 = vmatprep.subr.bf16.mxu0 0
    %3750 = vmatpush1.bf16.msra.mxu0 0
    %3751 = vmatprep.subr.bf16.mxu0 0
    %3752 = vmatpush1.bf16.msra.mxu0 0
    %3753 = vmatprep.subr.bf16.mxu0 0
    %3754 = vmatpush1.bf16.msra.mxu0 0
    %3755 = vmatprep.subr.bf16.mxu0 0
    %3756 = vmatpush1.bf16.msra.mxu0 0
    %3757 = vmatprep.subr.bf16.mxu0 %v2601
    %3758 = vmatpush1.bf16.msra.mxu0 %v2600
    %3759 = vmatprep.subr.bf16.mxu0 0
    %3760 = vmatpush2.bf16.msra.mxu0 0
    %3761 = vmatprep.subr.bf16.mxu0 0
    %3762 = vmatpush2.bf16.msra.mxu0 0
    %3763 = vmatprep.subr.bf16.mxu0 0
    %3764 = vmatpush2.bf16.msra.mxu0 0
    %3765 = vmatprep.subr.bf16.mxu0 0
    %3766 = vmatpush2.bf16.msra.mxu0 0
    %3767 = vmatprep.subr.bf16.mxu0 0
    %3768 = vmatpush2.bf16.msra.mxu0 0
    %3769 = vmatprep.subr.bf16.mxu0 0
    %3770 = vmatpush2.bf16.msra.mxu0 0
    %3771 = vmatprep.subr.bf16.mxu0 0
    %3772 = vmatpush2.bf16.msra.mxu0 0
    %3773 = vmatprep.subr.bf16.mxu0 0
    %3774 = vmatpush2.bf16.msra.mxu0 0
    %3775 = vmatprep.mubr.bf16.mxu0 0
    %3776 = vmatmul.mubr.bf16.gmra.mxu0 %v3096
    %v3777 = vpop.f32.mrf.mxu0
    %v3778 = vadd.f32 %v3735, %v3777
    %v3779 = vpop.f32.mrf.mxu0
    %v3780 = vadd.f32 %v3737, %v3779
    %v3781 = vpop.f32.mrf.mxu0
    %v3782 = vadd.f32 %v3739, %v3781
    %v3783 = vpop.f32.mrf.mxu0
    %v3784 = vadd.f32 %v3741, %v3783
    %3785 = vdwg.mxu0
    %3786 = vmatprep.subr.bf16.mxu0 %v2193
    %3787 = vmatpush1.bf16.msra.mxu0 %v2192
    %3788 = vmatprep.subr.bf16.mxu0 %v2183
    %3789 = vmatpush1.bf16.msra.mxu0 %v2182
    %3790 = vmatprep.subr.bf16.mxu0 %v2173
    %3791 = vmatpush1.bf16.msra.mxu0 %v2172
    %3792 = vmatprep.subr.bf16.mxu0 %v2163
    %3793 = vmatpush1.bf16.msra.mxu0 %v2162
    %3794 = vmatprep.subr.bf16.mxu0 %v2153
    %3795 = vmatpush1.bf16.msra.mxu0 %v2152
    %3796 = vmatprep.subr.bf16.mxu0 %v2143
    %3797 = vmatpush1.bf16.msra.mxu0 %v2142
    %3798 = vmatprep.subr.bf16.mxu0 %v2133
    %3799 = vmatpush1.bf16.msra.mxu0 %v2132
    %3800 = vmatprep.subr.bf16.mxu0 %v2123
    %3801 = vmatpush1.bf16.msra.mxu0 %v2122
    %3802 = vmatprep.subr.bf16.mxu0 %v2273
    %3803 = vmatpush2.bf16.msra.mxu0 %v2272
    %3804 = vmatprep.subr.bf16.mxu0 %v2263
    %3805 = vmatpush2.bf16.msra.mxu0 %v2262
    %3806 = vmatprep.subr.bf16.mxu0 %v2253
    %3807 = vmatpush2.bf16.msra.mxu0 %v2252
    %3808 = vmatprep.subr.bf16.mxu0 %v2243
    %3809 = vmatpush2.bf16.msra.mxu0 %v2242
    %3810 = vmatprep.subr.bf16.mxu0 %v2233
    %3811 = vmatpush2.bf16.msra.mxu0 %v2232
    %3812 = vmatprep.subr.bf16.mxu0 %v2223
    %3813 = vmatpush2.bf16.msra.mxu0 %v2222
    %3814 = vmatprep.subr.bf16.mxu0 %v2213
    %3815 = vmatpush2.bf16.msra.mxu0 %v2212
    %3816 = vmatprep.subr.bf16.mxu0 %v2203
    %3817 = vmatpush2.bf16.msra.mxu0 %v2202
    %3818 = vmatprep.mubr.bf16.mxu0 %v148
    %3819 = vmatmul.mubr.bf16.gmra.mxu0 %v147
    %v3820 = vpop.f32.mrf.mxu0
    %v3821 = vadd.f32 0.0, %v3820
    %v3822 = vpop.f32.mrf.mxu0
    %v3823 = vadd.f32 0.0, %v3822
    %v3824 = vpop.f32.mrf.mxu0
    %v3825 = vadd.f32 0.0, %v3824
    %v3826 = vpop.f32.mrf.mxu0
    %v3827 = vadd.f32 0.0, %v3826
    %3828 = vdwg.mxu0
    %3829 = vmatprep.subr.bf16.mxu0 %v2353
    %3830 = vmatpush1.bf16.msra.mxu0 %v2352
    %3831 = vmatprep.subr.bf16.mxu0 %v2343
    %3832 = vmatpush1.bf16.msra.mxu0 %v2342
    %3833 = vmatprep.subr.bf16.mxu0 %v2333
    %3834 = vmatpush1.bf16.msra.mxu0 %v2332
    %3835 = vmatprep.subr.bf16.mxu0 %v2323
    %3836 = vmatpush1.bf16.msra.mxu0 %v2322
    %3837 = vmatprep.subr.bf16.mxu0 %v2313
    %3838 = vmatpush1.bf16.msra.mxu0 %v2312
    %3839 = vmatprep.subr.bf16.mxu0 %v2303
    %3840 = vmatpush1.bf16.msra.mxu0 %v2302
    %3841 = vmatprep.subr.bf16.mxu0 %v2293
    %3842 = vmatpush1.bf16.msra.mxu0 %v2292
    %3843 = vmatprep.subr.bf16.mxu0 %v2283
    %3844 = vmatpush1.bf16.msra.mxu0 %v2282
    %3845 = vmatprep.subr.bf16.mxu0 %v2433
    %3846 = vmatpush2.bf16.msra.mxu0 %v2432
    %3847 = vmatprep.subr.bf16.mxu0 %v2423
    %3848 = vmatpush2.bf16.msra.mxu0 %v2422
    %3849 = vmatprep.subr.bf16.mxu0 %v2413
    %3850 = vmatpush2.bf16.msra.mxu0 %v2412
    %3851 = vmatprep.subr.bf16.mxu0 %v2403
    %3852 = vmatpush2.bf16.msra.mxu0 %v2402
    %3853 = vmatprep.subr.bf16.mxu0 %v2393
    %3854 = vmatpush2.bf16.msra.mxu0 %v2392
    %3855 = vmatprep.subr.bf16.mxu0 %v2383
    %3856 = vmatpush2.bf16.msra.mxu0 %v2382
    %3857 = vmatprep.subr.bf16.mxu0 %v2373
    %3858 = vmatpush2.bf16.msra.mxu0 %v2372
    %3859 = vmatprep.subr.bf16.mxu0 %v2363
    %3860 = vmatpush2.bf16.msra.mxu0 %v2362
    %3861 = vmatprep.mubr.bf16.mxu0 %v150
    %3862 = vmatmul.mubr.bf16.gmra.mxu0 %v149
    %v3863 = vpop.f32.mrf.mxu0
    %v3864 = vadd.f32 %v3821, %v3863
    %v3865 = vpop.f32.mrf.mxu0
    %v3866 = vadd.f32 %v3823, %v3865
    %v3867 = vpop.f32.mrf.mxu0
    %v3868 = vadd.f32 %v3825, %v3867
    %v3869 = vpop.f32.mrf.mxu0
    %v3870 = vadd.f32 %v3827, %v3869
    %3871 = vdwg.mxu0
    %3872 = vmatprep.subr.bf16.mxu0 %v2513
    %3873 = vmatpush1.bf16.msra.mxu0 %v2512
    %3874 = vmatprep.subr.bf16.mxu0 %v2503
    %3875 = vmatpush1.bf16.msra.mxu0 %v2502
    %3876 = vmatprep.subr.bf16.mxu0 %v2493
    %3877 = vmatpush1.bf16.msra.mxu0 %v2492
    %3878 = vmatprep.subr.bf16.mxu0 %v2483
    %3879 = vmatpush1.bf16.msra.mxu0 %v2482
    %3880 = vmatprep.subr.bf16.mxu0 %v2473
    %3881 = vmatpush1.bf16.msra.mxu0 %v2472
    %3882 = vmatprep.subr.bf16.mxu0 %v2463
    %3883 = vmatpush1.bf16.msra.mxu0 %v2462
    %3884 = vmatprep.subr.bf16.mxu0 %v2453
    %3885 = vmatpush1.bf16.msra.mxu0 %v2452
    %3886 = vmatprep.subr.bf16.mxu0 %v2443
    %3887 = vmatpush1.bf16.msra.mxu0 %v2442
    %3888 = vmatprep.subr.bf16.mxu0 %v2593
    %3889 = vmatpush2.bf16.msra.mxu0 %v2592
    %3890 = vmatprep.subr.bf16.mxu0 %v2583
    %3891 = vmatpush2.bf16.msra.mxu0 %v2582
    %3892 = vmatprep.subr.bf16.mxu0 %v2573
    %3893 = vmatpush2.bf16.msra.mxu0 %v2572
    %3894 = vmatprep.subr.bf16.mxu0 %v2563
    %3895 = vmatpush2.bf16.msra.mxu0 %v2562
    %3896 = vmatprep.subr.bf16.mxu0 %v2553
    %3897 = vmatpush2.bf16.msra.mxu0 %v2552
    %3898 = vmatprep.subr.bf16.mxu0 %v2543
    %3899 = vmatpush2.bf16.msra.mxu0 %v2542
    %3900 = vmatprep.subr.bf16.mxu0 %v2533
    %3901 = vmatpush2.bf16.msra.mxu0 %v2532
    %3902 = vmatprep.subr.bf16.mxu0 %v2523
    %3903 = vmatpush2.bf16.msra.mxu0 %v2522
    %3904 = vmatprep.mubr.bf16.mxu0 %v152
    %3905 = vmatmul.mubr.bf16.gmra.mxu0 %v151
    %v3906 = vpop.f32.mrf.mxu0
    %v3907 = vadd.f32 %v3864, %v3906
    %v3908 = vpop.f32.mrf.mxu0
    %v3909 = vadd.f32 %v3866, %v3908
    %v3910 = vpop.f32.mrf.mxu0
    %v3911 = vadd.f32 %v3868, %v3910
    %v3912 = vpop.f32.mrf.mxu0
    %v3913 = vadd.f32 %v3870, %v3912
    %3914 = vdwg.mxu0
    %3915 = vmatprep.subr.bf16.mxu0 0
    %3916 = vmatpush1.bf16.msra.mxu0 0
    %3917 = vmatprep.subr.bf16.mxu0 0
    %3918 = vmatpush1.bf16.msra.mxu0 0
    %3919 = vmatprep.subr.bf16.mxu0 0
    %3920 = vmatpush1.bf16.msra.mxu0 0
    %3921 = vmatprep.subr.bf16.mxu0 0
    %3922 = vmatpush1.bf16.msra.mxu0 0
    %3923 = vmatprep.subr.bf16.mxu0 0
    %3924 = vmatpush1.bf16.msra.mxu0 0
    %3925 = vmatprep.subr.bf16.mxu0 0
    %3926 = vmatpush1.bf16.msra.mxu0 0
    %3927 = vmatprep.subr.bf16.mxu0 0
    %3928 = vmatpush1.bf16.msra.mxu0 0
    %3929 = vmatprep.subr.bf16.mxu0 %v2603
    %3930 = vmatpush1.bf16.msra.mxu0 %v2602
    %3931 = vmatprep.subr.bf16.mxu0 0
    %3932 = vmatpush2.bf16.msra.mxu0 0
    %3933 = vmatprep.subr.bf16.mxu0 0
    %3934 = vmatpush2.bf16.msra.mxu0 0
    %3935 = vmatprep.subr.bf16.mxu0 0
    %3936 = vmatpush2.bf16.msra.mxu0 0
    %3937 = vmatprep.subr.bf16.mxu0 0
    %3938 = vmatpush2.bf16.msra.mxu0 0
    %3939 = vmatprep.subr.bf16.mxu0 0
    %3940 = vmatpush2.bf16.msra.mxu0 0
    %3941 = vmatprep.subr.bf16.mxu0 0
    %3942 = vmatpush2.bf16.msra.mxu0 0
    %3943 = vmatprep.subr.bf16.mxu0 0
    %3944 = vmatpush2.bf16.msra.mxu0 0
    %3945 = vmatprep.subr.bf16.mxu0 0
    %3946 = vmatpush2.bf16.msra.mxu0 0
    %3947 = vmatprep.mubr.bf16.mxu0 0
    %3948 = vmatmul.mubr.bf16.gmra.mxu0 %v3096
    %v3949 = vpop.f32.mrf.mxu0
    %v3950 = vadd.f32 %v3907, %v3949
    %v3951 = vpop.f32.mrf.mxu0
    %v3952 = vadd.f32 %v3909, %v3951
    %v3953 = vpop.f32.mrf.mxu0
    %v3954 = vadd.f32 %v3911, %v3953
    %v3955 = vpop.f32.mrf.mxu0
    %v3956 = vadd.f32 %v3913, %v3955
    %3957 = vdwg.mxu0
    %v3958 = vld [vmem:[#allocation7] sm:$0xff]
    %v3959 = vld [vmem:[#allocation7 + $0x8] sm:$0x3]
    %v3960 = vld [vmem:[#allocation8] sm:$0xff]
    %v3961 = vld [vmem:[#allocation8 + $0x8] sm:$0x3]
    %v3962 = vadd.f32 %v3262, %v3266
    %v3963 = vrot.slane %v3962, 4
    %v3964 = vadd.f32 %v3962, %v3963
    %v3965 = vrot.slane %v3964, 2
    %v3966 = vadd.f32 %v3964, %v3965
    %v3967 = vrot.slane %v3966, 1
    %v3968 = vadd.f32 %v3966, %v3967
    %v3969 = vadd.f32 %v3264, %v3268
    %v3970 = vrot.slane %v3969, 4
    %v3971 = vadd.f32 %v3969, %v3970
    %v3972 = vrot.slane %v3971, 2
    %v3973 = vadd.f32 %v3971, %v3972
    %v3974 = vrot.slane %v3973, 1
    %v3975 = vadd.f32 %v3973, %v3974
    %v3976 = vadd.f32 %v3434, %v3438
    %v3977 = vrot.slane %v3976, 4
    %v3978 = vadd.f32 %v3976, %v3977
    %v3979 = vrot.slane %v3978, 2
    %v3980 = vadd.f32 %v3978, %v3979
    %v3981 = vrot.slane %v3980, 1
    %v3982 = vadd.f32 %v3980, %v3981
    %v3983 = vadd.f32 %v3436, %v3440
    %v3984 = vrot.slane %v3983, 4
    %v3985 = vadd.f32 %v3983, %v3984
    %v3986 = vrot.slane %v3985, 2
    %v3987 = vadd.f32 %v3985, %v3986
    %v3988 = vrot.slane %v3987, 1
    %v3989 = vadd.f32 %v3987, %v3988
    %v3990 = vadd.f32 %v3606, %v3610
    %v3991 = vrot.slane %v3990, 4
    %v3992 = vadd.f32 %v3990, %v3991
    %v3993 = vrot.slane %v3992, 2
    %v3994 = vadd.f32 %v3992, %v3993
    %v3995 = vrot.slane %v3994, 1
    %v3996 = vadd.f32 %v3994, %v3995
    %v3997 = vadd.f32 %v3608, %v3612
    %v3998 = vrot.slane %v3997, 4
    %v3999 = vadd.f32 %v3997, %v3998
    %v4000 = vrot.slane %v3999, 2
    %v4001 = vadd.f32 %v3999, %v4000
    %v4002 = vrot.slane %v4001, 1
    %v4003 = vadd.f32 %v4001, %v4002
    %v4004 = vadd.f32 %v3778, %v3782
    %v4005 = vrot.slane %v4004, 4
    %v4006 = vadd.f32 %v4004, %v4005
    %v4007 = vrot.slane %v4006, 2
    %v4008 = vadd.f32 %v4006, %v4007
    %v4009 = vrot.slane %v4008, 1
    %v4010 = vadd.f32 %v4008, %v4009
    %v4011 = vadd.f32 %v3780, %v3784
    %v4012 = vrot.slane %v4011, 4
    %v4013 = vadd.f32 %v4011, %v4012
    %v4014 = vrot.slane %v4013, 2
    %v4015 = vadd.f32 %v4013, %v4014
    %v4016 = vrot.slane %v4015, 1
    %v4017 = vadd.f32 %v4015, %v4016
    %v4018 = vadd.f32 %v3950, %v3954
    %v4019 = vrot.slane %v4018, 4
    %v4020 = vadd.f32 %v4018, %v4019
    %v4021 = vrot.slane %v4020, 2
    %v4022 = vadd.f32 %v4020, %v4021
    %v4023 = vrot.slane %v4022, 1
    %v4024 = vadd.f32 %v4022, %v4023
    %vm4025 = vcmask 392192
    %v4026 = vsel %vm4025, %v3952, 0.0
    %v4027 = vsel %vm4025, %v3956, 0.0
    %v4028 = vadd.f32 %v4026, %v4027
    %v4029 = vrot.slane %v4028, 4
    %v4030 = vadd.f32 %v4028, %v4029
    %v4031 = vrot.slane %v4030, 2
    %v4032 = vadd.f32 %v4030, %v4031
    %v4033 = vrot.slane %v4032, 1
    %v4034 = vadd.f32 %v4032, %v4033
    %v4035 = vrcp.pop 16.0
    %v4036 = vmul.f32 %v3968, %v4035
    %v4037 = vmul.f32 %v3975, %v4035
    %v4038 = vmul.f32 %v3982, %v4035
    %v4039 = vmul.f32 %v3989, %v4035
    %v4040 = vmul.f32 %v3996, %v4035
    %v4041 = vmul.f32 %v4003, %v4035
    %v4042 = vmul.f32 %v4010, %v4035
    %v4043 = vmul.f32 %v4017, %v4035
    %v4044 = vmul.f32 %v4024, %v4035
    %v4045 = vmul.f32 %v4034, %v4035
    %v4046 = vmul.f32 %v3262, %v3262
    %v4047 = vmul.f32 %v3264, %v3264
    %v4048 = vmul.f32 %v3434, %v3434
    %v4049 = vmul.f32 %v3436, %v3436
    %v4050 = vmul.f32 %v3606, %v3606
    %v4051 = vmul.f32 %v3608, %v3608
    %v4052 = vmul.f32 %v3778, %v3778
    %v4053 = vmul.f32 %v3780, %v3780
    %v4054 = vmul.f32 %v3950, %v3950
    %v4055 = vmul.f32 %v3952, %v3952
    %v4056 = vmul.f32 %v3266, %v3266
    %v4057 = vmul.f32 %v3268, %v3268
    %v4058 = vmul.f32 %v3438, %v3438
    %v4059 = vmul.f32 %v3440, %v3440
    %v4060 = vmul.f32 %v3610, %v3610
    %v4061 = vmul.f32 %v3612, %v3612
    %v4062 = vmul.f32 %v3782, %v3782
    %v4063 = vmul.f32 %v3784, %v3784
    %v4064 = vmul.f32 %v3954, %v3954
    %v4065 = vmul.f32 %v3956, %v3956
    %v4066 = vadd.f32 %v4046, %v4056
    %v4067 = vrot.slane %v4066, 4
    %v4068 = vadd.f32 %v4066, %v4067
    %v4069 = vrot.slane %v4068, 2
    %v4070 = vadd.f32 %v4068, %v4069
    %v4071 = vrot.slane %v4070, 1
    %v4072 = vadd.f32 %v4070, %v4071
    %v4073 = vadd.f32 %v4047, %v4057
    %v4074 = vrot.slane %v4073, 4
    %v4075 = vadd.f32 %v4073, %v4074
    %v4076 = vrot.slane %v4075, 2
    %v4077 = vadd.f32 %v4075, %v4076
    %v4078 = vrot.slane %v4077, 1
    %v4079 = vadd.f32 %v4077, %v4078
    %v4080 = vadd.f32 %v4048, %v4058
    %v4081 = vrot.slane %v4080, 4
    %v4082 = vadd.f32 %v4080, %v4081
    %v4083 = vrot.slane %v4082, 2
    %v4084 = vadd.f32 %v4082, %v4083
    %v4085 = vrot.slane %v4084, 1
    %v4086 = vadd.f32 %v4084, %v4085
    %v4087 = vadd.f32 %v4049, %v4059
    %v4088 = vrot.slane %v4087, 4
    %v4089 = vadd.f32 %v4087, %v4088
    %v4090 = vrot.slane %v4089, 2
    %v4091 = vadd.f32 %v4089, %v4090
    %v4092 = vrot.slane %v4091, 1
    %v4093 = vadd.f32 %v4091, %v4092
    %v4094 = vadd.f32 %v4050, %v4060
    %v4095 = vrot.slane %v4094, 4
    %v4096 = vadd.f32 %v4094, %v4095
    %v4097 = vrot.slane %v4096, 2
    %v4098 = vadd.f32 %v4096, %v4097
    %v4099 = vrot.slane %v4098, 1
    %v4100 = vadd.f32 %v4098, %v4099
    %v4101 = vadd.f32 %v4051, %v4061
    %v4102 = vrot.slane %v4101, 4
    %v4103 = vadd.f32 %v4101, %v4102
    %v4104 = vrot.slane %v4103, 2
    %v4105 = vadd.f32 %v4103, %v4104
    %v4106 = vrot.slane %v4105, 1
    %v4107 = vadd.f32 %v4105, %v4106
    %v4108 = vadd.f32 %v4052, %v4062
    %v4109 = vrot.slane %v4108, 4
    %v4110 = vadd.f32 %v4108, %v4109
    %v4111 = vrot.slane %v4110, 2
    %v4112 = vadd.f32 %v4110, %v4111
    %v4113 = vrot.slane %v4112, 1
    %v4114 = vadd.f32 %v4112, %v4113
    %v4115 = vadd.f32 %v4053, %v4063
    %v4116 = vrot.slane %v4115, 4
    %v4117 = vadd.f32 %v4115, %v4116
    %v4118 = vrot.slane %v4117, 2
    %v4119 = vadd.f32 %v4117, %v4118
    %v4120 = vrot.slane %v4119, 1
    %v4121 = vadd.f32 %v4119, %v4120
    %v4122 = vadd.f32 %v4054, %v4064
    %v4123 = vrot.slane %v4122, 4
    %v4124 = vadd.f32 %v4122, %v4123
    %v4125 = vrot.slane %v4124, 2
    %v4126 = vadd.f32 %v4124, %v4125
    %v4127 = vrot.slane %v4126, 1
    %v4128 = vadd.f32 %v4126, %v4127
    %v4129 = vsel %vm4025, %v4055, 0.0
    %v4130 = vsel %vm4025, %v4065, 0.0
    %v4131 = vadd.f32 %v4129, %v4130
    %v4132 = vrot.slane %v4131, 4
    %v4133 = vadd.f32 %v4131, %v4132
    %v4134 = vrot.slane %v4133, 2
    %v4135 = vadd.f32 %v4133, %v4134
    %v4136 = vrot.slane %v4135, 1
    %v4137 = vadd.f32 %v4135, %v4136
    %v4138 = vmul.f32 %v4072, %v4035
    %v4139 = vmul.f32 %v4079, %v4035
    %v4140 = vmul.f32 %v4086, %v4035
    %v4141 = vmul.f32 %v4093, %v4035
    %v4142 = vmul.f32 %v4100, %v4035
    %v4143 = vmul.f32 %v4107, %v4035
    %v4144 = vmul.f32 %v4114, %v4035
    %v4145 = vmul.f32 %v4121, %v4035
    %v4146 = vmul.f32 %v4128, %v4035
    %v4147 = vmul.f32 %v4137, %v4035
    %v4148 = vmul.f32 %v4036, %v4036
    %v4149 = vmul.f32 %v4037, %v4037
    %v4150 = vmul.f32 %v4038, %v4038
    %v4151 = vmul.f32 %v4039, %v4039
    %v4152 = vmul.f32 %v4040, %v4040
    %v4153 = vmul.f32 %v4041, %v4041
    %v4154 = vmul.f32 %v4042, %v4042
    %v4155 = vmul.f32 %v4043, %v4043
    %v4156 = vmul.f32 %v4044, %v4044
    %v4157 = vmul.f32 %v4045, %v4045
    %v4158 = vsub.f32 %v4138, %v4148
    %v4159 = vsub.f32 %v4139, %v4149
    %v4160 = vsub.f32 %v4140, %v4150
    %v4161 = vsub.f32 %v4141, %v4151
    %v4162 = vsub.f32 %v4142, %v4152
    %v4163 = vsub.f32 %v4143, %v4153
    %v4164 = vsub.f32 %v4144, %v4154
    %v4165 = vsub.f32 %v4145, %v4155
    %v4166 = vsub.f32 %v4146, %v4156
    %v4167 = vsub.f32 %v4147, %v4157
    %v4168 = vmax.f32 %v4158, 0.0
    %v4169 = vmax.f32 %v4159, 0.0
    %v4170 = vmax.f32 %v4160, 0.0
    %v4171 = vmax.f32 %v4161, 0.0
    %v4172 = vmax.f32 %v4162, 0.0
    %v4173 = vmax.f32 %v4163, 0.0
    %v4174 = vmax.f32 %v4164, 0.0
    %v4175 = vmax.f32 %v4165, 0.0
    %v4176 = vmax.f32 %v4166, 0.0
    %v4177 = vmax.f32 %v4167, 0.0
    %v4178 = vsub.f32 %v3262, %v4036
    %v4179 = vsub.f32 %v3264, %v4037
    %v4180 = vsub.f32 %v3434, %v4038
    %v4181 = vsub.f32 %v3436, %v4039
    %v4182 = vsub.f32 %v3606, %v4040
    %v4183 = vsub.f32 %v3608, %v4041
    %v4184 = vsub.f32 %v3778, %v4042
    %v4185 = vsub.f32 %v3780, %v4043
    %v4186 = vsub.f32 %v3950, %v4044
    %v4187 = vsub.f32 %v3952, %v4045
    %v4188 = vsub.f32 %v3266, %v4036
    %v4189 = vsub.f32 %v3268, %v4037
    %v4190 = vsub.f32 %v3438, %v4038
    %v4191 = vsub.f32 %v3440, %v4039
    %v4192 = vsub.f32 %v3610, %v4040
    %v4193 = vsub.f32 %v3612, %v4041
    %v4194 = vsub.f32 %v3782, %v4042
    %v4195 = vsub.f32 %v3784, %v4043
    %v4196 = vsub.f32 %v3954, %v4044
    %v4197 = vsub.f32 %v3956, %v4045
    %v4198 = vadd.f32 %v4168, 2e-05
    %v4199 = vadd.f32 %v4169, 2e-05
    %v4200 = vadd.f32 %v4170, 2e-05
    %v4201 = vadd.f32 %v4171, 2e-05
    %v4202 = vadd.f32 %v4172, 2e-05
    %v4203 = vadd.f32 %v4173, 2e-05
    %v4204 = vadd.f32 %v4174, 2e-05
    %v4205 = vadd.f32 %v4175, 2e-05
    %v4206 = vadd.f32 %v4176, 2e-05
    %v4207 = vadd.f32 %v4177, 2e-05
    %v4208 = vrsqrt.pop %v4198
    %v4209 = vrsqrt.pop %v4199
    %v4210 = vrsqrt.pop %v4200
    %v4211 = vrsqrt.pop %v4201
    %v4212 = vrsqrt.pop %v4202
    %v4213 = vrsqrt.pop %v4203
    %v4214 = vrsqrt.pop %v4204
    %v4215 = vrsqrt.pop %v4205
    %v4216 = vrsqrt.pop %v4206
    %v4217 = vrsqrt.pop %v4207
    %v4218 = vmul.f32 %v4178, %v4208
    %v4219 = vmul.f32 %v4179, %v4209
    %v4220 = vmul.f32 %v4180, %v4210
    %v4221 = vmul.f32 %v4181, %v4211
    %v4222 = vmul.f32 %v4182, %v4212
    %v4223 = vmul.f32 %v4183, %v4213
    %v4224 = vmul.f32 %v4184, %v4214
    %v4225 = vmul.f32 %v4185, %v4215
    %v4226 = vmul.f32 %v4186, %v4216
    %v4227 = vmul.f32 %v4187, %v4217
    %v4228 = vmul.f32 %v4188, %v4208
    %v4229 = vmul.f32 %v4189, %v4209
    %v4230 = vmul.f32 %v4190, %v4210
    %v4231 = vmul.f32 %v4191, %v4211
    %v4232 = vmul.f32 %v4192, %v4212
    %v4233 = vmul.f32 %v4193, %v4213
    %v4234 = vmul.f32 %v4194, %v4214
    %v4235 = vmul.f32 %v4195, %v4215
    %v4236 = vmul.f32 %v4196, %v4216
    %v4237 = vmul.f32 %v4197, %v4217
    %v4240 = vlaneseq
    %v4241 = vshrl.u32 %v4240, 7
    %v4242 = vsub.s32 0, %v4241
    %v4243 = vrot.slane %v3958, %v4242
    %v4244 = vlaneseq
    %v4245 = vshrl.u32 %v4244, 7
    %v4246 = vsub.s32 1, %v4245
    %v4247 = vrot.slane %v3958, %v4246
    %v4248 = vlaneseq
    %v4249 = vshrl.u32 %v4248, 7
    %v4250 = vsub.s32 2, %v4249
    %v4251 = vrot.slane %v3958, %v4250
    %v4252 = vlaneseq
    %v4253 = vshrl.u32 %v4252, 7
    %v4254 = vsub.s32 3, %v4253
    %v4255 = vrot.slane %v3958, %v4254
    %v4256 = vlaneseq
    %v4257 = vshrl.u32 %v4256, 7
    %v4258 = vsub.s32 4, %v4257
    %v4259 = vrot.slane %v3958, %v4258
    %v4260 = vlaneseq
    %v4261 = vshrl.u32 %v4260, 7
    %v4262 = vsub.s32 5, %v4261
    %v4263 = vrot.slane %v3958, %v4262
    %v4264 = vlaneseq
    %v4265 = vshrl.u32 %v4264, 7
    %v4266 = vsub.s32 6, %v4265
    %v4267 = vrot.slane %v3958, %v4266
    %v4268 = vlaneseq
    %v4269 = vshrl.u32 %v4268, 7
    %v4270 = vsub.s32 7, %v4269
    %v4271 = vrot.slane %v3958, %v4270
    %v4272 = vlaneseq
    %v4273 = vshrl.u32 %v4272, 7
    %v4274 = vsub.s32 0, %v4273
    %v4275 = vrot.slane %v3959, %v4274
    %v4276 = vlaneseq
    %v4277 = vshrl.u32 %v4276, 7
    %v4278 = vsub.s32 1, %v4277
    %v4279 = vrot.slane %v3959, %v4278
    %v4290 = vmul.f32 %v4218, %v4243
    %v4291 = vmul.f32 %v4219, %v4247
    %v4292 = vmul.f32 %v4220, %v4251
    %v4293 = vmul.f32 %v4221, %v4255
    %v4294 = vmul.f32 %v4222, %v4259
    %v4295 = vmul.f32 %v4223, %v4263
    %v4296 = vmul.f32 %v4224, %v4267
    %v4297 = vmul.f32 %v4225, %v4271
    %v4298 = vmul.f32 %v4226, %v4275
    %v4299 = vmul.f32 %v4227, %v4279
    %v4300 = vmul.f32 %v4228, %v4243
    %v4301 = vmul.f32 %v4229, %v4247
    %v4302 = vmul.f32 %v4230, %v4251
    %v4303 = vmul.f32 %v4231, %v4255
    %v4304 = vmul.f32 %v4232, %v4259
    %v4305 = vmul.f32 %v4233, %v4263
    %v4306 = vmul.f32 %v4234, %v4267
    %v4307 = vmul.f32 %v4235, %v4271
    %v4308 = vmul.f32 %v4236, %v4275
    %v4309 = vmul.f32 %v4237, %v4279
    %v4312 = vlaneseq
    %v4313 = vshrl.u32 %v4312, 7
    %v4314 = vsub.s32 0, %v4313
    %v4315 = vrot.slane %v3960, %v4314
    %v4316 = vlaneseq
    %v4317 = vshrl.u32 %v4316, 7
    %v4318 = vsub.s32 1, %v4317
    %v4319 = vrot.slane %v3960, %v4318
    %v4320 = vlaneseq
    %v4321 = vshrl.u32 %v4320, 7
    %v4322 = vsub.s32 2, %v4321
    %v4323 = vrot.slane %v3960, %v4322
    %v4324 = vlaneseq
    %v4325 = vshrl.u32 %v4324, 7
    %v4326 = vsub.s32 3, %v4325
    %v4327 = vrot.slane %v3960, %v4326
    %v4328 = vlaneseq
    %v4329 = vshrl.u32 %v4328, 7
    %v4330 = vsub.s32 4, %v4329
    %v4331 = vrot.slane %v3960, %v4330
    %v4332 = vlaneseq
    %v4333 = vshrl.u32 %v4332, 7
    %v4334 = vsub.s32 5, %v4333
    %v4335 = vrot.slane %v3960, %v4334
    %v4336 = vlaneseq
    %v4337 = vshrl.u32 %v4336, 7
    %v4338 = vsub.s32 6, %v4337
    %v4339 = vrot.slane %v3960, %v4338
    %v4340 = vlaneseq
    %v4341 = vshrl.u32 %v4340, 7
    %v4342 = vsub.s32 7, %v4341
    %v4343 = vrot.slane %v3960, %v4342
    %v4344 = vlaneseq
    %v4345 = vshrl.u32 %v4344, 7
    %v4346 = vsub.s32 0, %v4345
    %v4347 = vrot.slane %v3961, %v4346
    %v4348 = vlaneseq
    %v4349 = vshrl.u32 %v4348, 7
    %v4350 = vsub.s32 1, %v4349
    %v4351 = vrot.slane %v3961, %v4350
    %v4362 = vadd.f32 %v4290, %v4315
    %v4363 = vadd.f32 %v4291, %v4319
    %v4364 = vadd.f32 %v4292, %v4323
    %v4365 = vadd.f32 %v4293, %v4327
    %v4366 = vadd.f32 %v4294, %v4331
    %v4367 = vadd.f32 %v4295, %v4335
    %v4368 = vadd.f32 %v4296, %v4339
    %v4369 = vadd.f32 %v4297, %v4343
    %v4370 = vadd.f32 %v4298, %v4347
    %v4371 = vadd.f32 %v4299, %v4351
    %v4372 = vadd.f32 %v4300, %v4315
    %v4373 = vadd.f32 %v4301, %v4319
    %v4374 = vadd.f32 %v4302, %v4323
    %v4375 = vadd.f32 %v4303, %v4327
    %v4376 = vadd.f32 %v4304, %v4331
    %v4377 = vadd.f32 %v4305, %v4335
    %v4378 = vadd.f32 %v4306, %v4339
    %v4379 = vadd.f32 %v4307, %v4343
    %v4380 = vadd.f32 %v4308, %v4347
    %v4381 = vadd.f32 %v4309, %v4351
    %v4382 = vmax.f32 %v4362, 0.0
    %v4383 = vmax.f32 %v4363, 0.0
    %v4384 = vmax.f32 %v4364, 0.0
    %v4385 = vmax.f32 %v4365, 0.0
    %v4386 = vmax.f32 %v4366, 0.0
    %v4387 = vmax.f32 %v4367, 0.0
    %v4388 = vmax.f32 %v4368, 0.0
    %v4389 = vmax.f32 %v4369, 0.0
    %v4390 = vmax.f32 %v4370, 0.0
    %v4391 = vmax.f32 %v4371, 0.0
    %v4392 = vmax.f32 %v4372, 0.0
    %v4393 = vmax.f32 %v4373, 0.0
    %v4394 = vmax.f32 %v4374, 0.0
    %v4395 = vmax.f32 %v4375, 0.0
    %v4396 = vmax.f32 %v4376, 0.0
    %v4397 = vmax.f32 %v4377, 0.0
    %v4398 = vmax.f32 %v4378, 0.0
    %v4399 = vmax.f32 %v4379, 0.0
    %v4400 = vmax.f32 %v4380, 0.0
    %v4401 = vmax.f32 %v4381, 0.0
    %v4402 = vpack.c.bf16 %v4392, %v4382
    %v4403 = vpack.c.bf16 %v4393, %v4383
    %v4404 = vpack.c.bf16 %v4394, %v4384
    %v4405 = vpack.c.bf16 %v4395, %v4385
    %v4406 = vpack.c.bf16 %v4396, %v4386
    %v4407 = vpack.c.bf16 %v4397, %v4387
    %v4408 = vpack.c.bf16 %v4398, %v4388
    %v4409 = vpack.c.bf16 %v4399, %v4389
    %v4410 = vpack.c.bf16 %v4400, %v4390
    %v4411 = vpack.c.bf16 %v4401, %v4391
    %v4412 = vld [vmem:[#allocation10] sm:$0xff]
    %v4413 = vld [vmem:[#allocation10 + $0x8] sm:$0xff]
    %v4414 = vld [vmem:[#allocation10 + $0x10] sm:$0xff]
    %v4415 = vld [vmem:[#allocation10 + $0x18] sm:$0xff]
    %v4416 = vld [vmem:[#allocation10 + $0x20] sm:$0xff]
    %v4417 = vld [vmem:[#allocation10 + $0x28] sm:$0xff]
    %v4418 = vld [vmem:[#allocation10 + $0x30] sm:$0xff]
    %v4419 = vld [vmem:[#allocation10 + $0x38] sm:$0xff]
    %v4420 = vld [vmem:[#allocation10 + $0x40] sm:$0xff]
    %v4421 = vld [vmem:[#allocation10 + $0x48] sm:$0xff]
    %v4422 = vld [vmem:[#allocation10 + $0x50] sm:$0xff]
    %v4423 = vld [vmem:[#allocation10 + $0x58] sm:$0xff]
    %v4424 = vld [vmem:[#allocation10 + $0x60] sm:$0xff]
    %v4425 = vld [vmem:[#allocation10 + $0x68] sm:$0xff]
    %v4426 = vld [vmem:[#allocation10 + $0x70] sm:$0xff]
    %v4427 = vld [vmem:[#allocation10 + $0x78] sm:$0xff]
    %v4428 = vld [vmem:[#allocation10 + $0x80] sm:$0xff]
    %v4429 = vld [vmem:[#allocation10 + $0x88] sm:$0xff]
    %v4430 = vld [vmem:[#allocation10 + $0x90] sm:$0xff]
    %v4431 = vld [vmem:[#allocation10 + $0x98] sm:$0xff]
    %v4432 = vld [vmem:[#allocation10 + $0xa0] sm:$0xff]
    %v4433 = vld [vmem:[#allocation10 + $0xa8] sm:$0xff]
    %v4434 = vld [vmem:[#allocation10 + $0xb0] sm:$0xff]
    %v4435 = vld [vmem:[#allocation10 + $0xb8] sm:$0xff]
    %v4436 = vld [vmem:[#allocation10 + $0xc0] sm:$0xff]
    %v4437 = vld [vmem:[#allocation10 + $0xc8] sm:$0xff]
    %v4438 = vld [vmem:[#allocation10 + $0xd0] sm:$0xff]
    %v4439 = vld [vmem:[#allocation10 + $0xd8] sm:$0xff]
    %v4440 = vld [vmem:[#allocation10 + $0xe0] sm:$0xff]
    %v4441 = vld [vmem:[#allocation10 + $0xe8] sm:$0xff]
    %v4442 = vld [vmem:[#allocation10 + $0xf0] sm:$0xff]
    %v4443 = vld [vmem:[#allocation10 + $0xf8] sm:$0xff]
    %v4444 = vld [vmem:[#allocation10 + $0x100] sm:$0xff]
    %v4445 = vld [vmem:[#allocation10 + $0x108] sm:$0xff]
    %v4446 = vld [vmem:[#allocation10 + $0x110] sm:$0xff]
    %v4447 = vld [vmem:[#allocation10 + $0x118] sm:$0xff]
    %v4448 = vld [vmem:[#allocation10 + $0x120] sm:$0xff]
    %v4449 = vld [vmem:[#allocation10 + $0x128] sm:$0xff]
    %v4450 = vld [vmem:[#allocation10 + $0x130] sm:$0xff]
    %v4451 = vld [vmem:[#allocation10 + $0x138] sm:$0xff]
    %v4452 = vld [vmem:[#allocation10 + $0x140] sm:$0xff]
    %v4453 = vld [vmem:[#allocation10 + $0x148] sm:$0xff]
    %v4454 = vld [vmem:[#allocation10 + $0x150] sm:$0xff]
    %v4455 = vld [vmem:[#allocation10 + $0x158] sm:$0xff]
    %v4456 = vld [vmem:[#allocation10 + $0x160] sm:$0xff]
    %v4457 = vld [vmem:[#allocation10 + $0x168] sm:$0xff]
    %v4458 = vld [vmem:[#allocation10 + $0x170] sm:$0xff]
    %v4459 = vld [vmem:[#allocation10 + $0x178] sm:$0xff]
    %v4460 = vld [vmem:[#allocation10 + $0x180] sm:$0xff]
    %v4461 = vld [vmem:[#allocation10 + $0x188] sm:$0xff]
    %v4462 = vld [vmem:[#allocation10 + $0x190] sm:$0xff]
    %v4463 = vld [vmem:[#allocation10 + $0x198] sm:$0xff]
    %v4464 = vld [vmem:[#allocation10 + $0x1a0] sm:$0xff]
    %v4465 = vld [vmem:[#allocation10 + $0x1a8] sm:$0xff]
    %v4466 = vld [vmem:[#allocation10 + $0x1b0] sm:$0xff]
    %v4467 = vld [vmem:[#allocation10 + $0x1b8] sm:$0xff]
    %v4468 = vld [vmem:[#allocation10 + $0x1c0] sm:$0xff]
    %v4469 = vld [vmem:[#allocation10 + $0x1c8] sm:$0xff]
    %v4470 = vld [vmem:[#allocation10 + $0x1d0] sm:$0xff]
    %v4471 = vld [vmem:[#allocation10 + $0x1d8] sm:$0xff]
    %v4472 = vld [vmem:[#allocation10 + $0x1e0] sm:$0xff]
    %v4473 = vld [vmem:[#allocation10 + $0x1e8] sm:$0xff]
    %v4474 = vld [vmem:[#allocation10 + $0x1f0] sm:$0xff]
    %v4475 = vld [vmem:[#allocation10 + $0x1f8] sm:$0xff]
    %v4476 = vld [vmem:[#allocation10 + $0x200] sm:$0xff]
    %v4477 = vld [vmem:[#allocation10 + $0x208] sm:$0xff]
    %v4478 = vld [vmem:[#allocation10 + $0x210] sm:$0xff]
    %v4479 = vld [vmem:[#allocation10 + $0x218] sm:$0xff]
    %v4480 = vld [vmem:[#allocation10 + $0x220] sm:$0xff]
    %v4481 = vld [vmem:[#allocation10 + $0x228] sm:$0xff]
    %v4482 = vld [vmem:[#allocation10 + $0x230] sm:$0xff]
    %v4483 = vld [vmem:[#allocation10 + $0x238] sm:$0xff]
    %v4484 = vld [vmem:[#allocation10 + $0x240] sm:$0xff]
    %v4485 = vld [vmem:[#allocation10 + $0x248] sm:$0xff]
    %v4486 = vld [vmem:[#allocation10 + $0x250] sm:$0xff]
    %v4487 = vld [vmem:[#allocation10 + $0x258] sm:$0xff]
    %v4488 = vld [vmem:[#allocation10 + $0x260] sm:$0xff]
    %v4489 = vld [vmem:[#allocation10 + $0x268] sm:$0xff]
    %v4490 = vld [vmem:[#allocation10 + $0x270] sm:$0xff]
    %v4491 = vld [vmem:[#allocation10 + $0x278] sm:$0xff]
    %v4492 = vld [vmem:[#allocation10 + $0x280] sm:$0xff]
    %v4493 = vld [vmem:[#allocation10 + $0x288] sm:$0xff]
    %v4494 = vld [vmem:[#allocation10 + $0x290] sm:$0xff]
    %v4495 = vld [vmem:[#allocation10 + $0x298] sm:$0xff]
    %v4496 = vld [vmem:[#allocation10 + $0x2a0] sm:$0xff]
    %v4497 = vld [vmem:[#allocation10 + $0x2a8] sm:$0xff]
    %v4498 = vld [vmem:[#allocation10 + $0x2b0] sm:$0xff]
    %v4499 = vld [vmem:[#allocation10 + $0x2b8] sm:$0xff]
    %v4500 = vld [vmem:[#allocation10 + $0x2c0] sm:$0xff]
    %v4501 = vld [vmem:[#allocation10 + $0x2c8] sm:$0xff]
    %v4502 = vld [vmem:[#allocation10 + $0x2d0] sm:$0xff]
    %v4503 = vld [vmem:[#allocation10 + $0x2d8] sm:$0xff]
    %v4504 = vld [vmem:[#allocation10 + $0x2e0] sm:$0xff]
    %v4505 = vld [vmem:[#allocation10 + $0x2e8] sm:$0xff]
    %v4506 = vld [vmem:[#allocation10 + $0x2f0] sm:$0xff]
    %v4507 = vld [vmem:[#allocation10 + $0x2f8] sm:$0xff]
    %v4508 = vld [vmem:[#allocation10 + $0x300] sm:$0xff]
    %v4509 = vld [vmem:[#allocation10 + $0x308] sm:$0xff]
    %v4510 = vld [vmem:[#allocation10 + $0x310] sm:$0xff]
    %v4511 = vld [vmem:[#allocation10 + $0x318] sm:$0xff]
    %v4512 = vld [vmem:[#allocation10 + $0x320] sm:$0xff]
    %v4513 = vld [vmem:[#allocation10 + $0x328] sm:$0xff]
    %v4514 = vld [vmem:[#allocation10 + $0x330] sm:$0xff]
    %v4515 = vld [vmem:[#allocation10 + $0x338] sm:$0xff]
    %v4516 = vld [vmem:[#allocation10 + $0x340] sm:$0xff]
    %v4517 = vld [vmem:[#allocation10 + $0x348] sm:$0xff]
    %v4518 = vld [vmem:[#allocation10 + $0x350] sm:$0xff]
    %v4519 = vld [vmem:[#allocation10 + $0x358] sm:$0xff]
    %v4520 = vld [vmem:[#allocation10 + $0x360] sm:$0xff]
    %v4521 = vld [vmem:[#allocation10 + $0x368] sm:$0xff]
    %v4522 = vld [vmem:[#allocation10 + $0x370] sm:$0xff]
    %v4523 = vld [vmem:[#allocation10 + $0x378] sm:$0xff]
    %v4524 = vld [vmem:[#allocation10 + $0x380] sm:$0xff]
    %v4525 = vld [vmem:[#allocation10 + $0x388] sm:$0xff]
    %v4526 = vld [vmem:[#allocation10 + $0x390] sm:$0xff]
    %v4527 = vld [vmem:[#allocation10 + $0x398] sm:$0xff]
    %v4528 = vld [vmem:[#allocation10 + $0x3a0] sm:$0xff]
    %v4529 = vld [vmem:[#allocation10 + $0x3a8] sm:$0xff]
    %v4530 = vld [vmem:[#allocation10 + $0x3b0] sm:$0xff]
    %v4531 = vld [vmem:[#allocation10 + $0x3b8] sm:$0xff]
    %v4532 = vld [vmem:[#allocation10 + $0x3c0] sm:$0xff]
    %v4533 = vld [vmem:[#allocation10 + $0x3c8] sm:$0xff]
    %v4534 = vld [vmem:[#allocation10 + $0x3d0] sm:$0xff]
    %v4535 = vld [vmem:[#allocation10 + $0x3d8] sm:$0xff]
    %v4536 = vld [vmem:[#allocation10 + $0x3e0] sm:$0xff]
    %v4537 = vld [vmem:[#allocation10 + $0x3e8] sm:$0xff]
    %v4538 = vld [vmem:[#allocation10 + $0x3f0] sm:$0xff]
    %v4539 = vld [vmem:[#allocation10 + $0x3f8] sm:$0xff]
    %v4540 = vld [vmem:[#allocation10 + $0x400] sm:$0xff]
    %v4541 = vld [vmem:[#allocation10 + $0x408] sm:$0xff]
    %v4542 = vld [vmem:[#allocation10 + $0x410] sm:$0xff]
    %v4543 = vld [vmem:[#allocation10 + $0x418] sm:$0xff]
    %v4544 = vld [vmem:[#allocation10 + $0x420] sm:$0xff]
    %v4545 = vld [vmem:[#allocation10 + $0x428] sm:$0xff]
    %v4546 = vld [vmem:[#allocation10 + $0x430] sm:$0xff]
    %v4547 = vld [vmem:[#allocation10 + $0x438] sm:$0xff]
    %v4548 = vld [vmem:[#allocation10 + $0x440] sm:$0xff]
    %v4549 = vld [vmem:[#allocation10 + $0x448] sm:$0xff]
    %v4550 = vld [vmem:[#allocation10 + $0x450] sm:$0xff]
    %v4551 = vld [vmem:[#allocation10 + $0x458] sm:$0xff]
    %v4552 = vld [vmem:[#allocation10 + $0x460] sm:$0xff]
    %v4553 = vld [vmem:[#allocation10 + $0x468] sm:$0xff]
    %v4554 = vld [vmem:[#allocation10 + $0x470] sm:$0xff]
    %v4555 = vld [vmem:[#allocation10 + $0x478] sm:$0xff]
    %v4556 = vld [vmem:[#allocation10 + $0x480] sm:$0xff]
    %v4557 = vld [vmem:[#allocation10 + $0x488] sm:$0xff]
    %v4558 = vld [vmem:[#allocation10 + $0x490] sm:$0xff]
    %v4559 = vld [vmem:[#allocation10 + $0x498] sm:$0xff]
    %v4560 = vld [vmem:[#allocation10 + $0x4a0] sm:$0xff]
    %v4561 = vld [vmem:[#allocation10 + $0x4a8] sm:$0xff]
    %v4562 = vld [vmem:[#allocation10 + $0x4b0] sm:$0xff]
    %v4563 = vld [vmem:[#allocation10 + $0x4b8] sm:$0xff]
    %v4564 = vld [vmem:[#allocation10 + $0x4c0] sm:$0xff]
    %v4565 = vld [vmem:[#allocation10 + $0x4c8] sm:$0xff]
    %v4566 = vld [vmem:[#allocation10 + $0x4d0] sm:$0xff]
    %v4567 = vld [vmem:[#allocation10 + $0x4d8] sm:$0xff]
    %v4568 = vld [vmem:[#allocation10 + $0x4e0] sm:$0xff]
    %v4569 = vld [vmem:[#allocation10 + $0x4e8] sm:$0xff]
    %v4570 = vld [vmem:[#allocation10 + $0x4f0] sm:$0xff]
    %v4571 = vld [vmem:[#allocation10 + $0x4f8] sm:$0xff]
    %v4572 = vld [vmem:[#allocation10 + $0x500] sm:$0xff]
    %v4573 = vld [vmem:[#allocation10 + $0x508] sm:$0xff]
    %v4574 = vld [vmem:[#allocation10 + $0x510] sm:$0xff]
    %v4575 = vld [vmem:[#allocation10 + $0x518] sm:$0xff]
    %v4576 = vld [vmem:[#allocation10 + $0x520] sm:$0xff]
    %v4577 = vld [vmem:[#allocation10 + $0x528] sm:$0xff]
    %v4578 = vld [vmem:[#allocation10 + $0x530] sm:$0xff]
    %v4579 = vld [vmem:[#allocation10 + $0x538] sm:$0xff]
    %v4580 = vld [vmem:[#allocation10 + $0x540] sm:$0xff]
    %v4581 = vld [vmem:[#allocation10 + $0x548] sm:$0xff]
    %v4582 = vld [vmem:[#allocation10 + $0x550] sm:$0xff]
    %v4583 = vld [vmem:[#allocation10 + $0x558] sm:$0xff]
    %v4584 = vld [vmem:[#allocation10 + $0x560] sm:$0xff]
    %v4585 = vld [vmem:[#allocation10 + $0x568] sm:$0xff]
    %v4586 = vld [vmem:[#allocation10 + $0x570] sm:$0xff]
    %v4587 = vld [vmem:[#allocation10 + $0x578] sm:$0xff]
    %v4588 = vld [vmem:[#allocation10 + $0x580] sm:$0xff]
    %v4589 = vld [vmem:[#allocation10 + $0x588] sm:$0xff]
    %v4590 = vld [vmem:[#allocation10 + $0x590] sm:$0xff]
    %v4591 = vld [vmem:[#allocation10 + $0x598] sm:$0xff]
    %v4592 = vld [vmem:[#allocation10 + $0x5a0] sm:$0xff]
    %v4593 = vld [vmem:[#allocation10 + $0x5a8] sm:$0xff]
    %v4594 = vld [vmem:[#allocation10 + $0x5b0] sm:$0xff]
    %v4595 = vld [vmem:[#allocation10 + $0x5b8] sm:$0xff]
    %v4596 = vld [vmem:[#allocation10 + $0x5c0] sm:$0xff]
    %v4597 = vld [vmem:[#allocation10 + $0x5c8] sm:$0xff]
    %v4598 = vld [vmem:[#allocation10 + $0x5d0] sm:$0xff]
    %v4599 = vld [vmem:[#allocation10 + $0x5d8] sm:$0xff]
    %v4600 = vld [vmem:[#allocation10 + $0x5e0] sm:$0xff]
    %v4601 = vld [vmem:[#allocation10 + $0x5e8] sm:$0xff]
    %v4602 = vld [vmem:[#allocation10 + $0x5f0] sm:$0xff]
    %v4603 = vld [vmem:[#allocation10 + $0x5f8] sm:$0xff]
    %v4604 = vld [vmem:[#allocation10 + $0x600] sm:$0xff]
    %v4605 = vld [vmem:[#allocation10 + $0x608] sm:$0xff]
    %v4606 = vld [vmem:[#allocation10 + $0x610] sm:$0xff]
    %v4607 = vld [vmem:[#allocation10 + $0x618] sm:$0xff]
    %v4608 = vld [vmem:[#allocation10 + $0x620] sm:$0xff]
    %v4609 = vld [vmem:[#allocation10 + $0x628] sm:$0xff]
    %v4610 = vld [vmem:[#allocation10 + $0x630] sm:$0xff]
    %v4611 = vld [vmem:[#allocation10 + $0x638] sm:$0xff]
    %v4612 = vld [vmem:[#allocation10 + $0x640] sm:$0xff]
    %v4613 = vld [vmem:[#allocation10 + $0x648] sm:$0xff]
    %v4614 = vld [vmem:[#allocation10 + $0x650] sm:$0xff]
    %v4615 = vld [vmem:[#allocation10 + $0x658] sm:$0xff]
    %v4616 = vld [vmem:[#allocation10 + $0x660] sm:$0xff]
    %v4617 = vld [vmem:[#allocation10 + $0x668] sm:$0xff]
    %v4618 = vld [vmem:[#allocation10 + $0x670] sm:$0xff]
    %v4619 = vld [vmem:[#allocation10 + $0x678] sm:$0xff]
    %v4620 = vld [vmem:[#allocation10 + $0x680] sm:$0xff]
    %v4621 = vld [vmem:[#allocation10 + $0x688] sm:$0xff]
    %v4622 = vld [vmem:[#allocation10 + $0x690] sm:$0xff]
    %v4623 = vld [vmem:[#allocation10 + $0x698] sm:$0xff]
    %v4624 = vld [vmem:[#allocation10 + $0x6a0] sm:$0xff]
    %v4625 = vld [vmem:[#allocation10 + $0x6a8] sm:$0xff]
    %v4626 = vld [vmem:[#allocation10 + $0x6b0] sm:$0xff]
    %v4627 = vld [vmem:[#allocation10 + $0x6b8] sm:$0xff]
    %v4628 = vld [vmem:[#allocation10 + $0x6c0] sm:$0xff]
    %v4629 = vld [vmem:[#allocation10 + $0x6c8] sm:$0xff]
    %v4630 = vld [vmem:[#allocation10 + $0x6d0] sm:$0xff]
    %v4631 = vld [vmem:[#allocation10 + $0x6d8] sm:$0xff]
    %v4632 = vld [vmem:[#allocation10 + $0x6e0] sm:$0xff]
    %v4633 = vld [vmem:[#allocation10 + $0x6e8] sm:$0xff]
    %v4634 = vld [vmem:[#allocation10 + $0x6f0] sm:$0xff]
    %v4635 = vld [vmem:[#allocation10 + $0x6f8] sm:$0xff]
    %v4636 = vld [vmem:[#allocation10 + $0x700] sm:$0xff]
    %v4637 = vld [vmem:[#allocation10 + $0x708] sm:$0xff]
    %v4638 = vld [vmem:[#allocation10 + $0x710] sm:$0xff]
    %v4639 = vld [vmem:[#allocation10 + $0x718] sm:$0xff]
    %v4640 = vld [vmem:[#allocation10 + $0x720] sm:$0xff]
    %v4641 = vld [vmem:[#allocation10 + $0x728] sm:$0xff]
    %v4642 = vld [vmem:[#allocation10 + $0x730] sm:$0xff]
    %v4643 = vld [vmem:[#allocation10 + $0x738] sm:$0xff]
    %v4644 = vld [vmem:[#allocation10 + $0x740] sm:$0xff]
    %v4645 = vld [vmem:[#allocation10 + $0x748] sm:$0xff]
    %v4646 = vld [vmem:[#allocation10 + $0x750] sm:$0xff]
    %v4647 = vld [vmem:[#allocation10 + $0x758] sm:$0xff]
    %v4648 = vld [vmem:[#allocation10 + $0x760] sm:$0xff]
    %v4649 = vld [vmem:[#allocation10 + $0x768] sm:$0xff]
    %v4650 = vld [vmem:[#allocation10 + $0x770] sm:$0xff]
    %v4651 = vld [vmem:[#allocation10 + $0x778] sm:$0xff]
    %v4652 = vld [vmem:[#allocation10 + $0x780] sm:$0xff]
    %v4653 = vld [vmem:[#allocation10 + $0x788] sm:$0xff]
    %v4654 = vld [vmem:[#allocation10 + $0x790] sm:$0xff]
    %v4655 = vld [vmem:[#allocation10 + $0x798] sm:$0xff]
    %v4656 = vld [vmem:[#allocation10 + $0x7a0] sm:$0xff]
    %v4657 = vld [vmem:[#allocation10 + $0x7a8] sm:$0xff]
    %v4658 = vld [vmem:[#allocation10 + $0x7b0] sm:$0xff]
    %v4659 = vld [vmem:[#allocation10 + $0x7b8] sm:$0xff]
    %v4660 = vld [vmem:[#allocation10 + $0x7c0] sm:$0xff]
    %v4661 = vld [vmem:[#allocation10 + $0x7c8] sm:$0xff]
    %v4662 = vld [vmem:[#allocation10 + $0x7d0] sm:$0xff]
    %v4663 = vld [vmem:[#allocation10 + $0x7d8] sm:$0xff]
    %v4664 = vld [vmem:[#allocation10 + $0x7e0] sm:$0xff]
    %v4665 = vld [vmem:[#allocation10 + $0x7e8] sm:$0xff]
    %v4666 = vld [vmem:[#allocation10 + $0x7f0] sm:$0xff]
    %v4667 = vld [vmem:[#allocation10 + $0x7f8] sm:$0xff]
    %v4668 = vld [vmem:[#allocation10 + $0x800] sm:$0xff]
    %v4669 = vld [vmem:[#allocation10 + $0x808] sm:$0xff]
    %v4670 = vld [vmem:[#allocation10 + $0x810] sm:$0xff]
    %v4671 = vld [vmem:[#allocation10 + $0x818] sm:$0xff]
    %v4672 = vld [vmem:[#allocation10 + $0x820] sm:$0xff]
    %v4673 = vld [vmem:[#allocation10 + $0x828] sm:$0xff]
    %v4674 = vld [vmem:[#allocation10 + $0x830] sm:$0xff]
    %v4675 = vld [vmem:[#allocation10 + $0x838] sm:$0xff]
    %v4676 = vld [vmem:[#allocation10 + $0x840] sm:$0xff]
    %v4677 = vld [vmem:[#allocation10 + $0x848] sm:$0xff]
    %v4678 = vld [vmem:[#allocation10 + $0x850] sm:$0xff]
    %v4679 = vld [vmem:[#allocation10 + $0x858] sm:$0xff]
    %v4680 = vld [vmem:[#allocation10 + $0x860] sm:$0xff]
    %v4681 = vld [vmem:[#allocation10 + $0x868] sm:$0xff]
    %v4682 = vld [vmem:[#allocation10 + $0x870] sm:$0xff]
    %v4683 = vld [vmem:[#allocation10 + $0x878] sm:$0xff]
    %v4684 = vld [vmem:[#allocation10 + $0x880] sm:$0xff]
    %v4685 = vld [vmem:[#allocation10 + $0x888] sm:$0xff]
    %v4686 = vld [vmem:[#allocation10 + $0x890] sm:$0xff]
    %v4687 = vld [vmem:[#allocation10 + $0x898] sm:$0xff]
    %v4688 = vld [vmem:[#allocation10 + $0x8a0] sm:$0xff]
    %v4689 = vld [vmem:[#allocation10 + $0x8a8] sm:$0xff]
    %v4690 = vld [vmem:[#allocation10 + $0x8b0] sm:$0xff]
    %v4691 = vld [vmem:[#allocation10 + $0x8b8] sm:$0xff]
    %v4692 = vld [vmem:[#allocation10 + $0x8c0] sm:$0xff]
    %v4693 = vld [vmem:[#allocation10 + $0x8c8] sm:$0xff]
    %v4694 = vld [vmem:[#allocation10 + $0x8d0] sm:$0xff]
    %v4695 = vld [vmem:[#allocation10 + $0x8d8] sm:$0xff]
    %v4696 = vld [vmem:[#allocation10 + $0x8e0] sm:$0xff]
    %v4697 = vld [vmem:[#allocation10 + $0x8e8] sm:$0xff]
    %v4698 = vld [vmem:[#allocation10 + $0x8f0] sm:$0xff]
    %v4699 = vld [vmem:[#allocation10 + $0x8f8] sm:$0xff]
    %v4700 = vld [vmem:[#allocation10 + $0x900] sm:$0xff]
    %v4701 = vld [vmem:[#allocation10 + $0x908] sm:$0xff]
    %v4702 = vld [vmem:[#allocation10 + $0x910] sm:$0xff]
    %v4703 = vld [vmem:[#allocation10 + $0x918] sm:$0xff]
    %v4704 = vld [vmem:[#allocation10 + $0x920] sm:$0xff]
    %v4705 = vld [vmem:[#allocation10 + $0x928] sm:$0xff]
    %v4706 = vld [vmem:[#allocation10 + $0x930] sm:$0xff]
    %v4707 = vld [vmem:[#allocation10 + $0x938] sm:$0xff]
    %v4708 = vld [vmem:[#allocation10 + $0x940] sm:$0xff]
    %v4709 = vld [vmem:[#allocation10 + $0x948] sm:$0xff]
    %v4710 = vld [vmem:[#allocation10 + $0x950] sm:$0xff]
    %v4711 = vld [vmem:[#allocation10 + $0x958] sm:$0xff]
    %v4712 = vld [vmem:[#allocation10 + $0x960] sm:$0xff]
    %v4713 = vld [vmem:[#allocation10 + $0x968] sm:$0xff]
    %v4714 = vld [vmem:[#allocation10 + $0x970] sm:$0xff]
    %v4715 = vld [vmem:[#allocation10 + $0x978] sm:$0xff]
    %v4716 = vld [vmem:[#allocation10 + $0x980] sm:$0xff]
    %v4717 = vld [vmem:[#allocation10 + $0x988] sm:$0xff]
    %v4718 = vld [vmem:[#allocation10 + $0x990] sm:$0xff]
    %v4719 = vld [vmem:[#allocation10 + $0x998] sm:$0xff]
    %v4720 = vld [vmem:[#allocation10 + $0x9a0] sm:$0xff]
    %v4721 = vld [vmem:[#allocation10 + $0x9a8] sm:$0xff]
    %v4722 = vld [vmem:[#allocation10 + $0x9b0] sm:$0xff]
    %v4723 = vld [vmem:[#allocation10 + $0x9b8] sm:$0xff]
    %v4724 = vld [vmem:[#allocation10 + $0x9c0] sm:$0xff]
    %v4725 = vld [vmem:[#allocation10 + $0x9c8] sm:$0xff]
    %v4726 = vld [vmem:[#allocation10 + $0x9d0] sm:$0xff]
    %v4727 = vld [vmem:[#allocation10 + $0x9d8] sm:$0xff]
    %v4728 = vld [vmem:[#allocation10 + $0x9e0] sm:$0xff]
    %v4729 = vld [vmem:[#allocation10 + $0x9e8] sm:$0xff]
    %v4730 = vld [vmem:[#allocation10 + $0x9f0] sm:$0xff]
    %v4731 = vld [vmem:[#allocation10 + $0x9f8] sm:$0xff]
    %v4732 = vld [vmem:[#allocation10 + $0xa00] sm:$0xff]
    %v4733 = vld [vmem:[#allocation10 + $0xa08] sm:$0xff]
    %v4734 = vld [vmem:[#allocation10 + $0xa10] sm:$0xff]
    %v4735 = vld [vmem:[#allocation10 + $0xa18] sm:$0xff]
    %v4736 = vld [vmem:[#allocation10 + $0xa20] sm:$0xff]
    %v4737 = vld [vmem:[#allocation10 + $0xa28] sm:$0xff]
    %v4738 = vld [vmem:[#allocation10 + $0xa30] sm:$0xff]
    %v4739 = vld [vmem:[#allocation10 + $0xa38] sm:$0xff]
    %v4740 = vld [vmem:[#allocation10 + $0xa40] sm:$0xff]
    %v4741 = vld [vmem:[#allocation10 + $0xa48] sm:$0xff]
    %v4742 = vld [vmem:[#allocation10 + $0xa50] sm:$0xff]
    %v4743 = vld [vmem:[#allocation10 + $0xa58] sm:$0xff]
    %v4744 = vld [vmem:[#allocation10 + $0xa60] sm:$0xff]
    %v4745 = vld [vmem:[#allocation10 + $0xa68] sm:$0xff]
    %v4746 = vld [vmem:[#allocation10 + $0xa70] sm:$0xff]
    %v4747 = vld [vmem:[#allocation10 + $0xa78] sm:$0xff]
    %v4748 = vld [vmem:[#allocation10 + $0xa80] sm:$0xff]
    %v4749 = vld [vmem:[#allocation10 + $0xa88] sm:$0xff]
    %v4750 = vld [vmem:[#allocation10 + $0xa90] sm:$0xff]
    %v4751 = vld [vmem:[#allocation10 + $0xa98] sm:$0xff]
    %v4752 = vld [vmem:[#allocation10 + $0xaa0] sm:$0xff]
    %v4753 = vld [vmem:[#allocation10 + $0xaa8] sm:$0xff]
    %v4754 = vld [vmem:[#allocation10 + $0xab0] sm:$0xff]
    %v4755 = vld [vmem:[#allocation10 + $0xab8] sm:$0xff]
    %v4756 = vld [vmem:[#allocation10 + $0xac0] sm:$0xff]
    %v4757 = vld [vmem:[#allocation10 + $0xac8] sm:$0xff]
    %v4758 = vld [vmem:[#allocation10 + $0xad0] sm:$0xff]
    %v4759 = vld [vmem:[#allocation10 + $0xad8] sm:$0xff]
    %v4760 = vld [vmem:[#allocation10 + $0xae0] sm:$0xff]
    %v4761 = vld [vmem:[#allocation10 + $0xae8] sm:$0xff]
    %v4762 = vld [vmem:[#allocation10 + $0xaf0] sm:$0xff]
    %v4763 = vld [vmem:[#allocation10 + $0xaf8] sm:$0xff]
    %v4764 = vld [vmem:[#allocation10 + $0xb00] sm:$0xff]
    %v4765 = vld [vmem:[#allocation10 + $0xb08] sm:$0xff]
    %v4766 = vld [vmem:[#allocation10 + $0xb10] sm:$0xff]
    %v4767 = vld [vmem:[#allocation10 + $0xb18] sm:$0xff]
    %v4768 = vld [vmem:[#allocation10 + $0xb20] sm:$0xff]
    %v4769 = vld [vmem:[#allocation10 + $0xb28] sm:$0xff]
    %v4770 = vld [vmem:[#allocation10 + $0xb30] sm:$0xff]
    %v4771 = vld [vmem:[#allocation10 + $0xb38] sm:$0xff]
    %v4772 = vld [vmem:[#allocation10 + $0xb40] sm:$0xff]
    %v4773 = vld [vmem:[#allocation10 + $0xb48] sm:$0xff]
    %v4774 = vld [vmem:[#allocation10 + $0xb50] sm:$0xff]
    %v4775 = vld [vmem:[#allocation10 + $0xb58] sm:$0xff]
    %v4776 = vld [vmem:[#allocation10 + $0xb60] sm:$0xff]
    %v4777 = vld [vmem:[#allocation10 + $0xb68] sm:$0xff]
    %v4778 = vld [vmem:[#allocation10 + $0xb70] sm:$0xff]
    %v4779 = vld [vmem:[#allocation10 + $0xb78] sm:$0xff]
    %v4780 = vld [vmem:[#allocation10 + $0xb80] sm:$0xff]
    %v4781 = vld [vmem:[#allocation10 + $0xb88] sm:$0xff]
    %v4782 = vld [vmem:[#allocation10 + $0xb90] sm:$0xff]
    %v4783 = vld [vmem:[#allocation10 + $0xb98] sm:$0xff]
    %v4784 = vld [vmem:[#allocation10 + $0xba0] sm:$0xff]
    %v4785 = vld [vmem:[#allocation10 + $0xba8] sm:$0xff]
    %v4786 = vld [vmem:[#allocation10 + $0xbb0] sm:$0xff]
    %v4787 = vld [vmem:[#allocation10 + $0xbb8] sm:$0xff]
    %v4788 = vld [vmem:[#allocation10 + $0xbc0] sm:$0xff]
    %v4789 = vld [vmem:[#allocation10 + $0xbc8] sm:$0xff]
    %v4790 = vld [vmem:[#allocation10 + $0xbd0] sm:$0xff]
    %v4791 = vld [vmem:[#allocation10 + $0xbd8] sm:$0xff]
    %v4792 = vld [vmem:[#allocation10 + $0xbe0] sm:$0xff]
    %v4793 = vld [vmem:[#allocation10 + $0xbe8] sm:$0xff]
    %v4794 = vld [vmem:[#allocation10 + $0xbf0] sm:$0xff]
    %v4795 = vld [vmem:[#allocation10 + $0xbf8] sm:$0xff]
    %v4796 = vld [vmem:[#allocation10 + $0xc00] sm:$0xff]
    %v4797 = vld [vmem:[#allocation10 + $0xc08] sm:$0xff]
    %v4798 = vld [vmem:[#allocation10 + $0xc10] sm:$0xff]
    %v4799 = vld [vmem:[#allocation10 + $0xc18] sm:$0xff]
    %v4800 = vld [vmem:[#allocation10 + $0xc20] sm:$0xff]
    %v4801 = vld [vmem:[#allocation10 + $0xc28] sm:$0xff]
    %v4802 = vld [vmem:[#allocation10 + $0xc30] sm:$0xff]
    %v4803 = vld [vmem:[#allocation10 + $0xc38] sm:$0xff]
    %v4804 = vld [vmem:[#allocation10 + $0xc40] sm:$0xff]
    %v4805 = vld [vmem:[#allocation10 + $0xc48] sm:$0xff]
    %v4806 = vld [vmem:[#allocation10 + $0xc50] sm:$0xff]
    %v4807 = vld [vmem:[#allocation10 + $0xc58] sm:$0xff]
    %v4808 = vld [vmem:[#allocation10 + $0xc60] sm:$0xff]
    %v4809 = vld [vmem:[#allocation10 + $0xc68] sm:$0xff]
    %v4810 = vld [vmem:[#allocation10 + $0xc70] sm:$0xff]
    %v4811 = vld [vmem:[#allocation10 + $0xc78] sm:$0xff]
    %v4812 = vld [vmem:[#allocation10 + $0xc80] sm:$0xff]
    %v4813 = vld [vmem:[#allocation10 + $0xc88] sm:$0xff]
    %v4814 = vld [vmem:[#allocation10 + $0xc90] sm:$0xff]
    %v4815 = vld [vmem:[#allocation10 + $0xc98] sm:$0xff]
    %v4816 = vld [vmem:[#allocation10 + $0xca0] sm:$0xff]
    %v4817 = vld [vmem:[#allocation10 + $0xca8] sm:$0xff]
    %v4818 = vld [vmem:[#allocation10 + $0xcb0] sm:$0xff]
    %v4819 = vld [vmem:[#allocation10 + $0xcb8] sm:$0xff]
    %v4820 = vld [vmem:[#allocation10 + $0xcc0] sm:$0xff]
    %v4821 = vld [vmem:[#allocation10 + $0xcc8] sm:$0xff]
    %v4822 = vld [vmem:[#allocation10 + $0xcd0] sm:$0xff]
    %v4823 = vld [vmem:[#allocation10 + $0xcd8] sm:$0xff]
    %v4824 = vld [vmem:[#allocation10 + $0xce0] sm:$0xff]
    %v4825 = vld [vmem:[#allocation10 + $0xce8] sm:$0xff]
    %v4826 = vld [vmem:[#allocation10 + $0xcf0] sm:$0xff]
    %v4827 = vld [vmem:[#allocation10 + $0xcf8] sm:$0xff]
    %v4828 = vld [vmem:[#allocation10 + $0xd00] sm:$0xff]
    %v4829 = vld [vmem:[#allocation10 + $0xd08] sm:$0xff]
    %v4830 = vld [vmem:[#allocation10 + $0xd10] sm:$0xff]
    %v4831 = vld [vmem:[#allocation10 + $0xd18] sm:$0xff]
    %v4832 = vld [vmem:[#allocation10 + $0xd20] sm:$0xff]
    %v4833 = vld [vmem:[#allocation10 + $0xd28] sm:$0xff]
    %v4834 = vld [vmem:[#allocation10 + $0xd30] sm:$0xff]
    %v4835 = vld [vmem:[#allocation10 + $0xd38] sm:$0xff]
    %v4836 = vld [vmem:[#allocation10 + $0xd40] sm:$0xff]
    %v4837 = vld [vmem:[#allocation10 + $0xd48] sm:$0xff]
    %v4838 = vld [vmem:[#allocation10 + $0xd50] sm:$0xff]
    %v4839 = vld [vmem:[#allocation10 + $0xd58] sm:$0xff]
    %v4840 = vld [vmem:[#allocation10 + $0xd60] sm:$0xff]
    %v4841 = vld [vmem:[#allocation10 + $0xd68] sm:$0xff]
    %v4842 = vld [vmem:[#allocation10 + $0xd70] sm:$0xff]
    %v4843 = vld [vmem:[#allocation10 + $0xd78] sm:$0xff]
    %v4844 = vld [vmem:[#allocation10 + $0xd80] sm:$0xff]
    %v4845 = vld [vmem:[#allocation10 + $0xd88] sm:$0xff]
    %v4846 = vld [vmem:[#allocation10 + $0xd90] sm:$0xff]
    %v4847 = vld [vmem:[#allocation10 + $0xd98] sm:$0xff]
    %v4848 = vld [vmem:[#allocation10 + $0xda0] sm:$0xff]
    %v4849 = vld [vmem:[#allocation10 + $0xda8] sm:$0xff]
    %v4850 = vld [vmem:[#allocation10 + $0xdb0] sm:$0xff]
    %v4851 = vld [vmem:[#allocation10 + $0xdb8] sm:$0xff]
    %v4852 = vld [vmem:[#allocation10 + $0xdc0] sm:$0xff]
    %v4853 = vld [vmem:[#allocation10 + $0xdc8] sm:$0xff]
    %v4854 = vld [vmem:[#allocation10 + $0xdd0] sm:$0xff]
    %v4855 = vld [vmem:[#allocation10 + $0xdd8] sm:$0xff]
    %v4856 = vld [vmem:[#allocation10 + $0xde0] sm:$0xff]
    %v4857 = vld [vmem:[#allocation10 + $0xde8] sm:$0xff]
    %v4858 = vld [vmem:[#allocation10 + $0xdf0] sm:$0xff]
    %v4859 = vld [vmem:[#allocation10 + $0xdf8] sm:$0xff]
    %v4860 = vld [vmem:[#allocation10 + $0xe00] sm:$0xff]
    %v4861 = vld [vmem:[#allocation10 + $0xe08] sm:$0xff]
    %v4862 = vld [vmem:[#allocation10 + $0xe10] sm:$0xff]
    %v4863 = vld [vmem:[#allocation10 + $0xe18] sm:$0xff]
    %v4864 = vld [vmem:[#allocation10 + $0xe20] sm:$0xff]
    %v4865 = vld [vmem:[#allocation10 + $0xe28] sm:$0xff]
    %v4866 = vld [vmem:[#allocation10 + $0xe30] sm:$0xff]
    %v4867 = vld [vmem:[#allocation10 + $0xe38] sm:$0xff]
    %v4868 = vld [vmem:[#allocation10 + $0xe40] sm:$0xff]
    %v4869 = vld [vmem:[#allocation10 + $0xe48] sm:$0xff]
    %v4870 = vld [vmem:[#allocation10 + $0xe50] sm:$0xff]
    %v4871 = vld [vmem:[#allocation10 + $0xe58] sm:$0xff]
    %v4872 = vld [vmem:[#allocation10 + $0xe60] sm:$0xff]
    %v4873 = vld [vmem:[#allocation10 + $0xe68] sm:$0xff]
    %v4874 = vld [vmem:[#allocation10 + $0xe70] sm:$0xff]
    %v4875 = vld [vmem:[#allocation10 + $0xe78] sm:$0xff]
    %v4876 = vld [vmem:[#allocation10 + $0xe80] sm:$0xff]
    %v4877 = vld [vmem:[#allocation10 + $0xe88] sm:$0xff]
    %v4878 = vld [vmem:[#allocation10 + $0xe90] sm:$0xff]
    %v4879 = vld [vmem:[#allocation10 + $0xe98] sm:$0xff]
    %v4880 = vld [vmem:[#allocation10 + $0xea0] sm:$0xff]
    %v4881 = vld [vmem:[#allocation10 + $0xea8] sm:$0xff]
    %v4882 = vld [vmem:[#allocation10 + $0xeb0] sm:$0xff]
    %v4883 = vld [vmem:[#allocation10 + $0xeb8] sm:$0xff]
    %v4884 = vld [vmem:[#allocation10 + $0xec0] sm:$0xff]
    %v4885 = vld [vmem:[#allocation10 + $0xec8] sm:$0xff]
    %v4886 = vld [vmem:[#allocation10 + $0xed0] sm:$0xff]
    %v4887 = vld [vmem:[#allocation10 + $0xed8] sm:$0xff]
    %v4888 = vld [vmem:[#allocation10 + $0xee0] sm:$0xff]
    %v4889 = vld [vmem:[#allocation10 + $0xee8] sm:$0xff]
    %v4890 = vld [vmem:[#allocation10 + $0xef0] sm:$0xff]
    %v4891 = vld [vmem:[#allocation10 + $0xef8] sm:$0xff]
    %v4892 = vld [vmem:[#allocation10 + $0xf00] sm:$0xff]
    %v4893 = vld [vmem:[#allocation10 + $0xf08] sm:$0xff]
    %v4894 = vld [vmem:[#allocation10 + $0xf10] sm:$0xff]
    %v4895 = vld [vmem:[#allocation10 + $0xf18] sm:$0xff]
    %v4896 = vld [vmem:[#allocation10 + $0xf20] sm:$0xff]
    %v4897 = vld [vmem:[#allocation10 + $0xf28] sm:$0xff]
    %v4898 = vld [vmem:[#allocation10 + $0xf30] sm:$0xff]
    %v4899 = vld [vmem:[#allocation10 + $0xf38] sm:$0xff]
    %v4900 = vld [vmem:[#allocation10 + $0xf40] sm:$0xff]
    %v4901 = vld [vmem:[#allocation10 + $0xf48] sm:$0xff]
    %v4902 = vld [vmem:[#allocation10 + $0xf50] sm:$0xff]
    %v4903 = vld [vmem:[#allocation10 + $0xf58] sm:$0xff]
    %v4904 = vld [vmem:[#allocation10 + $0xf60] sm:$0xff]
    %v4905 = vld [vmem:[#allocation10 + $0xf68] sm:$0xff]
    %v4906 = vld [vmem:[#allocation10 + $0xf70] sm:$0xff]
    %v4907 = vld [vmem:[#allocation10 + $0xf78] sm:$0xff]
    %v4908 = vld [vmem:[#allocation10 + $0xf80] sm:$0xff]
    %v4909 = vld [vmem:[#allocation10 + $0xf88] sm:$0xff]
    %v4910 = vld [vmem:[#allocation10 + $0xf90] sm:$0xff]
    %v4911 = vld [vmem:[#allocation10 + $0xf98] sm:$0xff]
    %v4912 = vld [vmem:[#allocation10 + $0xfa0] sm:$0xff]
    %v4913 = vld [vmem:[#allocation10 + $0xfa8] sm:$0xff]
    %v4914 = vld [vmem:[#allocation10 + $0xfb0] sm:$0xff]
    %v4915 = vld [vmem:[#allocation10 + $0xfb8] sm:$0xff]
    %v4916 = vld [vmem:[#allocation10 + $0xfc0] sm:$0xff]
    %v4917 = vld [vmem:[#allocation10 + $0xfc8] sm:$0xff]
    %v4918 = vld [vmem:[#allocation10 + $0xfd0] sm:$0xff]
    %v4919 = vld [vmem:[#allocation10 + $0xfd8] sm:$0xff]
    %v4920 = vld [vmem:[#allocation10 + $0xfe0] sm:$0xff]
    %v4921 = vld [vmem:[#allocation10 + $0xfe8] sm:$0xff]
    %v4922 = vld [vmem:[#allocation10 + $0xff0] sm:$0xff]
    %v4923 = vld [vmem:[#allocation10 + $0xff8] sm:$0xff]
    %v4924 = vld [vmem:[#allocation10 + $0x1000] sm:$0xff]
    %v4925 = vld [vmem:[#allocation10 + $0x1008] sm:$0xff]
    %v4926 = vld [vmem:[#allocation10 + $0x1010] sm:$0xff]
    %v4927 = vld [vmem:[#allocation10 + $0x1018] sm:$0xff]
    %v4928 = vld [vmem:[#allocation10 + $0x1020] sm:$0xff]
    %v4929 = vld [vmem:[#allocation10 + $0x1028] sm:$0xff]
    %v4930 = vld [vmem:[#allocation10 + $0x1030] sm:$0xff]
    %v4931 = vld [vmem:[#allocation10 + $0x1038] sm:$0xff]
    %v4932 = vld [vmem:[#allocation10 + $0x1040] sm:$0xff]
    %v4933 = vld [vmem:[#allocation10 + $0x1048] sm:$0xff]
    %v4934 = vld [vmem:[#allocation10 + $0x1050] sm:$0xff]
    %v4935 = vld [vmem:[#allocation10 + $0x1058] sm:$0xff]
    %v4936 = vld [vmem:[#allocation10 + $0x1060] sm:$0xff]
    %v4937 = vld [vmem:[#allocation10 + $0x1068] sm:$0xff]
    %v4938 = vld [vmem:[#allocation10 + $0x1070] sm:$0xff]
    %v4939 = vld [vmem:[#allocation10 + $0x1078] sm:$0xff]
    %v4940 = vld [vmem:[#allocation10 + $0x1080] sm:$0xff]
    %v4941 = vld [vmem:[#allocation10 + $0x1088] sm:$0xff]
    %v4942 = vld [vmem:[#allocation10 + $0x1090] sm:$0xff]
    %v4943 = vld [vmem:[#allocation10 + $0x1098] sm:$0xff]
    %v4944 = vld [vmem:[#allocation10 + $0x10a0] sm:$0xff]
    %v4945 = vld [vmem:[#allocation10 + $0x10a8] sm:$0xff]
    %v4946 = vld [vmem:[#allocation10 + $0x10b0] sm:$0xff]
    %v4947 = vld [vmem:[#allocation10 + $0x10b8] sm:$0xff]
    %v4948 = vld [vmem:[#allocation10 + $0x10c0] sm:$0xff]
    %v4949 = vld [vmem:[#allocation10 + $0x10c8] sm:$0xff]
    %v4950 = vld [vmem:[#allocation10 + $0x10d0] sm:$0xff]
    %v4951 = vld [vmem:[#allocation10 + $0x10d8] sm:$0xff]
    %v4952 = vld [vmem:[#allocation10 + $0x10e0] sm:$0xff]
    %v4953 = vld [vmem:[#allocation10 + $0x10e8] sm:$0xff]
    %v4954 = vld [vmem:[#allocation10 + $0x10f0] sm:$0xff]
    %v4955 = vld [vmem:[#allocation10 + $0x10f8] sm:$0xff]
    %v4956 = vld [vmem:[#allocation10 + $0x1100] sm:$0xff]
    %v4957 = vld [vmem:[#allocation10 + $0x1108] sm:$0xff]
    %v4958 = vld [vmem:[#allocation10 + $0x1110] sm:$0xff]
    %v4959 = vld [vmem:[#allocation10 + $0x1118] sm:$0xff]
    %v4960 = vld [vmem:[#allocation10 + $0x1120] sm:$0xff]
    %v4961 = vld [vmem:[#allocation10 + $0x1128] sm:$0xff]
    %v4962 = vld [vmem:[#allocation10 + $0x1130] sm:$0xff]
    %v4963 = vld [vmem:[#allocation10 + $0x1138] sm:$0xff]
    %v4964 = vld [vmem:[#allocation10 + $0x1140] sm:$0xff]
    %v4965 = vld [vmem:[#allocation10 + $0x1148] sm:$0xff]
    %v4966 = vld [vmem:[#allocation10 + $0x1150] sm:$0xff]
    %v4967 = vld [vmem:[#allocation10 + $0x1158] sm:$0xff]
    %v4968 = vld [vmem:[#allocation10 + $0x1160] sm:$0xff]
    %v4969 = vld [vmem:[#allocation10 + $0x1168] sm:$0xff]
    %v4970 = vld [vmem:[#allocation10 + $0x1170] sm:$0xff]
    %v4971 = vld [vmem:[#allocation10 + $0x1178] sm:$0xff]
    %v4972 = vld [vmem:[#allocation10 + $0x1180] sm:$0xff]
    %v4973 = vld [vmem:[#allocation10 + $0x1188] sm:$0xff]
    %v4974 = vld [vmem:[#allocation10 + $0x1190] sm:$0xff]
    %v4975 = vld [vmem:[#allocation10 + $0x1198] sm:$0xff]
    %v4976 = vld [vmem:[#allocation10 + $0x11a0] sm:$0xff]
    %v4977 = vld [vmem:[#allocation10 + $0x11a8] sm:$0xff]
    %v4978 = vld [vmem:[#allocation10 + $0x11b0] sm:$0xff]
    %v4979 = vld [vmem:[#allocation10 + $0x11b8] sm:$0xff]
    %v4980 = vld [vmem:[#allocation10 + $0x11c0] sm:$0xff]
    %v4981 = vld [vmem:[#allocation10 + $0x11c8] sm:$0xff]
    %v4982 = vld [vmem:[#allocation10 + $0x11d0] sm:$0xff]
    %v4983 = vld [vmem:[#allocation10 + $0x11d8] sm:$0xff]
    %v4984 = vld [vmem:[#allocation10 + $0x11e0] sm:$0xff]
    %v4985 = vld [vmem:[#allocation10 + $0x11e8] sm:$0xff]
    %v4986 = vld [vmem:[#allocation10 + $0x11f0] sm:$0xff]
    %v4987 = vld [vmem:[#allocation10 + $0x11f8] sm:$0xff]
    %v4988 = vld [vmem:[#allocation10 + $0x1200] sm:$0xff]
    %v4989 = vld [vmem:[#allocation10 + $0x1208] sm:$0xff]
    %v4990 = vld [vmem:[#allocation10 + $0x1210] sm:$0xff]
    %v4991 = vld [vmem:[#allocation10 + $0x1218] sm:$0xff]
    %v4992 = vld [vmem:[#allocation10 + $0x1220] sm:$0xff]
    %v4993 = vld [vmem:[#allocation10 + $0x1228] sm:$0xff]
    %v4994 = vld [vmem:[#allocation10 + $0x1230] sm:$0xff]
    %v4995 = vld [vmem:[#allocation10 + $0x1238] sm:$0xff]
    %v4996 = vld [vmem:[#allocation10 + $0x1240] sm:$0xff]
    %v4997 = vld [vmem:[#allocation10 + $0x1248] sm:$0xff]
    %v4998 = vld [vmem:[#allocation10 + $0x1250] sm:$0xff]
    %v4999 = vld [vmem:[#allocation10 + $0x1258] sm:$0xff]
    %v5000 = vld [vmem:[#allocation10 + $0x1260] sm:$0xff]
    %v5001 = vld [vmem:[#allocation10 + $0x1268] sm:$0xff]
    %v5002 = vld [vmem:[#allocation10 + $0x1270] sm:$0xff]
    %v5003 = vld [vmem:[#allocation10 + $0x1278] sm:$0xff]
    %v5004 = vld [vmem:[#allocation10 + $0x1280] sm:$0xff]
    %v5005 = vld [vmem:[#allocation10 + $0x1288] sm:$0xff]
    %v5006 = vld [vmem:[#allocation10 + $0x1290] sm:$0xff]
    %v5007 = vld [vmem:[#allocation10 + $0x1298] sm:$0xff]
    %v5008 = vld [vmem:[#allocation10 + $0x12a0] sm:$0xff]
    %v5009 = vld [vmem:[#allocation10 + $0x12a8] sm:$0xff]
    %v5010 = vld [vmem:[#allocation10 + $0x12b0] sm:$0xff]
    %v5011 = vld [vmem:[#allocation10 + $0x12b8] sm:$0xff]
    %v5012 = vld [vmem:[#allocation10 + $0x12c0] sm:$0xff]
    %v5013 = vld [vmem:[#allocation10 + $0x12c8] sm:$0xff]
    %v5014 = vld [vmem:[#allocation10 + $0x12d0] sm:$0xff]
    %v5015 = vld [vmem:[#allocation10 + $0x12d8] sm:$0xff]
    %v5016 = vld [vmem:[#allocation10 + $0x12e0] sm:$0xff]
    %v5017 = vld [vmem:[#allocation10 + $0x12e8] sm:$0xff]
    %v5018 = vld [vmem:[#allocation10 + $0x12f0] sm:$0xff]
    %v5019 = vld [vmem:[#allocation10 + $0x12f8] sm:$0xff]
    %v5020 = vld [vmem:[#allocation10 + $0x1300] sm:$0xff]
    %v5021 = vld [vmem:[#allocation10 + $0x1308] sm:$0xff]
    %v5022 = vld [vmem:[#allocation10 + $0x1310] sm:$0xff]
    %v5023 = vld [vmem:[#allocation10 + $0x1318] sm:$0xff]
    %v5024 = vld [vmem:[#allocation10 + $0x1320] sm:$0xff]
    %v5025 = vld [vmem:[#allocation10 + $0x1328] sm:$0xff]
    %v5026 = vld [vmem:[#allocation10 + $0x1330] sm:$0xff]
    %v5027 = vld [vmem:[#allocation10 + $0x1338] sm:$0xff]
    %v5028 = vld [vmem:[#allocation10 + $0x1340] sm:$0xff]
    %v5029 = vld [vmem:[#allocation10 + $0x1348] sm:$0xff]
    %v5030 = vld [vmem:[#allocation10 + $0x1350] sm:$0xff]
    %v5031 = vld [vmem:[#allocation10 + $0x1358] sm:$0xff]
    %v5032 = vld [vmem:[#allocation10 + $0x1360] sm:$0xff]
    %v5033 = vld [vmem:[#allocation10 + $0x1368] sm:$0xff]
    %v5034 = vld [vmem:[#allocation10 + $0x1370] sm:$0xff]
    %v5035 = vld [vmem:[#allocation10 + $0x1378] sm:$0xff]
    %v5036 = vld [vmem:[#allocation10 + $0x1380] sm:$0xff]
    %v5037 = vld [vmem:[#allocation10 + $0x1388] sm:$0xff]
    %v5038 = vld [vmem:[#allocation10 + $0x1390] sm:$0xff]
    %v5039 = vld [vmem:[#allocation10 + $0x1398] sm:$0xff]
    %v5040 = vld [vmem:[#allocation10 + $0x13a0] sm:$0xff]
    %v5041 = vld [vmem:[#allocation10 + $0x13a8] sm:$0xff]
    %v5042 = vld [vmem:[#allocation10 + $0x13b0] sm:$0xff]
    %v5043 = vld [vmem:[#allocation10 + $0x13b8] sm:$0xff]
    %v5044 = vld [vmem:[#allocation10 + $0x13c0] sm:$0xff]
    %v5045 = vld [vmem:[#allocation10 + $0x13c8] sm:$0xff]
    %v5046 = vld [vmem:[#allocation10 + $0x13d0] sm:$0xff]
    %v5047 = vld [vmem:[#allocation10 + $0x13d8] sm:$0xff]
    %v5048 = vld [vmem:[#allocation10 + $0x13e0] sm:$0xff]
    %v5049 = vld [vmem:[#allocation10 + $0x13e8] sm:$0xff]
    %v5050 = vld [vmem:[#allocation10 + $0x13f0] sm:$0xff]
    %v5051 = vld [vmem:[#allocation10 + $0x13f8] sm:$0xff]
    %v5052 = vld [vmem:[#allocation10 + $0x1400] sm:$0xff]
    %v5053 = vld [vmem:[#allocation10 + $0x1408] sm:$0xff]
    %v5054 = vld [vmem:[#allocation10 + $0x1410] sm:$0xff]
    %v5055 = vld [vmem:[#allocation10 + $0x1418] sm:$0xff]
    %v5056 = vld [vmem:[#allocation10 + $0x1420] sm:$0xff]
    %v5057 = vld [vmem:[#allocation10 + $0x1428] sm:$0xff]
    %v5058 = vld [vmem:[#allocation10 + $0x1430] sm:$0xff]
    %v5059 = vld [vmem:[#allocation10 + $0x1438] sm:$0xff]
    %v5060 = vld [vmem:[#allocation10 + $0x1440] sm:$0xff]
    %v5061 = vld [vmem:[#allocation10 + $0x1448] sm:$0xff]
    %v5062 = vld [vmem:[#allocation10 + $0x1450] sm:$0xff]
    %v5063 = vld [vmem:[#allocation10 + $0x1458] sm:$0xff]
    %v5064 = vld [vmem:[#allocation10 + $0x1460] sm:$0xff]
    %v5065 = vld [vmem:[#allocation10 + $0x1468] sm:$0xff]
    %v5066 = vld [vmem:[#allocation10 + $0x1470] sm:$0xff]
    %v5067 = vld [vmem:[#allocation10 + $0x1478] sm:$0xff]
    %v5068 = vld [vmem:[#allocation10 + $0x1480] sm:$0xff]
    %v5069 = vld [vmem:[#allocation10 + $0x1488] sm:$0xff]
    %v5070 = vld [vmem:[#allocation10 + $0x1490] sm:$0xff]
    %v5071 = vld [vmem:[#allocation10 + $0x1498] sm:$0xff]
    %v5072 = vld [vmem:[#allocation10 + $0x14a0] sm:$0xff]
    %v5073 = vld [vmem:[#allocation10 + $0x14a8] sm:$0xff]
    %v5074 = vld [vmem:[#allocation10 + $0x14b0] sm:$0xff]
    %v5075 = vld [vmem:[#allocation10 + $0x14b8] sm:$0xff]
    %v5076 = vld [vmem:[#allocation10 + $0x14c0] sm:$0xff]
    %v5077 = vld [vmem:[#allocation10 + $0x14c8] sm:$0xff]
    %v5078 = vld [vmem:[#allocation10 + $0x14d0] sm:$0xff]
    %v5079 = vld [vmem:[#allocation10 + $0x14d8] sm:$0xff]
    %v5080 = vld [vmem:[#allocation10 + $0x14e0] sm:$0xff]
    %v5081 = vld [vmem:[#allocation10 + $0x14e8] sm:$0xff]
    %v5082 = vld [vmem:[#allocation10 + $0x14f0] sm:$0xff]
    %v5083 = vld [vmem:[#allocation10 + $0x14f8] sm:$0xff]
    %v5084 = vld [vmem:[#allocation10 + $0x1500] sm:$0xff]
    %v5085 = vld [vmem:[#allocation10 + $0x1508] sm:$0xff]
    %v5086 = vld [vmem:[#allocation10 + $0x1510] sm:$0xff]
    %v5087 = vld [vmem:[#allocation10 + $0x1518] sm:$0xff]
    %v5088 = vld [vmem:[#allocation10 + $0x1520] sm:$0xff]
    %v5089 = vld [vmem:[#allocation10 + $0x1528] sm:$0xff]
    %v5090 = vld [vmem:[#allocation10 + $0x1530] sm:$0xff]
    %v5091 = vld [vmem:[#allocation10 + $0x1538] sm:$0xff]
    %v5092 = vld [vmem:[#allocation10 + $0x1540] sm:$0xff]
    %v5093 = vld [vmem:[#allocation10 + $0x1548] sm:$0xff]
    %v5094 = vld [vmem:[#allocation10 + $0x1550] sm:$0xff]
    %v5095 = vld [vmem:[#allocation10 + $0x1558] sm:$0xff]
    %v5096 = vld [vmem:[#allocation10 + $0x1560] sm:$0xff]
    %v5097 = vld [vmem:[#allocation10 + $0x1568] sm:$0xff]
    %v5098 = vld [vmem:[#allocation10 + $0x1570] sm:$0xff]
    %v5099 = vld [vmem:[#allocation10 + $0x1578] sm:$0xff]
    %v5100 = vld [vmem:[#allocation10 + $0x1580] sm:$0xff]
    %v5101 = vld [vmem:[#allocation10 + $0x1588] sm:$0xff]
    %v5102 = vld [vmem:[#allocation10 + $0x1590] sm:$0xff]
    %v5103 = vld [vmem:[#allocation10 + $0x1598] sm:$0xff]
    %v5104 = vld [vmem:[#allocation10 + $0x15a0] sm:$0xff]
    %v5105 = vld [vmem:[#allocation10 + $0x15a8] sm:$0xff]
    %v5106 = vld [vmem:[#allocation10 + $0x15b0] sm:$0xff]
    %v5107 = vld [vmem:[#allocation10 + $0x15b8] sm:$0xff]
    %v5108 = vld [vmem:[#allocation10 + $0x15c0] sm:$0xff]
    %v5109 = vld [vmem:[#allocation10 + $0x15c8] sm:$0xff]
    %v5110 = vld [vmem:[#allocation10 + $0x15d0] sm:$0xff]
    %v5111 = vld [vmem:[#allocation10 + $0x15d8] sm:$0xff]
    %v5112 = vld [vmem:[#allocation10 + $0x15e0] sm:$0xff]
    %v5113 = vld [vmem:[#allocation10 + $0x15e8] sm:$0xff]
    %v5114 = vld [vmem:[#allocation10 + $0x15f0] sm:$0xff]
    %v5115 = vld [vmem:[#allocation10 + $0x15f8] sm:$0xff]
    %v5116 = vld [vmem:[#allocation10 + $0x1600] sm:$0xff]
    %v5117 = vld [vmem:[#allocation10 + $0x1608] sm:$0xff]
    %v5118 = vld [vmem:[#allocation10 + $0x1610] sm:$0xff]
    %v5119 = vld [vmem:[#allocation10 + $0x1618] sm:$0xff]
    %v5120 = vld [vmem:[#allocation10 + $0x1620] sm:$0xff]
    %v5121 = vld [vmem:[#allocation10 + $0x1628] sm:$0xff]
    %v5122 = vld [vmem:[#allocation10 + $0x1630] sm:$0xff]
    %v5123 = vld [vmem:[#allocation10 + $0x1638] sm:$0xff]
    %v5124 = vld [vmem:[#allocation10 + $0x1640] sm:$0xff]
    %v5125 = vld [vmem:[#allocation10 + $0x1648] sm:$0xff]
    %v5126 = vld [vmem:[#allocation10 + $0x1650] sm:$0xff]
    %v5127 = vld [vmem:[#allocation10 + $0x1658] sm:$0xff]
    %v5128 = vld [vmem:[#allocation10 + $0x1660] sm:$0xff]
    %v5129 = vld [vmem:[#allocation10 + $0x1668] sm:$0xff]
    %v5130 = vld [vmem:[#allocation10 + $0x1670] sm:$0xff]
    %v5131 = vld [vmem:[#allocation10 + $0x1678] sm:$0xff]
    %v5132 = vld [vmem:[#allocation10 + $0x1680] sm:$0xff]
    %v5133 = vld [vmem:[#allocation10 + $0x1688] sm:$0xff]
    %v5134 = vld [vmem:[#allocation10 + $0x1690] sm:$0xff]
    %v5135 = vld [vmem:[#allocation10 + $0x1698] sm:$0xff]
    %v5136 = vld [vmem:[#allocation10 + $0x16a0] sm:$0xff]
    %v5137 = vld [vmem:[#allocation10 + $0x16a8] sm:$0xff]
    %v5138 = vld [vmem:[#allocation10 + $0x16b0] sm:$0xff]
    %v5139 = vld [vmem:[#allocation10 + $0x16b8] sm:$0xff]
    %v5140 = vld [vmem:[#allocation10 + $0x16c0] sm:$0xff]
    %v5141 = vld [vmem:[#allocation10 + $0x16c8] sm:$0xff]
    %v5142 = vld [vmem:[#allocation10 + $0x16d0] sm:$0xff]
    %v5143 = vld [vmem:[#allocation10 + $0x16d8] sm:$0xff]
    %v5144 = vld [vmem:[#allocation10 + $0x16e0] sm:$0xff]
    %v5145 = vld [vmem:[#allocation10 + $0x16e8] sm:$0xff]
    %v5146 = vld [vmem:[#allocation10 + $0x16f0] sm:$0xff]
    %v5147 = vld [vmem:[#allocation10 + $0x16f8] sm:$0xff]
    %v5148 = vld [vmem:[#allocation10 + $0x1700] sm:$0xff]
    %v5149 = vld [vmem:[#allocation10 + $0x1708] sm:$0xff]
    %v5150 = vld [vmem:[#allocation10 + $0x1710] sm:$0xff]
    %v5151 = vld [vmem:[#allocation10 + $0x1718] sm:$0xff]
    %v5152 = vld [vmem:[#allocation10 + $0x1720] sm:$0xff]
    %v5153 = vld [vmem:[#allocation10 + $0x1728] sm:$0xff]
    %v5154 = vld [vmem:[#allocation10 + $0x1730] sm:$0xff]
    %v5155 = vld [vmem:[#allocation10 + $0x1738] sm:$0xff]
    %v5156 = vld [vmem:[#allocation10 + $0x1740] sm:$0xff]
    %v5157 = vld [vmem:[#allocation10 + $0x1748] sm:$0xff]
    %v5158 = vld [vmem:[#allocation10 + $0x1750] sm:$0xff]
    %v5159 = vld [vmem:[#allocation10 + $0x1758] sm:$0xff]
    %v5160 = vld [vmem:[#allocation10 + $0x1760] sm:$0xff]
    %v5161 = vld [vmem:[#allocation10 + $0x1768] sm:$0xff]
    %v5912 = vunpack.c.l.b16 %v4412
    %v5913 = vunpack.c.h.b16 %v4412
    %v5914 = vunpack.c.l.b16 %v4413
    %v5915 = vunpack.c.h.b16 %v4413
    %v5916 = vunpack.c.l.b16 %v4414
    %v5917 = vunpack.c.h.b16 %v4414
    %v5918 = vunpack.c.l.b16 %v4415
    %v5919 = vunpack.c.h.b16 %v4415
    %v5920 = vunpack.c.l.b16 %v4416
    %v5921 = vunpack.c.h.b16 %v4416
    %v5922 = vunpack.c.l.b16 %v4417
    %v5923 = vunpack.c.h.b16 %v4417
    %v5924 = vunpack.c.l.b16 %v4418
    %v5925 = vunpack.c.h.b16 %v4418
    %v5926 = vunpack.c.l.b16 %v4419
    %v5927 = vunpack.c.h.b16 %v4419
    %v5928 = vunpack.c.l.b16 %v4420
    %v5929 = vunpack.c.h.b16 %v4420
    %v5930 = vunpack.c.l.b16 %v4421
    %v5931 = vunpack.c.h.b16 %v4421
    %v5932 = vunpack.c.l.b16 %v4422
    %v5933 = vunpack.c.h.b16 %v4422
    %v5934 = vunpack.c.l.b16 %v4423
    %v5935 = vunpack.c.h.b16 %v4423
    %v5936 = vunpack.c.l.b16 %v4424
    %v5937 = vunpack.c.h.b16 %v4424
    %v5938 = vunpack.c.l.b16 %v4425
    %v5939 = vunpack.c.h.b16 %v4425
    %v5940 = vunpack.c.l.b16 %v4426
    %v5941 = vunpack.c.h.b16 %v4426
    %v5942 = vunpack.c.l.b16 %v4427
    %v5943 = vunpack.c.h.b16 %v4427
    %v5944 = vunpack.c.l.b16 %v4428
    %v5945 = vunpack.c.h.b16 %v4428
    %v5946 = vunpack.c.l.b16 %v4429
    %v5947 = vunpack.c.h.b16 %v4429
    %v5948 = vunpack.c.l.b16 %v4430
    %v5949 = vunpack.c.h.b16 %v4430
    %v5950 = vunpack.c.l.b16 %v4431
    %v5951 = vunpack.c.h.b16 %v4431
    %v5952 = vunpack.c.l.b16 %v4432
    %v5953 = vunpack.c.h.b16 %v4432
    %v5954 = vunpack.c.l.b16 %v4433
    %v5955 = vunpack.c.h.b16 %v4433
    %v5956 = vunpack.c.l.b16 %v4434
    %v5957 = vunpack.c.h.b16 %v4434
    %v5958 = vunpack.c.l.b16 %v4435
    %v5959 = vunpack.c.h.b16 %v4435
    %v5960 = vunpack.c.l.b16 %v4436
    %v5961 = vunpack.c.h.b16 %v4436
    %v5962 = vunpack.c.l.b16 %v4437
    %v5963 = vunpack.c.h.b16 %v4437
    %v5964 = vunpack.c.l.b16 %v4438
    %v5965 = vunpack.c.h.b16 %v4438
    %v5966 = vunpack.c.l.b16 %v4439
    %v5967 = vunpack.c.h.b16 %v4439
    %v5968 = vunpack.c.l.b16 %v4440
    %v5969 = vunpack.c.h.b16 %v4440
    %v5970 = vunpack.c.l.b16 %v4441
    %v5971 = vunpack.c.h.b16 %v4441
    %v5972 = vunpack.c.l.b16 %v4442
    %v5973 = vunpack.c.h.b16 %v4442
    %v5974 = vunpack.c.l.b16 %v4443
    %v5975 = vunpack.c.h.b16 %v4443
    %v5976 = vunpack.c.l.b16 %v4444
    %v5977 = vunpack.c.h.b16 %v4444
    %v5978 = vunpack.c.l.b16 %v4445
    %v5979 = vunpack.c.h.b16 %v4445
    %v5980 = vunpack.c.l.b16 %v4446
    %v5981 = vunpack.c.h.b16 %v4446
    %v5982 = vunpack.c.l.b16 %v4447
    %v5983 = vunpack.c.h.b16 %v4447
    %v5984 = vunpack.c.l.b16 %v4448
    %v5985 = vunpack.c.h.b16 %v4448
    %v5986 = vunpack.c.l.b16 %v4449
    %v5987 = vunpack.c.h.b16 %v4449
    %v5988 = vunpack.c.l.b16 %v4450
    %v5989 = vunpack.c.h.b16 %v4450
    %v5990 = vunpack.c.l.b16 %v4451
    %v5991 = vunpack.c.h.b16 %v4451
    %v5992 = vunpack.c.l.b16 %v4452
    %v5993 = vunpack.c.h.b16 %v4452
    %v5994 = vunpack.c.l.b16 %v4453
    %v5995 = vunpack.c.h.b16 %v4453
    %v5996 = vunpack.c.l.b16 %v4454
    %v5997 = vunpack.c.h.b16 %v4454
    %v5998 = vunpack.c.l.b16 %v4455
    %v5999 = vunpack.c.h.b16 %v4455
    %v6000 = vunpack.c.l.b16 %v4456
    %v6001 = vunpack.c.h.b16 %v4456
    %v6002 = vunpack.c.l.b16 %v4457
    %v6003 = vunpack.c.h.b16 %v4457
    %v6004 = vunpack.c.l.b16 %v4458
    %v6005 = vunpack.c.h.b16 %v4458
    %v6006 = vunpack.c.l.b16 %v4459
    %v6007 = vunpack.c.h.b16 %v4459
    %v6008 = vunpack.c.l.b16 %v4460
    %v6009 = vunpack.c.h.b16 %v4460
    %v6010 = vunpack.c.l.b16 %v4461
    %v6011 = vunpack.c.h.b16 %v4461
    %v6012 = vunpack.c.l.b16 %v4462
    %v6013 = vunpack.c.h.b16 %v4462
    %v6014 = vunpack.c.l.b16 %v4463
    %v6015 = vunpack.c.h.b16 %v4463
    %v6016 = vunpack.c.l.b16 %v4464
    %v6017 = vunpack.c.h.b16 %v4464
    %v6018 = vunpack.c.l.b16 %v4465
    %v6019 = vunpack.c.h.b16 %v4465
    %v6020 = vunpack.c.l.b16 %v4466
    %v6021 = vunpack.c.h.b16 %v4466
    %v6022 = vunpack.c.l.b16 %v4467
    %v6023 = vunpack.c.h.b16 %v4467
    %v6024 = vunpack.c.l.b16 %v4468
    %v6025 = vunpack.c.h.b16 %v4468
    %v6026 = vunpack.c.l.b16 %v4469
    %v6027 = vunpack.c.h.b16 %v4469
    %v6028 = vunpack.c.l.b16 %v4470
    %v6029 = vunpack.c.h.b16 %v4470
    %v6030 = vunpack.c.l.b16 %v4471
    %v6031 = vunpack.c.h.b16 %v4471
    %v6032 = vunpack.c.l.b16 %v4472
    %v6033 = vunpack.c.h.b16 %v4472
    %v6034 = vunpack.c.l.b16 %v4473
    %v6035 = vunpack.c.h.b16 %v4473
    %v6036 = vunpack.c.l.b16 %v4474
    %v6037 = vunpack.c.h.b16 %v4474
    %v6038 = vunpack.c.l.b16 %v4475
    %v6039 = vunpack.c.h.b16 %v4475
    %v6040 = vunpack.c.l.b16 %v4476
    %v6041 = vunpack.c.h.b16 %v4476
    %v6042 = vunpack.c.l.b16 %v4477
    %v6043 = vunpack.c.h.b16 %v4477
    %v6044 = vunpack.c.l.b16 %v4478
    %v6045 = vunpack.c.h.b16 %v4478
    %v6046 = vunpack.c.l.b16 %v4479
    %v6047 = vunpack.c.h.b16 %v4479
    %v6048 = vunpack.c.l.b16 %v4480
    %v6049 = vunpack.c.h.b16 %v4480
    %v6050 = vunpack.c.l.b16 %v4481
    %v6051 = vunpack.c.h.b16 %v4481
    %v6052 = vunpack.c.l.b16 %v4482
    %v6053 = vunpack.c.h.b16 %v4482
    %v6054 = vunpack.c.l.b16 %v4483
    %v6055 = vunpack.c.h.b16 %v4483
    %v6056 = vunpack.c.l.b16 %v4484
    %v6057 = vunpack.c.h.b16 %v4484
    %v6058 = vunpack.c.l.b16 %v4485
    %v6059 = vunpack.c.h.b16 %v4485
    %v6060 = vunpack.c.l.b16 %v4486
    %v6061 = vunpack.c.h.b16 %v4486
    %v6062 = vunpack.c.l.b16 %v4487
    %v6063 = vunpack.c.h.b16 %v4487
    %v6064 = vunpack.c.l.b16 %v4488
    %v6065 = vunpack.c.h.b16 %v4488
    %v6066 = vunpack.c.l.b16 %v4489
    %v6067 = vunpack.c.h.b16 %v4489
    %v6068 = vunpack.c.l.b16 %v4490
    %v6069 = vunpack.c.h.b16 %v4490
    %v6070 = vunpack.c.l.b16 %v4491
    %v6071 = vunpack.c.h.b16 %v4491
    %v6072 = vunpack.c.l.b16 %v4492
    %v6073 = vunpack.c.h.b16 %v4492
    %v6074 = vunpack.c.l.b16 %v4493
    %v6075 = vunpack.c.h.b16 %v4493
    %v6076 = vunpack.c.l.b16 %v4494
    %v6077 = vunpack.c.h.b16 %v4494
    %v6078 = vunpack.c.l.b16 %v4495
    %v6079 = vunpack.c.h.b16 %v4495
    %v6080 = vunpack.c.l.b16 %v4496
    %v6081 = vunpack.c.h.b16 %v4496
    %v6082 = vunpack.c.l.b16 %v4497
    %v6083 = vunpack.c.h.b16 %v4497
    %v6084 = vunpack.c.l.b16 %v4498
    %v6085 = vunpack.c.h.b16 %v4498
    %v6086 = vunpack.c.l.b16 %v4499
    %v6087 = vunpack.c.h.b16 %v4499
    %v6088 = vunpack.c.l.b16 %v4500
    %v6089 = vunpack.c.h.b16 %v4500
    %v6090 = vunpack.c.l.b16 %v4501
    %v6091 = vunpack.c.h.b16 %v4501
    %v6092 = vunpack.c.l.b16 %v4502
    %v6093 = vunpack.c.h.b16 %v4502
    %v6094 = vunpack.c.l.b16 %v4503
    %v6095 = vunpack.c.h.b16 %v4503
    %v6096 = vunpack.c.l.b16 %v4504
    %v6097 = vunpack.c.h.b16 %v4504
    %v6098 = vunpack.c.l.b16 %v4505
    %v6099 = vunpack.c.h.b16 %v4505
    %v6100 = vunpack.c.l.b16 %v4506
    %v6101 = vunpack.c.h.b16 %v4506
    %v6102 = vunpack.c.l.b16 %v4507
    %v6103 = vunpack.c.h.b16 %v4507
    %v6104 = vunpack.c.l.b16 %v4508
    %v6105 = vunpack.c.h.b16 %v4508
    %v6106 = vunpack.c.l.b16 %v4509
    %v6107 = vunpack.c.h.b16 %v4509
    %v6108 = vunpack.c.l.b16 %v4510
    %v6109 = vunpack.c.h.b16 %v4510
    %v6110 = vunpack.c.l.b16 %v4511
    %v6111 = vunpack.c.h.b16 %v4511
    %v6112 = vunpack.c.l.b16 %v4512
    %v6113 = vunpack.c.h.b16 %v4512
    %v6114 = vunpack.c.l.b16 %v4513
    %v6115 = vunpack.c.h.b16 %v4513
    %v6116 = vunpack.c.l.b16 %v4514
    %v6117 = vunpack.c.h.b16 %v4514
    %v6118 = vunpack.c.l.b16 %v4515
    %v6119 = vunpack.c.h.b16 %v4515
    %v6120 = vunpack.c.l.b16 %v4516
    %v6121 = vunpack.c.h.b16 %v4516
    %v6122 = vunpack.c.l.b16 %v4517
    %v6123 = vunpack.c.h.b16 %v4517
    %v6124 = vunpack.c.l.b16 %v4518
    %v6125 = vunpack.c.h.b16 %v4518
    %v6126 = vunpack.c.l.b16 %v4519
    %v6127 = vunpack.c.h.b16 %v4519
    %v6128 = vunpack.c.l.b16 %v4520
    %v6129 = vunpack.c.h.b16 %v4520
    %v6130 = vunpack.c.l.b16 %v4521
    %v6131 = vunpack.c.h.b16 %v4521
    %v6132 = vunpack.c.l.b16 %v4522
    %v6133 = vunpack.c.h.b16 %v4522
    %v6134 = vunpack.c.l.b16 %v4523
    %v6135 = vunpack.c.h.b16 %v4523
    %v6136 = vunpack.c.l.b16 %v4524
    %v6137 = vunpack.c.h.b16 %v4524
    %v6138 = vunpack.c.l.b16 %v4525
    %v6139 = vunpack.c.h.b16 %v4525
    %v6140 = vunpack.c.l.b16 %v4526
    %v6141 = vunpack.c.h.b16 %v4526
    %v6142 = vunpack.c.l.b16 %v4527
    %v6143 = vunpack.c.h.b16 %v4527
    %v6144 = vunpack.c.l.b16 %v4528
    %v6145 = vunpack.c.h.b16 %v4528
    %v6146 = vunpack.c.l.b16 %v4529
    %v6147 = vunpack.c.h.b16 %v4529
    %v6148 = vunpack.c.l.b16 %v4530
    %v6149 = vunpack.c.h.b16 %v4530
    %v6150 = vunpack.c.l.b16 %v4531
    %v6151 = vunpack.c.h.b16 %v4531
    %v6152 = vunpack.c.l.b16 %v4532
    %v6153 = vunpack.c.h.b16 %v4532
    %v6154 = vunpack.c.l.b16 %v4533
    %v6155 = vunpack.c.h.b16 %v4533
    %v6156 = vunpack.c.l.b16 %v4534
    %v6157 = vunpack.c.h.b16 %v4534
    %v6158 = vunpack.c.l.b16 %v4535
    %v6159 = vunpack.c.h.b16 %v4535
    %v6160 = vunpack.c.l.b16 %v4536
    %v6161 = vunpack.c.h.b16 %v4536
    %v6162 = vunpack.c.l.b16 %v4537
    %v6163 = vunpack.c.h.b16 %v4537
    %v6164 = vunpack.c.l.b16 %v4538
    %v6165 = vunpack.c.h.b16 %v4538
    %v6166 = vunpack.c.l.b16 %v4539
    %v6167 = vunpack.c.h.b16 %v4539
    %v6168 = vunpack.c.l.b16 %v4540
    %v6169 = vunpack.c.h.b16 %v4540
    %v6170 = vunpack.c.l.b16 %v4541
    %v6171 = vunpack.c.h.b16 %v4541
    %v6172 = vunpack.c.l.b16 %v4542
    %v6173 = vunpack.c.h.b16 %v4542
    %v6174 = vunpack.c.l.b16 %v4543
    %v6175 = vunpack.c.h.b16 %v4543
    %v6176 = vunpack.c.l.b16 %v4544
    %v6177 = vunpack.c.h.b16 %v4544
    %v6178 = vunpack.c.l.b16 %v4545
    %v6179 = vunpack.c.h.b16 %v4545
    %v6180 = vunpack.c.l.b16 %v4546
    %v6181 = vunpack.c.h.b16 %v4546
    %v6182 = vunpack.c.l.b16 %v4547
    %v6183 = vunpack.c.h.b16 %v4547
    %v6184 = vunpack.c.l.b16 %v4548
    %v6185 = vunpack.c.h.b16 %v4548
    %v6186 = vunpack.c.l.b16 %v4549
    %v6187 = vunpack.c.h.b16 %v4549
    %v6188 = vunpack.c.l.b16 %v4550
    %v6189 = vunpack.c.h.b16 %v4550
    %v6190 = vunpack.c.l.b16 %v4551
    %v6191 = vunpack.c.h.b16 %v4551
    %v6192 = vunpack.c.l.b16 %v4552
    %v6193 = vunpack.c.h.b16 %v4552
    %v6194 = vunpack.c.l.b16 %v4553
    %v6195 = vunpack.c.h.b16 %v4553
    %v6196 = vunpack.c.l.b16 %v4554
    %v6197 = vunpack.c.h.b16 %v4554
    %v6198 = vunpack.c.l.b16 %v4555
    %v6199 = vunpack.c.h.b16 %v4555
    %v6200 = vunpack.c.l.b16 %v4556
    %v6201 = vunpack.c.h.b16 %v4556
    %v6202 = vunpack.c.l.b16 %v4557
    %v6203 = vunpack.c.h.b16 %v4557
    %v6204 = vunpack.c.l.b16 %v4558
    %v6205 = vunpack.c.h.b16 %v4558
    %v6206 = vunpack.c.l.b16 %v4559
    %v6207 = vunpack.c.h.b16 %v4559
    %v6208 = vunpack.c.l.b16 %v4560
    %v6209 = vunpack.c.h.b16 %v4560
    %v6210 = vunpack.c.l.b16 %v4561
    %v6211 = vunpack.c.h.b16 %v4561
    %v6212 = vunpack.c.l.b16 %v4562
    %v6213 = vunpack.c.h.b16 %v4562
    %v6214 = vunpack.c.l.b16 %v4563
    %v6215 = vunpack.c.h.b16 %v4563
    %v6216 = vunpack.c.l.b16 %v4564
    %v6217 = vunpack.c.h.b16 %v4564
    %v6218 = vunpack.c.l.b16 %v4565
    %v6219 = vunpack.c.h.b16 %v4565
    %v6220 = vunpack.c.l.b16 %v4566
    %v6221 = vunpack.c.h.b16 %v4566
    %v6222 = vunpack.c.l.b16 %v4567
    %v6223 = vunpack.c.h.b16 %v4567
    %v6224 = vunpack.c.l.b16 %v4568
    %v6225 = vunpack.c.h.b16 %v4568
    %v6226 = vunpack.c.l.b16 %v4569
    %v6227 = vunpack.c.h.b16 %v4569
    %v6228 = vunpack.c.l.b16 %v4570
    %v6229 = vunpack.c.h.b16 %v4570
    %v6230 = vunpack.c.l.b16 %v4571
    %v6231 = vunpack.c.h.b16 %v4571
    %v6232 = vunpack.c.l.b16 %v4572
    %v6233 = vunpack.c.h.b16 %v4572
    %v6234 = vunpack.c.l.b16 %v4573
    %v6235 = vunpack.c.h.b16 %v4573
    %v6236 = vunpack.c.l.b16 %v4574
    %v6237 = vunpack.c.h.b16 %v4574
    %v6238 = vunpack.c.l.b16 %v4575
    %v6239 = vunpack.c.h.b16 %v4575
    %v6240 = vunpack.c.l.b16 %v4576
    %v6241 = vunpack.c.h.b16 %v4576
    %v6242 = vunpack.c.l.b16 %v4577
    %v6243 = vunpack.c.h.b16 %v4577
    %v6244 = vunpack.c.l.b16 %v4578
    %v6245 = vunpack.c.h.b16 %v4578
    %v6246 = vunpack.c.l.b16 %v4579
    %v6247 = vunpack.c.h.b16 %v4579
    %v6248 = vunpack.c.l.b16 %v4580
    %v6249 = vunpack.c.h.b16 %v4580
    %v6250 = vunpack.c.l.b16 %v4581
    %v6251 = vunpack.c.h.b16 %v4581
    %v6252 = vunpack.c.l.b16 %v4582
    %v6253 = vunpack.c.h.b16 %v4582
    %v6254 = vunpack.c.l.b16 %v4583
    %v6255 = vunpack.c.h.b16 %v4583
    %v6256 = vunpack.c.l.b16 %v4584
    %v6257 = vunpack.c.h.b16 %v4584
    %v6258 = vunpack.c.l.b16 %v4585
    %v6259 = vunpack.c.h.b16 %v4585
    %v6260 = vunpack.c.l.b16 %v4586
    %v6261 = vunpack.c.h.b16 %v4586
    %v6262 = vunpack.c.l.b16 %v4587
    %v6263 = vunpack.c.h.b16 %v4587
    %v6264 = vunpack.c.l.b16 %v4588
    %v6265 = vunpack.c.h.b16 %v4588
    %v6266 = vunpack.c.l.b16 %v4589
    %v6267 = vunpack.c.h.b16 %v4589
    %v6268 = vunpack.c.l.b16 %v4590
    %v6269 = vunpack.c.h.b16 %v4590
    %v6270 = vunpack.c.l.b16 %v4591
    %v6271 = vunpack.c.h.b16 %v4591
    %v6272 = vunpack.c.l.b16 %v4592
    %v6273 = vunpack.c.h.b16 %v4592
    %v6274 = vunpack.c.l.b16 %v4593
    %v6275 = vunpack.c.h.b16 %v4593
    %v6276 = vunpack.c.l.b16 %v4594
    %v6277 = vunpack.c.h.b16 %v4594
    %v6278 = vunpack.c.l.b16 %v4595
    %v6279 = vunpack.c.h.b16 %v4595
    %v6280 = vunpack.c.l.b16 %v4596
    %v6281 = vunpack.c.h.b16 %v4596
    %v6282 = vunpack.c.l.b16 %v4597
    %v6283 = vunpack.c.h.b16 %v4597
    %v6284 = vunpack.c.l.b16 %v4598
    %v6285 = vunpack.c.h.b16 %v4598
    %v6286 = vunpack.c.l.b16 %v4599
    %v6287 = vunpack.c.h.b16 %v4599
    %v6288 = vunpack.c.l.b16 %v4600
    %v6289 = vunpack.c.h.b16 %v4600
    %v6290 = vunpack.c.l.b16 %v4601
    %v6291 = vunpack.c.h.b16 %v4601
    %v6292 = vunpack.c.l.b16 %v4602
    %v6293 = vunpack.c.h.b16 %v4602
    %v6294 = vunpack.c.l.b16 %v4603
    %v6295 = vunpack.c.h.b16 %v4603
    %v6296 = vunpack.c.l.b16 %v4604
    %v6297 = vunpack.c.h.b16 %v4604
    %v6298 = vunpack.c.l.b16 %v4605
    %v6299 = vunpack.c.h.b16 %v4605
    %v6300 = vunpack.c.l.b16 %v4606
    %v6301 = vunpack.c.h.b16 %v4606
    %v6302 = vunpack.c.l.b16 %v4607
    %v6303 = vunpack.c.h.b16 %v4607
    %v6304 = vunpack.c.l.b16 %v4608
    %v6305 = vunpack.c.h.b16 %v4608
    %v6306 = vunpack.c.l.b16 %v4609
    %v6307 = vunpack.c.h.b16 %v4609
    %v6308 = vunpack.c.l.b16 %v4610
    %v6309 = vunpack.c.h.b16 %v4610
    %v6310 = vunpack.c.l.b16 %v4611
    %v6311 = vunpack.c.h.b16 %v4611
    %v6312 = vunpack.c.l.b16 %v4612
    %v6313 = vunpack.c.h.b16 %v4612
    %v6314 = vunpack.c.l.b16 %v4613
    %v6315 = vunpack.c.h.b16 %v4613
    %v6316 = vunpack.c.l.b16 %v4614
    %v6317 = vunpack.c.h.b16 %v4614
    %v6318 = vunpack.c.l.b16 %v4615
    %v6319 = vunpack.c.h.b16 %v4615
    %v6320 = vunpack.c.l.b16 %v4616
    %v6321 = vunpack.c.h.b16 %v4616
    %v6322 = vunpack.c.l.b16 %v4617
    %v6323 = vunpack.c.h.b16 %v4617
    %v6324 = vunpack.c.l.b16 %v4618
    %v6325 = vunpack.c.h.b16 %v4618
    %v6326 = vunpack.c.l.b16 %v4619
    %v6327 = vunpack.c.h.b16 %v4619
    %v6328 = vunpack.c.l.b16 %v4620
    %v6329 = vunpack.c.h.b16 %v4620
    %v6330 = vunpack.c.l.b16 %v4621
    %v6331 = vunpack.c.h.b16 %v4621
    %v6332 = vunpack.c.l.b16 %v4622
    %v6333 = vunpack.c.h.b16 %v4622
    %v6334 = vunpack.c.l.b16 %v4623
    %v6335 = vunpack.c.h.b16 %v4623
    %v6336 = vunpack.c.l.b16 %v4624
    %v6337 = vunpack.c.h.b16 %v4624
    %v6338 = vunpack.c.l.b16 %v4625
    %v6339 = vunpack.c.h.b16 %v4625
    %v6340 = vunpack.c.l.b16 %v4626
    %v6341 = vunpack.c.h.b16 %v4626
    %v6342 = vunpack.c.l.b16 %v4627
    %v6343 = vunpack.c.h.b16 %v4627
    %v6344 = vunpack.c.l.b16 %v4628
    %v6345 = vunpack.c.h.b16 %v4628
    %v6346 = vunpack.c.l.b16 %v4629
    %v6347 = vunpack.c.h.b16 %v4629
    %v6348 = vunpack.c.l.b16 %v4630
    %v6349 = vunpack.c.h.b16 %v4630
    %v6350 = vunpack.c.l.b16 %v4631
    %v6351 = vunpack.c.h.b16 %v4631
    %v6352 = vunpack.c.l.b16 %v4632
    %v6353 = vunpack.c.h.b16 %v4632
    %v6354 = vunpack.c.l.b16 %v4633
    %v6355 = vunpack.c.h.b16 %v4633
    %v6356 = vunpack.c.l.b16 %v4634
    %v6357 = vunpack.c.h.b16 %v4634
    %v6358 = vunpack.c.l.b16 %v4635
    %v6359 = vunpack.c.h.b16 %v4635
    %v6360 = vunpack.c.l.b16 %v4636
    %v6361 = vunpack.c.h.b16 %v4636
    %v6362 = vunpack.c.l.b16 %v4637
    %v6363 = vunpack.c.h.b16 %v4637
    %v6364 = vunpack.c.l.b16 %v4638
    %v6365 = vunpack.c.h.b16 %v4638
    %v6366 = vunpack.c.l.b16 %v4639
    %v6367 = vunpack.c.h.b16 %v4639
    %v6368 = vunpack.c.l.b16 %v4640
    %v6369 = vunpack.c.h.b16 %v4640
    %v6370 = vunpack.c.l.b16 %v4641
    %v6371 = vunpack.c.h.b16 %v4641
    %v6372 = vunpack.c.l.b16 %v4642
    %v6373 = vunpack.c.h.b16 %v4642
    %v6374 = vunpack.c.l.b16 %v4643
    %v6375 = vunpack.c.h.b16 %v4643
    %v6376 = vunpack.c.l.b16 %v4644
    %v6377 = vunpack.c.h.b16 %v4644
    %v6378 = vunpack.c.l.b16 %v4645
    %v6379 = vunpack.c.h.b16 %v4645
    %v6380 = vunpack.c.l.b16 %v4646
    %v6381 = vunpack.c.h.b16 %v4646
    %v6382 = vunpack.c.l.b16 %v4647
    %v6383 = vunpack.c.h.b16 %v4647
    %v6384 = vunpack.c.l.b16 %v4648
    %v6385 = vunpack.c.h.b16 %v4648
    %v6386 = vunpack.c.l.b16 %v4649
    %v6387 = vunpack.c.h.b16 %v4649
    %v6388 = vunpack.c.l.b16 %v4650
    %v6389 = vunpack.c.h.b16 %v4650
    %v6390 = vunpack.c.l.b16 %v4651
    %v6391 = vunpack.c.h.b16 %v4651
    %v6392 = vunpack.c.l.b16 %v4652
    %v6393 = vunpack.c.h.b16 %v4652
    %v6394 = vunpack.c.l.b16 %v4653
    %v6395 = vunpack.c.h.b16 %v4653
    %v6396 = vunpack.c.l.b16 %v4654
    %v6397 = vunpack.c.h.b16 %v4654
    %v6398 = vunpack.c.l.b16 %v4655
    %v6399 = vunpack.c.h.b16 %v4655
    %v6400 = vunpack.c.l.b16 %v4656
    %v6401 = vunpack.c.h.b16 %v4656
    %v6402 = vunpack.c.l.b16 %v4657
    %v6403 = vunpack.c.h.b16 %v4657
    %v6404 = vunpack.c.l.b16 %v4658
    %v6405 = vunpack.c.h.b16 %v4658
    %v6406 = vunpack.c.l.b16 %v4659
    %v6407 = vunpack.c.h.b16 %v4659
    %v6408 = vunpack.c.l.b16 %v4660
    %v6409 = vunpack.c.h.b16 %v4660
    %v6410 = vunpack.c.l.b16 %v4661
    %v6411 = vunpack.c.h.b16 %v4661
    %v6412 = vunpack.c.l.b16 %v4662
    %v6413 = vunpack.c.h.b16 %v4662
    %v6414 = vunpack.c.l.b16 %v4663
    %v6415 = vunpack.c.h.b16 %v4663
    %v6416 = vunpack.c.l.b16 %v4664
    %v6417 = vunpack.c.h.b16 %v4664
    %v6418 = vunpack.c.l.b16 %v4665
    %v6419 = vunpack.c.h.b16 %v4665
    %v6420 = vunpack.c.l.b16 %v4666
    %v6421 = vunpack.c.h.b16 %v4666
    %v6422 = vunpack.c.l.b16 %v4667
    %v6423 = vunpack.c.h.b16 %v4667
    %v6424 = vunpack.c.l.b16 %v4668
    %v6425 = vunpack.c.h.b16 %v4668
    %v6426 = vunpack.c.l.b16 %v4669
    %v6427 = vunpack.c.h.b16 %v4669
    %v6428 = vunpack.c.l.b16 %v4670
    %v6429 = vunpack.c.h.b16 %v4670
    %v6430 = vunpack.c.l.b16 %v4671
    %v6431 = vunpack.c.h.b16 %v4671
    %v6432 = vunpack.c.l.b16 %v4672
    %v6433 = vunpack.c.h.b16 %v4672
    %v6434 = vunpack.c.l.b16 %v4673
    %v6435 = vunpack.c.h.b16 %v4673
    %v6436 = vunpack.c.l.b16 %v4674
    %v6437 = vunpack.c.h.b16 %v4674
    %v6438 = vunpack.c.l.b16 %v4675
    %v6439 = vunpack.c.h.b16 %v4675
    %v6440 = vunpack.c.l.b16 %v4676
    %v6441 = vunpack.c.h.b16 %v4676
    %v6442 = vunpack.c.l.b16 %v4677
    %v6443 = vunpack.c.h.b16 %v4677
    %v6444 = vunpack.c.l.b16 %v4678
    %v6445 = vunpack.c.h.b16 %v4678
    %v6446 = vunpack.c.l.b16 %v4679
    %v6447 = vunpack.c.h.b16 %v4679
    %v6448 = vunpack.c.l.b16 %v4680
    %v6449 = vunpack.c.h.b16 %v4680
    %v6450 = vunpack.c.l.b16 %v4681
    %v6451 = vunpack.c.h.b16 %v4681
    %v6452 = vunpack.c.l.b16 %v4682
    %v6453 = vunpack.c.h.b16 %v4682
    %v6454 = vunpack.c.l.b16 %v4683
    %v6455 = vunpack.c.h.b16 %v4683
    %v6456 = vunpack.c.l.b16 %v4684
    %v6457 = vunpack.c.h.b16 %v4684
    %v6458 = vunpack.c.l.b16 %v4685
    %v6459 = vunpack.c.h.b16 %v4685
    %v6460 = vunpack.c.l.b16 %v4686
    %v6461 = vunpack.c.h.b16 %v4686
    %v6462 = vunpack.c.l.b16 %v4687
    %v6463 = vunpack.c.h.b16 %v4687
    %v6464 = vunpack.c.l.b16 %v4688
    %v6465 = vunpack.c.h.b16 %v4688
    %v6466 = vunpack.c.l.b16 %v4689
    %v6467 = vunpack.c.h.b16 %v4689
    %v6468 = vunpack.c.l.b16 %v4690
    %v6469 = vunpack.c.h.b16 %v4690
    %v6470 = vunpack.c.l.b16 %v4691
    %v6471 = vunpack.c.h.b16 %v4691
    %v6472 = vunpack.c.l.b16 %v4692
    %v6473 = vunpack.c.h.b16 %v4692
    %v6474 = vunpack.c.l.b16 %v4693
    %v6475 = vunpack.c.h.b16 %v4693
    %v6476 = vunpack.c.l.b16 %v4694
    %v6477 = vunpack.c.h.b16 %v4694
    %v6478 = vunpack.c.l.b16 %v4695
    %v6479 = vunpack.c.h.b16 %v4695
    %v6480 = vunpack.c.l.b16 %v4696
    %v6481 = vunpack.c.h.b16 %v4696
    %v6482 = vunpack.c.l.b16 %v4697
    %v6483 = vunpack.c.h.b16 %v4697
    %v6484 = vunpack.c.l.b16 %v4698
    %v6485 = vunpack.c.h.b16 %v4698
    %v6486 = vunpack.c.l.b16 %v4699
    %v6487 = vunpack.c.h.b16 %v4699
    %v6488 = vunpack.c.l.b16 %v4700
    %v6489 = vunpack.c.h.b16 %v4700
    %v6490 = vunpack.c.l.b16 %v4701
    %v6491 = vunpack.c.h.b16 %v4701
    %v6492 = vunpack.c.l.b16 %v4702
    %v6493 = vunpack.c.h.b16 %v4702
    %v6494 = vunpack.c.l.b16 %v4703
    %v6495 = vunpack.c.h.b16 %v4703
    %v6496 = vunpack.c.l.b16 %v4704
    %v6497 = vunpack.c.h.b16 %v4704
    %v6498 = vunpack.c.l.b16 %v4705
    %v6499 = vunpack.c.h.b16 %v4705
    %v6500 = vunpack.c.l.b16 %v4706
    %v6501 = vunpack.c.h.b16 %v4706
    %v6502 = vunpack.c.l.b16 %v4707
    %v6503 = vunpack.c.h.b16 %v4707
    %v6504 = vunpack.c.l.b16 %v4708
    %v6505 = vunpack.c.h.b16 %v4708
    %v6506 = vunpack.c.l.b16 %v4709
    %v6507 = vunpack.c.h.b16 %v4709
    %v6508 = vunpack.c.l.b16 %v4710
    %v6509 = vunpack.c.h.b16 %v4710
    %v6510 = vunpack.c.l.b16 %v4711
    %v6511 = vunpack.c.h.b16 %v4711
    %v6512 = vunpack.c.l.b16 %v4712
    %v6513 = vunpack.c.h.b16 %v4712
    %v6514 = vunpack.c.l.b16 %v4713
    %v6515 = vunpack.c.h.b16 %v4713
    %v6516 = vunpack.c.l.b16 %v4714
    %v6517 = vunpack.c.h.b16 %v4714
    %v6518 = vunpack.c.l.b16 %v4715
    %v6519 = vunpack.c.h.b16 %v4715
    %v6520 = vunpack.c.l.b16 %v4716
    %v6521 = vunpack.c.h.b16 %v4716
    %v6522 = vunpack.c.l.b16 %v4717
    %v6523 = vunpack.c.h.b16 %v4717
    %v6524 = vunpack.c.l.b16 %v4718
    %v6525 = vunpack.c.h.b16 %v4718
    %v6526 = vunpack.c.l.b16 %v4719
    %v6527 = vunpack.c.h.b16 %v4719
    %v6528 = vunpack.c.l.b16 %v4720
    %v6529 = vunpack.c.h.b16 %v4720
    %v6530 = vunpack.c.l.b16 %v4721
    %v6531 = vunpack.c.h.b16 %v4721
    %v6532 = vunpack.c.l.b16 %v4722
    %v6533 = vunpack.c.h.b16 %v4722
    %v6534 = vunpack.c.l.b16 %v4723
    %v6535 = vunpack.c.h.b16 %v4723
    %v6536 = vunpack.c.l.b16 %v4724
    %v6537 = vunpack.c.h.b16 %v4724
    %v6538 = vunpack.c.l.b16 %v4725
    %v6539 = vunpack.c.h.b16 %v4725
    %v6540 = vunpack.c.l.b16 %v4726
    %v6541 = vunpack.c.h.b16 %v4726
    %v6542 = vunpack.c.l.b16 %v4727
    %v6543 = vunpack.c.h.b16 %v4727
    %v6544 = vunpack.c.l.b16 %v4728
    %v6545 = vunpack.c.h.b16 %v4728
    %v6546 = vunpack.c.l.b16 %v4729
    %v6547 = vunpack.c.h.b16 %v4729
    %v6548 = vunpack.c.l.b16 %v4730
    %v6549 = vunpack.c.h.b16 %v4730
    %v6550 = vunpack.c.l.b16 %v4731
    %v6551 = vunpack.c.h.b16 %v4731
    %v6552 = vunpack.c.l.b16 %v4732
    %v6553 = vunpack.c.h.b16 %v4732
    %v6554 = vunpack.c.l.b16 %v4733
    %v6555 = vunpack.c.h.b16 %v4733
    %v6556 = vunpack.c.l.b16 %v4734
    %v6557 = vunpack.c.h.b16 %v4734
    %v6558 = vunpack.c.l.b16 %v4735
    %v6559 = vunpack.c.h.b16 %v4735
    %v6560 = vunpack.c.l.b16 %v4736
    %v6561 = vunpack.c.h.b16 %v4736
    %v6562 = vunpack.c.l.b16 %v4737
    %v6563 = vunpack.c.h.b16 %v4737
    %v6564 = vunpack.c.l.b16 %v4738
    %v6565 = vunpack.c.h.b16 %v4738
    %v6566 = vunpack.c.l.b16 %v4739
    %v6567 = vunpack.c.h.b16 %v4739
    %v6568 = vunpack.c.l.b16 %v4740
    %v6569 = vunpack.c.h.b16 %v4740
    %v6570 = vunpack.c.l.b16 %v4741
    %v6571 = vunpack.c.h.b16 %v4741
    %v6572 = vunpack.c.l.b16 %v4742
    %v6573 = vunpack.c.h.b16 %v4742
    %v6574 = vunpack.c.l.b16 %v4743
    %v6575 = vunpack.c.h.b16 %v4743
    %v6576 = vunpack.c.l.b16 %v4744
    %v6577 = vunpack.c.h.b16 %v4744
    %v6578 = vunpack.c.l.b16 %v4745
    %v6579 = vunpack.c.h.b16 %v4745
    %v6580 = vunpack.c.l.b16 %v4746
    %v6581 = vunpack.c.h.b16 %v4746
    %v6582 = vunpack.c.l.b16 %v4747
    %v6583 = vunpack.c.h.b16 %v4747
    %v6584 = vunpack.c.l.b16 %v4748
    %v6585 = vunpack.c.h.b16 %v4748
    %v6586 = vunpack.c.l.b16 %v4749
    %v6587 = vunpack.c.h.b16 %v4749
    %v6588 = vunpack.c.l.b16 %v4750
    %v6589 = vunpack.c.h.b16 %v4750
    %v6590 = vunpack.c.l.b16 %v4751
    %v6591 = vunpack.c.h.b16 %v4751
    %v6592 = vunpack.c.l.b16 %v4752
    %v6593 = vunpack.c.h.b16 %v4752
    %v6594 = vunpack.c.l.b16 %v4753
    %v6595 = vunpack.c.h.b16 %v4753
    %v6596 = vunpack.c.l.b16 %v4754
    %v6597 = vunpack.c.h.b16 %v4754
    %v6598 = vunpack.c.l.b16 %v4755
    %v6599 = vunpack.c.h.b16 %v4755
    %v6600 = vunpack.c.l.b16 %v4756
    %v6601 = vunpack.c.h.b16 %v4756
    %v6602 = vunpack.c.l.b16 %v4757
    %v6603 = vunpack.c.h.b16 %v4757
    %v6604 = vunpack.c.l.b16 %v4758
    %v6605 = vunpack.c.h.b16 %v4758
    %v6606 = vunpack.c.l.b16 %v4759
    %v6607 = vunpack.c.h.b16 %v4759
    %v6608 = vunpack.c.l.b16 %v4760
    %v6609 = vunpack.c.h.b16 %v4760
    %v6610 = vunpack.c.l.b16 %v4761
    %v6611 = vunpack.c.h.b16 %v4761
    %v6612 = vunpack.c.l.b16 %v4762
    %v6613 = vunpack.c.h.b16 %v4762
    %v6614 = vunpack.c.l.b16 %v4763
    %v6615 = vunpack.c.h.b16 %v4763
    %v6616 = vunpack.c.l.b16 %v4764
    %v6617 = vunpack.c.h.b16 %v4764
    %v6618 = vunpack.c.l.b16 %v4765
    %v6619 = vunpack.c.h.b16 %v4765
    %v6620 = vunpack.c.l.b16 %v4766
    %v6621 = vunpack.c.h.b16 %v4766
    %v6622 = vunpack.c.l.b16 %v4767
    %v6623 = vunpack.c.h.b16 %v4767
    %v6624 = vunpack.c.l.b16 %v4768
    %v6625 = vunpack.c.h.b16 %v4768
    %v6626 = vunpack.c.l.b16 %v4769
    %v6627 = vunpack.c.h.b16 %v4769
    %v6628 = vunpack.c.l.b16 %v4770
    %v6629 = vunpack.c.h.b16 %v4770
    %v6630 = vunpack.c.l.b16 %v4771
    %v6631 = vunpack.c.h.b16 %v4771
    %v6632 = vunpack.c.l.b16 %v4772
    %v6633 = vunpack.c.h.b16 %v4772
    %v6634 = vunpack.c.l.b16 %v4773
    %v6635 = vunpack.c.h.b16 %v4773
    %v6636 = vunpack.c.l.b16 %v4774
    %v6637 = vunpack.c.h.b16 %v4774
    %v6638 = vunpack.c.l.b16 %v4775
    %v6639 = vunpack.c.h.b16 %v4775
    %v6640 = vunpack.c.l.b16 %v4776
    %v6641 = vunpack.c.h.b16 %v4776
    %v6642 = vunpack.c.l.b16 %v4777
    %v6643 = vunpack.c.h.b16 %v4777
    %v6644 = vunpack.c.l.b16 %v4778
    %v6645 = vunpack.c.h.b16 %v4778
    %v6646 = vunpack.c.l.b16 %v4779
    %v6647 = vunpack.c.h.b16 %v4779
    %v6648 = vunpack.c.l.b16 %v4780
    %v6649 = vunpack.c.h.b16 %v4780
    %v6650 = vunpack.c.l.b16 %v4781
    %v6651 = vunpack.c.h.b16 %v4781
    %v6652 = vunpack.c.l.b16 %v4782
    %v6653 = vunpack.c.h.b16 %v4782
    %v6654 = vunpack.c.l.b16 %v4783
    %v6655 = vunpack.c.h.b16 %v4783
    %v6656 = vunpack.c.l.b16 %v4784
    %v6657 = vunpack.c.h.b16 %v4784
    %v6658 = vunpack.c.l.b16 %v4785
    %v6659 = vunpack.c.h.b16 %v4785
    %v6660 = vunpack.c.l.b16 %v4786
    %v6661 = vunpack.c.h.b16 %v4786
    %v6662 = vunpack.c.l.b16 %v4787
    %v6663 = vunpack.c.h.b16 %v4787
    %v6664 = vunpack.c.l.b16 %v4788
    %v6665 = vunpack.c.h.b16 %v4788
    %v6666 = vunpack.c.l.b16 %v4789
    %v6667 = vunpack.c.h.b16 %v4789
    %v6668 = vunpack.c.l.b16 %v4790
    %v6669 = vunpack.c.h.b16 %v4790
    %v6670 = vunpack.c.l.b16 %v4791
    %v6671 = vunpack.c.h.b16 %v4791
    %v6672 = vunpack.c.l.b16 %v4792
    %v6673 = vunpack.c.h.b16 %v4792
    %v6674 = vunpack.c.l.b16 %v4793
    %v6675 = vunpack.c.h.b16 %v4793
    %v6676 = vunpack.c.l.b16 %v4794
    %v6677 = vunpack.c.h.b16 %v4794
    %v6678 = vunpack.c.l.b16 %v4795
    %v6679 = vunpack.c.h.b16 %v4795
    %v6680 = vunpack.c.l.b16 %v4796
    %v6681 = vunpack.c.h.b16 %v4796
    %v6682 = vunpack.c.l.b16 %v4797
    %v6683 = vunpack.c.h.b16 %v4797
    %v6684 = vunpack.c.l.b16 %v4798
    %v6685 = vunpack.c.h.b16 %v4798
    %v6686 = vunpack.c.l.b16 %v4799
    %v6687 = vunpack.c.h.b16 %v4799
    %v6688 = vunpack.c.l.b16 %v4800
    %v6689 = vunpack.c.h.b16 %v4800
    %v6690 = vunpack.c.l.b16 %v4801
    %v6691 = vunpack.c.h.b16 %v4801
    %v6692 = vunpack.c.l.b16 %v4802
    %v6693 = vunpack.c.h.b16 %v4802
    %v6694 = vunpack.c.l.b16 %v4803
    %v6695 = vunpack.c.h.b16 %v4803
    %v6696 = vunpack.c.l.b16 %v4804
    %v6697 = vunpack.c.h.b16 %v4804
    %v6698 = vunpack.c.l.b16 %v4805
    %v6699 = vunpack.c.h.b16 %v4805
    %v6700 = vunpack.c.l.b16 %v4806
    %v6701 = vunpack.c.h.b16 %v4806
    %v6702 = vunpack.c.l.b16 %v4807
    %v6703 = vunpack.c.h.b16 %v4807
    %v6704 = vunpack.c.l.b16 %v4808
    %v6705 = vunpack.c.h.b16 %v4808
    %v6706 = vunpack.c.l.b16 %v4809
    %v6707 = vunpack.c.h.b16 %v4809
    %v6708 = vunpack.c.l.b16 %v4810
    %v6709 = vunpack.c.h.b16 %v4810
    %v6710 = vunpack.c.l.b16 %v4811
    %v6711 = vunpack.c.h.b16 %v4811
    %v6712 = vunpack.c.l.b16 %v4812
    %v6713 = vunpack.c.h.b16 %v4812
    %v6714 = vunpack.c.l.b16 %v4813
    %v6715 = vunpack.c.h.b16 %v4813
    %v6716 = vunpack.c.l.b16 %v4814
    %v6717 = vunpack.c.h.b16 %v4814
    %v6718 = vunpack.c.l.b16 %v4815
    %v6719 = vunpack.c.h.b16 %v4815
    %v6720 = vunpack.c.l.b16 %v4816
    %v6721 = vunpack.c.h.b16 %v4816
    %v6722 = vunpack.c.l.b16 %v4817
    %v6723 = vunpack.c.h.b16 %v4817
    %v6724 = vunpack.c.l.b16 %v4818
    %v6725 = vunpack.c.h.b16 %v4818
    %v6726 = vunpack.c.l.b16 %v4819
    %v6727 = vunpack.c.h.b16 %v4819
    %v6728 = vunpack.c.l.b16 %v4820
    %v6729 = vunpack.c.h.b16 %v4820
    %v6730 = vunpack.c.l.b16 %v4821
    %v6731 = vunpack.c.h.b16 %v4821
    %v6732 = vunpack.c.l.b16 %v4822
    %v6733 = vunpack.c.h.b16 %v4822
    %v6734 = vunpack.c.l.b16 %v4823
    %v6735 = vunpack.c.h.b16 %v4823
    %v6736 = vunpack.c.l.b16 %v4824
    %v6737 = vunpack.c.h.b16 %v4824
    %v6738 = vunpack.c.l.b16 %v4825
    %v6739 = vunpack.c.h.b16 %v4825
    %v6740 = vunpack.c.l.b16 %v4826
    %v6741 = vunpack.c.h.b16 %v4826
    %v6742 = vunpack.c.l.b16 %v4827
    %v6743 = vunpack.c.h.b16 %v4827
    %v6744 = vunpack.c.l.b16 %v4828
    %v6745 = vunpack.c.h.b16 %v4828
    %v6746 = vunpack.c.l.b16 %v4829
    %v6747 = vunpack.c.h.b16 %v4829
    %v6748 = vunpack.c.l.b16 %v4830
    %v6749 = vunpack.c.h.b16 %v4830
    %v6750 = vunpack.c.l.b16 %v4831
    %v6751 = vunpack.c.h.b16 %v4831
    %v6752 = vunpack.c.l.b16 %v4832
    %v6753 = vunpack.c.h.b16 %v4832
    %v6754 = vunpack.c.l.b16 %v4833
    %v6755 = vunpack.c.h.b16 %v4833
    %v6756 = vunpack.c.l.b16 %v4834
    %v6757 = vunpack.c.h.b16 %v4834
    %v6758 = vunpack.c.l.b16 %v4835
    %v6759 = vunpack.c.h.b16 %v4835
    %v6760 = vunpack.c.l.b16 %v4836
    %v6761 = vunpack.c.h.b16 %v4836
    %v6762 = vunpack.c.l.b16 %v4837
    %v6763 = vunpack.c.h.b16 %v4837
    %v6764 = vunpack.c.l.b16 %v4838
    %v6765 = vunpack.c.h.b16 %v4838
    %v6766 = vunpack.c.l.b16 %v4839
    %v6767 = vunpack.c.h.b16 %v4839
    %v6768 = vunpack.c.l.b16 %v4840
    %v6769 = vunpack.c.h.b16 %v4840
    %v6770 = vunpack.c.l.b16 %v4841
    %v6771 = vunpack.c.h.b16 %v4841
    %v6772 = vunpack.c.l.b16 %v4842
    %v6773 = vunpack.c.h.b16 %v4842
    %v6774 = vunpack.c.l.b16 %v4843
    %v6775 = vunpack.c.h.b16 %v4843
    %v6776 = vunpack.c.l.b16 %v4844
    %v6777 = vunpack.c.h.b16 %v4844
    %v6778 = vunpack.c.l.b16 %v4845
    %v6779 = vunpack.c.h.b16 %v4845
    %v6780 = vunpack.c.l.b16 %v4846
    %v6781 = vunpack.c.h.b16 %v4846
    %v6782 = vunpack.c.l.b16 %v4847
    %v6783 = vunpack.c.h.b16 %v4847
    %v6784 = vunpack.c.l.b16 %v4848
    %v6785 = vunpack.c.h.b16 %v4848
    %v6786 = vunpack.c.l.b16 %v4849
    %v6787 = vunpack.c.h.b16 %v4849
    %v6788 = vunpack.c.l.b16 %v4850
    %v6789 = vunpack.c.h.b16 %v4850
    %v6790 = vunpack.c.l.b16 %v4851
    %v6791 = vunpack.c.h.b16 %v4851
    %v6792 = vunpack.c.l.b16 %v4852
    %v6793 = vunpack.c.h.b16 %v4852
    %v6794 = vunpack.c.l.b16 %v4853
    %v6795 = vunpack.c.h.b16 %v4853
    %v6796 = vunpack.c.l.b16 %v4854
    %v6797 = vunpack.c.h.b16 %v4854
    %v6798 = vunpack.c.l.b16 %v4855
    %v6799 = vunpack.c.h.b16 %v4855
    %v6800 = vunpack.c.l.b16 %v4856
    %v6801 = vunpack.c.h.b16 %v4856
    %v6802 = vunpack.c.l.b16 %v4857
    %v6803 = vunpack.c.h.b16 %v4857
    %v6804 = vunpack.c.l.b16 %v4858
    %v6805 = vunpack.c.h.b16 %v4858
    %v6806 = vunpack.c.l.b16 %v4859
    %v6807 = vunpack.c.h.b16 %v4859
    %v6808 = vunpack.c.l.b16 %v4860
    %v6809 = vunpack.c.h.b16 %v4860
    %v6810 = vunpack.c.l.b16 %v4861
    %v6811 = vunpack.c.h.b16 %v4861
    %v6812 = vunpack.c.l.b16 %v4862
    %v6813 = vunpack.c.h.b16 %v4862
    %v6814 = vunpack.c.l.b16 %v4863
    %v6815 = vunpack.c.h.b16 %v4863
    %v6816 = vunpack.c.l.b16 %v4864
    %v6817 = vunpack.c.h.b16 %v4864
    %v6818 = vunpack.c.l.b16 %v4865
    %v6819 = vunpack.c.h.b16 %v4865
    %v6820 = vunpack.c.l.b16 %v4866
    %v6821 = vunpack.c.h.b16 %v4866
    %v6822 = vunpack.c.l.b16 %v4867
    %v6823 = vunpack.c.h.b16 %v4867
    %v6824 = vunpack.c.l.b16 %v4868
    %v6825 = vunpack.c.h.b16 %v4868
    %v6826 = vunpack.c.l.b16 %v4869
    %v6827 = vunpack.c.h.b16 %v4869
    %v6828 = vunpack.c.l.b16 %v4870
    %v6829 = vunpack.c.h.b16 %v4870
    %v6830 = vunpack.c.l.b16 %v4871
    %v6831 = vunpack.c.h.b16 %v4871
    %v6832 = vunpack.c.l.b16 %v4872
    %v6833 = vunpack.c.h.b16 %v4872
    %v6834 = vunpack.c.l.b16 %v4873
    %v6835 = vunpack.c.h.b16 %v4873
    %v6836 = vunpack.c.l.b16 %v4874
    %v6837 = vunpack.c.h.b16 %v4874
    %v6838 = vunpack.c.l.b16 %v4875
    %v6839 = vunpack.c.h.b16 %v4875
    %v6840 = vunpack.c.l.b16 %v4876
    %v6841 = vunpack.c.h.b16 %v4876
    %v6842 = vunpack.c.l.b16 %v4877
    %v6843 = vunpack.c.h.b16 %v4877
    %v6844 = vunpack.c.l.b16 %v4878
    %v6845 = vunpack.c.h.b16 %v4878
    %v6846 = vunpack.c.l.b16 %v4879
    %v6847 = vunpack.c.h.b16 %v4879
    %v6848 = vunpack.c.l.b16 %v4880
    %v6849 = vunpack.c.h.b16 %v4880
    %v6850 = vunpack.c.l.b16 %v4881
    %v6851 = vunpack.c.h.b16 %v4881
    %v6852 = vunpack.c.l.b16 %v4882
    %v6853 = vunpack.c.h.b16 %v4882
    %v6854 = vunpack.c.l.b16 %v4883
    %v6855 = vunpack.c.h.b16 %v4883
    %v6856 = vunpack.c.l.b16 %v4884
    %v6857 = vunpack.c.h.b16 %v4884
    %v6858 = vunpack.c.l.b16 %v4885
    %v6859 = vunpack.c.h.b16 %v4885
    %v6860 = vunpack.c.l.b16 %v4886
    %v6861 = vunpack.c.h.b16 %v4886
    %v6862 = vunpack.c.l.b16 %v4887
    %v6863 = vunpack.c.h.b16 %v4887
    %v6864 = vunpack.c.l.b16 %v4888
    %v6865 = vunpack.c.h.b16 %v4888
    %v6866 = vunpack.c.l.b16 %v4889
    %v6867 = vunpack.c.h.b16 %v4889
    %v6868 = vunpack.c.l.b16 %v4890
    %v6869 = vunpack.c.h.b16 %v4890
    %v6870 = vunpack.c.l.b16 %v4891
    %v6871 = vunpack.c.h.b16 %v4891
    %v6872 = vunpack.c.l.b16 %v4892
    %v6873 = vunpack.c.h.b16 %v4892
    %v6874 = vunpack.c.l.b16 %v4893
    %v6875 = vunpack.c.h.b16 %v4893
    %v6876 = vunpack.c.l.b16 %v4894
    %v6877 = vunpack.c.h.b16 %v4894
    %v6878 = vunpack.c.l.b16 %v4895
    %v6879 = vunpack.c.h.b16 %v4895
    %v6880 = vunpack.c.l.b16 %v4896
    %v6881 = vunpack.c.h.b16 %v4896
    %v6882 = vunpack.c.l.b16 %v4897
    %v6883 = vunpack.c.h.b16 %v4897
    %v6884 = vunpack.c.l.b16 %v4898
    %v6885 = vunpack.c.h.b16 %v4898
    %v6886 = vunpack.c.l.b16 %v4899
    %v6887 = vunpack.c.h.b16 %v4899
    %v6888 = vunpack.c.l.b16 %v4900
    %v6889 = vunpack.c.h.b16 %v4900
    %v6890 = vunpack.c.l.b16 %v4901
    %v6891 = vunpack.c.h.b16 %v4901
    %v6892 = vunpack.c.l.b16 %v4902
    %v6893 = vunpack.c.h.b16 %v4902
    %v6894 = vunpack.c.l.b16 %v4903
    %v6895 = vunpack.c.h.b16 %v4903
    %v6896 = vunpack.c.l.b16 %v4904
    %v6897 = vunpack.c.h.b16 %v4904
    %v6898 = vunpack.c.l.b16 %v4905
    %v6899 = vunpack.c.h.b16 %v4905
    %v6900 = vunpack.c.l.b16 %v4906
    %v6901 = vunpack.c.h.b16 %v4906
    %v6902 = vunpack.c.l.b16 %v4907
    %v6903 = vunpack.c.h.b16 %v4907
    %v6904 = vunpack.c.l.b16 %v4908
    %v6905 = vunpack.c.h.b16 %v4908
    %v6906 = vunpack.c.l.b16 %v4909
    %v6907 = vunpack.c.h.b16 %v4909
    %v6908 = vunpack.c.l.b16 %v4910
    %v6909 = vunpack.c.h.b16 %v4910
    %v6910 = vunpack.c.l.b16 %v4911
    %v6911 = vunpack.c.h.b16 %v4911
    %v6912 = vunpack.c.l.b16 %v4912
    %v6913 = vunpack.c.h.b16 %v4912
    %v6914 = vunpack.c.l.b16 %v4913
    %v6915 = vunpack.c.h.b16 %v4913
    %v6916 = vunpack.c.l.b16 %v4914
    %v6917 = vunpack.c.h.b16 %v4914
    %v6918 = vunpack.c.l.b16 %v4915
    %v6919 = vunpack.c.h.b16 %v4915
    %v6920 = vunpack.c.l.b16 %v4916
    %v6921 = vunpack.c.h.b16 %v4916
    %v6922 = vunpack.c.l.b16 %v4917
    %v6923 = vunpack.c.h.b16 %v4917
    %v6924 = vunpack.c.l.b16 %v4918
    %v6925 = vunpack.c.h.b16 %v4918
    %v6926 = vunpack.c.l.b16 %v4919
    %v6927 = vunpack.c.h.b16 %v4919
    %v6928 = vunpack.c.l.b16 %v4920
    %v6929 = vunpack.c.h.b16 %v4920
    %v6930 = vunpack.c.l.b16 %v4921
    %v6931 = vunpack.c.h.b16 %v4921
    %v6932 = vunpack.c.l.b16 %v4922
    %v6933 = vunpack.c.h.b16 %v4922
    %v6934 = vunpack.c.l.b16 %v4923
    %v6935 = vunpack.c.h.b16 %v4923
    %v6936 = vunpack.c.l.b16 %v4924
    %v6937 = vunpack.c.h.b16 %v4924
    %v6938 = vunpack.c.l.b16 %v4925
    %v6939 = vunpack.c.h.b16 %v4925
    %v6940 = vunpack.c.l.b16 %v4926
    %v6941 = vunpack.c.h.b16 %v4926
    %v6942 = vunpack.c.l.b16 %v4927
    %v6943 = vunpack.c.h.b16 %v4927
    %v6944 = vunpack.c.l.b16 %v4928
    %v6945 = vunpack.c.h.b16 %v4928
    %v6946 = vunpack.c.l.b16 %v4929
    %v6947 = vunpack.c.h.b16 %v4929
    %v6948 = vunpack.c.l.b16 %v4930
    %v6949 = vunpack.c.h.b16 %v4930
    %v6950 = vunpack.c.l.b16 %v4931
    %v6951 = vunpack.c.h.b16 %v4931
    %v6952 = vunpack.c.l.b16 %v4932
    %v6953 = vunpack.c.h.b16 %v4932
    %v6954 = vunpack.c.l.b16 %v4933
    %v6955 = vunpack.c.h.b16 %v4933
    %v6956 = vunpack.c.l.b16 %v4934
    %v6957 = vunpack.c.h.b16 %v4934
    %v6958 = vunpack.c.l.b16 %v4935
    %v6959 = vunpack.c.h.b16 %v4935
    %v6960 = vunpack.c.l.b16 %v4936
    %v6961 = vunpack.c.h.b16 %v4936
    %v6962 = vunpack.c.l.b16 %v4937
    %v6963 = vunpack.c.h.b16 %v4937
    %v6964 = vunpack.c.l.b16 %v4938
    %v6965 = vunpack.c.h.b16 %v4938
    %v6966 = vunpack.c.l.b16 %v4939
    %v6967 = vunpack.c.h.b16 %v4939
    %v6968 = vunpack.c.l.b16 %v4940
    %v6969 = vunpack.c.h.b16 %v4940
    %v6970 = vunpack.c.l.b16 %v4941
    %v6971 = vunpack.c.h.b16 %v4941
    %v6972 = vunpack.c.l.b16 %v4942
    %v6973 = vunpack.c.h.b16 %v4942
    %v6974 = vunpack.c.l.b16 %v4943
    %v6975 = vunpack.c.h.b16 %v4943
    %v6976 = vunpack.c.l.b16 %v4944
    %v6977 = vunpack.c.h.b16 %v4944
    %v6978 = vunpack.c.l.b16 %v4945
    %v6979 = vunpack.c.h.b16 %v4945
    %v6980 = vunpack.c.l.b16 %v4946
    %v6981 = vunpack.c.h.b16 %v4946
    %v6982 = vunpack.c.l.b16 %v4947
    %v6983 = vunpack.c.h.b16 %v4947
    %v6984 = vunpack.c.l.b16 %v4948
    %v6985 = vunpack.c.h.b16 %v4948
    %v6986 = vunpack.c.l.b16 %v4949
    %v6987 = vunpack.c.h.b16 %v4949
    %v6988 = vunpack.c.l.b16 %v4950
    %v6989 = vunpack.c.h.b16 %v4950
    %v6990 = vunpack.c.l.b16 %v4951
    %v6991 = vunpack.c.h.b16 %v4951
    %v6992 = vunpack.c.l.b16 %v4952
    %v6993 = vunpack.c.h.b16 %v4952
    %v6994 = vunpack.c.l.b16 %v4953
    %v6995 = vunpack.c.h.b16 %v4953
    %v6996 = vunpack.c.l.b16 %v4954
    %v6997 = vunpack.c.h.b16 %v4954
    %v6998 = vunpack.c.l.b16 %v4955
    %v6999 = vunpack.c.h.b16 %v4955
    %v7000 = vunpack.c.l.b16 %v4956
    %v7001 = vunpack.c.h.b16 %v4956
    %v7002 = vunpack.c.l.b16 %v4957
    %v7003 = vunpack.c.h.b16 %v4957
    %v7004 = vunpack.c.l.b16 %v4958
    %v7005 = vunpack.c.h.b16 %v4958
    %v7006 = vunpack.c.l.b16 %v4959
    %v7007 = vunpack.c.h.b16 %v4959
    %v7008 = vunpack.c.l.b16 %v4960
    %v7009 = vunpack.c.h.b16 %v4960
    %v7010 = vunpack.c.l.b16 %v4961
    %v7011 = vunpack.c.h.b16 %v4961
    %v7012 = vunpack.c.l.b16 %v4962
    %v7013 = vunpack.c.h.b16 %v4962
    %v7014 = vunpack.c.l.b16 %v4963
    %v7015 = vunpack.c.h.b16 %v4963
    %v7016 = vunpack.c.l.b16 %v4964
    %v7017 = vunpack.c.h.b16 %v4964
    %v7018 = vunpack.c.l.b16 %v4965
    %v7019 = vunpack.c.h.b16 %v4965
    %v7020 = vunpack.c.l.b16 %v4966
    %v7021 = vunpack.c.h.b16 %v4966
    %v7022 = vunpack.c.l.b16 %v4967
    %v7023 = vunpack.c.h.b16 %v4967
    %v7024 = vunpack.c.l.b16 %v4968
    %v7025 = vunpack.c.h.b16 %v4968
    %v7026 = vunpack.c.l.b16 %v4969
    %v7027 = vunpack.c.h.b16 %v4969
    %v7028 = vunpack.c.l.b16 %v4970
    %v7029 = vunpack.c.h.b16 %v4970
    %v7030 = vunpack.c.l.b16 %v4971
    %v7031 = vunpack.c.h.b16 %v4971
    %v7032 = vunpack.c.l.b16 %v4972
    %v7033 = vunpack.c.h.b16 %v4972
    %v7034 = vunpack.c.l.b16 %v4973
    %v7035 = vunpack.c.h.b16 %v4973
    %v7036 = vunpack.c.l.b16 %v4974
    %v7037 = vunpack.c.h.b16 %v4974
    %v7038 = vunpack.c.l.b16 %v4975
    %v7039 = vunpack.c.h.b16 %v4975
    %v7040 = vunpack.c.l.b16 %v4976
    %v7041 = vunpack.c.h.b16 %v4976
    %v7042 = vunpack.c.l.b16 %v4977
    %v7043 = vunpack.c.h.b16 %v4977
    %v7044 = vunpack.c.l.b16 %v4978
    %v7045 = vunpack.c.h.b16 %v4978
    %v7046 = vunpack.c.l.b16 %v4979
    %v7047 = vunpack.c.h.b16 %v4979
    %v7048 = vunpack.c.l.b16 %v4980
    %v7049 = vunpack.c.h.b16 %v4980
    %v7050 = vunpack.c.l.b16 %v4981
    %v7051 = vunpack.c.h.b16 %v4981
    %v7052 = vunpack.c.l.b16 %v4982
    %v7053 = vunpack.c.h.b16 %v4982
    %v7054 = vunpack.c.l.b16 %v4983
    %v7055 = vunpack.c.h.b16 %v4983
    %v7056 = vunpack.c.l.b16 %v4984
    %v7057 = vunpack.c.h.b16 %v4984
    %v7058 = vunpack.c.l.b16 %v4985
    %v7059 = vunpack.c.h.b16 %v4985
    %v7060 = vunpack.c.l.b16 %v4986
    %v7061 = vunpack.c.h.b16 %v4986
    %v7062 = vunpack.c.l.b16 %v4987
    %v7063 = vunpack.c.h.b16 %v4987
    %v7064 = vunpack.c.l.b16 %v4988
    %v7065 = vunpack.c.h.b16 %v4988
    %v7066 = vunpack.c.l.b16 %v4989
    %v7067 = vunpack.c.h.b16 %v4989
    %v7068 = vunpack.c.l.b16 %v4990
    %v7069 = vunpack.c.h.b16 %v4990
    %v7070 = vunpack.c.l.b16 %v4991
    %v7071 = vunpack.c.h.b16 %v4991
    %v7072 = vunpack.c.l.b16 %v4992
    %v7073 = vunpack.c.h.b16 %v4992
    %v7074 = vunpack.c.l.b16 %v4993
    %v7075 = vunpack.c.h.b16 %v4993
    %v7076 = vunpack.c.l.b16 %v4994
    %v7077 = vunpack.c.h.b16 %v4994
    %v7078 = vunpack.c.l.b16 %v4995
    %v7079 = vunpack.c.h.b16 %v4995
    %v7080 = vunpack.c.l.b16 %v4996
    %v7081 = vunpack.c.h.b16 %v4996
    %v7082 = vunpack.c.l.b16 %v4997
    %v7083 = vunpack.c.h.b16 %v4997
    %v7084 = vunpack.c.l.b16 %v4998
    %v7085 = vunpack.c.h.b16 %v4998
    %v7086 = vunpack.c.l.b16 %v4999
    %v7087 = vunpack.c.h.b16 %v4999
    %v7088 = vunpack.c.l.b16 %v5000
    %v7089 = vunpack.c.h.b16 %v5000
    %v7090 = vunpack.c.l.b16 %v5001
    %v7091 = vunpack.c.h.b16 %v5001
    %v7092 = vunpack.c.l.b16 %v5002
    %v7093 = vunpack.c.h.b16 %v5002
    %v7094 = vunpack.c.l.b16 %v5003
    %v7095 = vunpack.c.h.b16 %v5003
    %v7096 = vunpack.c.l.b16 %v5004
    %v7097 = vunpack.c.h.b16 %v5004
    %v7098 = vunpack.c.l.b16 %v5005
    %v7099 = vunpack.c.h.b16 %v5005
    %v7100 = vunpack.c.l.b16 %v5006
    %v7101 = vunpack.c.h.b16 %v5006
    %v7102 = vunpack.c.l.b16 %v5007
    %v7103 = vunpack.c.h.b16 %v5007
    %v7104 = vunpack.c.l.b16 %v5008
    %v7105 = vunpack.c.h.b16 %v5008
    %v7106 = vunpack.c.l.b16 %v5009
    %v7107 = vunpack.c.h.b16 %v5009
    %v7108 = vunpack.c.l.b16 %v5010
    %v7109 = vunpack.c.h.b16 %v5010
    %v7110 = vunpack.c.l.b16 %v5011
    %v7111 = vunpack.c.h.b16 %v5011
    %v7112 = vunpack.c.l.b16 %v5012
    %v7113 = vunpack.c.h.b16 %v5012
    %v7114 = vunpack.c.l.b16 %v5013
    %v7115 = vunpack.c.h.b16 %v5013
    %v7116 = vunpack.c.l.b16 %v5014
    %v7117 = vunpack.c.h.b16 %v5014
    %v7118 = vunpack.c.l.b16 %v5015
    %v7119 = vunpack.c.h.b16 %v5015
    %v7120 = vunpack.c.l.b16 %v5016
    %v7121 = vunpack.c.h.b16 %v5016
    %v7122 = vunpack.c.l.b16 %v5017
    %v7123 = vunpack.c.h.b16 %v5017
    %v7124 = vunpack.c.l.b16 %v5018
    %v7125 = vunpack.c.h.b16 %v5018
    %v7126 = vunpack.c.l.b16 %v5019
    %v7127 = vunpack.c.h.b16 %v5019
    %v7128 = vunpack.c.l.b16 %v5020
    %v7129 = vunpack.c.h.b16 %v5020
    %v7130 = vunpack.c.l.b16 %v5021
    %v7131 = vunpack.c.h.b16 %v5021
    %v7132 = vunpack.c.l.b16 %v5022
    %v7133 = vunpack.c.h.b16 %v5022
    %v7134 = vunpack.c.l.b16 %v5023
    %v7135 = vunpack.c.h.b16 %v5023
    %v7136 = vunpack.c.l.b16 %v5024
    %v7137 = vunpack.c.h.b16 %v5024
    %v7138 = vunpack.c.l.b16 %v5025
    %v7139 = vunpack.c.h.b16 %v5025
    %v7140 = vunpack.c.l.b16 %v5026
    %v7141 = vunpack.c.h.b16 %v5026
    %v7142 = vunpack.c.l.b16 %v5027
    %v7143 = vunpack.c.h.b16 %v5027
    %v7144 = vunpack.c.l.b16 %v5028
    %v7145 = vunpack.c.h.b16 %v5028
    %v7146 = vunpack.c.l.b16 %v5029
    %v7147 = vunpack.c.h.b16 %v5029
    %v7148 = vunpack.c.l.b16 %v5030
    %v7149 = vunpack.c.h.b16 %v5030
    %v7150 = vunpack.c.l.b16 %v5031
    %v7151 = vunpack.c.h.b16 %v5031
    %v7152 = vunpack.c.l.b16 %v5032
    %v7153 = vunpack.c.h.b16 %v5032
    %v7154 = vunpack.c.l.b16 %v5033
    %v7155 = vunpack.c.h.b16 %v5033
    %v7156 = vunpack.c.l.b16 %v5034
    %v7157 = vunpack.c.h.b16 %v5034
    %v7158 = vunpack.c.l.b16 %v5035
    %v7159 = vunpack.c.h.b16 %v5035
    %v7160 = vunpack.c.l.b16 %v5036
    %v7161 = vunpack.c.h.b16 %v5036
    %v7162 = vunpack.c.l.b16 %v5037
    %v7163 = vunpack.c.h.b16 %v5037
    %v7164 = vunpack.c.l.b16 %v5038
    %v7165 = vunpack.c.h.b16 %v5038
    %v7166 = vunpack.c.l.b16 %v5039
    %v7167 = vunpack.c.h.b16 %v5039
    %v7168 = vunpack.c.l.b16 %v5040
    %v7169 = vunpack.c.h.b16 %v5040
    %v7170 = vunpack.c.l.b16 %v5041
    %v7171 = vunpack.c.h.b16 %v5041
    %v7172 = vunpack.c.l.b16 %v5042
    %v7173 = vunpack.c.h.b16 %v5042
    %v7174 = vunpack.c.l.b16 %v5043
    %v7175 = vunpack.c.h.b16 %v5043
    %v7176 = vunpack.c.l.b16 %v5044
    %v7177 = vunpack.c.h.b16 %v5044
    %v7178 = vunpack.c.l.b16 %v5045
    %v7179 = vunpack.c.h.b16 %v5045
    %v7180 = vunpack.c.l.b16 %v5046
    %v7181 = vunpack.c.h.b16 %v5046
    %v7182 = vunpack.c.l.b16 %v5047
    %v7183 = vunpack.c.h.b16 %v5047
    %v7184 = vunpack.c.l.b16 %v5048
    %v7185 = vunpack.c.h.b16 %v5048
    %v7186 = vunpack.c.l.b16 %v5049
    %v7187 = vunpack.c.h.b16 %v5049
    %v7188 = vunpack.c.l.b16 %v5050
    %v7189 = vunpack.c.h.b16 %v5050
    %v7190 = vunpack.c.l.b16 %v5051
    %v7191 = vunpack.c.h.b16 %v5051
    %v7192 = vunpack.c.l.b16 %v5052
    %v7193 = vunpack.c.h.b16 %v5052
    %v7194 = vunpack.c.l.b16 %v5053
    %v7195 = vunpack.c.h.b16 %v5053
    %v7196 = vunpack.c.l.b16 %v5054
    %v7197 = vunpack.c.h.b16 %v5054
    %v7198 = vunpack.c.l.b16 %v5055
    %v7199 = vunpack.c.h.b16 %v5055
    %v7200 = vunpack.c.l.b16 %v5056
    %v7201 = vunpack.c.h.b16 %v5056
    %v7202 = vunpack.c.l.b16 %v5057
    %v7203 = vunpack.c.h.b16 %v5057
    %v7204 = vunpack.c.l.b16 %v5058
    %v7205 = vunpack.c.h.b16 %v5058
    %v7206 = vunpack.c.l.b16 %v5059
    %v7207 = vunpack.c.h.b16 %v5059
    %v7208 = vunpack.c.l.b16 %v5060
    %v7209 = vunpack.c.h.b16 %v5060
    %v7210 = vunpack.c.l.b16 %v5061
    %v7211 = vunpack.c.h.b16 %v5061
    %v7212 = vunpack.c.l.b16 %v5062
    %v7213 = vunpack.c.h.b16 %v5062
    %v7214 = vunpack.c.l.b16 %v5063
    %v7215 = vunpack.c.h.b16 %v5063
    %v7216 = vunpack.c.l.b16 %v5064
    %v7217 = vunpack.c.h.b16 %v5064
    %v7218 = vunpack.c.l.b16 %v5065
    %v7219 = vunpack.c.h.b16 %v5065
    %v7220 = vunpack.c.l.b16 %v5066
    %v7221 = vunpack.c.h.b16 %v5066
    %v7222 = vunpack.c.l.b16 %v5067
    %v7223 = vunpack.c.h.b16 %v5067
    %v7224 = vunpack.c.l.b16 %v5068
    %v7225 = vunpack.c.h.b16 %v5068
    %v7226 = vunpack.c.l.b16 %v5069
    %v7227 = vunpack.c.h.b16 %v5069
    %v7228 = vunpack.c.l.b16 %v5070
    %v7229 = vunpack.c.h.b16 %v5070
    %v7230 = vunpack.c.l.b16 %v5071
    %v7231 = vunpack.c.h.b16 %v5071
    %v7232 = vunpack.c.l.b16 %v5072
    %v7233 = vunpack.c.h.b16 %v5072
    %v7234 = vunpack.c.l.b16 %v5073
    %v7235 = vunpack.c.h.b16 %v5073
    %v7236 = vunpack.c.l.b16 %v5074
    %v7237 = vunpack.c.h.b16 %v5074
    %v7238 = vunpack.c.l.b16 %v5075
    %v7239 = vunpack.c.h.b16 %v5075
    %v7240 = vunpack.c.l.b16 %v5076
    %v7241 = vunpack.c.h.b16 %v5076
    %v7242 = vunpack.c.l.b16 %v5077
    %v7243 = vunpack.c.h.b16 %v5077
    %v7244 = vunpack.c.l.b16 %v5078
    %v7245 = vunpack.c.h.b16 %v5078
    %v7246 = vunpack.c.l.b16 %v5079
    %v7247 = vunpack.c.h.b16 %v5079
    %v7248 = vunpack.c.l.b16 %v5080
    %v7249 = vunpack.c.h.b16 %v5080
    %v7250 = vunpack.c.l.b16 %v5081
    %v7251 = vunpack.c.h.b16 %v5081
    %v7252 = vunpack.c.l.b16 %v5082
    %v7253 = vunpack.c.h.b16 %v5082
    %v7254 = vunpack.c.l.b16 %v5083
    %v7255 = vunpack.c.h.b16 %v5083
    %v7256 = vunpack.c.l.b16 %v5084
    %v7257 = vunpack.c.h.b16 %v5084
    %v7258 = vunpack.c.l.b16 %v5085
    %v7259 = vunpack.c.h.b16 %v5085
    %v7260 = vunpack.c.l.b16 %v5086
    %v7261 = vunpack.c.h.b16 %v5086
    %v7262 = vunpack.c.l.b16 %v5087
    %v7263 = vunpack.c.h.b16 %v5087
    %v7264 = vunpack.c.l.b16 %v5088
    %v7265 = vunpack.c.h.b16 %v5088
    %v7266 = vunpack.c.l.b16 %v5089
    %v7267 = vunpack.c.h.b16 %v5089
    %v7268 = vunpack.c.l.b16 %v5090
    %v7269 = vunpack.c.h.b16 %v5090
    %v7270 = vunpack.c.l.b16 %v5091
    %v7271 = vunpack.c.h.b16 %v5091
    %v7272 = vunpack.c.l.b16 %v5092
    %v7273 = vunpack.c.h.b16 %v5092
    %v7274 = vunpack.c.l.b16 %v5093
    %v7275 = vunpack.c.h.b16 %v5093
    %v7276 = vunpack.c.l.b16 %v5094
    %v7277 = vunpack.c.h.b16 %v5094
    %v7278 = vunpack.c.l.b16 %v5095
    %v7279 = vunpack.c.h.b16 %v5095
    %v7280 = vunpack.c.l.b16 %v5096
    %v7281 = vunpack.c.h.b16 %v5096
    %v7282 = vunpack.c.l.b16 %v5097
    %v7283 = vunpack.c.h.b16 %v5097
    %v7284 = vunpack.c.l.b16 %v5098
    %v7285 = vunpack.c.h.b16 %v5098
    %v7286 = vunpack.c.l.b16 %v5099
    %v7287 = vunpack.c.h.b16 %v5099
    %v7288 = vunpack.c.l.b16 %v5100
    %v7289 = vunpack.c.h.b16 %v5100
    %v7290 = vunpack.c.l.b16 %v5101
    %v7291 = vunpack.c.h.b16 %v5101
    %v7292 = vunpack.c.l.b16 %v5102
    %v7293 = vunpack.c.h.b16 %v5102
    %v7294 = vunpack.c.l.b16 %v5103
    %v7295 = vunpack.c.h.b16 %v5103
    %v7296 = vunpack.c.l.b16 %v5104
    %v7297 = vunpack.c.h.b16 %v5104
    %v7298 = vunpack.c.l.b16 %v5105
    %v7299 = vunpack.c.h.b16 %v5105
    %v7300 = vunpack.c.l.b16 %v5106
    %v7301 = vunpack.c.h.b16 %v5106
    %v7302 = vunpack.c.l.b16 %v5107
    %v7303 = vunpack.c.h.b16 %v5107
    %v7304 = vunpack.c.l.b16 %v5108
    %v7305 = vunpack.c.h.b16 %v5108
    %v7306 = vunpack.c.l.b16 %v5109
    %v7307 = vunpack.c.h.b16 %v5109
    %v7308 = vunpack.c.l.b16 %v5110
    %v7309 = vunpack.c.h.b16 %v5110
    %v7310 = vunpack.c.l.b16 %v5111
    %v7311 = vunpack.c.h.b16 %v5111
    %v7312 = vunpack.c.l.b16 %v5112
    %v7313 = vunpack.c.h.b16 %v5112
    %v7314 = vunpack.c.l.b16 %v5113
    %v7315 = vunpack.c.h.b16 %v5113
    %v7316 = vunpack.c.l.b16 %v5114
    %v7317 = vunpack.c.h.b16 %v5114
    %v7318 = vunpack.c.l.b16 %v5115
    %v7319 = vunpack.c.h.b16 %v5115
    %v7320 = vunpack.c.l.b16 %v5116
    %v7321 = vunpack.c.h.b16 %v5116
    %v7322 = vunpack.c.l.b16 %v5117
    %v7323 = vunpack.c.h.b16 %v5117
    %v7324 = vunpack.c.l.b16 %v5118
    %v7325 = vunpack.c.h.b16 %v5118
    %v7326 = vunpack.c.l.b16 %v5119
    %v7327 = vunpack.c.h.b16 %v5119
    %v7328 = vunpack.c.l.b16 %v5120
    %v7329 = vunpack.c.h.b16 %v5120
    %v7330 = vunpack.c.l.b16 %v5121
    %v7331 = vunpack.c.h.b16 %v5121
    %v7332 = vunpack.c.l.b16 %v5122
    %v7333 = vunpack.c.h.b16 %v5122
    %v7334 = vunpack.c.l.b16 %v5123
    %v7335 = vunpack.c.h.b16 %v5123
    %v7336 = vunpack.c.l.b16 %v5124
    %v7337 = vunpack.c.h.b16 %v5124
    %v7338 = vunpack.c.l.b16 %v5125
    %v7339 = vunpack.c.h.b16 %v5125
    %v7340 = vunpack.c.l.b16 %v5126
    %v7341 = vunpack.c.h.b16 %v5126
    %v7342 = vunpack.c.l.b16 %v5127
    %v7343 = vunpack.c.h.b16 %v5127
    %v7344 = vunpack.c.l.b16 %v5128
    %v7345 = vunpack.c.h.b16 %v5128
    %v7346 = vunpack.c.l.b16 %v5129
    %v7347 = vunpack.c.h.b16 %v5129
    %v7348 = vunpack.c.l.b16 %v5130
    %v7349 = vunpack.c.h.b16 %v5130
    %v7350 = vunpack.c.l.b16 %v5131
    %v7351 = vunpack.c.h.b16 %v5131
    %v7352 = vunpack.c.l.b16 %v5132
    %v7353 = vunpack.c.h.b16 %v5132
    %v7354 = vunpack.c.l.b16 %v5133
    %v7355 = vunpack.c.h.b16 %v5133
    %v7356 = vunpack.c.l.b16 %v5134
    %v7357 = vunpack.c.h.b16 %v5134
    %v7358 = vunpack.c.l.b16 %v5135
    %v7359 = vunpack.c.h.b16 %v5135
    %v7360 = vunpack.c.l.b16 %v5136
    %v7361 = vunpack.c.h.b16 %v5136
    %v7362 = vunpack.c.l.b16 %v5137
    %v7363 = vunpack.c.h.b16 %v5137
    %v7364 = vunpack.c.l.b16 %v5138
    %v7365 = vunpack.c.h.b16 %v5138
    %v7366 = vunpack.c.l.b16 %v5139
    %v7367 = vunpack.c.h.b16 %v5139
    %v7368 = vunpack.c.l.b16 %v5140
    %v7369 = vunpack.c.h.b16 %v5140
    %v7370 = vunpack.c.l.b16 %v5141
    %v7371 = vunpack.c.h.b16 %v5141
    %v7372 = vunpack.c.l.b16 %v5142
    %v7373 = vunpack.c.h.b16 %v5142
    %v7374 = vunpack.c.l.b16 %v5143
    %v7375 = vunpack.c.h.b16 %v5143
    %v7376 = vunpack.c.l.b16 %v5144
    %v7377 = vunpack.c.h.b16 %v5144
    %v7378 = vunpack.c.l.b16 %v5145
    %v7379 = vunpack.c.h.b16 %v5145
    %v7380 = vunpack.c.l.b16 %v5146
    %v7381 = vunpack.c.h.b16 %v5146
    %v7382 = vunpack.c.l.b16 %v5147
    %v7383 = vunpack.c.h.b16 %v5147
    %v7384 = vunpack.c.l.b16 %v5148
    %v7385 = vunpack.c.h.b16 %v5148
    %v7386 = vunpack.c.l.b16 %v5149
    %v7387 = vunpack.c.h.b16 %v5149
    %v7388 = vunpack.c.l.b16 %v5150
    %v7389 = vunpack.c.h.b16 %v5150
    %v7390 = vunpack.c.l.b16 %v5151
    %v7391 = vunpack.c.h.b16 %v5151
    %v7392 = vunpack.c.l.b16 %v5152
    %v7393 = vunpack.c.h.b16 %v5152
    %v7394 = vunpack.c.l.b16 %v5153
    %v7395 = vunpack.c.h.b16 %v5153
    %v7396 = vunpack.c.l.b16 %v5154
    %v7397 = vunpack.c.h.b16 %v5154
    %v7398 = vunpack.c.l.b16 %v5155
    %v7399 = vunpack.c.h.b16 %v5155
    %v7400 = vunpack.c.l.b16 %v5156
    %v7401 = vunpack.c.h.b16 %v5156
    %v7402 = vunpack.c.l.b16 %v5157
    %v7403 = vunpack.c.h.b16 %v5157
    %v7404 = vunpack.c.l.b16 %v5158
    %v7405 = vunpack.c.h.b16 %v5158
    %v7406 = vunpack.c.l.b16 %v5159
    %v7407 = vunpack.c.h.b16 %v5159
    %v7408 = vunpack.c.l.b16 %v5160
    %v7409 = vunpack.c.h.b16 %v5160
    %v7410 = vunpack.c.l.b16 %v5161
    %v7411 = vunpack.c.h.b16 %v5161
    %v7412 = vpack.c.b16 %v5922, %v5912
    %v7413 = vpack.c.b16 %v5923, %v5913
    %v7414 = vpack.c.b16 %v5924, %v5914
    %v7415 = vpack.c.b16 %v5925, %v5915
    %v7416 = vpack.c.b16 %v5926, %v5916
    %v7417 = vpack.c.b16 %v5927, %v5917
    %v7418 = vpack.c.b16 %v5928, %v5918
    %v7419 = vpack.c.b16 %v5929, %v5919
    %v7420 = vpack.c.b16 %v5930, %v5920
    %v7421 = vpack.c.b16 %v5931, %v5921
    %v7422 = vpack.c.b16 %v5942, %v5932
    %v7423 = vpack.c.b16 %v5943, %v5933
    %v7424 = vpack.c.b16 %v5944, %v5934
    %v7425 = vpack.c.b16 %v5945, %v5935
    %v7426 = vpack.c.b16 %v5946, %v5936
    %v7427 = vpack.c.b16 %v5947, %v5937
    %v7428 = vpack.c.b16 %v5948, %v5938
    %v7429 = vpack.c.b16 %v5949, %v5939
    %v7430 = vpack.c.b16 %v5950, %v5940
    %v7431 = vpack.c.b16 %v5951, %v5941
    %v7432 = vpack.c.b16 %v5962, %v5952
    %v7433 = vpack.c.b16 %v5963, %v5953
    %v7434 = vpack.c.b16 %v5964, %v5954
    %v7435 = vpack.c.b16 %v5965, %v5955
    %v7436 = vpack.c.b16 %v5966, %v5956
    %v7437 = vpack.c.b16 %v5967, %v5957
    %v7438 = vpack.c.b16 %v5968, %v5958
    %v7439 = vpack.c.b16 %v5969, %v5959
    %v7440 = vpack.c.b16 %v5970, %v5960
    %v7441 = vpack.c.b16 %v5971, %v5961
    %v7442 = vpack.c.b16 %v5982, %v5972
    %v7443 = vpack.c.b16 %v5983, %v5973
    %v7444 = vpack.c.b16 %v5984, %v5974
    %v7445 = vpack.c.b16 %v5985, %v5975
    %v7446 = vpack.c.b16 %v5986, %v5976
    %v7447 = vpack.c.b16 %v5987, %v5977
    %v7448 = vpack.c.b16 %v5988, %v5978
    %v7449 = vpack.c.b16 %v5989, %v5979
    %v7450 = vpack.c.b16 %v5990, %v5980
    %v7451 = vpack.c.b16 %v5991, %v5981
    %v7452 = vpack.c.b16 %v6002, %v5992
    %v7453 = vpack.c.b16 %v6003, %v5993
    %v7454 = vpack.c.b16 %v6004, %v5994
    %v7455 = vpack.c.b16 %v6005, %v5995
    %v7456 = vpack.c.b16 %v6006, %v5996
    %v7457 = vpack.c.b16 %v6007, %v5997
    %v7458 = vpack.c.b16 %v6008, %v5998
    %v7459 = vpack.c.b16 %v6009, %v5999
    %v7460 = vpack.c.b16 %v6010, %v6000
    %v7461 = vpack.c.b16 %v6011, %v6001
    %v7462 = vpack.c.b16 %v6022, %v6012
    %v7463 = vpack.c.b16 %v6023, %v6013
    %v7464 = vpack.c.b16 %v6024, %v6014
    %v7465 = vpack.c.b16 %v6025, %v6015
    %v7466 = vpack.c.b16 %v6026, %v6016
    %v7467 = vpack.c.b16 %v6027, %v6017
    %v7468 = vpack.c.b16 %v6028, %v6018
    %v7469 = vpack.c.b16 %v6029, %v6019
    %v7470 = vpack.c.b16 %v6030, %v6020
    %v7471 = vpack.c.b16 %v6031, %v6021
    %v7472 = vpack.c.b16 %v6042, %v6032
    %v7473 = vpack.c.b16 %v6043, %v6033
    %v7474 = vpack.c.b16 %v6044, %v6034
    %v7475 = vpack.c.b16 %v6045, %v6035
    %v7476 = vpack.c.b16 %v6046, %v6036
    %v7477 = vpack.c.b16 %v6047, %v6037
    %v7478 = vpack.c.b16 %v6048, %v6038
    %v7479 = vpack.c.b16 %v6049, %v6039
    %v7480 = vpack.c.b16 %v6050, %v6040
    %v7481 = vpack.c.b16 %v6051, %v6041
    %v7482 = vpack.c.b16 %v6062, %v6052
    %v7483 = vpack.c.b16 %v6063, %v6053
    %v7484 = vpack.c.b16 %v6064, %v6054
    %v7485 = vpack.c.b16 %v6065, %v6055
    %v7486 = vpack.c.b16 %v6066, %v6056
    %v7487 = vpack.c.b16 %v6067, %v6057
    %v7488 = vpack.c.b16 %v6068, %v6058
    %v7489 = vpack.c.b16 %v6069, %v6059
    %v7490 = vpack.c.b16 %v6070, %v6060
    %v7491 = vpack.c.b16 %v6071, %v6061
    %v7492 = vpack.c.b16 %v6082, %v6072
    %v7493 = vpack.c.b16 %v6083, %v6073
    %v7494 = vpack.c.b16 %v6084, %v6074
    %v7495 = vpack.c.b16 %v6085, %v6075
    %v7496 = vpack.c.b16 %v6086, %v6076
    %v7497 = vpack.c.b16 %v6087, %v6077
    %v7498 = vpack.c.b16 %v6088, %v6078
    %v7499 = vpack.c.b16 %v6089, %v6079
    %v7500 = vpack.c.b16 %v6090, %v6080
    %v7501 = vpack.c.b16 %v6091, %v6081
    %v7502 = vpack.c.b16 %v6102, %v6092
    %v7503 = vpack.c.b16 %v6103, %v6093
    %v7504 = vpack.c.b16 %v6104, %v6094
    %v7505 = vpack.c.b16 %v6105, %v6095
    %v7506 = vpack.c.b16 %v6106, %v6096
    %v7507 = vpack.c.b16 %v6107, %v6097
    %v7508 = vpack.c.b16 %v6108, %v6098
    %v7509 = vpack.c.b16 %v6109, %v6099
    %v7510 = vpack.c.b16 %v6110, %v6100
    %v7511 = vpack.c.b16 %v6111, %v6101
    %v7512 = vpack.c.b16 %v6122, %v6112
    %v7513 = vpack.c.b16 %v6123, %v6113
    %v7514 = vpack.c.b16 %v6124, %v6114
    %v7515 = vpack.c.b16 %v6125, %v6115
    %v7516 = vpack.c.b16 %v6126, %v6116
    %v7517 = vpack.c.b16 %v6127, %v6117
    %v7518 = vpack.c.b16 %v6128, %v6118
    %v7519 = vpack.c.b16 %v6129, %v6119
    %v7520 = vpack.c.b16 %v6130, %v6120
    %v7521 = vpack.c.b16 %v6131, %v6121
    %v7522 = vpack.c.b16 %v6142, %v6132
    %v7523 = vpack.c.b16 %v6143, %v6133
    %v7524 = vpack.c.b16 %v6144, %v6134
    %v7525 = vpack.c.b16 %v6145, %v6135
    %v7526 = vpack.c.b16 %v6146, %v6136
    %v7527 = vpack.c.b16 %v6147, %v6137
    %v7528 = vpack.c.b16 %v6148, %v6138
    %v7529 = vpack.c.b16 %v6149, %v6139
    %v7530 = vpack.c.b16 %v6150, %v6140
    %v7531 = vpack.c.b16 %v6151, %v6141
    %v7532 = vpack.c.b16 %v6162, %v6152
    %v7533 = vpack.c.b16 %v6163, %v6153
    %v7534 = vpack.c.b16 %v6164, %v6154
    %v7535 = vpack.c.b16 %v6165, %v6155
    %v7536 = vpack.c.b16 %v6166, %v6156
    %v7537 = vpack.c.b16 %v6167, %v6157
    %v7538 = vpack.c.b16 %v6168, %v6158
    %v7539 = vpack.c.b16 %v6169, %v6159
    %v7540 = vpack.c.b16 %v6170, %v6160
    %v7541 = vpack.c.b16 %v6171, %v6161
    %v7542 = vpack.c.b16 %v6182, %v6172
    %v7543 = vpack.c.b16 %v6183, %v6173
    %v7544 = vpack.c.b16 %v6184, %v6174
    %v7545 = vpack.c.b16 %v6185, %v6175
    %v7546 = vpack.c.b16 %v6186, %v6176
    %v7547 = vpack.c.b16 %v6187, %v6177
    %v7548 = vpack.c.b16 %v6188, %v6178
    %v7549 = vpack.c.b16 %v6189, %v6179
    %v7550 = vpack.c.b16 %v6190, %v6180
    %v7551 = vpack.c.b16 %v6191, %v6181
    %v7552 = vpack.c.b16 %v6202, %v6192
    %v7553 = vpack.c.b16 %v6203, %v6193
    %v7554 = vpack.c.b16 %v6204, %v6194
    %v7555 = vpack.c.b16 %v6205, %v6195
    %v7556 = vpack.c.b16 %v6206, %v6196
    %v7557 = vpack.c.b16 %v6207, %v6197
    %v7558 = vpack.c.b16 %v6208, %v6198
    %v7559 = vpack.c.b16 %v6209, %v6199
    %v7560 = vpack.c.b16 %v6210, %v6200
    %v7561 = vpack.c.b16 %v6211, %v6201
    %v7562 = vpack.c.b16 %v6222, %v6212
    %v7563 = vpack.c.b16 %v6223, %v6213
    %v7564 = vpack.c.b16 %v6224, %v6214
    %v7565 = vpack.c.b16 %v6225, %v6215
    %v7566 = vpack.c.b16 %v6226, %v6216
    %v7567 = vpack.c.b16 %v6227, %v6217
    %v7568 = vpack.c.b16 %v6228, %v6218
    %v7569 = vpack.c.b16 %v6229, %v6219
    %v7570 = vpack.c.b16 %v6230, %v6220
    %v7571 = vpack.c.b16 %v6231, %v6221
    %v7572 = vpack.c.b16 %v6242, %v6232
    %v7573 = vpack.c.b16 %v6243, %v6233
    %v7574 = vpack.c.b16 %v6244, %v6234
    %v7575 = vpack.c.b16 %v6245, %v6235
    %v7576 = vpack.c.b16 %v6246, %v6236
    %v7577 = vpack.c.b16 %v6247, %v6237
    %v7578 = vpack.c.b16 %v6248, %v6238
    %v7579 = vpack.c.b16 %v6249, %v6239
    %v7580 = vpack.c.b16 %v6250, %v6240
    %v7581 = vpack.c.b16 %v6251, %v6241
    %v7582 = vpack.c.b16 %v6262, %v6252
    %v7583 = vpack.c.b16 %v6263, %v6253
    %v7584 = vpack.c.b16 %v6264, %v6254
    %v7585 = vpack.c.b16 %v6265, %v6255
    %v7586 = vpack.c.b16 %v6266, %v6256
    %v7587 = vpack.c.b16 %v6267, %v6257
    %v7588 = vpack.c.b16 %v6268, %v6258
    %v7589 = vpack.c.b16 %v6269, %v6259
    %v7590 = vpack.c.b16 %v6270, %v6260
    %v7591 = vpack.c.b16 %v6271, %v6261
    %v7592 = vpack.c.b16 %v6282, %v6272
    %v7593 = vpack.c.b16 %v6283, %v6273
    %v7594 = vpack.c.b16 %v6284, %v6274
    %v7595 = vpack.c.b16 %v6285, %v6275
    %v7596 = vpack.c.b16 %v6286, %v6276
    %v7597 = vpack.c.b16 %v6287, %v6277
    %v7598 = vpack.c.b16 %v6288, %v6278
    %v7599 = vpack.c.b16 %v6289, %v6279
    %v7600 = vpack.c.b16 %v6290, %v6280
    %v7601 = vpack.c.b16 %v6291, %v6281
    %v7602 = vpack.c.b16 %v6302, %v6292
    %v7603 = vpack.c.b16 %v6303, %v6293
    %v7604 = vpack.c.b16 %v6304, %v6294
    %v7605 = vpack.c.b16 %v6305, %v6295
    %v7606 = vpack.c.b16 %v6306, %v6296
    %v7607 = vpack.c.b16 %v6307, %v6297
    %v7608 = vpack.c.b16 %v6308, %v6298
    %v7609 = vpack.c.b16 %v6309, %v6299
    %v7610 = vpack.c.b16 %v6310, %v6300
    %v7611 = vpack.c.b16 %v6311, %v6301
    %v7612 = vpack.c.b16 %v6322, %v6312
    %v7613 = vpack.c.b16 %v6323, %v6313
    %v7614 = vpack.c.b16 %v6324, %v6314
    %v7615 = vpack.c.b16 %v6325, %v6315
    %v7616 = vpack.c.b16 %v6326, %v6316
    %v7617 = vpack.c.b16 %v6327, %v6317
    %v7618 = vpack.c.b16 %v6328, %v6318
    %v7619 = vpack.c.b16 %v6329, %v6319
    %v7620 = vpack.c.b16 %v6330, %v6320
    %v7621 = vpack.c.b16 %v6331, %v6321
    %v7622 = vpack.c.b16 %v6342, %v6332
    %v7623 = vpack.c.b16 %v6343, %v6333
    %v7624 = vpack.c.b16 %v6344, %v6334
    %v7625 = vpack.c.b16 %v6345, %v6335
    %v7626 = vpack.c.b16 %v6346, %v6336
    %v7627 = vpack.c.b16 %v6347, %v6337
    %v7628 = vpack.c.b16 %v6348, %v6338
    %v7629 = vpack.c.b16 %v6349, %v6339
    %v7630 = vpack.c.b16 %v6350, %v6340
    %v7631 = vpack.c.b16 %v6351, %v6341
    %v7632 = vpack.c.b16 %v6362, %v6352
    %v7633 = vpack.c.b16 %v6363, %v6353
    %v7634 = vpack.c.b16 %v6364, %v6354
    %v7635 = vpack.c.b16 %v6365, %v6355
    %v7636 = vpack.c.b16 %v6366, %v6356
    %v7637 = vpack.c.b16 %v6367, %v6357
    %v7638 = vpack.c.b16 %v6368, %v6358
    %v7639 = vpack.c.b16 %v6369, %v6359
    %v7640 = vpack.c.b16 %v6370, %v6360
    %v7641 = vpack.c.b16 %v6371, %v6361
    %v7642 = vpack.c.b16 %v6382, %v6372
    %v7643 = vpack.c.b16 %v6383, %v6373
    %v7644 = vpack.c.b16 %v6384, %v6374
    %v7645 = vpack.c.b16 %v6385, %v6375
    %v7646 = vpack.c.b16 %v6386, %v6376
    %v7647 = vpack.c.b16 %v6387, %v6377
    %v7648 = vpack.c.b16 %v6388, %v6378
    %v7649 = vpack.c.b16 %v6389, %v6379
    %v7650 = vpack.c.b16 %v6390, %v6380
    %v7651 = vpack.c.b16 %v6391, %v6381
    %v7652 = vpack.c.b16 %v6402, %v6392
    %v7653 = vpack.c.b16 %v6403, %v6393
    %v7654 = vpack.c.b16 %v6404, %v6394
    %v7655 = vpack.c.b16 %v6405, %v6395
    %v7656 = vpack.c.b16 %v6406, %v6396
    %v7657 = vpack.c.b16 %v6407, %v6397
    %v7658 = vpack.c.b16 %v6408, %v6398
    %v7659 = vpack.c.b16 %v6409, %v6399
    %v7660 = vpack.c.b16 %v6410, %v6400
    %v7661 = vpack.c.b16 %v6411, %v6401
    %v7662 = vpack.c.b16 %v6422, %v6412
    %v7663 = vpack.c.b16 %v6423, %v6413
    %v7664 = vpack.c.b16 %v6424, %v6414
    %v7665 = vpack.c.b16 %v6425, %v6415
    %v7666 = vpack.c.b16 %v6426, %v6416
    %v7667 = vpack.c.b16 %v6427, %v6417
    %v7668 = vpack.c.b16 %v6428, %v6418
    %v7669 = vpack.c.b16 %v6429, %v6419
    %v7670 = vpack.c.b16 %v6430, %v6420
    %v7671 = vpack.c.b16 %v6431, %v6421
    %v7672 = vpack.c.b16 %v6442, %v6432
    %v7673 = vpack.c.b16 %v6443, %v6433
    %v7674 = vpack.c.b16 %v6444, %v6434
    %v7675 = vpack.c.b16 %v6445, %v6435
    %v7676 = vpack.c.b16 %v6446, %v6436
    %v7677 = vpack.c.b16 %v6447, %v6437
    %v7678 = vpack.c.b16 %v6448, %v6438
    %v7679 = vpack.c.b16 %v6449, %v6439
    %v7680 = vpack.c.b16 %v6450, %v6440
    %v7681 = vpack.c.b16 %v6451, %v6441
    %v7682 = vpack.c.b16 %v6462, %v6452
    %v7683 = vpack.c.b16 %v6463, %v6453
    %v7684 = vpack.c.b16 %v6464, %v6454
    %v7685 = vpack.c.b16 %v6465, %v6455
    %v7686 = vpack.c.b16 %v6466, %v6456
    %v7687 = vpack.c.b16 %v6467, %v6457
    %v7688 = vpack.c.b16 %v6468, %v6458
    %v7689 = vpack.c.b16 %v6469, %v6459
    %v7690 = vpack.c.b16 %v6470, %v6460
    %v7691 = vpack.c.b16 %v6471, %v6461
    %v7692 = vpack.c.b16 %v6482, %v6472
    %v7693 = vpack.c.b16 %v6483, %v6473
    %v7694 = vpack.c.b16 %v6484, %v6474
    %v7695 = vpack.c.b16 %v6485, %v6475
    %v7696 = vpack.c.b16 %v6486, %v6476
    %v7697 = vpack.c.b16 %v6487, %v6477
    %v7698 = vpack.c.b16 %v6488, %v6478
    %v7699 = vpack.c.b16 %v6489, %v6479
    %v7700 = vpack.c.b16 %v6490, %v6480
    %v7701 = vpack.c.b16 %v6491, %v6481
    %v7702 = vpack.c.b16 %v6502, %v6492
    %v7703 = vpack.c.b16 %v6503, %v6493
    %v7704 = vpack.c.b16 %v6504, %v6494
    %v7705 = vpack.c.b16 %v6505, %v6495
    %v7706 = vpack.c.b16 %v6506, %v6496
    %v7707 = vpack.c.b16 %v6507, %v6497
    %v7708 = vpack.c.b16 %v6508, %v6498
    %v7709 = vpack.c.b16 %v6509, %v6499
    %v7710 = vpack.c.b16 %v6510, %v6500
    %v7711 = vpack.c.b16 %v6511, %v6501
    %v7712 = vpack.c.b16 %v6522, %v6512
    %v7713 = vpack.c.b16 %v6523, %v6513
    %v7714 = vpack.c.b16 %v6524, %v6514
    %v7715 = vpack.c.b16 %v6525, %v6515
    %v7716 = vpack.c.b16 %v6526, %v6516
    %v7717 = vpack.c.b16 %v6527, %v6517
    %v7718 = vpack.c.b16 %v6528, %v6518
    %v7719 = vpack.c.b16 %v6529, %v6519
    %v7720 = vpack.c.b16 %v6530, %v6520
    %v7721 = vpack.c.b16 %v6531, %v6521
    %v7722 = vpack.c.b16 %v6542, %v6532
    %v7723 = vpack.c.b16 %v6543, %v6533
    %v7724 = vpack.c.b16 %v6544, %v6534
    %v7725 = vpack.c.b16 %v6545, %v6535
    %v7726 = vpack.c.b16 %v6546, %v6536
    %v7727 = vpack.c.b16 %v6547, %v6537
    %v7728 = vpack.c.b16 %v6548, %v6538
    %v7729 = vpack.c.b16 %v6549, %v6539
    %v7730 = vpack.c.b16 %v6550, %v6540
    %v7731 = vpack.c.b16 %v6551, %v6541
    %v7732 = vpack.c.b16 %v6562, %v6552
    %v7733 = vpack.c.b16 %v6563, %v6553
    %v7734 = vpack.c.b16 %v6564, %v6554
    %v7735 = vpack.c.b16 %v6565, %v6555
    %v7736 = vpack.c.b16 %v6566, %v6556
    %v7737 = vpack.c.b16 %v6567, %v6557
    %v7738 = vpack.c.b16 %v6568, %v6558
    %v7739 = vpack.c.b16 %v6569, %v6559
    %v7740 = vpack.c.b16 %v6570, %v6560
    %v7741 = vpack.c.b16 %v6571, %v6561
    %v7742 = vpack.c.b16 %v6582, %v6572
    %v7743 = vpack.c.b16 %v6583, %v6573
    %v7744 = vpack.c.b16 %v6584, %v6574
    %v7745 = vpack.c.b16 %v6585, %v6575
    %v7746 = vpack.c.b16 %v6586, %v6576
    %v7747 = vpack.c.b16 %v6587, %v6577
    %v7748 = vpack.c.b16 %v6588, %v6578
    %v7749 = vpack.c.b16 %v6589, %v6579
    %v7750 = vpack.c.b16 %v6590, %v6580
    %v7751 = vpack.c.b16 %v6591, %v6581
    %v7752 = vpack.c.b16 %v6602, %v6592
    %v7753 = vpack.c.b16 %v6603, %v6593
    %v7754 = vpack.c.b16 %v6604, %v6594
    %v7755 = vpack.c.b16 %v6605, %v6595
    %v7756 = vpack.c.b16 %v6606, %v6596
    %v7757 = vpack.c.b16 %v6607, %v6597
    %v7758 = vpack.c.b16 %v6608, %v6598
    %v7759 = vpack.c.b16 %v6609, %v6599
    %v7760 = vpack.c.b16 %v6610, %v6600
    %v7761 = vpack.c.b16 %v6611, %v6601
    %v7762 = vpack.c.b16 %v6622, %v6612
    %v7763 = vpack.c.b16 %v6623, %v6613
    %v7764 = vpack.c.b16 %v6624, %v6614
    %v7765 = vpack.c.b16 %v6625, %v6615
    %v7766 = vpack.c.b16 %v6626, %v6616
    %v7767 = vpack.c.b16 %v6627, %v6617
    %v7768 = vpack.c.b16 %v6628, %v6618
    %v7769 = vpack.c.b16 %v6629, %v6619
    %v7770 = vpack.c.b16 %v6630, %v6620
    %v7771 = vpack.c.b16 %v6631, %v6621
    %v7772 = vpack.c.b16 %v6642, %v6632
    %v7773 = vpack.c.b16 %v6643, %v6633
    %v7774 = vpack.c.b16 %v6644, %v6634
    %v7775 = vpack.c.b16 %v6645, %v6635
    %v7776 = vpack.c.b16 %v6646, %v6636
    %v7777 = vpack.c.b16 %v6647, %v6637
    %v7778 = vpack.c.b16 %v6648, %v6638
    %v7779 = vpack.c.b16 %v6649, %v6639
    %v7780 = vpack.c.b16 %v6650, %v6640
    %v7781 = vpack.c.b16 %v6651, %v6641
    %v7782 = vpack.c.b16 %v6662, %v6652
    %v7783 = vpack.c.b16 %v6663, %v6653
    %v7784 = vpack.c.b16 %v6664, %v6654
    %v7785 = vpack.c.b16 %v6665, %v6655
    %v7786 = vpack.c.b16 %v6666, %v6656
    %v7787 = vpack.c.b16 %v6667, %v6657
    %v7788 = vpack.c.b16 %v6668, %v6658
    %v7789 = vpack.c.b16 %v6669, %v6659
    %v7790 = vpack.c.b16 %v6670, %v6660
    %v7791 = vpack.c.b16 %v6671, %v6661
    %v7792 = vpack.c.b16 %v6682, %v6672
    %v7793 = vpack.c.b16 %v6683, %v6673
    %v7794 = vpack.c.b16 %v6684, %v6674
    %v7795 = vpack.c.b16 %v6685, %v6675
    %v7796 = vpack.c.b16 %v6686, %v6676
    %v7797 = vpack.c.b16 %v6687, %v6677
    %v7798 = vpack.c.b16 %v6688, %v6678
    %v7799 = vpack.c.b16 %v6689, %v6679
    %v7800 = vpack.c.b16 %v6690, %v6680
    %v7801 = vpack.c.b16 %v6691, %v6681
    %v7802 = vpack.c.b16 %v6702, %v6692
    %v7803 = vpack.c.b16 %v6703, %v6693
    %v7804 = vpack.c.b16 %v6704, %v6694
    %v7805 = vpack.c.b16 %v6705, %v6695
    %v7806 = vpack.c.b16 %v6706, %v6696
    %v7807 = vpack.c.b16 %v6707, %v6697
    %v7808 = vpack.c.b16 %v6708, %v6698
    %v7809 = vpack.c.b16 %v6709, %v6699
    %v7810 = vpack.c.b16 %v6710, %v6700
    %v7811 = vpack.c.b16 %v6711, %v6701
    %v7812 = vpack.c.b16 %v6722, %v6712
    %v7813 = vpack.c.b16 %v6723, %v6713
    %v7814 = vpack.c.b16 %v6724, %v6714
    %v7815 = vpack.c.b16 %v6725, %v6715
    %v7816 = vpack.c.b16 %v6726, %v6716
    %v7817 = vpack.c.b16 %v6727, %v6717
    %v7818 = vpack.c.b16 %v6728, %v6718
    %v7819 = vpack.c.b16 %v6729, %v6719
    %v7820 = vpack.c.b16 %v6730, %v6720
    %v7821 = vpack.c.b16 %v6731, %v6721
    %v7822 = vpack.c.b16 %v6742, %v6732
    %v7823 = vpack.c.b16 %v6743, %v6733
    %v7824 = vpack.c.b16 %v6744, %v6734
    %v7825 = vpack.c.b16 %v6745, %v6735
    %v7826 = vpack.c.b16 %v6746, %v6736
    %v7827 = vpack.c.b16 %v6747, %v6737
    %v7828 = vpack.c.b16 %v6748, %v6738
    %v7829 = vpack.c.b16 %v6749, %v6739
    %v7830 = vpack.c.b16 %v6750, %v6740
    %v7831 = vpack.c.b16 %v6751, %v6741
    %v7832 = vpack.c.b16 %v6762, %v6752
    %v7833 = vpack.c.b16 %v6763, %v6753
    %v7834 = vpack.c.b16 %v6764, %v6754
    %v7835 = vpack.c.b16 %v6765, %v6755
    %v7836 = vpack.c.b16 %v6766, %v6756
    %v7837 = vpack.c.b16 %v6767, %v6757
    %v7838 = vpack.c.b16 %v6768, %v6758
    %v7839 = vpack.c.b16 %v6769, %v6759
    %v7840 = vpack.c.b16 %v6770, %v6760
    %v7841 = vpack.c.b16 %v6771, %v6761
    %v7842 = vpack.c.b16 %v6782, %v6772
    %v7843 = vpack.c.b16 %v6783, %v6773
    %v7844 = vpack.c.b16 %v6784, %v6774
    %v7845 = vpack.c.b16 %v6785, %v6775
    %v7846 = vpack.c.b16 %v6786, %v6776
    %v7847 = vpack.c.b16 %v6787, %v6777
    %v7848 = vpack.c.b16 %v6788, %v6778
    %v7849 = vpack.c.b16 %v6789, %v6779
    %v7850 = vpack.c.b16 %v6790, %v6780
    %v7851 = vpack.c.b16 %v6791, %v6781
    %v7852 = vpack.c.b16 %v6802, %v6792
    %v7853 = vpack.c.b16 %v6803, %v6793
    %v7854 = vpack.c.b16 %v6804, %v6794
    %v7855 = vpack.c.b16 %v6805, %v6795
    %v7856 = vpack.c.b16 %v6806, %v6796
    %v7857 = vpack.c.b16 %v6807, %v6797
    %v7858 = vpack.c.b16 %v6808, %v6798
    %v7859 = vpack.c.b16 %v6809, %v6799
    %v7860 = vpack.c.b16 %v6810, %v6800
    %v7861 = vpack.c.b16 %v6811, %v6801
    %v7862 = vpack.c.b16 %v6822, %v6812
    %v7863 = vpack.c.b16 %v6823, %v6813
    %v7864 = vpack.c.b16 %v6824, %v6814
    %v7865 = vpack.c.b16 %v6825, %v6815
    %v7866 = vpack.c.b16 %v6826, %v6816
    %v7867 = vpack.c.b16 %v6827, %v6817
    %v7868 = vpack.c.b16 %v6828, %v6818
    %v7869 = vpack.c.b16 %v6829, %v6819
    %v7870 = vpack.c.b16 %v6830, %v6820
    %v7871 = vpack.c.b16 %v6831, %v6821
    %v7872 = vpack.c.b16 %v6842, %v6832
    %v7873 = vpack.c.b16 %v6843, %v6833
    %v7874 = vpack.c.b16 %v6844, %v6834
    %v7875 = vpack.c.b16 %v6845, %v6835
    %v7876 = vpack.c.b16 %v6846, %v6836
    %v7877 = vpack.c.b16 %v6847, %v6837
    %v7878 = vpack.c.b16 %v6848, %v6838
    %v7879 = vpack.c.b16 %v6849, %v6839
    %v7880 = vpack.c.b16 %v6850, %v6840
    %v7881 = vpack.c.b16 %v6851, %v6841
    %v7882 = vpack.c.b16 %v6862, %v6852
    %v7883 = vpack.c.b16 %v6863, %v6853
    %v7884 = vpack.c.b16 %v6864, %v6854
    %v7885 = vpack.c.b16 %v6865, %v6855
    %v7886 = vpack.c.b16 %v6866, %v6856
    %v7887 = vpack.c.b16 %v6867, %v6857
    %v7888 = vpack.c.b16 %v6868, %v6858
    %v7889 = vpack.c.b16 %v6869, %v6859
    %v7890 = vpack.c.b16 %v6870, %v6860
    %v7891 = vpack.c.b16 %v6871, %v6861
    %v7892 = vpack.c.b16 %v6882, %v6872
    %v7893 = vpack.c.b16 %v6883, %v6873
    %v7894 = vpack.c.b16 %v6884, %v6874
    %v7895 = vpack.c.b16 %v6885, %v6875
    %v7896 = vpack.c.b16 %v6886, %v6876
    %v7897 = vpack.c.b16 %v6887, %v6877
    %v7898 = vpack.c.b16 %v6888, %v6878
    %v7899 = vpack.c.b16 %v6889, %v6879
    %v7900 = vpack.c.b16 %v6890, %v6880
    %v7901 = vpack.c.b16 %v6891, %v6881
    %v7902 = vpack.c.b16 %v6902, %v6892
    %v7903 = vpack.c.b16 %v6903, %v6893
    %v7904 = vpack.c.b16 %v6904, %v6894
    %v7905 = vpack.c.b16 %v6905, %v6895
    %v7906 = vpack.c.b16 %v6906, %v6896
    %v7907 = vpack.c.b16 %v6907, %v6897
    %v7908 = vpack.c.b16 %v6908, %v6898
    %v7909 = vpack.c.b16 %v6909, %v6899
    %v7910 = vpack.c.b16 %v6910, %v6900
    %v7911 = vpack.c.b16 %v6911, %v6901
    %v7912 = vpack.c.b16 %v6922, %v6912
    %v7913 = vpack.c.b16 %v6923, %v6913
    %v7914 = vpack.c.b16 %v6924, %v6914
    %v7915 = vpack.c.b16 %v6925, %v6915
    %v7916 = vpack.c.b16 %v6926, %v6916
    %v7917 = vpack.c.b16 %v6927, %v6917
    %v7918 = vpack.c.b16 %v6928, %v6918
    %v7919 = vpack.c.b16 %v6929, %v6919
    %v7920 = vpack.c.b16 %v6930, %v6920
    %v7921 = vpack.c.b16 %v6931, %v6921
    %v7922 = vpack.c.b16 %v6942, %v6932
    %v7923 = vpack.c.b16 %v6943, %v6933
    %v7924 = vpack.c.b16 %v6944, %v6934
    %v7925 = vpack.c.b16 %v6945, %v6935
    %v7926 = vpack.c.b16 %v6946, %v6936
    %v7927 = vpack.c.b16 %v6947, %v6937
    %v7928 = vpack.c.b16 %v6948, %v6938
    %v7929 = vpack.c.b16 %v6949, %v6939
    %v7930 = vpack.c.b16 %v6950, %v6940
    %v7931 = vpack.c.b16 %v6951, %v6941
    %v7932 = vpack.c.b16 %v6962, %v6952
    %v7933 = vpack.c.b16 %v6963, %v6953
    %v7934 = vpack.c.b16 %v6964, %v6954
    %v7935 = vpack.c.b16 %v6965, %v6955
    %v7936 = vpack.c.b16 %v6966, %v6956
    %v7937 = vpack.c.b16 %v6967, %v6957
    %v7938 = vpack.c.b16 %v6968, %v6958
    %v7939 = vpack.c.b16 %v6969, %v6959
    %v7940 = vpack.c.b16 %v6970, %v6960
    %v7941 = vpack.c.b16 %v6971, %v6961
    %v7942 = vpack.c.b16 %v6982, %v6972
    %v7943 = vpack.c.b16 %v6983, %v6973
    %v7944 = vpack.c.b16 %v6984, %v6974
    %v7945 = vpack.c.b16 %v6985, %v6975
    %v7946 = vpack.c.b16 %v6986, %v6976
    %v7947 = vpack.c.b16 %v6987, %v6977
    %v7948 = vpack.c.b16 %v6988, %v6978
    %v7949 = vpack.c.b16 %v6989, %v6979
    %v7950 = vpack.c.b16 %v6990, %v6980
    %v7951 = vpack.c.b16 %v6991, %v6981
    %v7952 = vpack.c.b16 %v7002, %v6992
    %v7953 = vpack.c.b16 %v7003, %v6993
    %v7954 = vpack.c.b16 %v7004, %v6994
    %v7955 = vpack.c.b16 %v7005, %v6995
    %v7956 = vpack.c.b16 %v7006, %v6996
    %v7957 = vpack.c.b16 %v7007, %v6997
    %v7958 = vpack.c.b16 %v7008, %v6998
    %v7959 = vpack.c.b16 %v7009, %v6999
    %v7960 = vpack.c.b16 %v7010, %v7000
    %v7961 = vpack.c.b16 %v7011, %v7001
    %v7962 = vpack.c.b16 %v7022, %v7012
    %v7963 = vpack.c.b16 %v7023, %v7013
    %v7964 = vpack.c.b16 %v7024, %v7014
    %v7965 = vpack.c.b16 %v7025, %v7015
    %v7966 = vpack.c.b16 %v7026, %v7016
    %v7967 = vpack.c.b16 %v7027, %v7017
    %v7968 = vpack.c.b16 %v7028, %v7018
    %v7969 = vpack.c.b16 %v7029, %v7019
    %v7970 = vpack.c.b16 %v7030, %v7020
    %v7971 = vpack.c.b16 %v7031, %v7021
    %v7972 = vpack.c.b16 %v7042, %v7032
    %v7973 = vpack.c.b16 %v7043, %v7033
    %v7974 = vpack.c.b16 %v7044, %v7034
    %v7975 = vpack.c.b16 %v7045, %v7035
    %v7976 = vpack.c.b16 %v7046, %v7036
    %v7977 = vpack.c.b16 %v7047, %v7037
    %v7978 = vpack.c.b16 %v7048, %v7038
    %v7979 = vpack.c.b16 %v7049, %v7039
    %v7980 = vpack.c.b16 %v7050, %v7040
    %v7981 = vpack.c.b16 %v7051, %v7041
    %v7982 = vpack.c.b16 %v7062, %v7052
    %v7983 = vpack.c.b16 %v7063, %v7053
    %v7984 = vpack.c.b16 %v7064, %v7054
    %v7985 = vpack.c.b16 %v7065, %v7055
    %v7986 = vpack.c.b16 %v7066, %v7056
    %v7987 = vpack.c.b16 %v7067, %v7057
    %v7988 = vpack.c.b16 %v7068, %v7058
    %v7989 = vpack.c.b16 %v7069, %v7059
    %v7990 = vpack.c.b16 %v7070, %v7060
    %v7991 = vpack.c.b16 %v7071, %v7061
    %v7992 = vpack.c.b16 %v7082, %v7072
    %v7993 = vpack.c.b16 %v7083, %v7073
    %v7994 = vpack.c.b16 %v7084, %v7074
    %v7995 = vpack.c.b16 %v7085, %v7075
    %v7996 = vpack.c.b16 %v7086, %v7076
    %v7997 = vpack.c.b16 %v7087, %v7077
    %v7998 = vpack.c.b16 %v7088, %v7078
    %v7999 = vpack.c.b16 %v7089, %v7079
    %v8000 = vpack.c.b16 %v7090, %v7080
    %v8001 = vpack.c.b16 %v7091, %v7081
    %v8002 = vpack.c.b16 %v7102, %v7092
    %v8003 = vpack.c.b16 %v7103, %v7093
    %v8004 = vpack.c.b16 %v7104, %v7094
    %v8005 = vpack.c.b16 %v7105, %v7095
    %v8006 = vpack.c.b16 %v7106, %v7096
    %v8007 = vpack.c.b16 %v7107, %v7097
    %v8008 = vpack.c.b16 %v7108, %v7098
    %v8009 = vpack.c.b16 %v7109, %v7099
    %v8010 = vpack.c.b16 %v7110, %v7100
    %v8011 = vpack.c.b16 %v7111, %v7101
    %v8012 = vpack.c.b16 %v7122, %v7112
    %v8013 = vpack.c.b16 %v7123, %v7113
    %v8014 = vpack.c.b16 %v7124, %v7114
    %v8015 = vpack.c.b16 %v7125, %v7115
    %v8016 = vpack.c.b16 %v7126, %v7116
    %v8017 = vpack.c.b16 %v7127, %v7117
    %v8018 = vpack.c.b16 %v7128, %v7118
    %v8019 = vpack.c.b16 %v7129, %v7119
    %v8020 = vpack.c.b16 %v7130, %v7120
    %v8021 = vpack.c.b16 %v7131, %v7121
    %v8022 = vpack.c.b16 %v7142, %v7132
    %v8023 = vpack.c.b16 %v7143, %v7133
    %v8024 = vpack.c.b16 %v7144, %v7134
    %v8025 = vpack.c.b16 %v7145, %v7135
    %v8026 = vpack.c.b16 %v7146, %v7136
    %v8027 = vpack.c.b16 %v7147, %v7137
    %v8028 = vpack.c.b16 %v7148, %v7138
    %v8029 = vpack.c.b16 %v7149, %v7139
    %v8030 = vpack.c.b16 %v7150, %v7140
    %v8031 = vpack.c.b16 %v7151, %v7141
    %v8032 = vpack.c.b16 %v7162, %v7152
    %v8033 = vpack.c.b16 %v7163, %v7153
    %v8034 = vpack.c.b16 %v7164, %v7154
    %v8035 = vpack.c.b16 %v7165, %v7155
    %v8036 = vpack.c.b16 %v7166, %v7156
    %v8037 = vpack.c.b16 %v7167, %v7157
    %v8038 = vpack.c.b16 %v7168, %v7158
    %v8039 = vpack.c.b16 %v7169, %v7159
    %v8040 = vpack.c.b16 %v7170, %v7160
    %v8041 = vpack.c.b16 %v7171, %v7161
    %v8042 = vpack.c.b16 %v7182, %v7172
    %v8043 = vpack.c.b16 %v7183, %v7173
    %v8044 = vpack.c.b16 %v7184, %v7174
    %v8045 = vpack.c.b16 %v7185, %v7175
    %v8046 = vpack.c.b16 %v7186, %v7176
    %v8047 = vpack.c.b16 %v7187, %v7177
    %v8048 = vpack.c.b16 %v7188, %v7178
    %v8049 = vpack.c.b16 %v7189, %v7179
    %v8050 = vpack.c.b16 %v7190, %v7180
    %v8051 = vpack.c.b16 %v7191, %v7181
    %v8052 = vpack.c.b16 %v7202, %v7192
    %v8053 = vpack.c.b16 %v7203, %v7193
    %v8054 = vpack.c.b16 %v7204, %v7194
    %v8055 = vpack.c.b16 %v7205, %v7195
    %v8056 = vpack.c.b16 %v7206, %v7196
    %v8057 = vpack.c.b16 %v7207, %v7197
    %v8058 = vpack.c.b16 %v7208, %v7198
    %v8059 = vpack.c.b16 %v7209, %v7199
    %v8060 = vpack.c.b16 %v7210, %v7200
    %v8061 = vpack.c.b16 %v7211, %v7201
    %v8062 = vpack.c.b16 %v7222, %v7212
    %v8063 = vpack.c.b16 %v7223, %v7213
    %v8064 = vpack.c.b16 %v7224, %v7214
    %v8065 = vpack.c.b16 %v7225, %v7215
    %v8066 = vpack.c.b16 %v7226, %v7216
    %v8067 = vpack.c.b16 %v7227, %v7217
    %v8068 = vpack.c.b16 %v7228, %v7218
    %v8069 = vpack.c.b16 %v7229, %v7219
    %v8070 = vpack.c.b16 %v7230, %v7220
    %v8071 = vpack.c.b16 %v7231, %v7221
    %v8072 = vpack.c.b16 %v7242, %v7232
    %v8073 = vpack.c.b16 %v7243, %v7233
    %v8074 = vpack.c.b16 %v7244, %v7234
    %v8075 = vpack.c.b16 %v7245, %v7235
    %v8076 = vpack.c.b16 %v7246, %v7236
    %v8077 = vpack.c.b16 %v7247, %v7237
    %v8078 = vpack.c.b16 %v7248, %v7238
    %v8079 = vpack.c.b16 %v7249, %v7239
    %v8080 = vpack.c.b16 %v7250, %v7240
    %v8081 = vpack.c.b16 %v7251, %v7241
    %v8082 = vpack.c.b16 %v7262, %v7252
    %v8083 = vpack.c.b16 %v7263, %v7253
    %v8084 = vpack.c.b16 %v7264, %v7254
    %v8085 = vpack.c.b16 %v7265, %v7255
    %v8086 = vpack.c.b16 %v7266, %v7256
    %v8087 = vpack.c.b16 %v7267, %v7257
    %v8088 = vpack.c.b16 %v7268, %v7258
    %v8089 = vpack.c.b16 %v7269, %v7259
    %v8090 = vpack.c.b16 %v7270, %v7260
    %v8091 = vpack.c.b16 %v7271, %v7261
    %v8092 = vpack.c.b16 %v7282, %v7272
    %v8093 = vpack.c.b16 %v7283, %v7273
    %v8094 = vpack.c.b16 %v7284, %v7274
    %v8095 = vpack.c.b16 %v7285, %v7275
    %v8096 = vpack.c.b16 %v7286, %v7276
    %v8097 = vpack.c.b16 %v7287, %v7277
    %v8098 = vpack.c.b16 %v7288, %v7278
    %v8099 = vpack.c.b16 %v7289, %v7279
    %v8100 = vpack.c.b16 %v7290, %v7280
    %v8101 = vpack.c.b16 %v7291, %v7281
    %v8102 = vpack.c.b16 %v7302, %v7292
    %v8103 = vpack.c.b16 %v7303, %v7293
    %v8104 = vpack.c.b16 %v7304, %v7294
    %v8105 = vpack.c.b16 %v7305, %v7295
    %v8106 = vpack.c.b16 %v7306, %v7296
    %v8107 = vpack.c.b16 %v7307, %v7297
    %v8108 = vpack.c.b16 %v7308, %v7298
    %v8109 = vpack.c.b16 %v7309, %v7299
    %v8110 = vpack.c.b16 %v7310, %v7300
    %v8111 = vpack.c.b16 %v7311, %v7301
    %v8112 = vpack.c.b16 %v7322, %v7312
    %v8113 = vpack.c.b16 %v7323, %v7313
    %v8114 = vpack.c.b16 %v7324, %v7314
    %v8115 = vpack.c.b16 %v7325, %v7315
    %v8116 = vpack.c.b16 %v7326, %v7316
    %v8117 = vpack.c.b16 %v7327, %v7317
    %v8118 = vpack.c.b16 %v7328, %v7318
    %v8119 = vpack.c.b16 %v7329, %v7319
    %v8120 = vpack.c.b16 %v7330, %v7320
    %v8121 = vpack.c.b16 %v7331, %v7321
    %v8122 = vpack.c.b16 %v7342, %v7332
    %v8123 = vpack.c.b16 %v7343, %v7333
    %v8124 = vpack.c.b16 %v7344, %v7334
    %v8125 = vpack.c.b16 %v7345, %v7335
    %v8126 = vpack.c.b16 %v7346, %v7336
    %v8127 = vpack.c.b16 %v7347, %v7337
    %v8128 = vpack.c.b16 %v7348, %v7338
    %v8129 = vpack.c.b16 %v7349, %v7339
    %v8130 = vpack.c.b16 %v7350, %v7340
    %v8131 = vpack.c.b16 %v7351, %v7341
    %v8132 = vpack.c.b16 %v7362, %v7352
    %v8133 = vpack.c.b16 %v7363, %v7353
    %v8134 = vpack.c.b16 %v7364, %v7354
    %v8135 = vpack.c.b16 %v7365, %v7355
    %v8136 = vpack.c.b16 %v7366, %v7356
    %v8137 = vpack.c.b16 %v7367, %v7357
    %v8138 = vpack.c.b16 %v7368, %v7358
    %v8139 = vpack.c.b16 %v7369, %v7359
    %v8140 = vpack.c.b16 %v7370, %v7360
    %v8141 = vpack.c.b16 %v7371, %v7361
    %v8142 = vpack.c.b16 %v7382, %v7372
    %v8143 = vpack.c.b16 %v7383, %v7373
    %v8144 = vpack.c.b16 %v7384, %v7374
    %v8145 = vpack.c.b16 %v7385, %v7375
    %v8146 = vpack.c.b16 %v7386, %v7376
    %v8147 = vpack.c.b16 %v7387, %v7377
    %v8148 = vpack.c.b16 %v7388, %v7378
    %v8149 = vpack.c.b16 %v7389, %v7379
    %v8150 = vpack.c.b16 %v7390, %v7380
    %v8151 = vpack.c.b16 %v7391, %v7381
    %v8152 = vpack.c.b16 %v7402, %v7392
    %v8153 = vpack.c.b16 %v7403, %v7393
    %v8154 = vpack.c.b16 %v7404, %v7394
    %v8155 = vpack.c.b16 %v7405, %v7395
    %v8156 = vpack.c.b16 %v7406, %v7396
    %v8157 = vpack.c.b16 %v7407, %v7397
    %v8158 = vpack.c.b16 %v7408, %v7398
    %v8159 = vpack.c.b16 %v7409, %v7399
    %v8160 = vpack.c.b16 %v7410, %v7400
    %v8161 = vpack.c.b16 %v7411, %v7401
    %v8913 = vsel %vm4025, %v4411, 0
    %8915 = vmatprep.subr.bf16.mxu0 %v7483
    %8916 = vmatpush1.bf16.msra.mxu0 %v7482
    %8917 = vmatprep.subr.bf16.mxu0 %v7473
    %8918 = vmatpush1.bf16.msra.mxu0 %v7472
    %8919 = vmatprep.subr.bf16.mxu0 %v7463
    %8920 = vmatpush1.bf16.msra.mxu0 %v7462
    %8921 = vmatprep.subr.bf16.mxu0 %v7453
    %8922 = vmatpush1.bf16.msra.mxu0 %v7452
    %8923 = vmatprep.subr.bf16.mxu0 %v7443
    %8924 = vmatpush1.bf16.msra.mxu0 %v7442
    %8925 = vmatprep.subr.bf16.mxu0 %v7433
    %8926 = vmatpush1.bf16.msra.mxu0 %v7432
    %8927 = vmatprep.subr.bf16.mxu0 %v7423
    %8928 = vmatpush1.bf16.msra.mxu0 %v7422
    %8929 = vmatprep.subr.bf16.mxu0 %v7413
    %8930 = vmatpush1.bf16.msra.mxu0 %v7412
    %8931 = vmatprep.subr.bf16.mxu0 %v7563
    %8932 = vmatpush2.bf16.msra.mxu0 %v7562
    %8933 = vmatprep.subr.bf16.mxu0 %v7553
    %8934 = vmatpush2.bf16.msra.mxu0 %v7552
    %8935 = vmatprep.subr.bf16.mxu0 %v7543
    %8936 = vmatpush2.bf16.msra.mxu0 %v7542
    %8937 = vmatprep.subr.bf16.mxu0 %v7533
    %8938 = vmatpush2.bf16.msra.mxu0 %v7532
    %8939 = vmatprep.subr.bf16.mxu0 %v7523
    %8940 = vmatpush2.bf16.msra.mxu0 %v7522
    %8941 = vmatprep.subr.bf16.mxu0 %v7513
    %8942 = vmatpush2.bf16.msra.mxu0 %v7512
    %8943 = vmatprep.subr.bf16.mxu0 %v7503
    %8944 = vmatpush2.bf16.msra.mxu0 %v7502
    %8945 = vmatprep.subr.bf16.mxu0 %v7493
    %8946 = vmatpush2.bf16.msra.mxu0 %v7492
    %8947 = vmatprep.mubr.bf16.mxu0 %v4403
    %8948 = vmatmul.mubr.bf16.gmra.mxu0 %v4402
    %v8949 = vpop.f32.mrf.mxu0
    %v8950 = vadd.f32 0.0, %v8949
    %v8951 = vpop.f32.mrf.mxu0
    %v8952 = vadd.f32 0.0, %v8951
    %v8953 = vpop.f32.mrf.mxu0
    %v8954 = vadd.f32 0.0, %v8953
    %v8955 = vpop.f32.mrf.mxu0
    %v8956 = vadd.f32 0.0, %v8955
    %8957 = vdwg.mxu0
    %8958 = vmatprep.subr.bf16.mxu0 %v7643
    %8959 = vmatpush1.bf16.msra.mxu0 %v7642
    %8960 = vmatprep.subr.bf16.mxu0 %v7633
    %8961 = vmatpush1.bf16.msra.mxu0 %v7632
    %8962 = vmatprep.subr.bf16.mxu0 %v7623
    %8963 = vmatpush1.bf16.msra.mxu0 %v7622
    %8964 = vmatprep.subr.bf16.mxu0 %v7613
    %8965 = vmatpush1.bf16.msra.mxu0 %v7612
    %8966 = vmatprep.subr.bf16.mxu0 %v7603
    %8967 = vmatpush1.bf16.msra.mxu0 %v7602
    %8968 = vmatprep.subr.bf16.mxu0 %v7593
    %8969 = vmatpush1.bf16.msra.mxu0 %v7592
    %8970 = vmatprep.subr.bf16.mxu0 %v7583
    %8971 = vmatpush1.bf16.msra.mxu0 %v7582
    %8972 = vmatprep.subr.bf16.mxu0 %v7573
    %8973 = vmatpush1.bf16.msra.mxu0 %v7572
    %8974 = vmatprep.subr.bf16.mxu0 %v7723
    %8975 = vmatpush2.bf16.msra.mxu0 %v7722
    %8976 = vmatprep.subr.bf16.mxu0 %v7713
    %8977 = vmatpush2.bf16.msra.mxu0 %v7712
    %8978 = vmatprep.subr.bf16.mxu0 %v7703
    %8979 = vmatpush2.bf16.msra.mxu0 %v7702
    %8980 = vmatprep.subr.bf16.mxu0 %v7693
    %8981 = vmatpush2.bf16.msra.mxu0 %v7692
    %8982 = vmatprep.subr.bf16.mxu0 %v7683
    %8983 = vmatpush2.bf16.msra.mxu0 %v7682
    %8984 = vmatprep.subr.bf16.mxu0 %v7673
    %8985 = vmatpush2.bf16.msra.mxu0 %v7672
    %8986 = vmatprep.subr.bf16.mxu0 %v7663
    %8987 = vmatpush2.bf16.msra.mxu0 %v7662
    %8988 = vmatprep.subr.bf16.mxu0 %v7653
    %8989 = vmatpush2.bf16.msra.mxu0 %v7652
    %8990 = vmatprep.mubr.bf16.mxu0 %v4405
    %8991 = vmatmul.mubr.bf16.gmra.mxu0 %v4404
    %v8992 = vpop.f32.mrf.mxu0
    %v8993 = vadd.f32 %v8950, %v8992
    %v8994 = vpop.f32.mrf.mxu0
    %v8995 = vadd.f32 %v8952, %v8994
    %v8996 = vpop.f32.mrf.mxu0
    %v8997 = vadd.f32 %v8954, %v8996
    %v8998 = vpop.f32.mrf.mxu0
    %v8999 = vadd.f32 %v8956, %v8998
    %9000 = vdwg.mxu0
    %9001 = vmatprep.subr.bf16.mxu0 %v7803
    %9002 = vmatpush1.bf16.msra.mxu0 %v7802
    %9003 = vmatprep.subr.bf16.mxu0 %v7793
    %9004 = vmatpush1.bf16.msra.mxu0 %v7792
    %9005 = vmatprep.subr.bf16.mxu0 %v7783
    %9006 = vmatpush1.bf16.msra.mxu0 %v7782
    %9007 = vmatprep.subr.bf16.mxu0 %v7773
    %9008 = vmatpush1.bf16.msra.mxu0 %v7772
    %9009 = vmatprep.subr.bf16.mxu0 %v7763
    %9010 = vmatpush1.bf16.msra.mxu0 %v7762
    %9011 = vmatprep.subr.bf16.mxu0 %v7753
    %9012 = vmatpush1.bf16.msra.mxu0 %v7752
    %9013 = vmatprep.subr.bf16.mxu0 %v7743
    %9014 = vmatpush1.bf16.msra.mxu0 %v7742
    %9015 = vmatprep.subr.bf16.mxu0 %v7733
    %9016 = vmatpush1.bf16.msra.mxu0 %v7732
    %9017 = vmatprep.subr.bf16.mxu0 %v7883
    %9018 = vmatpush2.bf16.msra.mxu0 %v7882
    %9019 = vmatprep.subr.bf16.mxu0 %v7873
    %9020 = vmatpush2.bf16.msra.mxu0 %v7872
    %9021 = vmatprep.subr.bf16.mxu0 %v7863
    %9022 = vmatpush2.bf16.msra.mxu0 %v7862
    %9023 = vmatprep.subr.bf16.mxu0 %v7853
    %9024 = vmatpush2.bf16.msra.mxu0 %v7852
    %9025 = vmatprep.subr.bf16.mxu0 %v7843
    %9026 = vmatpush2.bf16.msra.mxu0 %v7842
    %9027 = vmatprep.subr.bf16.mxu0 %v7833
    %9028 = vmatpush2.bf16.msra.mxu0 %v7832
    %9029 = vmatprep.subr.bf16.mxu0 %v7823
    %9030 = vmatpush2.bf16.msra.mxu0 %v7822
    %9031 = vmatprep.subr.bf16.mxu0 %v7813
    %9032 = vmatpush2.bf16.msra.mxu0 %v7812
    %9033 = vmatprep.mubr.bf16.mxu0 %v4407
    %9034 = vmatmul.mubr.bf16.gmra.mxu0 %v4406
    %v9035 = vpop.f32.mrf.mxu0
    %v9036 = vadd.f32 %v8993, %v9035
    %v9037 = vpop.f32.mrf.mxu0
    %v9038 = vadd.f32 %v8995, %v9037
    %v9039 = vpop.f32.mrf.mxu0
    %v9040 = vadd.f32 %v8997, %v9039
    %v9041 = vpop.f32.mrf.mxu0
    %v9042 = vadd.f32 %v8999, %v9041
    %9043 = vdwg.mxu0
    %9044 = vmatprep.subr.bf16.mxu0 %v7963
    %9045 = vmatpush1.bf16.msra.mxu0 %v7962
    %9046 = vmatprep.subr.bf16.mxu0 %v7953
    %9047 = vmatpush1.bf16.msra.mxu0 %v7952
    %9048 = vmatprep.subr.bf16.mxu0 %v7943
    %9049 = vmatpush1.bf16.msra.mxu0 %v7942
    %9050 = vmatprep.subr.bf16.mxu0 %v7933
    %9051 = vmatpush1.bf16.msra.mxu0 %v7932
    %9052 = vmatprep.subr.bf16.mxu0 %v7923
    %9053 = vmatpush1.bf16.msra.mxu0 %v7922
    %9054 = vmatprep.subr.bf16.mxu0 %v7913
    %9055 = vmatpush1.bf16.msra.mxu0 %v7912
    %9056 = vmatprep.subr.bf16.mxu0 %v7903
    %9057 = vmatpush1.bf16.msra.mxu0 %v7902
    %9058 = vmatprep.subr.bf16.mxu0 %v7893
    %9059 = vmatpush1.bf16.msra.mxu0 %v7892
    %9060 = vmatprep.subr.bf16.mxu0 %v8043
    %9061 = vmatpush2.bf16.msra.mxu0 %v8042
    %9062 = vmatprep.subr.bf16.mxu0 %v8033
    %9063 = vmatpush2.bf16.msra.mxu0 %v8032
    %9064 = vmatprep.subr.bf16.mxu0 %v8023
    %9065 = vmatpush2.bf16.msra.mxu0 %v8022
    %9066 = vmatprep.subr.bf16.mxu0 %v8013
    %9067 = vmatpush2.bf16.msra.mxu0 %v8012
    %9068 = vmatprep.subr.bf16.mxu0 %v8003
    %9069 = vmatpush2.bf16.msra.mxu0 %v8002
    %9070 = vmatprep.subr.bf16.mxu0 %v7993
    %9071 = vmatpush2.bf16.msra.mxu0 %v7992
    %9072 = vmatprep.subr.bf16.mxu0 %v7983
    %9073 = vmatpush2.bf16.msra.mxu0 %v7982
    %9074 = vmatprep.subr.bf16.mxu0 %v7973
    %9075 = vmatpush2.bf16.msra.mxu0 %v7972
    %9076 = vmatprep.mubr.bf16.mxu0 %v4409
    %9077 = vmatmul.mubr.bf16.gmra.mxu0 %v4408
    %v9078 = vpop.f32.mrf.mxu0
    %v9079 = vadd.f32 %v9036, %v9078
    %v9080 = vpop.f32.mrf.mxu0
    %v9081 = vadd.f32 %v9038, %v9080
    %v9082 = vpop.f32.mrf.mxu0
    %v9083 = vadd.f32 %v9040, %v9082
    %v9084 = vpop.f32.mrf.mxu0
    %v9085 = vadd.f32 %v9042, %v9084
    %9086 = vdwg.mxu0
    %9087 = vmatprep.subr.bf16.mxu0 %v8123
    %9088 = vmatpush1.bf16.msra.mxu0 %v8122
    %9089 = vmatprep.subr.bf16.mxu0 %v8113
    %9090 = vmatpush1.bf16.msra.mxu0 %v8112
    %9091 = vmatprep.subr.bf16.mxu0 %v8103
    %9092 = vmatpush1.bf16.msra.mxu0 %v8102
    %9093 = vmatprep.subr.bf16.mxu0 %v8093
    %9094 = vmatpush1.bf16.msra.mxu0 %v8092
    %9095 = vmatprep.subr.bf16.mxu0 %v8083
    %9096 = vmatpush1.bf16.msra.mxu0 %v8082
    %9097 = vmatprep.subr.bf16.mxu0 %v8073
    %9098 = vmatpush1.bf16.msra.mxu0 %v8072
    %9099 = vmatprep.subr.bf16.mxu0 %v8063
    %9100 = vmatpush1.bf16.msra.mxu0 %v8062
    %9101 = vmatprep.subr.bf16.mxu0 %v8053
    %9102 = vmatpush1.bf16.msra.mxu0 %v8052
    %9103 = vmatprep.subr.bf16.mxu0 0
    %9104 = vmatpush2.bf16.msra.mxu0 0
    %9105 = vmatprep.subr.bf16.mxu0 0
    %9106 = vmatpush2.bf16.msra.mxu0 0
    %9107 = vmatprep.subr.bf16.mxu0 0
    %9108 = vmatpush2.bf16.msra.mxu0 0
    %9109 = vmatprep.subr.bf16.mxu0 0
    %9110 = vmatpush2.bf16.msra.mxu0 0
    %9111 = vmatprep.subr.bf16.mxu0 0
    %9112 = vmatpush2.bf16.msra.mxu0 0
    %9113 = vmatprep.subr.bf16.mxu0 %v8153
    %9114 = vmatpush2.bf16.msra.mxu0 %v8152
    %9115 = vmatprep.subr.bf16.mxu0 %v8143
    %9116 = vmatpush2.bf16.msra.mxu0 %v8142
    %9117 = vmatprep.subr.bf16.mxu0 %v8133
    %9118 = vmatpush2.bf16.msra.mxu0 %v8132
    %9119 = vmatprep.mubr.bf16.mxu0 %v8913
    %9120 = vmatmul.mubr.bf16.gmra.mxu0 %v4410
    %v9121 = vpop.f32.mrf.mxu0
    %v9122 = vadd.f32 %v9079, %v9121
    %v9123 = vpop.f32.mrf.mxu0
    %v9124 = vadd.f32 %v9081, %v9123
    %v9125 = vpop.f32.mrf.mxu0
    %v9126 = vadd.f32 %v9083, %v9125
    %v9127 = vpop.f32.mrf.mxu0
    %v9128 = vadd.f32 %v9085, %v9127
    %9129 = vdwg.mxu0
    %9130 = vmatprep.subr.bf16.mxu0 %v7485
    %9131 = vmatpush1.bf16.msra.mxu0 %v7484
    %9132 = vmatprep.subr.bf16.mxu0 %v7475
    %9133 = vmatpush1.bf16.msra.mxu0 %v7474
    %9134 = vmatprep.subr.bf16.mxu0 %v7465
    %9135 = vmatpush1.bf16.msra.mxu0 %v7464
    %9136 = vmatprep.subr.bf16.mxu0 %v7455
    %9137 = vmatpush1.bf16.msra.mxu0 %v7454
    %9138 = vmatprep.subr.bf16.mxu0 %v7445
    %9139 = vmatpush1.bf16.msra.mxu0 %v7444
    %9140 = vmatprep.subr.bf16.mxu0 %v7435
    %9141 = vmatpush1.bf16.msra.mxu0 %v7434
    %9142 = vmatprep.subr.bf16.mxu0 %v7425
    %9143 = vmatpush1.bf16.msra.mxu0 %v7424
    %9144 = vmatprep.subr.bf16.mxu0 %v7415
    %9145 = vmatpush1.bf16.msra.mxu0 %v7414
    %9146 = vmatprep.subr.bf16.mxu0 %v7565
    %9147 = vmatpush2.bf16.msra.mxu0 %v7564
    %9148 = vmatprep.subr.bf16.mxu0 %v7555
    %9149 = vmatpush2.bf16.msra.mxu0 %v7554
    %9150 = vmatprep.subr.bf16.mxu0 %v7545
    %9151 = vmatpush2.bf16.msra.mxu0 %v7544
    %9152 = vmatprep.subr.bf16.mxu0 %v7535
    %9153 = vmatpush2.bf16.msra.mxu0 %v7534
    %9154 = vmatprep.subr.bf16.mxu0 %v7525
    %9155 = vmatpush2.bf16.msra.mxu0 %v7524
    %9156 = vmatprep.subr.bf16.mxu0 %v7515
    %9157 = vmatpush2.bf16.msra.mxu0 %v7514
    %9158 = vmatprep.subr.bf16.mxu0 %v7505
    %9159 = vmatpush2.bf16.msra.mxu0 %v7504
    %9160 = vmatprep.subr.bf16.mxu0 %v7495
    %9161 = vmatpush2.bf16.msra.mxu0 %v7494
    %9162 = vmatprep.mubr.bf16.mxu0 %v4403
    %9163 = vmatmul.mubr.bf16.gmra.mxu0 %v4402
    %v9164 = vpop.f32.mrf.mxu0
    %v9165 = vadd.f32 0.0, %v9164
    %v9166 = vpop.f32.mrf.mxu0
    %v9167 = vadd.f32 0.0, %v9166
    %v9168 = vpop.f32.mrf.mxu0
    %v9169 = vadd.f32 0.0, %v9168
    %v9170 = vpop.f32.mrf.mxu0
    %v9171 = vadd.f32 0.0, %v9170
    %9172 = vdwg.mxu0
    %9173 = vmatprep.subr.bf16.mxu0 %v7645
    %9174 = vmatpush1.bf16.msra.mxu0 %v7644
    %9175 = vmatprep.subr.bf16.mxu0 %v7635
    %9176 = vmatpush1.bf16.msra.mxu0 %v7634
    %9177 = vmatprep.subr.bf16.mxu0 %v7625
    %9178 = vmatpush1.bf16.msra.mxu0 %v7624
    %9179 = vmatprep.subr.bf16.mxu0 %v7615
    %9180 = vmatpush1.bf16.msra.mxu0 %v7614
    %9181 = vmatprep.subr.bf16.mxu0 %v7605
    %9182 = vmatpush1.bf16.msra.mxu0 %v7604
    %9183 = vmatprep.subr.bf16.mxu0 %v7595
    %9184 = vmatpush1.bf16.msra.mxu0 %v7594
    %9185 = vmatprep.subr.bf16.mxu0 %v7585
    %9186 = vmatpush1.bf16.msra.mxu0 %v7584
    %9187 = vmatprep.subr.bf16.mxu0 %v7575
    %9188 = vmatpush1.bf16.msra.mxu0 %v7574
    %9189 = vmatprep.subr.bf16.mxu0 %v7725
    %9190 = vmatpush2.bf16.msra.mxu0 %v7724
    %9191 = vmatprep.subr.bf16.mxu0 %v7715
    %9192 = vmatpush2.bf16.msra.mxu0 %v7714
    %9193 = vmatprep.subr.bf16.mxu0 %v7705
    %9194 = vmatpush2.bf16.msra.mxu0 %v7704
    %9195 = vmatprep.subr.bf16.mxu0 %v7695
    %9196 = vmatpush2.bf16.msra.mxu0 %v7694
    %9197 = vmatprep.subr.bf16.mxu0 %v7685
    %9198 = vmatpush2.bf16.msra.mxu0 %v7684
    %9199 = vmatprep.subr.bf16.mxu0 %v7675
    %9200 = vmatpush2.bf16.msra.mxu0 %v7674
    %9201 = vmatprep.subr.bf16.mxu0 %v7665
    %9202 = vmatpush2.bf16.msra.mxu0 %v7664
    %9203 = vmatprep.subr.bf16.mxu0 %v7655
    %9204 = vmatpush2.bf16.msra.mxu0 %v7654
    %9205 = vmatprep.mubr.bf16.mxu0 %v4405
    %9206 = vmatmul.mubr.bf16.gmra.mxu0 %v4404
    %v9207 = vpop.f32.mrf.mxu0
    %v9208 = vadd.f32 %v9165, %v9207
    %v9209 = vpop.f32.mrf.mxu0
    %v9210 = vadd.f32 %v9167, %v9209
    %v9211 = vpop.f32.mrf.mxu0
    %v9212 = vadd.f32 %v9169, %v9211
    %v9213 = vpop.f32.mrf.mxu0
    %v9214 = vadd.f32 %v9171, %v9213
    %9215 = vdwg.mxu0
    %9216 = vmatprep.subr.bf16.mxu0 %v7805
    %9217 = vmatpush1.bf16.msra.mxu0 %v7804
    %9218 = vmatprep.subr.bf16.mxu0 %v7795
    %9219 = vmatpush1.bf16.msra.mxu0 %v7794
    %9220 = vmatprep.subr.bf16.mxu0 %v7785
    %9221 = vmatpush1.bf16.msra.mxu0 %v7784
    %9222 = vmatprep.subr.bf16.mxu0 %v7775
    %9223 = vmatpush1.bf16.msra.mxu0 %v7774
    %9224 = vmatprep.subr.bf16.mxu0 %v7765
    %9225 = vmatpush1.bf16.msra.mxu0 %v7764
    %9226 = vmatprep.subr.bf16.mxu0 %v7755
    %9227 = vmatpush1.bf16.msra.mxu0 %v7754
    %9228 = vmatprep.subr.bf16.mxu0 %v7745
    %9229 = vmatpush1.bf16.msra.mxu0 %v7744
    %9230 = vmatprep.subr.bf16.mxu0 %v7735
    %9231 = vmatpush1.bf16.msra.mxu0 %v7734
    %9232 = vmatprep.subr.bf16.mxu0 %v7885
    %9233 = vmatpush2.bf16.msra.mxu0 %v7884
    %9234 = vmatprep.subr.bf16.mxu0 %v7875
    %9235 = vmatpush2.bf16.msra.mxu0 %v7874
    %9236 = vmatprep.subr.bf16.mxu0 %v7865
    %9237 = vmatpush2.bf16.msra.mxu0 %v7864
    %9238 = vmatprep.subr.bf16.mxu0 %v7855
    %9239 = vmatpush2.bf16.msra.mxu0 %v7854
    %9240 = vmatprep.subr.bf16.mxu0 %v7845
    %9241 = vmatpush2.bf16.msra.mxu0 %v7844
    %9242 = vmatprep.subr.bf16.mxu0 %v7835
    %9243 = vmatpush2.bf16.msra.mxu0 %v7834
    %9244 = vmatprep.subr.bf16.mxu0 %v7825
    %9245 = vmatpush2.bf16.msra.mxu0 %v7824
    %9246 = vmatprep.subr.bf16.mxu0 %v7815
    %9247 = vmatpush2.bf16.msra.mxu0 %v7814
    %9248 = vmatprep.mubr.bf16.mxu0 %v4407
    %9249 = vmatmul.mubr.bf16.gmra.mxu0 %v4406
    %v9250 = vpop.f32.mrf.mxu0
    %v9251 = vadd.f32 %v9208, %v9250
    %v9252 = vpop.f32.mrf.mxu0
    %v9253 = vadd.f32 %v9210, %v9252
    %v9254 = vpop.f32.mrf.mxu0
    %v9255 = vadd.f32 %v9212, %v9254
    %v9256 = vpop.f32.mrf.mxu0
    %v9257 = vadd.f32 %v9214, %v9256
    %9258 = vdwg.mxu0
    %9259 = vmatprep.subr.bf16.mxu0 %v7965
    %9260 = vmatpush1.bf16.msra.mxu0 %v7964
    %9261 = vmatprep.subr.bf16.mxu0 %v7955
    %9262 = vmatpush1.bf16.msra.mxu0 %v7954
    %9263 = vmatprep.subr.bf16.mxu0 %v7945
    %9264 = vmatpush1.bf16.msra.mxu0 %v7944
    %9265 = vmatprep.subr.bf16.mxu0 %v7935
    %9266 = vmatpush1.bf16.msra.mxu0 %v7934
    %9267 = vmatprep.subr.bf16.mxu0 %v7925
    %9268 = vmatpush1.bf16.msra.mxu0 %v7924
    %9269 = vmatprep.subr.bf16.mxu0 %v7915
    %9270 = vmatpush1.bf16.msra.mxu0 %v7914
    %9271 = vmatprep.subr.bf16.mxu0 %v7905
    %9272 = vmatpush1.bf16.msra.mxu0 %v7904
    %9273 = vmatprep.subr.bf16.mxu0 %v7895
    %9274 = vmatpush1.bf16.msra.mxu0 %v7894
    %9275 = vmatprep.subr.bf16.mxu0 %v8045
    %9276 = vmatpush2.bf16.msra.mxu0 %v8044
    %9277 = vmatprep.subr.bf16.mxu0 %v8035
    %9278 = vmatpush2.bf16.msra.mxu0 %v8034
    %9279 = vmatprep.subr.bf16.mxu0 %v8025
    %9280 = vmatpush2.bf16.msra.mxu0 %v8024
    %9281 = vmatprep.subr.bf16.mxu0 %v8015
    %9282 = vmatpush2.bf16.msra.mxu0 %v8014
    %9283 = vmatprep.subr.bf16.mxu0 %v8005
    %9284 = vmatpush2.bf16.msra.mxu0 %v8004
    %9285 = vmatprep.subr.bf16.mxu0 %v7995
    %9286 = vmatpush2.bf16.msra.mxu0 %v7994
    %9287 = vmatprep.subr.bf16.mxu0 %v7985
    %9288 = vmatpush2.bf16.msra.mxu0 %v7984
    %9289 = vmatprep.subr.bf16.mxu0 %v7975
    %9290 = vmatpush2.bf16.msra.mxu0 %v7974
    %9291 = vmatprep.mubr.bf16.mxu0 %v4409
    %9292 = vmatmul.mubr.bf16.gmra.mxu0 %v4408
    %v9293 = vpop.f32.mrf.mxu0
    %v9294 = vadd.f32 %v9251, %v9293
    %v9295 = vpop.f32.mrf.mxu0
    %v9296 = vadd.f32 %v9253, %v9295
    %v9297 = vpop.f32.mrf.mxu0
    %v9298 = vadd.f32 %v9255, %v9297
    %v9299 = vpop.f32.mrf.mxu0
    %v9300 = vadd.f32 %v9257, %v9299
    %9301 = vdwg.mxu0
    %9302 = vmatprep.subr.bf16.mxu0 %v8125
    %9303 = vmatpush1.bf16.msra.mxu0 %v8124
    %9304 = vmatprep.subr.bf16.mxu0 %v8115
    %9305 = vmatpush1.bf16.msra.mxu0 %v8114
    %9306 = vmatprep.subr.bf16.mxu0 %v8105
    %9307 = vmatpush1.bf16.msra.mxu0 %v8104
    %9308 = vmatprep.subr.bf16.mxu0 %v8095
    %9309 = vmatpush1.bf16.msra.mxu0 %v8094
    %9310 = vmatprep.subr.bf16.mxu0 %v8085
    %9311 = vmatpush1.bf16.msra.mxu0 %v8084
    %9312 = vmatprep.subr.bf16.mxu0 %v8075
    %9313 = vmatpush1.bf16.msra.mxu0 %v8074
    %9314 = vmatprep.subr.bf16.mxu0 %v8065
    %9315 = vmatpush1.bf16.msra.mxu0 %v8064
    %9316 = vmatprep.subr.bf16.mxu0 %v8055
    %9317 = vmatpush1.bf16.msra.mxu0 %v8054
    %9318 = vmatprep.subr.bf16.mxu0 0
    %9319 = vmatpush2.bf16.msra.mxu0 0
    %9320 = vmatprep.subr.bf16.mxu0 0
    %9321 = vmatpush2.bf16.msra.mxu0 0
    %9322 = vmatprep.subr.bf16.mxu0 0
    %9323 = vmatpush2.bf16.msra.mxu0 0
    %9324 = vmatprep.subr.bf16.mxu0 0
    %9325 = vmatpush2.bf16.msra.mxu0 0
    %9326 = vmatprep.subr.bf16.mxu0 0
    %9327 = vmatpush2.bf16.msra.mxu0 0
    %9328 = vmatprep.subr.bf16.mxu0 %v8155
    %9329 = vmatpush2.bf16.msra.mxu0 %v8154
    %9330 = vmatprep.subr.bf16.mxu0 %v8145
    %9331 = vmatpush2.bf16.msra.mxu0 %v8144
    %9332 = vmatprep.subr.bf16.mxu0 %v8135
    %9333 = vmatpush2.bf16.msra.mxu0 %v8134
    %9334 = vmatprep.mubr.bf16.mxu0 %v8913
    %9335 = vmatmul.mubr.bf16.gmra.mxu0 %v4410
    %v9336 = vpop.f32.mrf.mxu0
    %v9337 = vadd.f32 %v9294, %v9336
    %v9338 = vpop.f32.mrf.mxu0
    %v9339 = vadd.f32 %v9296, %v9338
    %v9340 = vpop.f32.mrf.mxu0
    %v9341 = vadd.f32 %v9298, %v9340
    %v9342 = vpop.f32.mrf.mxu0
    %v9343 = vadd.f32 %v9300, %v9342
    %9344 = vdwg.mxu0
    %9345 = vmatprep.subr.bf16.mxu0 %v7487
    %9346 = vmatpush1.bf16.msra.mxu0 %v7486
    %9347 = vmatprep.subr.bf16.mxu0 %v7477
    %9348 = vmatpush1.bf16.msra.mxu0 %v7476
    %9349 = vmatprep.subr.bf16.mxu0 %v7467
    %9350 = vmatpush1.bf16.msra.mxu0 %v7466
    %9351 = vmatprep.subr.bf16.mxu0 %v7457
    %9352 = vmatpush1.bf16.msra.mxu0 %v7456
    %9353 = vmatprep.subr.bf16.mxu0 %v7447
    %9354 = vmatpush1.bf16.msra.mxu0 %v7446
    %9355 = vmatprep.subr.bf16.mxu0 %v7437
    %9356 = vmatpush1.bf16.msra.mxu0 %v7436
    %9357 = vmatprep.subr.bf16.mxu0 %v7427
    %9358 = vmatpush1.bf16.msra.mxu0 %v7426
    %9359 = vmatprep.subr.bf16.mxu0 %v7417
    %9360 = vmatpush1.bf16.msra.mxu0 %v7416
    %9361 = vmatprep.subr.bf16.mxu0 %v7567
    %9362 = vmatpush2.bf16.msra.mxu0 %v7566
    %9363 = vmatprep.subr.bf16.mxu0 %v7557
    %9364 = vmatpush2.bf16.msra.mxu0 %v7556
    %9365 = vmatprep.subr.bf16.mxu0 %v7547
    %9366 = vmatpush2.bf16.msra.mxu0 %v7546
    %9367 = vmatprep.subr.bf16.mxu0 %v7537
    %9368 = vmatpush2.bf16.msra.mxu0 %v7536
    %9369 = vmatprep.subr.bf16.mxu0 %v7527
    %9370 = vmatpush2.bf16.msra.mxu0 %v7526
    %9371 = vmatprep.subr.bf16.mxu0 %v7517
    %9372 = vmatpush2.bf16.msra.mxu0 %v7516
    %9373 = vmatprep.subr.bf16.mxu0 %v7507
    %9374 = vmatpush2.bf16.msra.mxu0 %v7506
    %9375 = vmatprep.subr.bf16.mxu0 %v7497
    %9376 = vmatpush2.bf16.msra.mxu0 %v7496
    %9377 = vmatprep.mubr.bf16.mxu0 %v4403
    %9378 = vmatmul.mubr.bf16.gmra.mxu0 %v4402
    %v9379 = vpop.f32.mrf.mxu0
    %v9380 = vadd.f32 0.0, %v9379
    %v9381 = vpop.f32.mrf.mxu0
    %v9382 = vadd.f32 0.0, %v9381
    %v9383 = vpop.f32.mrf.mxu0
    %v9384 = vadd.f32 0.0, %v9383
    %v9385 = vpop.f32.mrf.mxu0
    %v9386 = vadd.f32 0.0, %v9385
    %9387 = vdwg.mxu0
    %9388 = vmatprep.subr.bf16.mxu0 %v7647
    %9389 = vmatpush1.bf16.msra.mxu0 %v7646
    %9390 = vmatprep.subr.bf16.mxu0 %v7637
    %9391 = vmatpush1.bf16.msra.mxu0 %v7636
    %9392 = vmatprep.subr.bf16.mxu0 %v7627
    %9393 = vmatpush1.bf16.msra.mxu0 %v7626
    %9394 = vmatprep.subr.bf16.mxu0 %v7617
    %9395 = vmatpush1.bf16.msra.mxu0 %v7616
    %9396 = vmatprep.subr.bf16.mxu0 %v7607
    %9397 = vmatpush1.bf16.msra.mxu0 %v7606
    %9398 = vmatprep.subr.bf16.mxu0 %v7597
    %9399 = vmatpush1.bf16.msra.mxu0 %v7596
    %9400 = vmatprep.subr.bf16.mxu0 %v7587
    %9401 = vmatpush1.bf16.msra.mxu0 %v7586
    %9402 = vmatprep.subr.bf16.mxu0 %v7577
    %9403 = vmatpush1.bf16.msra.mxu0 %v7576
    %9404 = vmatprep.subr.bf16.mxu0 %v7727
    %9405 = vmatpush2.bf16.msra.mxu0 %v7726
    %9406 = vmatprep.subr.bf16.mxu0 %v7717
    %9407 = vmatpush2.bf16.msra.mxu0 %v7716
    %9408 = vmatprep.subr.bf16.mxu0 %v7707
    %9409 = vmatpush2.bf16.msra.mxu0 %v7706
    %9410 = vmatprep.subr.bf16.mxu0 %v7697
    %9411 = vmatpush2.bf16.msra.mxu0 %v7696
    %9412 = vmatprep.subr.bf16.mxu0 %v7687
    %9413 = vmatpush2.bf16.msra.mxu0 %v7686
    %9414 = vmatprep.subr.bf16.mxu0 %v7677
    %9415 = vmatpush2.bf16.msra.mxu0 %v7676
    %9416 = vmatprep.subr.bf16.mxu0 %v7667
    %9417 = vmatpush2.bf16.msra.mxu0 %v7666
    %9418 = vmatprep.subr.bf16.mxu0 %v7657
    %9419 = vmatpush2.bf16.msra.mxu0 %v7656
    %9420 = vmatprep.mubr.bf16.mxu0 %v4405
    %9421 = vmatmul.mubr.bf16.gmra.mxu0 %v4404
    %v9422 = vpop.f32.mrf.mxu0
    %v9423 = vadd.f32 %v9380, %v9422
    %v9424 = vpop.f32.mrf.mxu0
    %v9425 = vadd.f32 %v9382, %v9424
    %v9426 = vpop.f32.mrf.mxu0
    %v9427 = vadd.f32 %v9384, %v9426
    %v9428 = vpop.f32.mrf.mxu0
    %v9429 = vadd.f32 %v9386, %v9428
    %9430 = vdwg.mxu0
    %9431 = vmatprep.subr.bf16.mxu0 %v7807
    %9432 = vmatpush1.bf16.msra.mxu0 %v7806
    %9433 = vmatprep.subr.bf16.mxu0 %v7797
    %9434 = vmatpush1.bf16.msra.mxu0 %v7796
    %9435 = vmatprep.subr.bf16.mxu0 %v7787
    %9436 = vmatpush1.bf16.msra.mxu0 %v7786
    %9437 = vmatprep.subr.bf16.mxu0 %v7777
    %9438 = vmatpush1.bf16.msra.mxu0 %v7776
    %9439 = vmatprep.subr.bf16.mxu0 %v7767
    %9440 = vmatpush1.bf16.msra.mxu0 %v7766
    %9441 = vmatprep.subr.bf16.mxu0 %v7757
    %9442 = vmatpush1.bf16.msra.mxu0 %v7756
    %9443 = vmatprep.subr.bf16.mxu0 %v7747
    %9444 = vmatpush1.bf16.msra.mxu0 %v7746
    %9445 = vmatprep.subr.bf16.mxu0 %v7737
    %9446 = vmatpush1.bf16.msra.mxu0 %v7736
    %9447 = vmatprep.subr.bf16.mxu0 %v7887
    %9448 = vmatpush2.bf16.msra.mxu0 %v7886
    %9449 = vmatprep.subr.bf16.mxu0 %v7877
    %9450 = vmatpush2.bf16.msra.mxu0 %v7876
    %9451 = vmatprep.subr.bf16.mxu0 %v7867
    %9452 = vmatpush2.bf16.msra.mxu0 %v7866
    %9453 = vmatprep.subr.bf16.mxu0 %v7857
    %9454 = vmatpush2.bf16.msra.mxu0 %v7856
    %9455 = vmatprep.subr.bf16.mxu0 %v7847
    %9456 = vmatpush2.bf16.msra.mxu0 %v7846
    %9457 = vmatprep.subr.bf16.mxu0 %v7837
    %9458 = vmatpush2.bf16.msra.mxu0 %v7836
    %9459 = vmatprep.subr.bf16.mxu0 %v7827
    %9460 = vmatpush2.bf16.msra.mxu0 %v7826
    %9461 = vmatprep.subr.bf16.mxu0 %v7817
    %9462 = vmatpush2.bf16.msra.mxu0 %v7816
    %9463 = vmatprep.mubr.bf16.mxu0 %v4407
    %9464 = vmatmul.mubr.bf16.gmra.mxu0 %v4406
    %v9465 = vpop.f32.mrf.mxu0
    %v9466 = vadd.f32 %v9423, %v9465
    %v9467 = vpop.f32.mrf.mxu0
    %v9468 = vadd.f32 %v9425, %v9467
    %v9469 = vpop.f32.mrf.mxu0
    %v9470 = vadd.f32 %v9427, %v9469
    %v9471 = vpop.f32.mrf.mxu0
    %v9472 = vadd.f32 %v9429, %v9471
    %9473 = vdwg.mxu0
    %9474 = vmatprep.subr.bf16.mxu0 %v7967
    %9475 = vmatpush1.bf16.msra.mxu0 %v7966
    %9476 = vmatprep.subr.bf16.mxu0 %v7957
    %9477 = vmatpush1.bf16.msra.mxu0 %v7956
    %9478 = vmatprep.subr.bf16.mxu0 %v7947
    %9479 = vmatpush1.bf16.msra.mxu0 %v7946
    %9480 = vmatprep.subr.bf16.mxu0 %v7937
    %9481 = vmatpush1.bf16.msra.mxu0 %v7936
    %9482 = vmatprep.subr.bf16.mxu0 %v7927
    %9483 = vmatpush1.bf16.msra.mxu0 %v7926
    %9484 = vmatprep.subr.bf16.mxu0 %v7917
    %9485 = vmatpush1.bf16.msra.mxu0 %v7916
    %9486 = vmatprep.subr.bf16.mxu0 %v7907
    %9487 = vmatpush1.bf16.msra.mxu0 %v7906
    %9488 = vmatprep.subr.bf16.mxu0 %v7897
    %9489 = vmatpush1.bf16.msra.mxu0 %v7896
    %9490 = vmatprep.subr.bf16.mxu0 %v8047
    %9491 = vmatpush2.bf16.msra.mxu0 %v8046
    %9492 = vmatprep.subr.bf16.mxu0 %v8037
    %9493 = vmatpush2.bf16.msra.mxu0 %v8036
    %9494 = vmatprep.subr.bf16.mxu0 %v8027
    %9495 = vmatpush2.bf16.msra.mxu0 %v8026
    %9496 = vmatprep.subr.bf16.mxu0 %v8017
    %9497 = vmatpush2.bf16.msra.mxu0 %v8016
    %9498 = vmatprep.subr.bf16.mxu0 %v8007
    %9499 = vmatpush2.bf16.msra.mxu0 %v8006
    %9500 = vmatprep.subr.bf16.mxu0 %v7997
    %9501 = vmatpush2.bf16.msra.mxu0 %v7996
    %9502 = vmatprep.subr.bf16.mxu0 %v7987
    %9503 = vmatpush2.bf16.msra.mxu0 %v7986
    %9504 = vmatprep.subr.bf16.mxu0 %v7977
    %9505 = vmatpush2.bf16.msra.mxu0 %v7976
    %9506 = vmatprep.mubr.bf16.mxu0 %v4409
    %9507 = vmatmul.mubr.bf16.gmra.mxu0 %v4408
    %v9508 = vpop.f32.mrf.mxu0
    %v9509 = vadd.f32 %v9466, %v9508
    %v9510 = vpop.f32.mrf.mxu0
    %v9511 = vadd.f32 %v9468, %v9510
    %v9512 = vpop.f32.mrf.mxu0
    %v9513 = vadd.f32 %v9470, %v9512
    %v9514 = vpop.f32.mrf.mxu0
    %v9515 = vadd.f32 %v9472, %v9514
    %9516 = vdwg.mxu0
    %9517 = vmatprep.subr.bf16.mxu0 %v8127
    %9518 = vmatpush1.bf16.msra.mxu0 %v8126
    %9519 = vmatprep.subr.bf16.mxu0 %v8117
    %9520 = vmatpush1.bf16.msra.mxu0 %v8116
    %9521 = vmatprep.subr.bf16.mxu0 %v8107
    %9522 = vmatpush1.bf16.msra.mxu0 %v8106
    %9523 = vmatprep.subr.bf16.mxu0 %v8097
    %9524 = vmatpush1.bf16.msra.mxu0 %v8096
    %9525 = vmatprep.subr.bf16.mxu0 %v8087
    %9526 = vmatpush1.bf16.msra.mxu0 %v8086
    %9527 = vmatprep.subr.bf16.mxu0 %v8077
    %9528 = vmatpush1.bf16.msra.mxu0 %v8076
    %9529 = vmatprep.subr.bf16.mxu0 %v8067
    %9530 = vmatpush1.bf16.msra.mxu0 %v8066
    %9531 = vmatprep.subr.bf16.mxu0 %v8057
    %9532 = vmatpush1.bf16.msra.mxu0 %v8056
    %9533 = vmatprep.subr.bf16.mxu0 0
    %9534 = vmatpush2.bf16.msra.mxu0 0
    %9535 = vmatprep.subr.bf16.mxu0 0
    %9536 = vmatpush2.bf16.msra.mxu0 0
    %9537 = vmatprep.subr.bf16.mxu0 0
    %9538 = vmatpush2.bf16.msra.mxu0 0
    %9539 = vmatprep.subr.bf16.mxu0 0
    %9540 = vmatpush2.bf16.msra.mxu0 0
    %9541 = vmatprep.subr.bf16.mxu0 0
    %9542 = vmatpush2.bf16.msra.mxu0 0
    %9543 = vmatprep.subr.bf16.mxu0 %v8157
    %9544 = vmatpush2.bf16.msra.mxu0 %v8156
    %9545 = vmatprep.subr.bf16.mxu0 %v8147
    %9546 = vmatpush2.bf16.msra.mxu0 %v8146
    %9547 = vmatprep.subr.bf16.mxu0 %v8137
    %9548 = vmatpush2.bf16.msra.mxu0 %v8136
    %9549 = vmatprep.mubr.bf16.mxu0 %v8913
    %9550 = vmatmul.mubr.bf16.gmra.mxu0 %v4410
    %v9551 = vpop.f32.mrf.mxu0
    %v9552 = vadd.f32 %v9509, %v9551
    %v9553 = vpop.f32.mrf.mxu0
    %v9554 = vadd.f32 %v9511, %v9553
    %v9555 = vpop.f32.mrf.mxu0
    %v9556 = vadd.f32 %v9513, %v9555
    %v9557 = vpop.f32.mrf.mxu0
    %v9558 = vadd.f32 %v9515, %v9557
    %9559 = vdwg.mxu0
    %9560 = vmatprep.subr.bf16.mxu0 %v7489
    %9561 = vmatpush1.bf16.msra.mxu0 %v7488
    %9562 = vmatprep.subr.bf16.mxu0 %v7479
    %9563 = vmatpush1.bf16.msra.mxu0 %v7478
    %9564 = vmatprep.subr.bf16.mxu0 %v7469
    %9565 = vmatpush1.bf16.msra.mxu0 %v7468
    %9566 = vmatprep.subr.bf16.mxu0 %v7459
    %9567 = vmatpush1.bf16.msra.mxu0 %v7458
    %9568 = vmatprep.subr.bf16.mxu0 %v7449
    %9569 = vmatpush1.bf16.msra.mxu0 %v7448
    %9570 = vmatprep.subr.bf16.mxu0 %v7439
    %9571 = vmatpush1.bf16.msra.mxu0 %v7438
    %9572 = vmatprep.subr.bf16.mxu0 %v7429
    %9573 = vmatpush1.bf16.msra.mxu0 %v7428
    %9574 = vmatprep.subr.bf16.mxu0 %v7419
    %9575 = vmatpush1.bf16.msra.mxu0 %v7418
    %9576 = vmatprep.subr.bf16.mxu0 %v7569
    %9577 = vmatpush2.bf16.msra.mxu0 %v7568
    %9578 = vmatprep.subr.bf16.mxu0 %v7559
    %9579 = vmatpush2.bf16.msra.mxu0 %v7558
    %9580 = vmatprep.subr.bf16.mxu0 %v7549
    %9581 = vmatpush2.bf16.msra.mxu0 %v7548
    %9582 = vmatprep.subr.bf16.mxu0 %v7539
    %9583 = vmatpush2.bf16.msra.mxu0 %v7538
    %9584 = vmatprep.subr.bf16.mxu0 %v7529
    %9585 = vmatpush2.bf16.msra.mxu0 %v7528
    %9586 = vmatprep.subr.bf16.mxu0 %v7519
    %9587 = vmatpush2.bf16.msra.mxu0 %v7518
    %9588 = vmatprep.subr.bf16.mxu0 %v7509
    %9589 = vmatpush2.bf16.msra.mxu0 %v7508
    %9590 = vmatprep.subr.bf16.mxu0 %v7499
    %9591 = vmatpush2.bf16.msra.mxu0 %v7498
    %9592 = vmatprep.mubr.bf16.mxu0 %v4403
    %9593 = vmatmul.mubr.bf16.gmra.mxu0 %v4402
    %v9594 = vpop.f32.mrf.mxu0
    %v9595 = vadd.f32 0.0, %v9594
    %v9596 = vpop.f32.mrf.mxu0
    %v9597 = vadd.f32 0.0, %v9596
    %v9598 = vpop.f32.mrf.mxu0
    %v9599 = vadd.f32 0.0, %v9598
    %v9600 = vpop.f32.mrf.mxu0
    %v9601 = vadd.f32 0.0, %v9600
    %9602 = vdwg.mxu0
    %9603 = vmatprep.subr.bf16.mxu0 %v7649
    %9604 = vmatpush1.bf16.msra.mxu0 %v7648
    %9605 = vmatprep.subr.bf16.mxu0 %v7639
    %9606 = vmatpush1.bf16.msra.mxu0 %v7638
    %9607 = vmatprep.subr.bf16.mxu0 %v7629
    %9608 = vmatpush1.bf16.msra.mxu0 %v7628
    %9609 = vmatprep.subr.bf16.mxu0 %v7619
    %9610 = vmatpush1.bf16.msra.mxu0 %v7618
    %9611 = vmatprep.subr.bf16.mxu0 %v7609
    %9612 = vmatpush1.bf16.msra.mxu0 %v7608
    %9613 = vmatprep.subr.bf16.mxu0 %v7599
    %9614 = vmatpush1.bf16.msra.mxu0 %v7598
    %9615 = vmatprep.subr.bf16.mxu0 %v7589
    %9616 = vmatpush1.bf16.msra.mxu0 %v7588
    %9617 = vmatprep.subr.bf16.mxu0 %v7579
    %9618 = vmatpush1.bf16.msra.mxu0 %v7578
    %9619 = vmatprep.subr.bf16.mxu0 %v7729
    %9620 = vmatpush2.bf16.msra.mxu0 %v7728
    %9621 = vmatprep.subr.bf16.mxu0 %v7719
    %9622 = vmatpush2.bf16.msra.mxu0 %v7718
    %9623 = vmatprep.subr.bf16.mxu0 %v7709
    %9624 = vmatpush2.bf16.msra.mxu0 %v7708
    %9625 = vmatprep.subr.bf16.mxu0 %v7699
    %9626 = vmatpush2.bf16.msra.mxu0 %v7698
    %9627 = vmatprep.subr.bf16.mxu0 %v7689
    %9628 = vmatpush2.bf16.msra.mxu0 %v7688
    %9629 = vmatprep.subr.bf16.mxu0 %v7679
    %9630 = vmatpush2.bf16.msra.mxu0 %v7678
    %9631 = vmatprep.subr.bf16.mxu0 %v7669
    %9632 = vmatpush2.bf16.msra.mxu0 %v7668
    %9633 = vmatprep.subr.bf16.mxu0 %v7659
    %9634 = vmatpush2.bf16.msra.mxu0 %v7658
    %9635 = vmatprep.mubr.bf16.mxu0 %v4405
    %9636 = vmatmul.mubr.bf16.gmra.mxu0 %v4404
    %v9637 = vpop.f32.mrf.mxu0
    %v9638 = vadd.f32 %v9595, %v9637
    %v9639 = vpop.f32.mrf.mxu0
    %v9640 = vadd.f32 %v9597, %v9639
    %v9641 = vpop.f32.mrf.mxu0
    %v9642 = vadd.f32 %v9599, %v9641
    %v9643 = vpop.f32.mrf.mxu0
    %v9644 = vadd.f32 %v9601, %v9643
    %9645 = vdwg.mxu0
    %9646 = vmatprep.subr.bf16.mxu0 %v7809
    %9647 = vmatpush1.bf16.msra.mxu0 %v7808
    %9648 = vmatprep.subr.bf16.mxu0 %v7799
    %9649 = vmatpush1.bf16.msra.mxu0 %v7798
    %9650 = vmatprep.subr.bf16.mxu0 %v7789
    %9651 = vmatpush1.bf16.msra.mxu0 %v7788
    %9652 = vmatprep.subr.bf16.mxu0 %v7779
    %9653 = vmatpush1.bf16.msra.mxu0 %v7778
    %9654 = vmatprep.subr.bf16.mxu0 %v7769
    %9655 = vmatpush1.bf16.msra.mxu0 %v7768
    %9656 = vmatprep.subr.bf16.mxu0 %v7759
    %9657 = vmatpush1.bf16.msra.mxu0 %v7758
    %9658 = vmatprep.subr.bf16.mxu0 %v7749
    %9659 = vmatpush1.bf16.msra.mxu0 %v7748
    %9660 = vmatprep.subr.bf16.mxu0 %v7739
    %9661 = vmatpush1.bf16.msra.mxu0 %v7738
    %9662 = vmatprep.subr.bf16.mxu0 %v7889
    %9663 = vmatpush2.bf16.msra.mxu0 %v7888
    %9664 = vmatprep.subr.bf16.mxu0 %v7879
    %9665 = vmatpush2.bf16.msra.mxu0 %v7878
    %9666 = vmatprep.subr.bf16.mxu0 %v7869
    %9667 = vmatpush2.bf16.msra.mxu0 %v7868
    %9668 = vmatprep.subr.bf16.mxu0 %v7859
    %9669 = vmatpush2.bf16.msra.mxu0 %v7858
    %9670 = vmatprep.subr.bf16.mxu0 %v7849
    %9671 = vmatpush2.bf16.msra.mxu0 %v7848
    %9672 = vmatprep.subr.bf16.mxu0 %v7839
    %9673 = vmatpush2.bf16.msra.mxu0 %v7838
    %9674 = vmatprep.subr.bf16.mxu0 %v7829
    %9675 = vmatpush2.bf16.msra.mxu0 %v7828
    %9676 = vmatprep.subr.bf16.mxu0 %v7819
    %9677 = vmatpush2.bf16.msra.mxu0 %v7818
    %9678 = vmatprep.mubr.bf16.mxu0 %v4407
    %9679 = vmatmul.mubr.bf16.gmra.mxu0 %v4406
    %v9680 = vpop.f32.mrf.mxu0
    %v9681 = vadd.f32 %v9638, %v9680
    %v9682 = vpop.f32.mrf.mxu0
    %v9683 = vadd.f32 %v9640, %v9682
    %v9684 = vpop.f32.mrf.mxu0
    %v9685 = vadd.f32 %v9642, %v9684
    %v9686 = vpop.f32.mrf.mxu0
    %v9687 = vadd.f32 %v9644, %v9686
    %9688 = vdwg.mxu0
    %9689 = vmatprep.subr.bf16.mxu0 %v7969
    %9690 = vmatpush1.bf16.msra.mxu0 %v7968
    %9691 = vmatprep.subr.bf16.mxu0 %v7959
    %9692 = vmatpush1.bf16.msra.mxu0 %v7958
    %9693 = vmatprep.subr.bf16.mxu0 %v7949
    %9694 = vmatpush1.bf16.msra.mxu0 %v7948
    %9695 = vmatprep.subr.bf16.mxu0 %v7939
    %9696 = vmatpush1.bf16.msra.mxu0 %v7938
    %9697 = vmatprep.subr.bf16.mxu0 %v7929
    %9698 = vmatpush1.bf16.msra.mxu0 %v7928
    %9699 = vmatprep.subr.bf16.mxu0 %v7919
    %9700 = vmatpush1.bf16.msra.mxu0 %v7918
    %9701 = vmatprep.subr.bf16.mxu0 %v7909
    %9702 = vmatpush1.bf16.msra.mxu0 %v7908
    %9703 = vmatprep.subr.bf16.mxu0 %v7899
    %9704 = vmatpush1.bf16.msra.mxu0 %v7898
    %9705 = vmatprep.subr.bf16.mxu0 %v8049
    %9706 = vmatpush2.bf16.msra.mxu0 %v8048
    %9707 = vmatprep.subr.bf16.mxu0 %v8039
    %9708 = vmatpush2.bf16.msra.mxu0 %v8038
    %9709 = vmatprep.subr.bf16.mxu0 %v8029
    %9710 = vmatpush2.bf16.msra.mxu0 %v8028
    %9711 = vmatprep.subr.bf16.mxu0 %v8019
    %9712 = vmatpush2.bf16.msra.mxu0 %v8018
    %9713 = vmatprep.subr.bf16.mxu0 %v8009
    %9714 = vmatpush2.bf16.msra.mxu0 %v8008
    %9715 = vmatprep.subr.bf16.mxu0 %v7999
    %9716 = vmatpush2.bf16.msra.mxu0 %v7998
    %9717 = vmatprep.subr.bf16.mxu0 %v7989
    %9718 = vmatpush2.bf16.msra.mxu0 %v7988
    %9719 = vmatprep.subr.bf16.mxu0 %v7979
    %9720 = vmatpush2.bf16.msra.mxu0 %v7978
    %9721 = vmatprep.mubr.bf16.mxu0 %v4409
    %9722 = vmatmul.mubr.bf16.gmra.mxu0 %v4408
    %v9723 = vpop.f32.mrf.mxu0
    %v9724 = vadd.f32 %v9681, %v9723
    %v9725 = vpop.f32.mrf.mxu0
    %v9726 = vadd.f32 %v9683, %v9725
    %v9727 = vpop.f32.mrf.mxu0
    %v9728 = vadd.f32 %v9685, %v9727
    %v9729 = vpop.f32.mrf.mxu0
    %v9730 = vadd.f32 %v9687, %v9729
    %9731 = vdwg.mxu0
    %9732 = vmatprep.subr.bf16.mxu0 %v8129
    %9733 = vmatpush1.bf16.msra.mxu0 %v8128
    %9734 = vmatprep.subr.bf16.mxu0 %v8119
    %9735 = vmatpush1.bf16.msra.mxu0 %v8118
    %9736 = vmatprep.subr.bf16.mxu0 %v8109
    %9737 = vmatpush1.bf16.msra.mxu0 %v8108
    %9738 = vmatprep.subr.bf16.mxu0 %v8099
    %9739 = vmatpush1.bf16.msra.mxu0 %v8098
    %9740 = vmatprep.subr.bf16.mxu0 %v8089
    %9741 = vmatpush1.bf16.msra.mxu0 %v8088
    %9742 = vmatprep.subr.bf16.mxu0 %v8079
    %9743 = vmatpush1.bf16.msra.mxu0 %v8078
    %9744 = vmatprep.subr.bf16.mxu0 %v8069
    %9745 = vmatpush1.bf16.msra.mxu0 %v8068
    %9746 = vmatprep.subr.bf16.mxu0 %v8059
    %9747 = vmatpush1.bf16.msra.mxu0 %v8058
    %9748 = vmatprep.subr.bf16.mxu0 0
    %9749 = vmatpush2.bf16.msra.mxu0 0
    %9750 = vmatprep.subr.bf16.mxu0 0
    %9751 = vmatpush2.bf16.msra.mxu0 0
    %9752 = vmatprep.subr.bf16.mxu0 0
    %9753 = vmatpush2.bf16.msra.mxu0 0
    %9754 = vmatprep.subr.bf16.mxu0 0
    %9755 = vmatpush2.bf16.msra.mxu0 0
    %9756 = vmatprep.subr.bf16.mxu0 0
    %9757 = vmatpush2.bf16.msra.mxu0 0
    %9758 = vmatprep.subr.bf16.mxu0 %v8159
    %9759 = vmatpush2.bf16.msra.mxu0 %v8158
    %9760 = vmatprep.subr.bf16.mxu0 %v8149
    %9761 = vmatpush2.bf16.msra.mxu0 %v8148
    %9762 = vmatprep.subr.bf16.mxu0 %v8139
    %9763 = vmatpush2.bf16.msra.mxu0 %v8138
    %9764 = vmatprep.mubr.bf16.mxu0 %v8913
    %9765 = vmatmul.mubr.bf16.gmra.mxu0 %v4410
    %v9766 = vpop.f32.mrf.mxu0
    %v9767 = vadd.f32 %v9724, %v9766
    %v9768 = vpop.f32.mrf.mxu0
    %v9769 = vadd.f32 %v9726, %v9768
    %v9770 = vpop.f32.mrf.mxu0
    %v9771 = vadd.f32 %v9728, %v9770
    %v9772 = vpop.f32.mrf.mxu0
    %v9773 = vadd.f32 %v9730, %v9772
    %9774 = vdwg.mxu0
    %9775 = vmatprep.subr.bf16.mxu0 %v7491
    %9776 = vmatpush1.bf16.msra.mxu0 %v7490
    %9777 = vmatprep.subr.bf16.mxu0 %v7481
    %9778 = vmatpush1.bf16.msra.mxu0 %v7480
    %9779 = vmatprep.subr.bf16.mxu0 %v7471
    %9780 = vmatpush1.bf16.msra.mxu0 %v7470
    %9781 = vmatprep.subr.bf16.mxu0 %v7461
    %9782 = vmatpush1.bf16.msra.mxu0 %v7460
    %9783 = vmatprep.subr.bf16.mxu0 %v7451
    %9784 = vmatpush1.bf16.msra.mxu0 %v7450
    %9785 = vmatprep.subr.bf16.mxu0 %v7441
    %9786 = vmatpush1.bf16.msra.mxu0 %v7440
    %9787 = vmatprep.subr.bf16.mxu0 %v7431
    %9788 = vmatpush1.bf16.msra.mxu0 %v7430
    %9789 = vmatprep.subr.bf16.mxu0 %v7421
    %9790 = vmatpush1.bf16.msra.mxu0 %v7420
    %9791 = vmatprep.subr.bf16.mxu0 %v7571
    %9792 = vmatpush2.bf16.msra.mxu0 %v7570
    %9793 = vmatprep.subr.bf16.mxu0 %v7561
    %9794 = vmatpush2.bf16.msra.mxu0 %v7560
    %9795 = vmatprep.subr.bf16.mxu0 %v7551
    %9796 = vmatpush2.bf16.msra.mxu0 %v7550
    %9797 = vmatprep.subr.bf16.mxu0 %v7541
    %9798 = vmatpush2.bf16.msra.mxu0 %v7540
    %9799 = vmatprep.subr.bf16.mxu0 %v7531
    %9800 = vmatpush2.bf16.msra.mxu0 %v7530
    %9801 = vmatprep.subr.bf16.mxu0 %v7521
    %9802 = vmatpush2.bf16.msra.mxu0 %v7520
    %9803 = vmatprep.subr.bf16.mxu0 %v7511
    %9804 = vmatpush2.bf16.msra.mxu0 %v7510
    %9805 = vmatprep.subr.bf16.mxu0 %v7501
    %9806 = vmatpush2.bf16.msra.mxu0 %v7500
    %9807 = vmatprep.mubr.bf16.mxu0 %v4403
    %9808 = vmatmul.mubr.bf16.gmra.mxu0 %v4402
    %v9809 = vpop.f32.mrf.mxu0
    %v9810 = vadd.f32 0.0, %v9809
    %v9811 = vpop.f32.mrf.mxu0
    %v9812 = vadd.f32 0.0, %v9811
    %v9813 = vpop.f32.mrf.mxu0
    %v9814 = vadd.f32 0.0, %v9813
    %v9815 = vpop.f32.mrf.mxu0
    %v9816 = vadd.f32 0.0, %v9815
    %9817 = vdwg.mxu0
    %9818 = vmatprep.subr.bf16.mxu0 %v7651
    %9819 = vmatpush1.bf16.msra.mxu0 %v7650
    %9820 = vmatprep.subr.bf16.mxu0 %v7641
    %9821 = vmatpush1.bf16.msra.mxu0 %v7640
    %9822 = vmatprep.subr.bf16.mxu0 %v7631
    %9823 = vmatpush1.bf16.msra.mxu0 %v7630
    %9824 = vmatprep.subr.bf16.mxu0 %v7621
    %9825 = vmatpush1.bf16.msra.mxu0 %v7620
    %9826 = vmatprep.subr.bf16.mxu0 %v7611
    %9827 = vmatpush1.bf16.msra.mxu0 %v7610
    %9828 = vmatprep.subr.bf16.mxu0 %v7601
    %9829 = vmatpush1.bf16.msra.mxu0 %v7600
    %9830 = vmatprep.subr.bf16.mxu0 %v7591
    %9831 = vmatpush1.bf16.msra.mxu0 %v7590
    %9832 = vmatprep.subr.bf16.mxu0 %v7581
    %9833 = vmatpush1.bf16.msra.mxu0 %v7580
    %9834 = vmatprep.subr.bf16.mxu0 %v7731
    %9835 = vmatpush2.bf16.msra.mxu0 %v7730
    %9836 = vmatprep.subr.bf16.mxu0 %v7721
    %9837 = vmatpush2.bf16.msra.mxu0 %v7720
    %9838 = vmatprep.subr.bf16.mxu0 %v7711
    %9839 = vmatpush2.bf16.msra.mxu0 %v7710
    %9840 = vmatprep.subr.bf16.mxu0 %v7701
    %9841 = vmatpush2.bf16.msra.mxu0 %v7700
    %9842 = vmatprep.subr.bf16.mxu0 %v7691
    %9843 = vmatpush2.bf16.msra.mxu0 %v7690
    %9844 = vmatprep.subr.bf16.mxu0 %v7681
    %9845 = vmatpush2.bf16.msra.mxu0 %v7680
    %9846 = vmatprep.subr.bf16.mxu0 %v7671
    %9847 = vmatpush2.bf16.msra.mxu0 %v7670
    %9848 = vmatprep.subr.bf16.mxu0 %v7661
    %9849 = vmatpush2.bf16.msra.mxu0 %v7660
    %9850 = vmatprep.mubr.bf16.mxu0 %v4405
    %9851 = vmatmul.mubr.bf16.gmra.mxu0 %v4404
    %v9852 = vpop.f32.mrf.mxu0
    %v9853 = vadd.f32 %v9810, %v9852
    %v9854 = vpop.f32.mrf.mxu0
    %v9855 = vadd.f32 %v9812, %v9854
    %v9856 = vpop.f32.mrf.mxu0
    %v9857 = vadd.f32 %v9814, %v9856
    %v9858 = vpop.f32.mrf.mxu0
    %v9859 = vadd.f32 %v9816, %v9858
    %9860 = vdwg.mxu0
    %9861 = vmatprep.subr.bf16.mxu0 %v7811
    %9862 = vmatpush1.bf16.msra.mxu0 %v7810
    %9863 = vmatprep.subr.bf16.mxu0 %v7801
    %9864 = vmatpush1.bf16.msra.mxu0 %v7800
    %9865 = vmatprep.subr.bf16.mxu0 %v7791
    %9866 = vmatpush1.bf16.msra.mxu0 %v7790
    %9867 = vmatprep.subr.bf16.mxu0 %v7781
    %9868 = vmatpush1.bf16.msra.mxu0 %v7780
    %9869 = vmatprep.subr.bf16.mxu0 %v7771
    %9870 = vmatpush1.bf16.msra.mxu0 %v7770
    %9871 = vmatprep.subr.bf16.mxu0 %v7761
    %9872 = vmatpush1.bf16.msra.mxu0 %v7760
    %9873 = vmatprep.subr.bf16.mxu0 %v7751
    %9874 = vmatpush1.bf16.msra.mxu0 %v7750
    %9875 = vmatprep.subr.bf16.mxu0 %v7741
    %9876 = vmatpush1.bf16.msra.mxu0 %v7740
    %9877 = vmatprep.subr.bf16.mxu0 %v7891
    %9878 = vmatpush2.bf16.msra.mxu0 %v7890
    %9879 = vmatprep.subr.bf16.mxu0 %v7881
    %9880 = vmatpush2.bf16.msra.mxu0 %v7880
    %9881 = vmatprep.subr.bf16.mxu0 %v7871
    %9882 = vmatpush2.bf16.msra.mxu0 %v7870
    %9883 = vmatprep.subr.bf16.mxu0 %v7861
    %9884 = vmatpush2.bf16.msra.mxu0 %v7860
    %9885 = vmatprep.subr.bf16.mxu0 %v7851
    %9886 = vmatpush2.bf16.msra.mxu0 %v7850
    %9887 = vmatprep.subr.bf16.mxu0 %v7841
    %9888 = vmatpush2.bf16.msra.mxu0 %v7840
    %9889 = vmatprep.subr.bf16.mxu0 %v7831
    %9890 = vmatpush2.bf16.msra.mxu0 %v7830
    %9891 = vmatprep.subr.bf16.mxu0 %v7821
    %9892 = vmatpush2.bf16.msra.mxu0 %v7820
    %9893 = vmatprep.mubr.bf16.mxu0 %v4407
    %9894 = vmatmul.mubr.bf16.gmra.mxu0 %v4406
    %v9895 = vpop.f32.mrf.mxu0
    %v9896 = vadd.f32 %v9853, %v9895
    %v9897 = vpop.f32.mrf.mxu0
    %v9898 = vadd.f32 %v9855, %v9897
    %v9899 = vpop.f32.mrf.mxu0
    %v9900 = vadd.f32 %v9857, %v9899
    %v9901 = vpop.f32.mrf.mxu0
    %v9902 = vadd.f32 %v9859, %v9901
    %9903 = vdwg.mxu0
    %9904 = vmatprep.subr.bf16.mxu0 %v7971
    %9905 = vmatpush1.bf16.msra.mxu0 %v7970
    %9906 = vmatprep.subr.bf16.mxu0 %v7961
    %9907 = vmatpush1.bf16.msra.mxu0 %v7960
    %9908 = vmatprep.subr.bf16.mxu0 %v7951
    %9909 = vmatpush1.bf16.msra.mxu0 %v7950
    %9910 = vmatprep.subr.bf16.mxu0 %v7941
    %9911 = vmatpush1.bf16.msra.mxu0 %v7940
    %9912 = vmatprep.subr.bf16.mxu0 %v7931
    %9913 = vmatpush1.bf16.msra.mxu0 %v7930
    %9914 = vmatprep.subr.bf16.mxu0 %v7921
    %9915 = vmatpush1.bf16.msra.mxu0 %v7920
    %9916 = vmatprep.subr.bf16.mxu0 %v7911
    %9917 = vmatpush1.bf16.msra.mxu0 %v7910
    %9918 = vmatprep.subr.bf16.mxu0 %v7901
    %9919 = vmatpush1.bf16.msra.mxu0 %v7900
    %9920 = vmatprep.subr.bf16.mxu0 %v8051
    %9921 = vmatpush2.bf16.msra.mxu0 %v8050
    %9922 = vmatprep.subr.bf16.mxu0 %v8041
    %9923 = vmatpush2.bf16.msra.mxu0 %v8040
    %9924 = vmatprep.subr.bf16.mxu0 %v8031
    %9925 = vmatpush2.bf16.msra.mxu0 %v8030
    %9926 = vmatprep.subr.bf16.mxu0 %v8021
    %9927 = vmatpush2.bf16.msra.mxu0 %v8020
    %9928 = vmatprep.subr.bf16.mxu0 %v8011
    %9929 = vmatpush2.bf16.msra.mxu0 %v8010
    %9930 = vmatprep.subr.bf16.mxu0 %v8001
    %9931 = vmatpush2.bf16.msra.mxu0 %v8000
    %9932 = vmatprep.subr.bf16.mxu0 %v7991
    %9933 = vmatpush2.bf16.msra.mxu0 %v7990
    %9934 = vmatprep.subr.bf16.mxu0 %v7981
    %9935 = vmatpush2.bf16.msra.mxu0 %v7980
    %9936 = vmatprep.mubr.bf16.mxu0 %v4409
    %9937 = vmatmul.mubr.bf16.gmra.mxu0 %v4408
    %v9938 = vpop.f32.mrf.mxu0
    %v9939 = vadd.f32 %v9896, %v9938
    %v9940 = vpop.f32.mrf.mxu0
    %v9941 = vadd.f32 %v9898, %v9940
    %v9942 = vpop.f32.mrf.mxu0
    %v9943 = vadd.f32 %v9900, %v9942
    %v9944 = vpop.f32.mrf.mxu0
    %v9945 = vadd.f32 %v9902, %v9944
    %9946 = vdwg.mxu0
    %9947 = vmatprep.subr.bf16.mxu0 %v8131
    %9948 = vmatpush1.bf16.msra.mxu0 %v8130
    %9949 = vmatprep.subr.bf16.mxu0 %v8121
    %9950 = vmatpush1.bf16.msra.mxu0 %v8120
    %9951 = vmatprep.subr.bf16.mxu0 %v8111
    %9952 = vmatpush1.bf16.msra.mxu0 %v8110
    %9953 = vmatprep.subr.bf16.mxu0 %v8101
    %9954 = vmatpush1.bf16.msra.mxu0 %v8100
    %9955 = vmatprep.subr.bf16.mxu0 %v8091
    %9956 = vmatpush1.bf16.msra.mxu0 %v8090
    %9957 = vmatprep.subr.bf16.mxu0 %v8081
    %9958 = vmatpush1.bf16.msra.mxu0 %v8080
    %9959 = vmatprep.subr.bf16.mxu0 %v8071
    %9960 = vmatpush1.bf16.msra.mxu0 %v8070
    %9961 = vmatprep.subr.bf16.mxu0 %v8061
    %9962 = vmatpush1.bf16.msra.mxu0 %v8060
    %9963 = vmatprep.subr.bf16.mxu0 0
    %9964 = vmatpush2.bf16.msra.mxu0 0
    %9965 = vmatprep.subr.bf16.mxu0 0
    %9966 = vmatpush2.bf16.msra.mxu0 0
    %9967 = vmatprep.subr.bf16.mxu0 0
    %9968 = vmatpush2.bf16.msra.mxu0 0
    %9969 = vmatprep.subr.bf16.mxu0 0
    %9970 = vmatpush2.bf16.msra.mxu0 0
    %9971 = vmatprep.subr.bf16.mxu0 0
    %9972 = vmatpush2.bf16.msra.mxu0 0
    %9973 = vmatprep.subr.bf16.mxu0 %v8161
    %9974 = vmatpush2.bf16.msra.mxu0 %v8160
    %9975 = vmatprep.subr.bf16.mxu0 %v8151
    %9976 = vmatpush2.bf16.msra.mxu0 %v8150
    %9977 = vmatprep.subr.bf16.mxu0 %v8141
    %9978 = vmatpush2.bf16.msra.mxu0 %v8140
    %9979 = vmatprep.mubr.bf16.mxu0 %v8913
    %9980 = vmatmul.mubr.bf16.gmra.mxu0 %v4410
    %v9981 = vpop.f32.mrf.mxu0
    %v9982 = vadd.f32 %v9939, %v9981
    %v9983 = vpop.f32.mrf.mxu0
    %v9984 = vadd.f32 %v9941, %v9983
    %v9985 = vpop.f32.mrf.mxu0
    %v9986 = vadd.f32 %v9943, %v9985
    %v9987 = vpop.f32.mrf.mxu0
    %v9988 = vadd.f32 %v9945, %v9987
    %9989 = vdwg.mxu0
    %v9990 = vld [vmem:[#allocation11] sm:$0xff]
    %v9991 = vld [vmem:[#allocation11 + $0x8] sm:$0x3]
    %v9992 = vld [vmem:[#allocation13] sm:$0xff]
    %v9993 = vld [vmem:[#allocation13 + $0x8] sm:$0x3]
    %v9994 = vadd.f32 %v9122, %v9126
    %v9995 = vrot.slane %v9994, 4
    %v9996 = vadd.f32 %v9994, %v9995
    %v9997 = vrot.slane %v9996, 2
    %v9998 = vadd.f32 %v9996, %v9997
    %v9999 = vrot.slane %v9998, 1
    %v10000 = vadd.f32 %v9998, %v9999
    %v10001 = vadd.f32 %v9124, %v9128
    %v10002 = vrot.slane %v10001, 4
    %v10003 = vadd.f32 %v10001, %v10002
    %v10004 = vrot.slane %v10003, 2
    %v10005 = vadd.f32 %v10003, %v10004
    %v10006 = vrot.slane %v10005, 1
    %v10007 = vadd.f32 %v10005, %v10006
    %v10008 = vadd.f32 %v9337, %v9341
    %v10009 = vrot.slane %v10008, 4
    %v10010 = vadd.f32 %v10008, %v10009
    %v10011 = vrot.slane %v10010, 2
    %v10012 = vadd.f32 %v10010, %v10011
    %v10013 = vrot.slane %v10012, 1
    %v10014 = vadd.f32 %v10012, %v10013
    %v10015 = vadd.f32 %v9339, %v9343
    %v10016 = vrot.slane %v10015, 4
    %v10017 = vadd.f32 %v10015, %v10016
    %v10018 = vrot.slane %v10017, 2
    %v10019 = vadd.f32 %v10017, %v10018
    %v10020 = vrot.slane %v10019, 1
    %v10021 = vadd.f32 %v10019, %v10020
    %v10022 = vadd.f32 %v9552, %v9556
    %v10023 = vrot.slane %v10022, 4
    %v10024 = vadd.f32 %v10022, %v10023
    %v10025 = vrot.slane %v10024, 2
    %v10026 = vadd.f32 %v10024, %v10025
    %v10027 = vrot.slane %v10026, 1
    %v10028 = vadd.f32 %v10026, %v10027
    %v10029 = vadd.f32 %v9554, %v9558
    %v10030 = vrot.slane %v10029, 4
    %v10031 = vadd.f32 %v10029, %v10030
    %v10032 = vrot.slane %v10031, 2
    %v10033 = vadd.f32 %v10031, %v10032
    %v10034 = vrot.slane %v10033, 1
    %v10035 = vadd.f32 %v10033, %v10034
    %v10036 = vadd.f32 %v9767, %v9771
    %v10037 = vrot.slane %v10036, 4
    %v10038 = vadd.f32 %v10036, %v10037
    %v10039 = vrot.slane %v10038, 2
    %v10040 = vadd.f32 %v10038, %v10039
    %v10041 = vrot.slane %v10040, 1
    %v10042 = vadd.f32 %v10040, %v10041
    %v10043 = vadd.f32 %v9769, %v9773
    %v10044 = vrot.slane %v10043, 4
    %v10045 = vadd.f32 %v10043, %v10044
    %v10046 = vrot.slane %v10045, 2
    %v10047 = vadd.f32 %v10045, %v10046
    %v10048 = vrot.slane %v10047, 1
    %v10049 = vadd.f32 %v10047, %v10048
    %v10050 = vadd.f32 %v9982, %v9986
    %v10051 = vrot.slane %v10050, 4
    %v10052 = vadd.f32 %v10050, %v10051
    %v10053 = vrot.slane %v10052, 2
    %v10054 = vadd.f32 %v10052, %v10053
    %v10055 = vrot.slane %v10054, 1
    %v10056 = vadd.f32 %v10054, %v10055
    %v10057 = vsel %vm4025, %v9984, 0.0
    %v10058 = vsel %vm4025, %v9988, 0.0
    %v10059 = vadd.f32 %v10057, %v10058
    %v10060 = vrot.slane %v10059, 4
    %v10061 = vadd.f32 %v10059, %v10060
    %v10062 = vrot.slane %v10061, 2
    %v10063 = vadd.f32 %v10061, %v10062
    %v10064 = vrot.slane %v10063, 1
    %v10065 = vadd.f32 %v10063, %v10064
    %v10066 = vmul.f32 %v10000, %v4035
    %v10067 = vmul.f32 %v10007, %v4035
    %v10068 = vmul.f32 %v10014, %v4035
    %v10069 = vmul.f32 %v10021, %v4035
    %v10070 = vmul.f32 %v10028, %v4035
    %v10071 = vmul.f32 %v10035, %v4035
    %v10072 = vmul.f32 %v10042, %v4035
    %v10073 = vmul.f32 %v10049, %v4035
    %v10074 = vmul.f32 %v10056, %v4035
    %v10075 = vmul.f32 %v10065, %v4035
    %v10076 = vmul.f32 %v9122, %v9122
    %v10077 = vmul.f32 %v9124, %v9124
    %v10078 = vmul.f32 %v9337, %v9337
    %v10079 = vmul.f32 %v9339, %v9339
    %v10080 = vmul.f32 %v9552, %v9552
    %v10081 = vmul.f32 %v9554, %v9554
    %v10082 = vmul.f32 %v9767, %v9767
    %v10083 = vmul.f32 %v9769, %v9769
    %v10084 = vmul.f32 %v9982, %v9982
    %v10085 = vmul.f32 %v9984, %v9984
    %v10086 = vmul.f32 %v9126, %v9126
    %v10087 = vmul.f32 %v9128, %v9128
    %v10088 = vmul.f32 %v9341, %v9341
    %v10089 = vmul.f32 %v9343, %v9343
    %v10090 = vmul.f32 %v9556, %v9556
    %v10091 = vmul.f32 %v9558, %v9558
    %v10092 = vmul.f32 %v9771, %v9771
    %v10093 = vmul.f32 %v9773, %v9773
    %v10094 = vmul.f32 %v9986, %v9986
    %v10095 = vmul.f32 %v9988, %v9988
    %v10096 = vadd.f32 %v10076, %v10086
    %v10097 = vrot.slane %v10096, 4
    %v10098 = vadd.f32 %v10096, %v10097
    %v10099 = vrot.slane %v10098, 2
    %v10100 = vadd.f32 %v10098, %v10099
    %v10101 = vrot.slane %v10100, 1
    %v10102 = vadd.f32 %v10100, %v10101
    %v10103 = vadd.f32 %v10077, %v10087
    %v10104 = vrot.slane %v10103, 4
    %v10105 = vadd.f32 %v10103, %v10104
    %v10106 = vrot.slane %v10105, 2
    %v10107 = vadd.f32 %v10105, %v10106
    %v10108 = vrot.slane %v10107, 1
    %v10109 = vadd.f32 %v10107, %v10108
    %v10110 = vadd.f32 %v10078, %v10088
    %v10111 = vrot.slane %v10110, 4
    %v10112 = vadd.f32 %v10110, %v10111
    %v10113 = vrot.slane %v10112, 2
    %v10114 = vadd.f32 %v10112, %v10113
    %v10115 = vrot.slane %v10114, 1
    %v10116 = vadd.f32 %v10114, %v10115
    %v10117 = vadd.f32 %v10079, %v10089
    %v10118 = vrot.slane %v10117, 4
    %v10119 = vadd.f32 %v10117, %v10118
    %v10120 = vrot.slane %v10119, 2
    %v10121 = vadd.f32 %v10119, %v10120
    %v10122 = vrot.slane %v10121, 1
    %v10123 = vadd.f32 %v10121, %v10122
    %v10124 = vadd.f32 %v10080, %v10090
    %v10125 = vrot.slane %v10124, 4
    %v10126 = vadd.f32 %v10124, %v10125
    %v10127 = vrot.slane %v10126, 2
    %v10128 = vadd.f32 %v10126, %v10127
    %v10129 = vrot.slane %v10128, 1
    %v10130 = vadd.f32 %v10128, %v10129
    %v10131 = vadd.f32 %v10081, %v10091
    %v10132 = vrot.slane %v10131, 4
    %v10133 = vadd.f32 %v10131, %v10132
    %v10134 = vrot.slane %v10133, 2
    %v10135 = vadd.f32 %v10133, %v10134
    %v10136 = vrot.slane %v10135, 1
    %v10137 = vadd.f32 %v10135, %v10136
    %v10138 = vadd.f32 %v10082, %v10092
    %v10139 = vrot.slane %v10138, 4
    %v10140 = vadd.f32 %v10138, %v10139
    %v10141 = vrot.slane %v10140, 2
    %v10142 = vadd.f32 %v10140, %v10141
    %v10143 = vrot.slane %v10142, 1
    %v10144 = vadd.f32 %v10142, %v10143
    %v10145 = vadd.f32 %v10083, %v10093
    %v10146 = vrot.slane %v10145, 4
    %v10147 = vadd.f32 %v10145, %v10146
    %v10148 = vrot.slane %v10147, 2
    %v10149 = vadd.f32 %v10147, %v10148
    %v10150 = vrot.slane %v10149, 1
    %v10151 = vadd.f32 %v10149, %v10150
    %v10152 = vadd.f32 %v10084, %v10094
    %v10153 = vrot.slane %v10152, 4
    %v10154 = vadd.f32 %v10152, %v10153
    %v10155 = vrot.slane %v10154, 2
    %v10156 = vadd.f32 %v10154, %v10155
    %v10157 = vrot.slane %v10156, 1
    %v10158 = vadd.f32 %v10156, %v10157
    %v10159 = vsel %vm4025, %v10085, 0.0
    %v10160 = vsel %vm4025, %v10095, 0.0
    %v10161 = vadd.f32 %v10159, %v10160
    %v10162 = vrot.slane %v10161, 4
    %v10163 = vadd.f32 %v10161, %v10162
    %v10164 = vrot.slane %v10163, 2
    %v10165 = vadd.f32 %v10163, %v10164
    %v10166 = vrot.slane %v10165, 1
    %v10167 = vadd.f32 %v10165, %v10166
    %v10168 = vmul.f32 %v10102, %v4035
    %v10169 = vmul.f32 %v10109, %v4035
    %v10170 = vmul.f32 %v10116, %v4035
    %v10171 = vmul.f32 %v10123, %v4035
    %v10172 = vmul.f32 %v10130, %v4035
    %v10173 = vmul.f32 %v10137, %v4035
    %v10174 = vmul.f32 %v10144, %v4035
    %v10175 = vmul.f32 %v10151, %v4035
    %v10176 = vmul.f32 %v10158, %v4035
    %v10177 = vmul.f32 %v10167, %v4035
    %v10178 = vmul.f32 %v10066, %v10066
    %v10179 = vmul.f32 %v10067, %v10067
    %v10180 = vmul.f32 %v10068, %v10068
    %v10181 = vmul.f32 %v10069, %v10069
    %v10182 = vmul.f32 %v10070, %v10070
    %v10183 = vmul.f32 %v10071, %v10071
    %v10184 = vmul.f32 %v10072, %v10072
    %v10185 = vmul.f32 %v10073, %v10073
    %v10186 = vmul.f32 %v10074, %v10074
    %v10187 = vmul.f32 %v10075, %v10075
    %v10188 = vsub.f32 %v10168, %v10178
    %v10189 = vsub.f32 %v10169, %v10179
    %v10190 = vsub.f32 %v10170, %v10180
    %v10191 = vsub.f32 %v10171, %v10181
    %v10192 = vsub.f32 %v10172, %v10182
    %v10193 = vsub.f32 %v10173, %v10183
    %v10194 = vsub.f32 %v10174, %v10184
    %v10195 = vsub.f32 %v10175, %v10185
    %v10196 = vsub.f32 %v10176, %v10186
    %v10197 = vsub.f32 %v10177, %v10187
    %v10198 = vmax.f32 %v10188, 0.0
    %v10199 = vmax.f32 %v10189, 0.0
    %v10200 = vmax.f32 %v10190, 0.0
    %v10201 = vmax.f32 %v10191, 0.0
    %v10202 = vmax.f32 %v10192, 0.0
    %v10203 = vmax.f32 %v10193, 0.0
    %v10204 = vmax.f32 %v10194, 0.0
    %v10205 = vmax.f32 %v10195, 0.0
    %v10206 = vmax.f32 %v10196, 0.0
    %v10207 = vmax.f32 %v10197, 0.0
    %v10208 = vsub.f32 %v9122, %v10066
    %v10209 = vsub.f32 %v9124, %v10067
    %v10210 = vsub.f32 %v9337, %v10068
    %v10211 = vsub.f32 %v9339, %v10069
    %v10212 = vsub.f32 %v9552, %v10070
    %v10213 = vsub.f32 %v9554, %v10071
    %v10214 = vsub.f32 %v9767, %v10072
    %v10215 = vsub.f32 %v9769, %v10073
    %v10216 = vsub.f32 %v9982, %v10074
    %v10217 = vsub.f32 %v9984, %v10075
    %v10218 = vsub.f32 %v9126, %v10066
    %v10219 = vsub.f32 %v9128, %v10067
    %v10220 = vsub.f32 %v9341, %v10068
    %v10221 = vsub.f32 %v9343, %v10069
    %v10222 = vsub.f32 %v9556, %v10070
    %v10223 = vsub.f32 %v9558, %v10071
    %v10224 = vsub.f32 %v9771, %v10072
    %v10225 = vsub.f32 %v9773, %v10073
    %v10226 = vsub.f32 %v9986, %v10074
    %v10227 = vsub.f32 %v9988, %v10075
    %v10228 = vadd.f32 %v10198, 2e-05
    %v10229 = vadd.f32 %v10199, 2e-05
    %v10230 = vadd.f32 %v10200, 2e-05
    %v10231 = vadd.f32 %v10201, 2e-05
    %v10232 = vadd.f32 %v10202, 2e-05
    %v10233 = vadd.f32 %v10203, 2e-05
    %v10234 = vadd.f32 %v10204, 2e-05
    %v10235 = vadd.f32 %v10205, 2e-05
    %v10236 = vadd.f32 %v10206, 2e-05
    %v10237 = vadd.f32 %v10207, 2e-05
    %v10238 = vrsqrt.pop %v10228
    %v10239 = vrsqrt.pop %v10229
    %v10240 = vrsqrt.pop %v10230
    %v10241 = vrsqrt.pop %v10231
    %v10242 = vrsqrt.pop %v10232
    %v10243 = vrsqrt.pop %v10233
    %v10244 = vrsqrt.pop %v10234
    %v10245 = vrsqrt.pop %v10235
    %v10246 = vrsqrt.pop %v10236
    %v10247 = vrsqrt.pop %v10237
    %v10248 = vmul.f32 %v10208, %v10238
    %v10249 = vmul.f32 %v10209, %v10239
    %v10250 = vmul.f32 %v10210, %v10240
    %v10251 = vmul.f32 %v10211, %v10241
    %v10252 = vmul.f32 %v10212, %v10242
    %v10253 = vmul.f32 %v10213, %v10243
    %v10254 = vmul.f32 %v10214, %v10244
    %v10255 = vmul.f32 %v10215, %v10245
    %v10256 = vmul.f32 %v10216, %v10246
    %v10257 = vmul.f32 %v10217, %v10247
    %v10258 = vmul.f32 %v10218, %v10238
    %v10259 = vmul.f32 %v10219, %v10239
    %v10260 = vmul.f32 %v10220, %v10240
    %v10261 = vmul.f32 %v10221, %v10241
    %v10262 = vmul.f32 %v10222, %v10242
    %v10263 = vmul.f32 %v10223, %v10243
    %v10264 = vmul.f32 %v10224, %v10244
    %v10265 = vmul.f32 %v10225, %v10245
    %v10266 = vmul.f32 %v10226, %v10246
    %v10267 = vmul.f32 %v10227, %v10247
    %v10270 = vlaneseq
    %v10271 = vshrl.u32 %v10270, 7
    %v10272 = vsub.s32 0, %v10271
    %v10273 = vrot.slane %v9990, %v10272
    %v10274 = vlaneseq
    %v10275 = vshrl.u32 %v10274, 7
    %v10276 = vsub.s32 1, %v10275
    %v10277 = vrot.slane %v9990, %v10276
    %v10278 = vlaneseq
    %v10279 = vshrl.u32 %v10278, 7
    %v10280 = vsub.s32 2, %v10279
    %v10281 = vrot.slane %v9990, %v10280
    %v10282 = vlaneseq
    %v10283 = vshrl.u32 %v10282, 7
    %v10284 = vsub.s32 3, %v10283
    %v10285 = vrot.slane %v9990, %v10284
    %v10286 = vlaneseq
    %v10287 = vshrl.u32 %v10286, 7
    %v10288 = vsub.s32 4, %v10287
    %v10289 = vrot.slane %v9990, %v10288
    %v10290 = vlaneseq
    %v10291 = vshrl.u32 %v10290, 7
    %v10292 = vsub.s32 5, %v10291
    %v10293 = vrot.slane %v9990, %v10292
    %v10294 = vlaneseq
    %v10295 = vshrl.u32 %v10294, 7
    %v10296 = vsub.s32 6, %v10295
    %v10297 = vrot.slane %v9990, %v10296
    %v10298 = vlaneseq
    %v10299 = vshrl.u32 %v10298, 7
    %v10300 = vsub.s32 7, %v10299
    %v10301 = vrot.slane %v9990, %v10300
    %v10302 = vlaneseq
    %v10303 = vshrl.u32 %v10302, 7
    %v10304 = vsub.s32 0, %v10303
    %v10305 = vrot.slane %v9991, %v10304
    %v10306 = vlaneseq
    %v10307 = vshrl.u32 %v10306, 7
    %v10308 = vsub.s32 1, %v10307
    %v10309 = vrot.slane %v9991, %v10308
    %v10320 = vmul.f32 %v10248, %v10273
    %v10321 = vmul.f32 %v10249, %v10277
    %v10322 = vmul.f32 %v10250, %v10281
    %v10323 = vmul.f32 %v10251, %v10285
    %v10324 = vmul.f32 %v10252, %v10289
    %v10325 = vmul.f32 %v10253, %v10293
    %v10326 = vmul.f32 %v10254, %v10297
    %v10327 = vmul.f32 %v10255, %v10301
    %v10328 = vmul.f32 %v10256, %v10305
    %v10329 = vmul.f32 %v10257, %v10309
    %v10330 = vmul.f32 %v10258, %v10273
    %v10331 = vmul.f32 %v10259, %v10277
    %v10332 = vmul.f32 %v10260, %v10281
    %v10333 = vmul.f32 %v10261, %v10285
    %v10334 = vmul.f32 %v10262, %v10289
    %v10335 = vmul.f32 %v10263, %v10293
    %v10336 = vmul.f32 %v10264, %v10297
    %v10337 = vmul.f32 %v10265, %v10301
    %v10338 = vmul.f32 %v10266, %v10305
    %v10339 = vmul.f32 %v10267, %v10309
    %v10342 = vlaneseq
    %v10343 = vshrl.u32 %v10342, 7
    %v10344 = vsub.s32 0, %v10343
    %v10345 = vrot.slane %v9992, %v10344
    %v10346 = vlaneseq
    %v10347 = vshrl.u32 %v10346, 7
    %v10348 = vsub.s32 1, %v10347
    %v10349 = vrot.slane %v9992, %v10348
    %v10350 = vlaneseq
    %v10351 = vshrl.u32 %v10350, 7
    %v10352 = vsub.s32 2, %v10351
    %v10353 = vrot.slane %v9992, %v10352
    %v10354 = vlaneseq
    %v10355 = vshrl.u32 %v10354, 7
    %v10356 = vsub.s32 3, %v10355
    %v10357 = vrot.slane %v9992, %v10356
    %v10358 = vlaneseq
    %v10359 = vshrl.u32 %v10358, 7
    %v10360 = vsub.s32 4, %v10359
    %v10361 = vrot.slane %v9992, %v10360
    %v10362 = vlaneseq
    %v10363 = vshrl.u32 %v10362, 7
    %v10364 = vsub.s32 5, %v10363
    %v10365 = vrot.slane %v9992, %v10364
    %v10366 = vlaneseq
    %v10367 = vshrl.u32 %v10366, 7
    %v10368 = vsub.s32 6, %v10367
    %v10369 = vrot.slane %v9992, %v10368
    %v10370 = vlaneseq
    %v10371 = vshrl.u32 %v10370, 7
    %v10372 = vsub.s32 7, %v10371
    %v10373 = vrot.slane %v9992, %v10372
    %v10374 = vlaneseq
    %v10375 = vshrl.u32 %v10374, 7
    %v10376 = vsub.s32 0, %v10375
    %v10377 = vrot.slane %v9993, %v10376
    %v10378 = vlaneseq
    %v10379 = vshrl.u32 %v10378, 7
    %v10380 = vsub.s32 1, %v10379
    %v10381 = vrot.slane %v9993, %v10380
    %v10392 = vadd.f32 %v10320, %v10345
    %v10393 = vadd.f32 %v10321, %v10349
    %v10394 = vadd.f32 %v10322, %v10353
    %v10395 = vadd.f32 %v10323, %v10357
    %v10396 = vadd.f32 %v10324, %v10361
    %v10397 = vadd.f32 %v10325, %v10365
    %v10398 = vadd.f32 %v10326, %v10369
    %v10399 = vadd.f32 %v10327, %v10373
    %v10400 = vadd.f32 %v10328, %v10377
    %v10401 = vadd.f32 %v10329, %v10381
    %v10402 = vadd.f32 %v10330, %v10345
    %v10403 = vadd.f32 %v10331, %v10349
    %v10404 = vadd.f32 %v10332, %v10353
    %v10405 = vadd.f32 %v10333, %v10357
    %v10406 = vadd.f32 %v10334, %v10361
    %v10407 = vadd.f32 %v10335, %v10365
    %v10408 = vadd.f32 %v10336, %v10369
    %v10409 = vadd.f32 %v10337, %v10373
    %v10410 = vadd.f32 %v10338, %v10377
    %v10411 = vadd.f32 %v10339, %v10381
    %v10412 = vmax.f32 %v10392, 0.0
    %v10413 = vmax.f32 %v10393, 0.0
    %v10414 = vmax.f32 %v10394, 0.0
    %v10415 = vmax.f32 %v10395, 0.0
    %v10416 = vmax.f32 %v10396, 0.0
    %v10417 = vmax.f32 %v10397, 0.0
    %v10418 = vmax.f32 %v10398, 0.0
    %v10419 = vmax.f32 %v10399, 0.0
    %v10420 = vmax.f32 %v10400, 0.0
    %v10421 = vmax.f32 %v10401, 0.0
    %v10422 = vmax.f32 %v10402, 0.0
    %v10423 = vmax.f32 %v10403, 0.0
    %v10424 = vmax.f32 %v10404, 0.0
    %v10425 = vmax.f32 %v10405, 0.0
    %v10426 = vmax.f32 %v10406, 0.0
    %v10427 = vmax.f32 %v10407, 0.0
    %v10428 = vmax.f32 %v10408, 0.0
    %v10429 = vmax.f32 %v10409, 0.0
    %v10430 = vmax.f32 %v10410, 0.0
    %v10431 = vmax.f32 %v10411, 0.0
    %v10432 = vpack.c.bf16 %v10422, %v10412
    %v10433 = vpack.c.bf16 %v10423, %v10413
    %v10434 = vpack.c.bf16 %v10424, %v10414
    %v10435 = vpack.c.bf16 %v10425, %v10415
    %v10436 = vpack.c.bf16 %v10426, %v10416
    %v10437 = vpack.c.bf16 %v10427, %v10417
    %v10438 = vpack.c.bf16 %v10428, %v10418
    %v10439 = vpack.c.bf16 %v10429, %v10419
    %v10440 = vpack.c.bf16 %v10430, %v10420
    %v10441 = vpack.c.bf16 %v10431, %v10421
    %v10442 = vld [vmem:[%s7] sm:$0xf]
    %v10443 = vld [vmem:[%s7 + $0x4] sm:$0xf]
    %v10444 = vld [vmem:[%s7 + $0x8] sm:$0xf]
    %v10445 = vld [vmem:[%s7 + $0xc] sm:$0xf]
    %v10446 = vld [vmem:[%s7 + $0x10] sm:$0xf]
    %v10447 = vld [vmem:[%s7 + $0x14] sm:$0xf]
    %v10448 = vld [vmem:[%s7 + $0x18] sm:$0xf]
    %v10449 = vld [vmem:[%s7 + $0x1c] sm:$0xf]
    %v10450 = vld [vmem:[%s7 + $0x20] sm:$0xf]
    %v10451 = vld [vmem:[%s7 + $0x24] sm:$0xf]
    %v10452 = vld [vmem:[%s7 + $0x28] sm:$0xf]
    %v10453 = vld [vmem:[%s7 + $0x2c] sm:$0xf]
    %v10454 = vld [vmem:[%s7 + $0x30] sm:$0xf]
    %v10455 = vld [vmem:[%s7 + $0x34] sm:$0xf]
    %v10456 = vld [vmem:[%s7 + $0x38] sm:$0xf]
    %v10457 = vld [vmem:[%s7 + $0x3c] sm:$0xf]
    %v10458 = vld [vmem:[%s7 + $0x40] sm:$0xf]
    %v10459 = vld [vmem:[%s7 + $0x44] sm:$0xf]
    %v10460 = vld [vmem:[%s7 + $0x48] sm:$0xf]
    %v10461 = vld [vmem:[%s7 + $0x4c] sm:$0xf]
    %v10462 = vld [vmem:[%s7 + $0x50] sm:$0xf]
    %v10463 = vld [vmem:[%s7 + $0x54] sm:$0xf]
    %v10464 = vld [vmem:[%s7 + $0x58] sm:$0xf]
    %v10465 = vld [vmem:[%s7 + $0x5c] sm:$0xf]
    %v10466 = vld [vmem:[%s7 + $0x60] sm:$0xf]
    %v10467 = vld [vmem:[%s7 + $0x64] sm:$0xf]
    %v10468 = vld [vmem:[%s7 + $0x68] sm:$0xf]
    %v10469 = vld [vmem:[%s7 + $0x6c] sm:$0xf]
    %v10470 = vld [vmem:[%s7 + $0x70] sm:$0xf]
    %v10471 = vld [vmem:[%s7 + $0x74] sm:$0xf]
    %v10472 = vld [vmem:[%s7 + $0x78] sm:$0xf]
    %v10473 = vld [vmem:[%s7 + $0x7c] sm:$0xf]
    %v10474 = vld [vmem:[%s7 + $0x80] sm:$0xf]
    %v10475 = vld [vmem:[%s7 + $0x84] sm:$0xf]
    %v10476 = vld [vmem:[%s7 + $0x88] sm:$0xf]
    %v10477 = vld [vmem:[%s7 + $0x8c] sm:$0xf]
    %v10478 = vld [vmem:[%s7 + $0x90] sm:$0xf]
    %v10479 = vld [vmem:[%s7 + $0x94] sm:$0xf]
    %v10480 = vld [vmem:[%s7 + $0x98] sm:$0xf]
    %v10481 = vld [vmem:[%s7 + $0x9c] sm:$0xf]
    %v10482 = vld [vmem:[%s7 + $0xa0] sm:$0xf]
    %v10483 = vld [vmem:[%s7 + $0xa4] sm:$0xf]
    %v10484 = vld [vmem:[%s7 + $0xa8] sm:$0xf]
    %v10485 = vld [vmem:[%s7 + $0xac] sm:$0xf]
    %v10486 = vld [vmem:[%s7 + $0xb0] sm:$0xf]
    %v10487 = vld [vmem:[%s7 + $0xb4] sm:$0xf]
    %v10488 = vld [vmem:[%s7 + $0xb8] sm:$0xf]
    %v10489 = vld [vmem:[%s7 + $0xbc] sm:$0xf]
    %v10490 = vld [vmem:[%s7 + $0xc0] sm:$0xf]
    %v10491 = vld [vmem:[%s7 + $0xc4] sm:$0xf]
    %v10492 = vld [vmem:[%s7 + $0xc8] sm:$0xf]
    %v10493 = vld [vmem:[%s7 + $0xcc] sm:$0xf]
    %v10494 = vld [vmem:[%s7 + $0xd0] sm:$0xf]
    %v10495 = vld [vmem:[%s7 + $0xd4] sm:$0xf]
    %v10496 = vld [vmem:[%s7 + $0xd8] sm:$0xf]
    %v10497 = vld [vmem:[%s7 + $0xdc] sm:$0xf]
    %v10498 = vld [vmem:[%s7 + $0xe0] sm:$0xf]
    %v10499 = vld [vmem:[%s7 + $0xe4] sm:$0xf]
    %v10500 = vld [vmem:[%s7 + $0xe8] sm:$0xf]
    %v10501 = vld [vmem:[%s7 + $0xec] sm:$0xf]
    %v10502 = vld [vmem:[%s7 + $0xf0] sm:$0xf]
    %v10503 = vld [vmem:[%s7 + $0xf4] sm:$0xf]
    %v10504 = vld [vmem:[%s7 + $0xf8] sm:$0xf]
    %v10505 = vld [vmem:[%s7 + $0xfc] sm:$0xf]
    %v10506 = vld [vmem:[%s7 + $0x100] sm:$0xf]
    %v10507 = vld [vmem:[%s7 + $0x104] sm:$0xf]
    %v10508 = vld [vmem:[%s7 + $0x108] sm:$0xf]
    %v10509 = vld [vmem:[%s7 + $0x10c] sm:$0xf]
    %v10510 = vld [vmem:[%s7 + $0x110] sm:$0xf]
    %v10511 = vld [vmem:[%s7 + $0x114] sm:$0xf]
    %v10512 = vld [vmem:[%s7 + $0x118] sm:$0xf]
    %v10513 = vld [vmem:[%s7 + $0x11c] sm:$0xf]
    %v10514 = vld [vmem:[%s7 + $0x120] sm:$0xf]
    %v10515 = vld [vmem:[%s7 + $0x124] sm:$0xf]
    %v10516 = vld [vmem:[%s7 + $0x128] sm:$0xf]
    %v10517 = vld [vmem:[%s7 + $0x12c] sm:$0xf]
    %v10518 = vld [vmem:[%s7 + $0x130] sm:$0xf]
    %v10519 = vld [vmem:[%s7 + $0x134] sm:$0xf]
    %v10520 = vld [vmem:[%s7 + $0x138] sm:$0xf]
    %v10521 = vld [vmem:[%s7 + $0x13c] sm:$0xf]
    %v10522 = vld [vmem:[%s7 + $0x140] sm:$0xf]
    %v10523 = vld [vmem:[%s7 + $0x144] sm:$0xf]
    %v10524 = vld [vmem:[%s7 + $0x148] sm:$0xf]
    %v10525 = vld [vmem:[%s7 + $0x14c] sm:$0xf]
    %v10526 = vld [vmem:[%s7 + $0x150] sm:$0xf]
    %v10527 = vld [vmem:[%s7 + $0x154] sm:$0xf]
    %v10528 = vld [vmem:[%s7 + $0x158] sm:$0xf]
    %v10529 = vld [vmem:[%s7 + $0x15c] sm:$0xf]
    %v10530 = vld [vmem:[%s7 + $0x160] sm:$0xf]
    %v10531 = vld [vmem:[%s7 + $0x164] sm:$0xf]
    %v10532 = vld [vmem:[%s7 + $0x168] sm:$0xf]
    %v10533 = vld [vmem:[%s7 + $0x16c] sm:$0xf]
    %v10534 = vld [vmem:[%s7 + $0x170] sm:$0xf]
    %v10535 = vld [vmem:[%s7 + $0x174] sm:$0xf]
    %v10536 = vld [vmem:[%s7 + $0x178] sm:$0xf]
    %v10537 = vld [vmem:[%s7 + $0x17c] sm:$0xf]
    %v10538 = vld [vmem:[%s7 + $0x180] sm:$0xf]
    %v10539 = vld [vmem:[%s7 + $0x184] sm:$0xf]
    %v10540 = vld [vmem:[%s7 + $0x188] sm:$0xf]
    %v10541 = vld [vmem:[%s7 + $0x18c] sm:$0xf]
    %v10542 = vld [vmem:[%s7 + $0x190] sm:$0xf]
    %v10543 = vld [vmem:[%s7 + $0x194] sm:$0xf]
    %v10544 = vld [vmem:[%s7 + $0x198] sm:$0xf]
    %v10545 = vld [vmem:[%s7 + $0x19c] sm:$0xf]
    %v10546 = vld [vmem:[%s7 + $0x1a0] sm:$0xf]
    %v10547 = vld [vmem:[%s7 + $0x1a4] sm:$0xf]
    %v10548 = vld [vmem:[%s7 + $0x1a8] sm:$0xf]
    %v10549 = vld [vmem:[%s7 + $0x1ac] sm:$0xf]
    %v10550 = vld [vmem:[%s7 + $0x1b0] sm:$0xf]
    %v10551 = vld [vmem:[%s7 + $0x1b4] sm:$0xf]
    %v10552 = vld [vmem:[%s7 + $0x1b8] sm:$0xf]
    %v10553 = vld [vmem:[%s7 + $0x1bc] sm:$0xf]
    %v10554 = vld [vmem:[%s7 + $0x1c0] sm:$0xf]
    %v10555 = vld [vmem:[%s7 + $0x1c4] sm:$0xf]
    %v10556 = vld [vmem:[%s7 + $0x1c8] sm:$0xf]
    %v10557 = vld [vmem:[%s7 + $0x1cc] sm:$0xf]
    %v10558 = vld [vmem:[%s7 + $0x1d0] sm:$0xf]
    %v10559 = vld [vmem:[%s7 + $0x1d4] sm:$0xf]
    %v10560 = vld [vmem:[%s7 + $0x1d8] sm:$0xf]
    %v10561 = vld [vmem:[%s7 + $0x1dc] sm:$0xf]
    %v10562 = vld [vmem:[%s7 + $0x1e0] sm:$0xf]
    %v10563 = vld [vmem:[%s7 + $0x1e4] sm:$0xf]
    %v10564 = vld [vmem:[%s7 + $0x1e8] sm:$0xf]
    %v10565 = vld [vmem:[%s7 + $0x1ec] sm:$0xf]
    %v10566 = vld [vmem:[%s7 + $0x1f0] sm:$0xf]
    %v10567 = vld [vmem:[%s7 + $0x1f4] sm:$0xf]
    %v10568 = vld [vmem:[%s7 + $0x1f8] sm:$0xf]
    %v10569 = vld [vmem:[%s7 + $0x1fc] sm:$0xf]
    %v10570 = vld [vmem:[%s7 + $0x200] sm:$0xf]
    %v10571 = vld [vmem:[%s7 + $0x204] sm:$0xf]
    %v10572 = vld [vmem:[%s7 + $0x208] sm:$0xf]
    %v10573 = vld [vmem:[%s7 + $0x20c] sm:$0xf]
    %v10574 = vld [vmem:[%s7 + $0x210] sm:$0xf]
    %v10575 = vld [vmem:[%s7 + $0x214] sm:$0xf]
    %v10576 = vld [vmem:[%s7 + $0x218] sm:$0xf]
    %v10577 = vld [vmem:[%s7 + $0x21c] sm:$0xf]
    %v10578 = vld [vmem:[%s7 + $0x220] sm:$0xf]
    %v10579 = vld [vmem:[%s7 + $0x224] sm:$0xf]
    %v10580 = vld [vmem:[%s7 + $0x228] sm:$0xf]
    %v10581 = vld [vmem:[%s7 + $0x22c] sm:$0xf]
    %v10582 = vld [vmem:[%s7 + $0x230] sm:$0xf]
    %v10583 = vld [vmem:[%s7 + $0x234] sm:$0xf]
    %v10584 = vld [vmem:[%s7 + $0x238] sm:$0xf]
    %v10585 = vld [vmem:[%s7 + $0x23c] sm:$0xf]
    %v10586 = vld [vmem:[%s7 + $0x240] sm:$0xf]
    %v10587 = vld [vmem:[%s7 + $0x244] sm:$0xf]
    %v10588 = vld [vmem:[%s7 + $0x248] sm:$0xf]
    %v10589 = vld [vmem:[%s7 + $0x24c] sm:$0xf]
    %v10590 = vld [vmem:[%s7 + $0x250] sm:$0xf]
    %v10591 = vld [vmem:[%s7 + $0x254] sm:$0xf]
    %v10592 = vld [vmem:[#allocation14] sm:$0x1]
    %v10594 = vlaneseq
    %v10595 = vshrl.u32 %v10594, 7
    %v10596 = vsub.s32 0, %v10595
    %v10597 = vrot.slane %v10592, %v10596
    %v10749 = vunpack.c.l.b16 %v10442
    %v10750 = vunpack.c.l.b16 %v10443
    %v10751 = vunpack.c.l.b16 %v10444
    %v10752 = vunpack.c.l.b16 %v10445
    %v10753 = vunpack.c.l.b16 %v10446
    %v10754 = vunpack.c.l.b16 %v10447
    %v10755 = vunpack.c.l.b16 %v10448
    %v10756 = vunpack.c.l.b16 %v10449
    %v10757 = vunpack.c.l.b16 %v10450
    %v10758 = vunpack.c.l.b16 %v10451
    %v10759 = vunpack.c.l.b16 %v10452
    %v10760 = vunpack.c.l.b16 %v10453
    %v10761 = vunpack.c.l.b16 %v10454
    %v10762 = vunpack.c.l.b16 %v10455
    %v10763 = vunpack.c.l.b16 %v10456
    %v10764 = vunpack.c.l.b16 %v10457
    %v10765 = vunpack.c.l.b16 %v10458
    %v10766 = vunpack.c.l.b16 %v10459
    %v10767 = vunpack.c.l.b16 %v10460
    %v10768 = vunpack.c.l.b16 %v10461
    %v10769 = vunpack.c.l.b16 %v10462
    %v10770 = vunpack.c.l.b16 %v10463
    %v10771 = vunpack.c.l.b16 %v10464
    %v10772 = vunpack.c.l.b16 %v10465
    %v10773 = vunpack.c.l.b16 %v10466
    %v10774 = vunpack.c.l.b16 %v10467
    %v10775 = vunpack.c.l.b16 %v10468
    %v10776 = vunpack.c.l.b16 %v10469
    %v10777 = vunpack.c.l.b16 %v10470
    %v10778 = vunpack.c.l.b16 %v10471
    %v10779 = vunpack.c.l.b16 %v10472
    %v10780 = vunpack.c.l.b16 %v10473
    %v10781 = vunpack.c.l.b16 %v10474
    %v10782 = vunpack.c.l.b16 %v10475
    %v10783 = vunpack.c.l.b16 %v10476
    %v10784 = vunpack.c.l.b16 %v10477
    %v10785 = vunpack.c.l.b16 %v10478
    %v10786 = vunpack.c.l.b16 %v10479
    %v10787 = vunpack.c.l.b16 %v10480
    %v10788 = vunpack.c.l.b16 %v10481
    %v10789 = vunpack.c.l.b16 %v10482
    %v10790 = vunpack.c.l.b16 %v10483
    %v10791 = vunpack.c.l.b16 %v10484
    %v10792 = vunpack.c.l.b16 %v10485
    %v10793 = vunpack.c.l.b16 %v10486
    %v10794 = vunpack.c.l.b16 %v10487
    %v10795 = vunpack.c.l.b16 %v10488
    %v10796 = vunpack.c.l.b16 %v10489
    %v10797 = vunpack.c.l.b16 %v10490
    %v10798 = vunpack.c.l.b16 %v10491
    %v10799 = vunpack.c.l.b16 %v10492
    %v10800 = vunpack.c.l.b16 %v10493
    %v10801 = vunpack.c.l.b16 %v10494
    %v10802 = vunpack.c.l.b16 %v10495
    %v10803 = vunpack.c.l.b16 %v10496
    %v10804 = vunpack.c.l.b16 %v10497
    %v10805 = vunpack.c.l.b16 %v10498
    %v10806 = vunpack.c.l.b16 %v10499
    %v10807 = vunpack.c.l.b16 %v10500
    %v10808 = vunpack.c.l.b16 %v10501
    %v10809 = vunpack.c.l.b16 %v10502
    %v10810 = vunpack.c.l.b16 %v10503
    %v10811 = vunpack.c.l.b16 %v10504
    %v10812 = vunpack.c.l.b16 %v10505
    %v10813 = vunpack.c.l.b16 %v10506
    %v10814 = vunpack.c.l.b16 %v10507
    %v10815 = vunpack.c.l.b16 %v10508
    %v10816 = vunpack.c.l.b16 %v10509
    %v10817 = vunpack.c.l.b16 %v10510
    %v10818 = vunpack.c.l.b16 %v10511
    %v10819 = vunpack.c.l.b16 %v10512
    %v10820 = vunpack.c.l.b16 %v10513
    %v10821 = vunpack.c.l.b16 %v10514
    %v10822 = vunpack.c.l.b16 %v10515
    %v10823 = vunpack.c.l.b16 %v10516
    %v10824 = vunpack.c.l.b16 %v10517
    %v10825 = vunpack.c.l.b16 %v10518
    %v10826 = vunpack.c.l.b16 %v10519
    %v10827 = vunpack.c.l.b16 %v10520
    %v10828 = vunpack.c.l.b16 %v10521
    %v10829 = vunpack.c.l.b16 %v10522
    %v10830 = vunpack.c.l.b16 %v10523
    %v10831 = vunpack.c.l.b16 %v10524
    %v10832 = vunpack.c.l.b16 %v10525
    %v10833 = vunpack.c.l.b16 %v10526
    %v10834 = vunpack.c.l.b16 %v10527
    %v10835 = vunpack.c.l.b16 %v10528
    %v10836 = vunpack.c.l.b16 %v10529
    %v10837 = vunpack.c.l.b16 %v10530
    %v10838 = vunpack.c.l.b16 %v10531
    %v10839 = vunpack.c.l.b16 %v10532
    %v10840 = vunpack.c.l.b16 %v10533
    %v10841 = vunpack.c.l.b16 %v10534
    %v10842 = vunpack.c.l.b16 %v10535
    %v10843 = vunpack.c.l.b16 %v10536
    %v10844 = vunpack.c.l.b16 %v10537
    %v10845 = vunpack.c.l.b16 %v10538
    %v10846 = vunpack.c.l.b16 %v10539
    %v10847 = vunpack.c.l.b16 %v10540
    %v10848 = vunpack.c.l.b16 %v10541
    %v10849 = vunpack.c.l.b16 %v10542
    %v10850 = vunpack.c.l.b16 %v10543
    %v10851 = vunpack.c.l.b16 %v10544
    %v10852 = vunpack.c.l.b16 %v10545
    %v10853 = vunpack.c.l.b16 %v10546
    %v10854 = vunpack.c.l.b16 %v10547
    %v10855 = vunpack.c.l.b16 %v10548
    %v10856 = vunpack.c.l.b16 %v10549
    %v10857 = vunpack.c.l.b16 %v10550
    %v10858 = vunpack.c.l.b16 %v10551
    %v10859 = vunpack.c.l.b16 %v10552
    %v10860 = vunpack.c.l.b16 %v10553
    %v10861 = vunpack.c.l.b16 %v10554
    %v10862 = vunpack.c.l.b16 %v10555
    %v10863 = vunpack.c.l.b16 %v10556
    %v10864 = vunpack.c.l.b16 %v10557
    %v10865 = vunpack.c.l.b16 %v10558
    %v10866 = vunpack.c.l.b16 %v10559
    %v10867 = vunpack.c.l.b16 %v10560
    %v10868 = vunpack.c.l.b16 %v10561
    %v10869 = vunpack.c.l.b16 %v10562
    %v10870 = vunpack.c.l.b16 %v10563
    %v10871 = vunpack.c.l.b16 %v10564
    %v10872 = vunpack.c.l.b16 %v10565
    %v10873 = vunpack.c.l.b16 %v10566
    %v10874 = vunpack.c.l.b16 %v10567
    %v10875 = vunpack.c.l.b16 %v10568
    %v10876 = vunpack.c.l.b16 %v10569
    %v10877 = vunpack.c.l.b16 %v10570
    %v10878 = vunpack.c.l.b16 %v10571
    %v10879 = vunpack.c.l.b16 %v10572
    %v10880 = vunpack.c.l.b16 %v10573
    %v10881 = vunpack.c.l.b16 %v10574
    %v10882 = vunpack.c.l.b16 %v10575
    %v10883 = vunpack.c.l.b16 %v10576
    %v10884 = vunpack.c.l.b16 %v10577
    %v10885 = vunpack.c.l.b16 %v10578
    %v10886 = vunpack.c.l.b16 %v10579
    %v10887 = vunpack.c.l.b16 %v10580
    %v10888 = vunpack.c.l.b16 %v10581
    %v10889 = vunpack.c.l.b16 %v10582
    %v10890 = vunpack.c.l.b16 %v10583
    %v10891 = vunpack.c.l.b16 %v10584
    %v10892 = vunpack.c.l.b16 %v10585
    %v10893 = vunpack.c.l.b16 %v10586
    %v10894 = vunpack.c.l.b16 %v10587
    %v10895 = vunpack.c.l.b16 %v10588
    %v10896 = vunpack.c.l.b16 %v10589
    %v10897 = vunpack.c.l.b16 %v10590
    %v10898 = vunpack.c.l.b16 %v10591
    %v10899 = vpack.c.b16 %v10750, %v10749
    %v10900 = vpack.c.b16 %v10752, %v10751
    %v10901 = vpack.c.b16 %v10754, %v10753
    %v10902 = vpack.c.b16 %v10756, %v10755
    %v10903 = vpack.c.b16 %v10758, %v10757
    %v10904 = vpack.c.b16 %v10760, %v10759
    %v10905 = vpack.c.b16 %v10762, %v10761
    %v10906 = vpack.c.b16 %v10764, %v10763
    %v10907 = vpack.c.b16 %v10766, %v10765
    %v10908 = vpack.c.b16 %v10768, %v10767
    %v10909 = vpack.c.b16 %v10770, %v10769
    %v10910 = vpack.c.b16 %v10772, %v10771
    %v10911 = vpack.c.b16 %v10774, %v10773
    %v10912 = vpack.c.b16 %v10776, %v10775
    %v10913 = vpack.c.b16 %v10778, %v10777
    %v10914 = vpack.c.b16 %v10780, %v10779
    %v10915 = vpack.c.b16 %v10782, %v10781
    %v10916 = vpack.c.b16 %v10784, %v10783
    %v10917 = vpack.c.b16 %v10786, %v10785
    %v10918 = vpack.c.b16 %v10788, %v10787
    %v10919 = vpack.c.b16 %v10790, %v10789
    %v10920 = vpack.c.b16 %v10792, %v10791
    %v10921 = vpack.c.b16 %v10794, %v10793
    %v10922 = vpack.c.b16 %v10796, %v10795
    %v10923 = vpack.c.b16 %v10798, %v10797
    %v10924 = vpack.c.b16 %v10800, %v10799
    %v10925 = vpack.c.b16 %v10802, %v10801
    %v10926 = vpack.c.b16 %v10804, %v10803
    %v10927 = vpack.c.b16 %v10806, %v10805
    %v10928 = vpack.c.b16 %v10808, %v10807
    %v10929 = vpack.c.b16 %v10810, %v10809
    %v10930 = vpack.c.b16 %v10812, %v10811
    %v10931 = vpack.c.b16 %v10814, %v10813
    %v10932 = vpack.c.b16 %v10816, %v10815
    %v10933 = vpack.c.b16 %v10818, %v10817
    %v10934 = vpack.c.b16 %v10820, %v10819
    %v10935 = vpack.c.b16 %v10822, %v10821
    %v10936 = vpack.c.b16 %v10824, %v10823
    %v10937 = vpack.c.b16 %v10826, %v10825
    %v10938 = vpack.c.b16 %v10828, %v10827
    %v10939 = vpack.c.b16 %v10830, %v10829
    %v10940 = vpack.c.b16 %v10832, %v10831
    %v10941 = vpack.c.b16 %v10834, %v10833
    %v10942 = vpack.c.b16 %v10836, %v10835
    %v10943 = vpack.c.b16 %v10838, %v10837
    %v10944 = vpack.c.b16 %v10840, %v10839
    %v10945 = vpack.c.b16 %v10842, %v10841
    %v10946 = vpack.c.b16 %v10844, %v10843
    %v10947 = vpack.c.b16 %v10846, %v10845
    %v10948 = vpack.c.b16 %v10848, %v10847
    %v10949 = vpack.c.b16 %v10850, %v10849
    %v10950 = vpack.c.b16 %v10852, %v10851
    %v10951 = vpack.c.b16 %v10854, %v10853
    %v10952 = vpack.c.b16 %v10856, %v10855
    %v10953 = vpack.c.b16 %v10858, %v10857
    %v10954 = vpack.c.b16 %v10860, %v10859
    %v10955 = vpack.c.b16 %v10862, %v10861
    %v10956 = vpack.c.b16 %v10864, %v10863
    %v10957 = vpack.c.b16 %v10866, %v10865
    %v10958 = vpack.c.b16 %v10868, %v10867
    %v10959 = vpack.c.b16 %v10870, %v10869
    %v10960 = vpack.c.b16 %v10872, %v10871
    %v10961 = vpack.c.b16 %v10874, %v10873
    %v10962 = vpack.c.b16 %v10876, %v10875
    %v10963 = vpack.c.b16 %v10878, %v10877
    %v10964 = vpack.c.b16 %v10880, %v10879
    %v10965 = vpack.c.b16 %v10882, %v10881
    %v10966 = vpack.c.b16 %v10884, %v10883
    %v10967 = vpack.c.b16 %v10886, %v10885
    %v10968 = vpack.c.b16 %v10888, %v10887
    %v10969 = vpack.c.b16 %v10890, %v10889
    %v10970 = vpack.c.b16 %v10892, %v10891
    %v10971 = vpack.c.b16 %v10894, %v10893
    %v10972 = vpack.c.b16 %v10896, %v10895
    %v10973 = vpack.c.b16 %v10898, %v10897
    %v11050 = vsel %vm4025, %v10441, 0
    %11052 = vmatprep.subr.bf16.mxu0 0
    %11053 = vmatpush1.bf16.msra.mxu0 %v10906
    %11054 = vmatprep.subr.bf16.mxu0 0
    %11055 = vmatpush1.bf16.msra.mxu0 %v10905
    %11056 = vmatprep.subr.bf16.mxu0 0
    %11057 = vmatpush1.bf16.msra.mxu0 %v10904
    %11058 = vmatprep.subr.bf16.mxu0 0
    %11059 = vmatpush1.bf16.msra.mxu0 %v10903
    %11060 = vmatprep.subr.bf16.mxu0 0
    %11061 = vmatpush1.bf16.msra.mxu0 %v10902
    %11062 = vmatprep.subr.bf16.mxu0 0
    %11063 = vmatpush1.bf16.msra.mxu0 %v10901
    %11064 = vmatprep.subr.bf16.mxu0 0
    %11065 = vmatpush1.bf16.msra.mxu0 %v10900
    %11066 = vmatprep.subr.bf16.mxu0 0
    %11067 = vmatpush1.bf16.msra.mxu0 %v10899
    %11068 = vmatprep.subr.bf16.mxu0 0
    %11069 = vmatpush2.bf16.msra.mxu0 %v10914
    %11070 = vmatprep.subr.bf16.mxu0 0
    %11071 = vmatpush2.bf16.msra.mxu0 %v10913
    %11072 = vmatprep.subr.bf16.mxu0 0
    %11073 = vmatpush2.bf16.msra.mxu0 %v10912
    %11074 = vmatprep.subr.bf16.mxu0 0
    %11075 = vmatpush2.bf16.msra.mxu0 %v10911
    %11076 = vmatprep.subr.bf16.mxu0 0
    %11077 = vmatpush2.bf16.msra.mxu0 %v10910
    %11078 = vmatprep.subr.bf16.mxu0 0
    %11079 = vmatpush2.bf16.msra.mxu0 %v10909
    %11080 = vmatprep.subr.bf16.mxu0 0
    %11081 = vmatpush2.bf16.msra.mxu0 %v10908
    %11082 = vmatprep.subr.bf16.mxu0 0
    %11083 = vmatpush2.bf16.msra.mxu0 %v10907
    %11084 = vmatprep.mubr.bf16.mxu0 %v10433
    %11085 = vmatmul.mubr.bf16.gmra.mxu0 %v10432
    %v11086 = vpop.f32.mrf.mxu0
    %v11087 = vadd.f32 %v10597, %v11086
    %v11088 = vpop.f32.mrf.mxu0
    %v11089 = vpop.f32.mrf.mxu0
    %v11090 = vadd.f32 %v10597, %v11089
    %v11091 = vpop.f32.mrf.mxu0
    %11092 = vdwg.mxu0
    %11093 = vmatprep.subr.bf16.mxu0 0
    %11094 = vmatpush1.bf16.msra.mxu0 %v10922
    %11095 = vmatprep.subr.bf16.mxu0 0
    %11096 = vmatpush1.bf16.msra.mxu0 %v10921
    %11097 = vmatprep.subr.bf16.mxu0 0
    %11098 = vmatpush1.bf16.msra.mxu0 %v10920
    %11099 = vmatprep.subr.bf16.mxu0 0
    %11100 = vmatpush1.bf16.msra.mxu0 %v10919
    %11101 = vmatprep.subr.bf16.mxu0 0
    %11102 = vmatpush1.bf16.msra.mxu0 %v10918
    %11103 = vmatprep.subr.bf16.mxu0 0
    %11104 = vmatpush1.bf16.msra.mxu0 %v10917
    %11105 = vmatprep.subr.bf16.mxu0 0
    %11106 = vmatpush1.bf16.msra.mxu0 %v10916
    %11107 = vmatprep.subr.bf16.mxu0 0
    %11108 = vmatpush1.bf16.msra.mxu0 %v10915
    %11109 = vmatprep.subr.bf16.mxu0 0
    %11110 = vmatpush2.bf16.msra.mxu0 %v10930
    %11111 = vmatprep.subr.bf16.mxu0 0
    %11112 = vmatpush2.bf16.msra.mxu0 %v10929
    %11113 = vmatprep.subr.bf16.mxu0 0
    %11114 = vmatpush2.bf16.msra.mxu0 %v10928
    %11115 = vmatprep.subr.bf16.mxu0 0
    %11116 = vmatpush2.bf16.msra.mxu0 %v10927
    %11117 = vmatprep.subr.bf16.mxu0 0
    %11118 = vmatpush2.bf16.msra.mxu0 %v10926
    %11119 = vmatprep.subr.bf16.mxu0 0
    %11120 = vmatpush2.bf16.msra.mxu0 %v10925
    %11121 = vmatprep.subr.bf16.mxu0 0
    %11122 = vmatpush2.bf16.msra.mxu0 %v10924
    %11123 = vmatprep.subr.bf16.mxu0 0
    %11124 = vmatpush2.bf16.msra.mxu0 %v10923
    %11125 = vmatprep.mubr.bf16.mxu0 %v10435
    %11126 = vmatmul.mubr.bf16.gmra.mxu0 %v10434
    %v11127 = vpop.f32.mrf.mxu0
    %v11128 = vadd.f32 %v11087, %v11127
    %v11129 = vpop.f32.mrf.mxu0
    %v11130 = vpop.f32.mrf.mxu0
    %v11131 = vadd.f32 %v11090, %v11130
    %v11132 = vpop.f32.mrf.mxu0
    %11133 = vdwg.mxu0
    %11134 = vmatprep.subr.bf16.mxu0 0
    %11135 = vmatpush1.bf16.msra.mxu0 %v10938
    %11136 = vmatprep.subr.bf16.mxu0 0
    %11137 = vmatpush1.bf16.msra.mxu0 %v10937
    %11138 = vmatprep.subr.bf16.mxu0 0
    %11139 = vmatpush1.bf16.msra.mxu0 %v10936
    %11140 = vmatprep.subr.bf16.mxu0 0
    %11141 = vmatpush1.bf16.msra.mxu0 %v10935
    %11142 = vmatprep.subr.bf16.mxu0 0
    %11143 = vmatpush1.bf16.msra.mxu0 %v10934
    %11144 = vmatprep.subr.bf16.mxu0 0
    %11145 = vmatpush1.bf16.msra.mxu0 %v10933
    %11146 = vmatprep.subr.bf16.mxu0 0
    %11147 = vmatpush1.bf16.msra.mxu0 %v10932
    %11148 = vmatprep.subr.bf16.mxu0 0
    %11149 = vmatpush1.bf16.msra.mxu0 %v10931
    %11150 = vmatprep.subr.bf16.mxu0 0
    %11151 = vmatpush2.bf16.msra.mxu0 %v10946
    %11152 = vmatprep.subr.bf16.mxu0 0
    %11153 = vmatpush2.bf16.msra.mxu0 %v10945
    %11154 = vmatprep.subr.bf16.mxu0 0
    %11155 = vmatpush2.bf16.msra.mxu0 %v10944
    %11156 = vmatprep.subr.bf16.mxu0 0
    %11157 = vmatpush2.bf16.msra.mxu0 %v10943
    %11158 = vmatprep.subr.bf16.mxu0 0
    %11159 = vmatpush2.bf16.msra.mxu0 %v10942
    %11160 = vmatprep.subr.bf16.mxu0 0
    %11161 = vmatpush2.bf16.msra.mxu0 %v10941
    %11162 = vmatprep.subr.bf16.mxu0 0
    %11163 = vmatpush2.bf16.msra.mxu0 %v10940
    %11164 = vmatprep.subr.bf16.mxu0 0
    %11165 = vmatpush2.bf16.msra.mxu0 %v10939
    %11166 = vmatprep.mubr.bf16.mxu0 %v10437
    %11167 = vmatmul.mubr.bf16.gmra.mxu0 %v10436
    %v11168 = vpop.f32.mrf.mxu0
    %v11169 = vadd.f32 %v11128, %v11168
    %v11170 = vpop.f32.mrf.mxu0
    %v11171 = vpop.f32.mrf.mxu0
    %v11172 = vadd.f32 %v11131, %v11171
    %v11173 = vpop.f32.mrf.mxu0
    %11174 = vdwg.mxu0
    %11175 = vmatprep.subr.bf16.mxu0 0
    %11176 = vmatpush1.bf16.msra.mxu0 %v10954
    %11177 = vmatprep.subr.bf16.mxu0 0
    %11178 = vmatpush1.bf16.msra.mxu0 %v10953
    %11179 = vmatprep.subr.bf16.mxu0 0
    %11180 = vmatpush1.bf16.msra.mxu0 %v10952
    %11181 = vmatprep.subr.bf16.mxu0 0
    %11182 = vmatpush1.bf16.msra.mxu0 %v10951
    %11183 = vmatprep.subr.bf16.mxu0 0
    %11184 = vmatpush1.bf16.msra.mxu0 %v10950
    %11185 = vmatprep.subr.bf16.mxu0 0
    %11186 = vmatpush1.bf16.msra.mxu0 %v10949
    %11187 = vmatprep.subr.bf16.mxu0 0
    %11188 = vmatpush1.bf16.msra.mxu0 %v10948
    %11189 = vmatprep.subr.bf16.mxu0 0
    %11190 = vmatpush1.bf16.msra.mxu0 %v10947
    %11191 = vmatprep.subr.bf16.mxu0 0
    %11192 = vmatpush2.bf16.msra.mxu0 %v10962
    %11193 = vmatprep.subr.bf16.mxu0 0
    %11194 = vmatpush2.bf16.msra.mxu0 %v10961
    %11195 = vmatprep.subr.bf16.mxu0 0
    %11196 = vmatpush2.bf16.msra.mxu0 %v10960
    %11197 = vmatprep.subr.bf16.mxu0 0
    %11198 = vmatpush2.bf16.msra.mxu0 %v10959
    %11199 = vmatprep.subr.bf16.mxu0 0
    %11200 = vmatpush2.bf16.msra.mxu0 %v10958
    %11201 = vmatprep.subr.bf16.mxu0 0
    %11202 = vmatpush2.bf16.msra.mxu0 %v10957
    %11203 = vmatprep.subr.bf16.mxu0 0
    %11204 = vmatpush2.bf16.msra.mxu0 %v10956
    %11205 = vmatprep.subr.bf16.mxu0 0
    %11206 = vmatpush2.bf16.msra.mxu0 %v10955
    %11207 = vmatprep.mubr.bf16.mxu0 %v10439
    %11208 = vmatmul.mubr.bf16.gmra.mxu0 %v10438
    %v11209 = vpop.f32.mrf.mxu0
    %v11210 = vadd.f32 %v11169, %v11209
    %v11211 = vpop.f32.mrf.mxu0
    %v11212 = vpop.f32.mrf.mxu0
    %v11213 = vadd.f32 %v11172, %v11212
    %v11214 = vpop.f32.mrf.mxu0
    %11215 = vdwg.mxu0
    %11216 = vmatprep.subr.bf16.mxu0 0
    %11217 = vmatpush1.bf16.msra.mxu0 %v10970
    %11218 = vmatprep.subr.bf16.mxu0 0
    %11219 = vmatpush1.bf16.msra.mxu0 %v10969
    %11220 = vmatprep.subr.bf16.mxu0 0
    %11221 = vmatpush1.bf16.msra.mxu0 %v10968
    %11222 = vmatprep.subr.bf16.mxu0 0
    %11223 = vmatpush1.bf16.msra.mxu0 %v10967
    %11224 = vmatprep.subr.bf16.mxu0 0
    %11225 = vmatpush1.bf16.msra.mxu0 %v10966
    %11226 = vmatprep.subr.bf16.mxu0 0
    %11227 = vmatpush1.bf16.msra.mxu0 %v10965
    %11228 = vmatprep.subr.bf16.mxu0 0
    %11229 = vmatpush1.bf16.msra.mxu0 %v10964
    %11230 = vmatprep.subr.bf16.mxu0 0
    %11231 = vmatpush1.bf16.msra.mxu0 %v10963
    %11232 = vmatprep.subr.bf16.mxu0 0
    %11233 = vmatpush2.bf16.msra.mxu0 0
    %11234 = vmatprep.subr.bf16.mxu0 0
    %11235 = vmatpush2.bf16.msra.mxu0 0
    %11236 = vmatprep.subr.bf16.mxu0 0
    %11237 = vmatpush2.bf16.msra.mxu0 0
    %11238 = vmatprep.subr.bf16.mxu0 0
    %11239 = vmatpush2.bf16.msra.mxu0 0
    %11240 = vmatprep.subr.bf16.mxu0 0
    %11241 = vmatpush2.bf16.msra.mxu0 0
    %11242 = vmatprep.subr.bf16.mxu0 0
    %11243 = vmatpush2.bf16.msra.mxu0 %v10973
    %11244 = vmatprep.subr.bf16.mxu0 0
    %11245 = vmatpush2.bf16.msra.mxu0 %v10972
    %11246 = vmatprep.subr.bf16.mxu0 0
    %11247 = vmatpush2.bf16.msra.mxu0 %v10971
    %11248 = vmatprep.mubr.bf16.mxu0 %v11050
    %11249 = vmatmul.mubr.bf16.gmra.mxu0 %v10440
    %v11250 = vpop.f32.mrf.mxu0
    %v11251 = vadd.f32 %v11210, %v11250
    %v11252 = vpop.f32.mrf.mxu0
    %v11253 = vpop.f32.mrf.mxu0
    %v11254 = vadd.f32 %v11213, %v11253
    %v11255 = vpop.f32.mrf.mxu0
    %11256 = vdwg.mxu0
    %v11257 = vlaneseq
    %v11258 = vand.u32 %v11257, 127
    %vm11259 = vcmp.lt.s32.totalorder %v11258, 50
    %vm11260 = vcmp.ge.s32.totalorder %v11258, 0
    %vm11261 = vcmp.lt.s32.totalorder %v11258, 10
    %vm11262 = vmand %vm11260, %vm11261
    %v11263 = vsel %vm11262, %v11251, -inf
    %v11264 = vsel %vm11262, %v11254, -inf
    %vm11265 = vcmask 523264
    %v11266 = vsel %vm11265, %v11263, -inf
    %11267 = vmax.xlane.f32.xlu0 %v11266
    %v11268 = vpop.xlane.xlu0 %11267
    %v11269 = vsel %vm11265, %v11264, -inf
    %11270 = vmax.xlane.f32.xlu0 %v11269
    %v11271 = vpop.xlane.xlu0 %11270
    %v11272 = vsel %vm11262, %v11268, 0.0
    %v11273 = vsel %vm11262, %v11271, 0.0
    %v11274 = vadd.f32 %v11272, 0.0
    %v11275 = vadd.f32 %v11273, 0.0
    %vm11276 = vcmp.ge.s32.totalorder %v11258, 10
    %vm11277 = vcmp.lt.s32.totalorder %v11258, 20
    %vm11278 = vmand %vm11276, %vm11277
    %v11279 = vsel %vm11278, %v11251, -inf
    %v11280 = vsel %vm11278, %v11254, -inf
    %v11281 = vsel %vm11265, %v11279, -inf
    %11282 = vmax.xlane.f32.xlu0 %v11281
    %v11283 = vpop.xlane.xlu0 %11282
    %v11284 = vsel %vm11265, %v11280, -inf
    %11285 = vmax.xlane.f32.xlu0 %v11284
    %v11286 = vpop.xlane.xlu0 %11285
    %v11287 = vsel %vm11278, %v11283, 0.0
    %v11288 = vsel %vm11278, %v11286, 0.0
    %v11289 = vadd.f32 %v11274, %v11287
    %v11290 = vadd.f32 %v11275, %v11288
    %vm11291 = vcmp.ge.s32.totalorder %v11258, 20
    %vm11292 = vcmp.lt.s32.totalorder %v11258, 30
    %vm11293 = vmand %vm11291, %vm11292
    %v11294 = vsel %vm11293, %v11251, -inf
    %v11295 = vsel %vm11293, %v11254, -inf
    %v11296 = vsel %vm11265, %v11294, -inf
    %11297 = vmax.xlane.f32.xlu0 %v11296
    %v11298 = vpop.xlane.xlu0 %11297
    %v11299 = vsel %vm11265, %v11295, -inf
    %11300 = vmax.xlane.f32.xlu0 %v11299
    %v11301 = vpop.xlane.xlu0 %11300
    %v11302 = vsel %vm11293, %v11298, 0.0
    %v11303 = vsel %vm11293, %v11301, 0.0
    %v11304 = vadd.f32 %v11289, %v11302
    %v11305 = vadd.f32 %v11290, %v11303
    %vm11306 = vcmp.ge.s32.totalorder %v11258, 30
    %vm11307 = vcmp.lt.s32.totalorder %v11258, 40
    %vm11308 = vmand %vm11306, %vm11307
    %v11309 = vsel %vm11308, %v11251, -inf
    %v11310 = vsel %vm11308, %v11254, -inf
    %v11311 = vsel %vm11265, %v11309, -inf
    %11312 = vmax.xlane.f32.xlu0 %v11311
    %v11313 = vpop.xlane.xlu0 %11312
    %v11314 = vsel %vm11265, %v11310, -inf
    %11315 = vmax.xlane.f32.xlu0 %v11314
    %v11316 = vpop.xlane.xlu0 %11315
    %v11317 = vsel %vm11308, %v11313, 0.0
    %v11318 = vsel %vm11308, %v11316, 0.0
    %v11319 = vadd.f32 %v11304, %v11317
    %v11320 = vadd.f32 %v11305, %v11318
    %vm11321 = vcmp.ge.s32.totalorder %v11258, 40
    %vm11322 = vmand %vm11321, %vm11259
    %v11323 = vsel %vm11322, %v11251, -inf
    %v11324 = vsel %vm11322, %v11254, -inf
    %v11325 = vsel %vm11265, %v11323, -inf
    %11326 = vmax.xlane.f32.xlu0 %v11325
    %v11327 = vpop.xlane.xlu0 %11326
    %v11328 = vsel %vm11265, %v11324, -inf
    %11329 = vmax.xlane.f32.xlu0 %v11328
    %v11330 = vpop.xlane.xlu0 %11329
    %v11331 = vsel %vm11322, %v11327, 0.0
    %v11332 = vsel %vm11322, %v11330, 0.0
    %v11333 = vadd.f32 %v11319, %v11331
    %v11334 = vadd.f32 %v11320, %v11332
    %v11335 = vsub.f32 %v11251, %v11333
    %v11336 = vsub.f32 %v11254, %v11334
    %v11337 = vmul.f32 %v11335, 1.442695
    %v11338 = vpow.pop %v11337
    %v11339 = vmul.f32 %v11336, 1.442695
    %v11340 = vpow.pop %v11339
    %v11341 = vsel %vm11259, %v11338, 0.0
    %v11342 = vsel %vm11259, %v11340, 0.0
    %v11343 = vsel %vm11262, %v11341, 0.0
    %v11344 = vsel %vm11262, %v11342, 0.0
    %v11345 = vsel %vm11265, %v11343, 0.0
    %11346 = vadd.xlane.f32.xlu0 %v11345
    %v11347 = vpop.xlane.xlu0 %11346
    %v11348 = vsel %vm11265, %v11344, 0.0
    %11349 = vadd.xlane.f32.xlu0 %v11348
    %v11350 = vpop.xlane.xlu0 %11349
    %v11351 = vsel %vm11262, %v11347, 0.0
    %v11352 = vsel %vm11262, %v11350, 0.0
    %v11353 = vadd.f32 %v11351, 0.0
    %v11354 = vadd.f32 %v11352, 0.0
    %v11355 = vsel %vm11278, %v11341, 0.0
    %v11356 = vsel %vm11278, %v11342, 0.0
    %v11357 = vsel %vm11265, %v11355, 0.0
    %11358 = vadd.xlane.f32.xlu0 %v11357
    %v11359 = vpop.xlane.xlu0 %11358
    %v11360 = vsel %vm11265, %v11356, 0.0
    %11361 = vadd.xlane.f32.xlu0 %v11360
    %v11362 = vpop.xlane.xlu0 %11361
    %v11363 = vsel %vm11278, %v11359, 0.0
    %v11364 = vsel %vm11278, %v11362, 0.0
    %v11365 = vadd.f32 %v11353, %v11363
    %v11366 = vadd.f32 %v11354, %v11364
    %v11367 = vsel %vm11293, %v11341, 0.0
    %v11368 = vsel %vm11293, %v11342, 0.0
    %v11369 = vsel %vm11265, %v11367, 0.0
    %11370 = vadd.xlane.f32.xlu0 %v11369
    %v11371 = vpop.xlane.xlu0 %11370
    %v11372 = vsel %vm11265, %v11368, 0.0
    %11373 = vadd.xlane.f32.xlu0 %v11372
    %v11374 = vpop.xlane.xlu0 %11373
    %v11375 = vsel %vm11293, %v11371, 0.0
    %v11376 = vsel %vm11293, %v11374, 0.0
    %v11377 = vadd.f32 %v11365, %v11375
    %v11378 = vadd.f32 %v11366, %v11376
    %v11379 = vsel %vm11308, %v11341, 0.0
    %v11380 = vsel %vm11308, %v11342, 0.0
    %v11381 = vsel %vm11265, %v11379, 0.0
    %11382 = vadd.xlane.f32.xlu0 %v11381
    %v11383 = vpop.xlane.xlu0 %11382
    %v11384 = vsel %vm11265, %v11380, 0.0
    %11385 = vadd.xlane.f32.xlu0 %v11384
    %v11386 = vpop.xlane.xlu0 %11385
    %v11387 = vsel %vm11308, %v11383, 0.0
    %v11388 = vsel %vm11308, %v11386, 0.0
    %v11389 = vadd.f32 %v11377, %v11387
    %v11390 = vadd.f32 %v11378, %v11388
    %v11391 = vsel %vm11322, %v11341, 0.0
    %v11392 = vsel %vm11322, %v11342, 0.0
    %v11393 = vsel %vm11265, %v11391, 0.0
    %11394 = vadd.xlane.f32.xlu0 %v11393
    %v11395 = vpop.xlane.xlu0 %11394
    %v11396 = vsel %vm11265, %v11392, 0.0
    %11397 = vadd.xlane.f32.xlu0 %v11396
    %v11398 = vpop.xlane.xlu0 %11397
    %v11399 = vsel %vm11322, %v11395, 0.0
    %v11400 = vsel %vm11322, %v11398, 0.0
    %v11401 = vadd.f32 %v11389, %v11399
    %v11402 = vadd.f32 %v11390, %v11400
    %v11403 = vsel %vm11259, %v11401, 1.0
    %v11404 = vsel %vm11259, %v11402, 1.0
    %v11405 = vrcp.pop %v11403
    %v11406 = vrcp.pop %v11404
    %v11407 = vmul.f32 %v11341, %v11405
    %v11408 = vmul.f32 %v11342, %v11406
    %11409 = vst.msk [vmem:[#allocation16] sm:$0xff] %vm11265, %v11407
    %11410 = vst.msk [vmem:[#allocation16 + $0x8] sm:$0xff] %vm11265, %v11408
    // Predicated region
    $region70: #{tpu_custom_call.1} parent=1 // pred_check
      _
    $region71: #{tpu_custom_call.1} parent=1 // pred_check_branch
      %11412 = sbr.rel (0) target = $region73
    $region72: #{tpu_custom_call.1} parent=1 // pred_region
      %s11414 = ssub.s32 256, 256
      %11415 = vsyncadd [#allocation4], %s11414
      %s11416 = sshll.u32 [#allocation16], 4
      %s11417 = int_to_ptr.vmem [resolvable:$true] %s11416
      %11422 = dma.vmem_to_hbm [thread:$0]  %s11417, 256, %s9, [#allocation4], 128, 128, 8
    $region73: #{tpu_custom_call.1} parent=1 // pred_fallthru
      _
    // Predicated region
    $region74: #{tpu_custom_call.1} parent=1 // pred_check
      _
    $region75: #{tpu_custom_call.1} parent=1 // pred_check_branch
      %11424 = sbr.rel (0) target = $region77
    $region76: #{tpu_custom_call.1} parent=1 // pred_region
      %11425 = dma.done [#allocation4], 256
    $region77: #{tpu_custom_call.1} parent=1 // pred_fallthru
      _
    %11426 = vsyncpa [#allocation3], 1
    %11427 = vsyncpa [#allocation6], 1
    %11428 = vsyncpa [#allocation9], 1
    %11429 = vsyncpa [#allocation12], 1
    %11430 = vsyncpa [#allocation15], 1
    %11431 = vsyncpa [#allocation4], 1

</llo_original>
